<compile_context>
chip_gen: v7x
topology: tpu7x:2x2x1
jax: 0.10.0
libtpu: 0.0.40
codegen_flags: <defaults>
</compile_context>

<pallas_src>
import numpy as np
import jax
import jax.numpy as jnp
from jax import lax
from jax.experimental import pallas as pl
from jax.experimental.pallas import tpu as pltpu


# ---------------------------------------------------------------------------
# Pallas kernels
# ---------------------------------------------------------------------------
def _encoder_kernel(p1_ref, w1_ref, b1_ref,
                    P2_ref, w2_ref, b2_ref,
                    P3_ref, w3_ref, b3_ref,
                    lat_ref):
    # layer 1: pre-im2col'd patches -> single full-K matmul
    a = jnp.dot(p1_ref[...], w1_ref[...], preferred_element_type=jnp.float32)
    a = (a + b1_ref[...]).astype(jnp.bfloat16)                 # (128, 64)

    # layers 2, 3: in-VMEM im2col via 0/1 gather matmuls (no HBM round trip).
    # Gathered rows are exact bf16 values, so the intermediate bf16 cast is
    # lossless and the only rounding per layer is the final one (matches ref).
    for P_ref, w_ref, b_ref in ((P2_ref, w2_ref, b2_ref),
                                (P3_ref, w3_ref, b3_ref)):
        m_out = P_ref.shape[1]
        c_out = w_ref.shape[2]
        acc = jnp.zeros((m_out, c_out), jnp.float32)
        for t in range(P_ref.shape[0]):                        # 9 taps, unrolled
            z = jnp.dot(P_ref[t], a,
                        preferred_element_type=jnp.float32).astype(jnp.bfloat16)
            acc = acc + jnp.dot(z, w_ref[t],
                                preferred_element_type=jnp.float32)
        a = (acc + b_ref[...]).astype(jnp.bfloat16)
    lat_ref[...] = a                                           # (8, 64) latent


def _decoder_kernel(lat_ref, Q0_ref, Q1_ref, Q2_ref,
                    w0_ref, b0_ref, w1_ref, b1_ref, w2_ref, b2_ref,
                    out_ref):
    # One grid step per decoder branch (decoder / decoder2); the per-branch
    # weights arrive via the blocked leading dim of w*_ref / b*_ref.
    h = lat_ref[...]                                           # (8, 64) bf16
    for Q_ref, w_ref, b_ref in ((Q0_ref, w0_ref, b0_ref),
                                (Q1_ref, w1_ref, b1_ref),
                                (Q2_ref, w2_ref, b2_ref)):
        m_out = Q_ref.shape[1]
        c_out = w_ref.shape[3]
        acc = jnp.zeros((m_out, c_out), jnp.float32)
        for t in range(Q_ref.shape[0]):                        # 4 taps, unrolled
            s = jnp.dot(Q_ref[t], h,
                        preferred_element_type=jnp.float32).astype(jnp.bfloat16)
            acc = acc + jnp.dot(s, w_ref[0, t],
                                preferred_element_type=jnp.float32)
        h = (acc + b_ref[0]).astype(jnp.bfloat16)
    out_ref[0] = h.astype(out_ref.dtype)                       # NHWC-flat rows


# ---------------------------------------------------------------------------
# pallas_call wrappers
# ---------------------------------------------------------------------------
def _encoder_call(patches1, pk):
    m_lat = pk["P3"].shape[1]
    c_lat = pk["w3"].shape[2]
    args = (patches1, pk["w1"], pk["b1"], pk["P2"], pk["w2"], pk["b2"],
            pk["P3"], pk["w3"], pk["b3"])

    flops = 2 * patches1.shape[0] * patches1.shape[1] * pk["w1"].shape[1]
    for lvl in ("2", "3"):
        P, wt = pk["P" + lvl], pk["w" + lvl]
        taps, mo, mi = P.shape
        cin, co = wt.shape[1], wt.shape[2]
        flops += 2 * taps * (mo * mi * cin + mo * cin * co)
    bytes_accessed = (sum(int(a.size) * a.dtype.itemsize for a in args)
                      + m_lat * c_lat * 2)

    return pl.pallas_call(
        _encoder_kernel,
        out_shape=jax.ShapeDtypeStruct((m_lat, c_lat), jnp.bfloat16),
        cost_estimate=pl.CostEstimate(flops=flops, transcendentals=0,
                                      bytes_accessed=bytes_accessed),
    )(*args)


def _decoder_call(lat, pk):
    m_out = pk["Q2"].shape[1]
    c_out = pk["Wd2"].shape[3]

    def shared(a):                      # same block for both branches
        shp = a.shape
        return pl.BlockSpec(shp, lambda b, nd=len(shp): (0,) * nd)

    def per_branch(a):                  # leading dim blocked over branches
        shp = a.shape
        blk = (1,) + shp[1:]
        return pl.BlockSpec(blk, lambda b, nd=len(shp): (b,) + (0,) * (nd - 1))

    args = (lat, pk["Q0"], pk["Q1"], pk["Q2"],
            pk["Wd0"], pk["bd0"], pk["Wd1"], pk["bd1"], pk["Wd2"], pk["bd2"])
    in_specs = [shared(lat), shared(pk["Q0"]), shared(pk["Q1"]), shared(pk["Q2"]),
                per_branch(pk["Wd0"]), per_branch(pk["bd0"]),
                per_branch(pk["Wd1"]), per_branch(pk["bd1"]),
                per_branch(pk["Wd2"]), per_branch(pk["bd2"])]

    flops = 0
    for lvl in range(3):
        Q, Wd = pk[f"Q{lvl}"], pk[f"Wd{lvl}"]
        taps, mo, mi = Q.shape
        cin, co = Wd.shape[2], Wd.shape[3]
        flops += 2 * taps * (mo * mi * cin + mo * cin * co)
    flops *= 2                                                  # two branches
    bytes_accessed = (sum(int(a.size) * a.dtype.itemsize for a in args)
                      + 2 * m_out * c_out * 4)

    return pl.pallas_call(
        _decoder_kernel,
        out_shape=jax.ShapeDtypeStruct((2, m_out, c_out), jnp.float32),
        grid=(2,),
        in_specs=in_specs,
        out_specs=pl.BlockSpec((1, m_out, c_out), lambda b: (b, 0, 0)),
        compiler_params=pltpu.CompilerParams(dimension_semantics=("parallel",)),
        cost_estimate=pl.CostEstimate(flops=flops, transcendentals=0,
                                      bytes_accessed=bytes_accessed),
    )(*args)


# ---------------------------------------------------------------------------
# One-time packing: weights + 0/1 gather (conv) / scatter (convT) matrices
# ---------------------------------------------------------------------------
def _conv_gather_matrix(n, hi, wi):
    """(9, n*Ho*Wo, n*Hi*Wi) 0/1 matrices for Conv2d k3 s2 p1 (zero rows = pad)."""
    ho, wo = (hi - 1) // 2 + 1, (wi - 1) // 2 + 1
    P = np.zeros((9, n * ho * wo, n * hi * wi), np.float32)
    for kh in range(3):
        for kw in range(3):
            t = kh * 3 + kw
            for b in range(n):
                for oh in range(ho):
                    for ow in range(wo):
                        ih, iw = 2 * oh + kh - 1, 2 * ow + kw - 1
                        if 0 <= ih < hi and 0 <= iw < wi:
                            P[t, (b * ho + oh) * wo + ow,
                                 (b * hi + ih) * wi + iw] = 1.0
    return P


def _convT_scatter_matrix(n, hi, wi):
    """(4, n*2Hi*2Wi, n*Hi*Wi) 0/1 matrices for ConvTranspose2d k2 s2 p0."""
    ho, wo = 2 * hi, 2 * wi
    Q = np.zeros((4, n * ho * wo, n * hi * wi), np.float32)
    for kh in range(2):
        for kw in range(2):
            t = kh * 2 + kw
            for b in range(n):
                for ih in range(hi):
                    for iw in range(wi):
                        Q[t, (b * ho + 2 * ih + kh) * wo + 2 * iw + kw,
                             (b * hi + ih) * wi + iw] = 1.0
    return Q


def pack_params(params, n, h, w):
    h1, w1 = (h - 1) // 2 + 1, (w - 1) // 2 + 1
    h2, w2 = (h1 - 1) // 2 + 1, (w1 - 1) // 2 + 1
    h3, w3 = (h2 - 1) // 2 + 1, (w2 - 1) // 2 + 1

    (we1, be1), (we2, be2), (we3, be3) = params["encoder"]

    def enc_w2d(wt):   # (Cout,Cin,3,3) -> (9*Cin, Cout)   [im2col layer 1]
        cout, cin = wt.shape[0], wt.shape[1]
        return jnp.transpose(wt, (2, 3, 1, 0)).reshape(9 * cin, cout)

    def enc_taps(wt):  # (Cout,Cin,3,3) -> (9, Cin, Cout)  [gather-matmul layers]
        cout, cin = wt.shape[0], wt.shape[1]
        return jnp.transpose(wt, (2, 3, 1, 0)).reshape(9, cin, cout)

    def dec_taps(wt):  # (Cin,Cout,2,2) -> (4, Cin, Cout)
        cin, cout = wt.shape[0], wt.shape[1]
        return jnp.transpose(wt, (2, 3, 0, 1)).reshape(4, cin, cout)

    packed = {
        "w1": enc_w2d(we1).astype(jnp.bfloat16),
        "b1": be1.reshape(1, -1).astype(jnp.float32),
        "P2": jnp.asarray(_conv_gather_matrix(n, h1, w1), jnp.bfloat16),
        "w2": enc_taps(we2).astype(jnp.bfloat16),
        "b2": be2.reshape(1, -1).astype(jnp.float32),
        "P3": jnp.asarray(_conv_gather_matrix(n, h2, w2), jnp.bfloat16),
        "w3": enc_taps(we3).astype(jnp.bfloat16),
        "b3": be3.reshape(1, -1).astype(jnp.float32),
        "Q0": jnp.asarray(_convT_scatter_matrix(n, h3, w3), jnp.bfloat16),
        "Q1": jnp.asarray(_convT_scatter_matrix(n, 2 * h3, 2 * w3), jnp.bfloat16),
        "Q2": jnp.asarray(_convT_scatter_matrix(n, 4 * h3, 4 * w3), jnp.bfloat16),
    }
    for lvl in range(3):
        wd, bd = params["decoder"][lvl]
        wz, bz = params["decoder2"][lvl]
        packed[f"Wd{lvl}"] = jnp.stack([dec_taps(wd), dec_taps(wz)],
                                       0).astype(jnp.bfloat16)     # (2,4,Cin,Cout)
        packed[f"bd{lvl}"] = jnp.stack([bd, bz], 0)[:, None, :].astype(jnp.float32)
    return packed


def _im2col_s2p1(x_nhwc):
    """im2col for the first conv only (depends on the network input, not on any
    kernel output, so it costs one tiny XLA fusion before the encoder kernel)."""
    n, h, w, c = x_nhwc.shape
    ho, wo = (h - 1) // 2 + 1, (w - 1) // 2 + 1
    xp = jnp.pad(x_nhwc, ((0, 0), (1, 1), (1, 1), (0, 0)))
    taps = [xp[:, kh:kh + 2 * ho - 1:2, kw:kw + 2 * wo - 1:2, :]
            for kh in range(3) for kw in range(3)]
    pat = jnp.stack(taps, axis=3)                        # (n,ho,wo,9,c)
    return pat.reshape(n * ho * wo, 9 * c)


# ---------------------------------------------------------------------------
# BasicAE forward (NCHW in / NCHW out, like the PyTorch module)
# ---------------------------------------------------------------------------
def basic_ae_forward(x_nchw, packed):
    n, _, h, w = x_nchw.shape
    x = jnp.transpose(x_nchw, (0, 2, 3, 1)).astype(jnp.bfloat16)   # NHWC
    patches1 = _im2col_s2p1(x)                                     # (n*h1*w1, 27)
    lat = _encoder_call(patches1, packed)                          # (n*h3*w3, 64)
    out = _decoder_call(lat, packed)                               # (2, n*h*w, 3) f32
    c_out = out.shape[-1]
    dx = jnp.transpose(out[0].reshape(n, h, w, c_out), (0, 3, 1, 2))
    dz = jnp.transpose(out[1].reshape(n, h, w, c_out), (0, 3, 1, 2))
    return dx, dz


# ---------------------------------------------------------------------------
# References (lax convs): bf16-matched (tight check) and full-f32 (fidelity)
# ---------------------------------------------------------------------------
def _conv_ref(x, w, b, *, bf16):
    if bf16:
        x, w = x.astype(jnp.bfloat16), w.astype(jnp.bfloat16)
        out = lax.conv_general_dilated(
            x, w, (2, 2), ((1, 1), (1, 1)),
            dimension_numbers=("NCHW", "OIHW", "NCHW"),
            preferred_element_type=jnp.float32)
        return (out + b[None, :, None, None]).astype(jnp.bfloat16)
    out = lax.conv_general_dilated(
        x, w, (2, 2), ((1, 1), (1, 1)),
        dimension_numbers=("NCHW", "OIHW", "NCHW"),
        precision=lax.Precision.HIGHEST)
    return out + b[None, :, None, None]


def _convT_ref(x, w, b, *, bf16):
    wf = jnp.transpose(w, (1, 0, 2, 3))[:, :, ::-1, ::-1]  # OIHW, flipped
    if bf16:
        x, wf = x.astype(jnp.bfloat16), wf.astype(jnp.bfloat16)
        out = lax.conv_general_dilated(
            x, wf, (1, 1), ((1, 1), (1, 1)), lhs_dilation=(2, 2),
            dimension_numbers=("NCHW", "OIHW", "NCHW"),
            preferred_element_type=jnp.float32)
        return (out + b[None, :, None, None]).astype(jnp.bfloat16)
    out = lax.conv_general_dilated(
        x, wf, (1, 1), ((1, 1), (1, 1)), lhs_dilation=(2, 2),
        dimension_numbers=("NCHW", "OIHW", "NCHW"),
        precision=lax.Precision.HIGHEST)
    return out + b[None, :, None, None]


def ref_forward(x, params, *, bf16):
    y = x
    for w, b in params["encoder"]:
        y = _conv_ref(y, w, b, bf16=bf16)
    dx = y
    for w, b in params["decoder"]:
        dx = _convT_ref(dx, w, b, bf16=bf16)
    dz = y
    for w, b in params["decoder2"]:
        dz = _convT_ref(dz, w, b, bf16=bf16)
    return dx.astype(jnp.float32), dz.astype(jnp.float32)


# ---------------------------------------------------------------------------
# Deterministic parameter init (same shapes as the PyTorch __init__)
# ---------------------------------------------------------------------------
def init_params(key):
    ks = iter(jax.random.split(key, 18))

    def norm(shape, scale):
        return scale * jax.random.normal(next(ks), shape, jnp.float32)

    enc_shapes = [(64, 3, 3, 3), (64, 64, 3, 3), (64, 64, 3, 3)]   # (Cout,Cin,3,3)
    dec_shapes = [(64, 64, 2, 2), (64, 64, 2, 2), (64, 3, 2, 2)]   # (Cin,Cout,2,2)
    enc = [(norm(s, 0.1), norm((s[0],), 0.01)) for s in enc_shapes]
    dec = [(norm(s, 0.1), norm((s[1],), 0.01)) for s in dec_shapes]
    dec2 = [(norm(s, 0.1), norm((s[1],), 0.01)) for s in dec_shapes]
    return {"encoder": enc, "decoder": dec, "decoder2": dec2}


# ---------------------------------------------------------------------------
if __name__ == "__main__":
    key = jax.random.PRNGKey(0)
    pkey, xkey = jax.random.split(key)
    params = init_params(pkey)

    x = jax.random.normal(xkey, (2, 3, 16, 16), jnp.float32)   # NCHW like PyTorch
    packed = pack_params(params, n=2, h=16, w=16)              # once, outside forward

    fwd = jax.jit(lambda xi: basic_ae_forward(xi, packed))
    out_x, out_z = fwd(x)
    out_x = jax.block_until_ready(out_x)
    out_z = jax.block_until_ready(out_z)
    assert out_x.shape == (2, 3, 16, 16) and out_z.shape == (2, 3, 16, 16)

    # Tight check vs a bf16-matched reference (same quantization points).
    brx, brz = ref_forward(x, params, bf16=True)
    assert jnp.allclose(out_x, brx, atol=5e-3, rtol=5e-3), "decoder mismatch (bf16 ref)"
    assert jnp.allclose(out_z, brz, atol=5e-3, rtol=5e-3), "decoder2 mismatch (bf16 ref)"

    # Fidelity check vs the full-f32 module (bf16-matmul tolerance).
    frx, frz = ref_forward(x, params, bf16=False)
    assert jnp.allclose(out_x, frx, atol=5e-2, rtol=5e-2), "decoder mismatch (f32 ref)"
    assert jnp.allclose(out_z, frz, atol=5e-2, rtol=5e-2), "decoder2 mismatch (f32 ref)"

    print("KERNEL_OK")
</pallas_src>

<mosaic_0001>
module attributes {stable_mosaic.version = 11 : i64} {
  func.func @_encoder_kernel(%arg0: memref<128x27xbf16, #tpu.memory_space<vmem>>, %arg1: memref<27x64xbf16, #tpu.memory_space<vmem>>, %arg2: memref<1x64xf32, #tpu.memory_space<vmem>>, %arg3: memref<9x32x128xbf16, #tpu.memory_space<vmem>>, %arg4: memref<9x64x64xbf16, #tpu.memory_space<vmem>>, %arg5: memref<1x64xf32, #tpu.memory_space<vmem>>, %arg6: memref<9x8x32xbf16, #tpu.memory_space<vmem>>, %arg7: memref<9x64x64xbf16, #tpu.memory_space<vmem>>, %arg8: memref<1x64xf32, #tpu.memory_space<vmem>>, %arg9: memref<8x64xbf16, #tpu.memory_space<vmem>>) attributes {dimension_semantics = [], scalar_prefetch = 0 : i64, scratch_operands = 0 : i64, tpu.core_type = #tpu.core_type<tc>} {
    %c0 = arith.constant 0 : index
    %c0_0 = arith.constant 0 : index
    %0 = vector.load %arg0[%c0, %c0_0] : memref<128x27xbf16, #tpu.memory_space<vmem>>, vector<128x27xbf16>
    %c0_1 = arith.constant 0 : index
    %c0_2 = arith.constant 0 : index
    %1 = vector.load %arg1[%c0_1, %c0_2] : memref<27x64xbf16, #tpu.memory_space<vmem>>, vector<27x64xbf16>
    %cst = arith.constant dense<0.000000e+00> : vector<128x64xf32>
    %2 = tpu.matmul %0, %1, %cst {dimension_numbers = #tpu.dot_dimension_numbers<[1], [0], [0], [1], [0, 0, 1, 1], [], []>} : vector<128x27xbf16>, vector<27x64xbf16>, vector<128x64xf32> -> vector<128x64xf32>
    %c0_3 = arith.constant 0 : index
    %c0_4 = arith.constant 0 : index
    %3 = vector.load %arg2[%c0_3, %c0_4] : memref<1x64xf32, #tpu.memory_space<vmem>>, vector<1x64xf32>
    %4 = vector.broadcast %3 : vector<1x64xf32> to vector<128x64xf32>
    %5 = arith.addf %2, %4 : vector<128x64xf32>
    %6 = arith.truncf %5 : vector<128x64xf32> to vector<128x64xbf16>
    %cst_5 = arith.constant 0.000000e+00 : f32
    %7 = vector.broadcast %cst_5 : f32 to vector<32x64xf32>
    %c0_6 = arith.constant 0 : index
    %c0_7 = arith.constant 0 : index
    %c0_8 = arith.constant 0 : index
    %8 = vector.load %arg3[%c0_6, %c0_7, %c0_8] : memref<9x32x128xbf16, #tpu.memory_space<vmem>>, vector<1x32x128xbf16>
    %9 = vector.shape_cast %8 : vector<1x32x128xbf16> to vector<32x128xbf16>
    %cst_9 = arith.constant dense<0.000000e+00> : vector<32x64xf32>
    %10 = tpu.matmul %9, %6, %cst_9 {dimension_numbers = #tpu.dot_dimension_numbers<[1], [0], [0], [1], [0, 0, 1, 1], [], []>} : vector<32x128xbf16>, vector<128x64xbf16>, vector<32x64xf32> -> vector<32x64xf32>
    %11 = arith.truncf %10 : vector<32x64xf32> to vector<32x64xbf16>
    %c0_10 = arith.constant 0 : index
    %c0_11 = arith.constant 0 : index
    %c0_12 = arith.constant 0 : index
    %12 = vector.load %arg4[%c0_10, %c0_11, %c0_12] : memref<9x64x64xbf16, #tpu.memory_space<vmem>>, vector<1x64x64xbf16>
    %13 = vector.shape_cast %12 : vector<1x64x64xbf16> to vector<64x64xbf16>
    %cst_13 = arith.constant dense<0.000000e+00> : vector<32x64xf32>
    %14 = tpu.matmul %11, %13, %cst_13 {dimension_numbers = #tpu.dot_dimension_numbers<[1], [0], [0], [1], [0, 0, 1, 1], [], []>} : vector<32x64xbf16>, vector<64x64xbf16>, vector<32x64xf32> -> vector<32x64xf32>
    %15 = arith.addf %7, %14 : vector<32x64xf32>
    %c1 = arith.constant 1 : index
    %c0_14 = arith.constant 0 : index
    %c0_15 = arith.constant 0 : index
    %16 = vector.load %arg3[%c1, %c0_14, %c0_15] : memref<9x32x128xbf16, #tpu.memory_space<vmem>>, vector<1x32x128xbf16>
    %17 = vector.shape_cast %16 : vector<1x32x128xbf16> to vector<32x128xbf16>
    %cst_16 = arith.constant dense<0.000000e+00> : vector<32x64xf32>
    %18 = tpu.matmul %17, %6, %cst_16 {dimension_numbers = #tpu.dot_dimension_numbers<[1], [0], [0], [1], [0, 0, 1, 1], [], []>} : vector<32x128xbf16>, vector<128x64xbf16>, vector<32x64xf32> -> vector<32x64xf32>
    %19 = arith.truncf %18 : vector<32x64xf32> to vector<32x64xbf16>
    %c1_17 = arith.constant 1 : index
    %c0_18 = arith.constant 0 : index
    %c0_19 = arith.constant 0 : index
    %20 = vector.load %arg4[%c1_17, %c0_18, %c0_19] : memref<9x64x64xbf16, #tpu.memory_space<vmem>>, vector<1x64x64xbf16>
    %21 = vector.shape_cast %20 : vector<1x64x64xbf16> to vector<64x64xbf16>
    %cst_20 = arith.constant dense<0.000000e+00> : vector<32x64xf32>
    %22 = tpu.matmul %19, %21, %cst_20 {dimension_numbers = #tpu.dot_dimension_numbers<[1], [0], [0], [1], [0, 0, 1, 1], [], []>} : vector<32x64xbf16>, vector<64x64xbf16>, vector<32x64xf32> -> vector<32x64xf32>
    %23 = arith.addf %15, %22 : vector<32x64xf32>
    %c2 = arith.constant 2 : index
    %c0_21 = arith.constant 0 : index
    %c0_22 = arith.constant 0 : index
    %24 = vector.load %arg3[%c2, %c0_21, %c0_22] : memref<9x32x128xbf16, #tpu.memory_space<vmem>>, vector<1x32x128xbf16>
    %25 = vector.shape_cast %24 : vector<1x32x128xbf16> to vector<32x128xbf16>
    %cst_23 = arith.constant dense<0.000000e+00> : vector<32x64xf32>
    %26 = tpu.matmul %25, %6, %cst_23 {dimension_numbers = #tpu.dot_dimension_numbers<[1], [0], [0], [1], [0, 0, 1, 1], [], []>} : vector<32x128xbf16>, vector<128x64xbf16>, vector<32x64xf32> -> vector<32x64xf32>
    %27 = arith.truncf %26 : vector<32x64xf32> to vector<32x64xbf16>
    %c2_24 = arith.constant 2 : index
    %c0_25 = arith.constant 0 : index
    %c0_26 = arith.constant 0 : index
    %28 = vector.load %arg4[%c2_24, %c0_25, %c0_26] : memref<9x64x64xbf16, #tpu.memory_space<vmem>>, vector<1x64x64xbf16>
    %29 = vector.shape_cast %28 : vector<1x64x64xbf16> to vector<64x64xbf16>
    %cst_27 = arith.constant dense<0.000000e+00> : vector<32x64xf32>
    %30 = tpu.matmul %27, %29, %cst_27 {dimension_numbers = #tpu.dot_dimension_numbers<[1], [0], [0], [1], [0, 0, 1, 1], [], []>} : vector<32x64xbf16>, vector<64x64xbf16>, vector<32x64xf32> -> vector<32x64xf32>
    %31 = arith.addf %23, %30 : vector<32x64xf32>
    %c3 = arith.constant 3 : index
    %c0_28 = arith.constant 0 : index
    %c0_29 = arith.constant 0 : index
    %32 = vector.load %arg3[%c3, %c0_28, %c0_29] : memref<9x32x128xbf16, #tpu.memory_space<vmem>>, vector<1x32x128xbf16>
    %33 = vector.shape_cast %32 : vector<1x32x128xbf16> to vector<32x128xbf16>
    %cst_30 = arith.constant dense<0.000000e+00> : vector<32x64xf32>
    %34 = tpu.matmul %33, %6, %cst_30 {dimension_numbers = #tpu.dot_dimension_numbers<[1], [0], [0], [1], [0, 0, 1, 1], [], []>} : vector<32x128xbf16>, vector<128x64xbf16>, vector<32x64xf32> -> vector<32x64xf32>
    %35 = arith.truncf %34 : vector<32x64xf32> to vector<32x64xbf16>
    %c3_31 = arith.constant 3 : index
    %c0_32 = arith.constant 0 : index
    %c0_33 = arith.constant 0 : index
    %36 = vector.load %arg4[%c3_31, %c0_32, %c0_33] : memref<9x64x64xbf16, #tpu.memory_space<vmem>>, vector<1x64x64xbf16>
    %37 = vector.shape_cast %36 : vector<1x64x64xbf16> to vector<64x64xbf16>
    %cst_34 = arith.constant dense<0.000000e+00> : vector<32x64xf32>
    %38 = tpu.matmul %35, %37, %cst_34 {dimension_numbers = #tpu.dot_dimension_numbers<[1], [0], [0], [1], [0, 0, 1, 1], [], []>} : vector<32x64xbf16>, vector<64x64xbf16>, vector<32x64xf32> -> vector<32x64xf32>
    %39 = arith.addf %31, %38 : vector<32x64xf32>
    %c4 = arith.constant 4 : index
    %c0_35 = arith.constant 0 : index
    %c0_36 = arith.constant 0 : index
    %40 = vector.load %arg3[%c4, %c0_35, %c0_36] : memref<9x32x128xbf16, #tpu.memory_space<vmem>>, vector<1x32x128xbf16>
    %41 = vector.shape_cast %40 : vector<1x32x128xbf16> to vector<32x128xbf16>
    %cst_37 = arith.constant dense<0.000000e+00> : vector<32x64xf32>
    %42 = tpu.matmul %41, %6, %cst_37 {dimension_numbers = #tpu.dot_dimension_numbers<[1], [0], [0], [1], [0, 0, 1, 1], [], []>} : vector<32x128xbf16>, vector<128x64xbf16>, vector<32x64xf32> -> vector<32x64xf32>
    %43 = arith.truncf %42 : vector<32x64xf32> to vector<32x64xbf16>
    %c4_38 = arith.constant 4 : index
    %c0_39 = arith.constant 0 : index
    %c0_40 = arith.constant 0 : index
    %44 = vector.load %arg4[%c4_38, %c0_39, %c0_40] : memref<9x64x64xbf16, #tpu.memory_space<vmem>>, vector<1x64x64xbf16>
    %45 = vector.shape_cast %44 : vector<1x64x64xbf16> to vector<64x64xbf16>
    %cst_41 = arith.constant dense<0.000000e+00> : vector<32x64xf32>
    %46 = tpu.matmul %43, %45, %cst_41 {dimension_numbers = #tpu.dot_dimension_numbers<[1], [0], [0], [1], [0, 0, 1, 1], [], []>} : vector<32x64xbf16>, vector<64x64xbf16>, vector<32x64xf32> -> vector<32x64xf32>
    %47 = arith.addf %39, %46 : vector<32x64xf32>
    %c5 = arith.constant 5 : index
    %c0_42 = arith.constant 0 : index
    %c0_43 = arith.constant 0 : index
    %48 = vector.load %arg3[%c5, %c0_42, %c0_43] : memref<9x32x128xbf16, #tpu.memory_space<vmem>>, vector<1x32x128xbf16>
    %49 = vector.shape_cast %48 : vector<1x32x128xbf16> to vector<32x128xbf16>
    %cst_44 = arith.constant dense<0.000000e+00> : vector<32x64xf32>
    %50 = tpu.matmul %49, %6, %cst_44 {dimension_numbers = #tpu.dot_dimension_numbers<[1], [0], [0], [1], [0, 0, 1, 1], [], []>} : vector<32x128xbf16>, vector<128x64xbf16>, vector<32x64xf32> -> vector<32x64xf32>
    %51 = arith.truncf %50 : vector<32x64xf32> to vector<32x64xbf16>
    %c5_45 = arith.constant 5 : index
    %c0_46 = arith.constant 0 : index
    %c0_47 = arith.constant 0 : index
    %52 = vector.load %arg4[%c5_45, %c0_46, %c0_47] : memref<9x64x64xbf16, #tpu.memory_space<vmem>>, vector<1x64x64xbf16>
    %53 = vector.shape_cast %52 : vector<1x64x64xbf16> to vector<64x64xbf16>
    %cst_48 = arith.constant dense<0.000000e+00> : vector<32x64xf32>
    %54 = tpu.matmul %51, %53, %cst_48 {dimension_numbers = #tpu.dot_dimension_numbers<[1], [0], [0], [1], [0, 0, 1, 1], [], []>} : vector<32x64xbf16>, vector<64x64xbf16>, vector<32x64xf32> -> vector<32x64xf32>
    %55 = arith.addf %47, %54 : vector<32x64xf32>
    %c6 = arith.constant 6 : index
    %c0_49 = arith.constant 0 : index
    %c0_50 = arith.constant 0 : index
    %56 = vector.load %arg3[%c6, %c0_49, %c0_50] : memref<9x32x128xbf16, #tpu.memory_space<vmem>>, vector<1x32x128xbf16>
    %57 = vector.shape_cast %56 : vector<1x32x128xbf16> to vector<32x128xbf16>
    %cst_51 = arith.constant dense<0.000000e+00> : vector<32x64xf32>
    %58 = tpu.matmul %57, %6, %cst_51 {dimension_numbers = #tpu.dot_dimension_numbers<[1], [0], [0], [1], [0, 0, 1, 1], [], []>} : vector<32x128xbf16>, vector<128x64xbf16>, vector<32x64xf32> -> vector<32x64xf32>
    %59 = arith.truncf %58 : vector<32x64xf32> to vector<32x64xbf16>
    %c6_52 = arith.constant 6 : index
    %c0_53 = arith.constant 0 : index
    %c0_54 = arith.constant 0 : index
    %60 = vector.load %arg4[%c6_52, %c0_53, %c0_54] : memref<9x64x64xbf16, #tpu.memory_space<vmem>>, vector<1x64x64xbf16>
    %61 = vector.shape_cast %60 : vector<1x64x64xbf16> to vector<64x64xbf16>
    %cst_55 = arith.constant dense<0.000000e+00> : vector<32x64xf32>
    %62 = tpu.matmul %59, %61, %cst_55 {dimension_numbers = #tpu.dot_dimension_numbers<[1], [0], [0], [1], [0, 0, 1, 1], [], []>} : vector<32x64xbf16>, vector<64x64xbf16>, vector<32x64xf32> -> vector<32x64xf32>
    %63 = arith.addf %55, %62 : vector<32x64xf32>
    %c7 = arith.constant 7 : index
    %c0_56 = arith.constant 0 : index
    %c0_57 = arith.constant 0 : index
    %64 = vector.load %arg3[%c7, %c0_56, %c0_57] : memref<9x32x128xbf16, #tpu.memory_space<vmem>>, vector<1x32x128xbf16>
    %65 = vector.shape_cast %64 : vector<1x32x128xbf16> to vector<32x128xbf16>
    %cst_58 = arith.constant dense<0.000000e+00> : vector<32x64xf32>
    %66 = tpu.matmul %65, %6, %cst_58 {dimension_numbers = #tpu.dot_dimension_numbers<[1], [0], [0], [1], [0, 0, 1, 1], [], []>} : vector<32x128xbf16>, vector<128x64xbf16>, vector<32x64xf32> -> vector<32x64xf32>
    %67 = arith.truncf %66 : vector<32x64xf32> to vector<32x64xbf16>
    %c7_59 = arith.constant 7 : index
    %c0_60 = arith.constant 0 : index
    %c0_61 = arith.constant 0 : index
    %68 = vector.load %arg4[%c7_59, %c0_60, %c0_61] : memref<9x64x64xbf16, #tpu.memory_space<vmem>>, vector<1x64x64xbf16>
    %69 = vector.shape_cast %68 : vector<1x64x64xbf16> to vector<64x64xbf16>
    %cst_62 = arith.constant dense<0.000000e+00> : vector<32x64xf32>
    %70 = tpu.matmul %67, %69, %cst_62 {dimension_numbers = #tpu.dot_dimension_numbers<[1], [0], [0], [1], [0, 0, 1, 1], [], []>} : vector<32x64xbf16>, vector<64x64xbf16>, vector<32x64xf32> -> vector<32x64xf32>
    %71 = arith.addf %63, %70 : vector<32x64xf32>
    %c8 = arith.constant 8 : index
    %c0_63 = arith.constant 0 : index
    %c0_64 = arith.constant 0 : index
    %72 = vector.load %arg3[%c8, %c0_63, %c0_64] : memref<9x32x128xbf16, #tpu.memory_space<vmem>>, vector<1x32x128xbf16>
    %73 = vector.shape_cast %72 : vector<1x32x128xbf16> to vector<32x128xbf16>
    %cst_65 = arith.constant dense<0.000000e+00> : vector<32x64xf32>
    %74 = tpu.matmul %73, %6, %cst_65 {dimension_numbers = #tpu.dot_dimension_numbers<[1], [0], [0], [1], [0, 0, 1, 1], [], []>} : vector<32x128xbf16>, vector<128x64xbf16>, vector<32x64xf32> -> vector<32x64xf32>
    %75 = arith.truncf %74 : vector<32x64xf32> to vector<32x64xbf16>
    %c8_66 = arith.constant 8 : index
    %c0_67 = arith.constant 0 : index
    %c0_68 = arith.constant 0 : index
    %76 = vector.load %arg4[%c8_66, %c0_67, %c0_68] : memref<9x64x64xbf16, #tpu.memory_space<vmem>>, vector<1x64x64xbf16>
    %77 = vector.shape_cast %76 : vector<1x64x64xbf16> to vector<64x64xbf16>
    %cst_69 = arith.constant dense<0.000000e+00> : vector<32x64xf32>
    %78 = tpu.matmul %75, %77, %cst_69 {dimension_numbers = #tpu.dot_dimension_numbers<[1], [0], [0], [1], [0, 0, 1, 1], [], []>} : vector<32x64xbf16>, vector<64x64xbf16>, vector<32x64xf32> -> vector<32x64xf32>
    %79 = arith.addf %71, %78 : vector<32x64xf32>
    %c0_70 = arith.constant 0 : index
    %c0_71 = arith.constant 0 : index
    %80 = vector.load %arg5[%c0_70, %c0_71] : memref<1x64xf32, #tpu.memory_space<vmem>>, vector<1x64xf32>
    %81 = vector.broadcast %80 : vector<1x64xf32> to vector<32x64xf32>
    %82 = arith.addf %79, %81 : vector<32x64xf32>
    %83 = arith.truncf %82 : vector<32x64xf32> to vector<32x64xbf16>
    %cst_72 = arith.constant 0.000000e+00 : f32
    %84 = vector.broadcast %cst_72 : f32 to vector<8x64xf32>
    %c0_73 = arith.constant 0 : index
    %c0_74 = arith.constant 0 : index
    %c0_75 = arith.constant 0 : index
    %85 = vector.load %arg6[%c0_73, %c0_74, %c0_75] : memref<9x8x32xbf16, #tpu.memory_space<vmem>>, vector<1x8x32xbf16>
    %86 = vector.shape_cast %85 : vector<1x8x32xbf16> to vector<8x32xbf16>
    %cst_76 = arith.constant dense<0.000000e+00> : vector<8x64xf32>
    %87 = tpu.matmul %86, %83, %cst_76 {dimension_numbers = #tpu.dot_dimension_numbers<[1], [0], [0], [1], [0, 0, 1, 1], [], []>} : vector<8x32xbf16>, vector<32x64xbf16>, vector<8x64xf32> -> vector<8x64xf32>
    %88 = arith.truncf %87 : vector<8x64xf32> to vector<8x64xbf16>
    %c0_77 = arith.constant 0 : index
    %c0_78 = arith.constant 0 : index
    %c0_79 = arith.constant 0 : index
    %89 = vector.load %arg7[%c0_77, %c0_78, %c0_79] : memref<9x64x64xbf16, #tpu.memory_space<vmem>>, vector<1x64x64xbf16>
    %90 = vector.shape_cast %89 : vector<1x64x64xbf16> to vector<64x64xbf16>
    %cst_80 = arith.constant dense<0.000000e+00> : vector<8x64xf32>
    %91 = tpu.matmul %88, %90, %cst_80 {dimension_numbers = #tpu.dot_dimension_numbers<[1], [0], [0], [1], [0, 0, 1, 1], [], []>} : vector<8x64xbf16>, vector<64x64xbf16>, vector<8x64xf32> -> vector<8x64xf32>
    %92 = arith.addf %84, %91 : vector<8x64xf32>
    %c1_81 = arith.constant 1 : index
    %c0_82 = arith.constant 0 : index
    %c0_83 = arith.constant 0 : index
    %93 = vector.load %arg6[%c1_81, %c0_82, %c0_83] : memref<9x8x32xbf16, #tpu.memory_space<vmem>>, vector<1x8x32xbf16>
    %94 = vector.shape_cast %93 : vector<1x8x32xbf16> to vector<8x32xbf16>
    %cst_84 = arith.constant dense<0.000000e+00> : vector<8x64xf32>
    %95 = tpu.matmul %94, %83, %cst_84 {dimension_numbers = #tpu.dot_dimension_numbers<[1], [0], [0], [1], [0, 0, 1, 1], [], []>} : vector<8x32xbf16>, vector<32x64xbf16>, vector<8x64xf32> -> vector<8x64xf32>
    %96 = arith.truncf %95 : vector<8x64xf32> to vector<8x64xbf16>
    %c1_85 = arith.constant 1 : index
    %c0_86 = arith.constant 0 : index
    %c0_87 = arith.constant 0 : index
    %97 = vector.load %arg7[%c1_85, %c0_86, %c0_87] : memref<9x64x64xbf16, #tpu.memory_space<vmem>>, vector<1x64x64xbf16>
    %98 = vector.shape_cast %97 : vector<1x64x64xbf16> to vector<64x64xbf16>
    %cst_88 = arith.constant dense<0.000000e+00> : vector<8x64xf32>
    %99 = tpu.matmul %96, %98, %cst_88 {dimension_numbers = #tpu.dot_dimension_numbers<[1], [0], [0], [1], [0, 0, 1, 1], [], []>} : vector<8x64xbf16>, vector<64x64xbf16>, vector<8x64xf32> -> vector<8x64xf32>
    %100 = arith.addf %92, %99 : vector<8x64xf32>
    %c2_89 = arith.constant 2 : index
    %c0_90 = arith.constant 0 : index
    %c0_91 = arith.constant 0 : index
    %101 = vector.load %arg6[%c2_89, %c0_90, %c0_91] : memref<9x8x32xbf16, #tpu.memory_space<vmem>>, vector<1x8x32xbf16>
    %102 = vector.shape_cast %101 : vector<1x8x32xbf16> to vector<8x32xbf16>
    %cst_92 = arith.constant dense<0.000000e+00> : vector<8x64xf32>
    %103 = tpu.matmul %102, %83, %cst_92 {dimension_numbers = #tpu.dot_dimension_numbers<[1], [0], [0], [1], [0, 0, 1, 1], [], []>} : vector<8x32xbf16>, vector<32x64xbf16>, vector<8x64xf32> -> vector<8x64xf32>
    %104 = arith.truncf %103 : vector<8x64xf32> to vector<8x64xbf16>
    %c2_93 = arith.constant 2 : index
    %c0_94 = arith.constant 0 : index
    %c0_95 = arith.constant 0 : index
    %105 = vector.load %arg7[%c2_93, %c0_94, %c0_95] : memref<9x64x64xbf16, #tpu.memory_space<vmem>>, vector<1x64x64xbf16>
    %106 = vector.shape_cast %105 : vector<1x64x64xbf16> to vector<64x64xbf16>
    %cst_96 = arith.constant dense<0.000000e+00> : vector<8x64xf32>
    %107 = tpu.matmul %104, %106, %cst_96 {dimension_numbers = #tpu.dot_dimension_numbers<[1], [0], [0], [1], [0, 0, 1, 1], [], []>} : vector<8x64xbf16>, vector<64x64xbf16>, vector<8x64xf32> -> vector<8x64xf32>
    %108 = arith.addf %100, %107 : vector<8x64xf32>
    %c3_97 = arith.constant 3 : index
    %c0_98 = arith.constant 0 : index
    %c0_99 = arith.constant 0 : index
    %109 = vector.load %arg6[%c3_97, %c0_98, %c0_99] : memref<9x8x32xbf16, #tpu.memory_space<vmem>>, vector<1x8x32xbf16>
    %110 = vector.shape_cast %109 : vector<1x8x32xbf16> to vector<8x32xbf16>
    %cst_100 = arith.constant dense<0.000000e+00> : vector<8x64xf32>
    %111 = tpu.matmul %110, %83, %cst_100 {dimension_numbers = #tpu.dot_dimension_numbers<[1], [0], [0], [1], [0, 0, 1, 1], [], []>} : vector<8x32xbf16>, vector<32x64xbf16>, vector<8x64xf32> -> vector<8x64xf32>
    %112 = arith.truncf %111 : vector<8x64xf32> to vector<8x64xbf16>
    %c3_101 = arith.constant 3 : index
    %c0_102 = arith.constant 0 : index
    %c0_103 = arith.constant 0 : index
    %113 = vector.load %arg7[%c3_101, %c0_102, %c0_103] : memref<9x64x64xbf16, #tpu.memory_space<vmem>>, vector<1x64x64xbf16>
    %114 = vector.shape_cast %113 : vector<1x64x64xbf16> to vector<64x64xbf16>
    %cst_104 = arith.constant dense<0.000000e+00> : vector<8x64xf32>
    %115 = tpu.matmul %112, %114, %cst_104 {dimension_numbers = #tpu.dot_dimension_numbers<[1], [0], [0], [1], [0, 0, 1, 1], [], []>} : vector<8x64xbf16>, vector<64x64xbf16>, vector<8x64xf32> -> vector<8x64xf32>
    %116 = arith.addf %108, %115 : vector<8x64xf32>
    %c4_105 = arith.constant 4 : index
    %c0_106 = arith.constant 0 : index
    %c0_107 = arith.constant 0 : index
    %117 = vector.load %arg6[%c4_105, %c0_106, %c0_107] : memref<9x8x32xbf16, #tpu.memory_space<vmem>>, vector<1x8x32xbf16>
    %118 = vector.shape_cast %117 : vector<1x8x32xbf16> to vector<8x32xbf16>
    %cst_108 = arith.constant dense<0.000000e+00> : vector<8x64xf32>
    %119 = tpu.matmul %118, %83, %cst_108 {dimension_numbers = #tpu.dot_dimension_numbers<[1], [0], [0], [1], [0, 0, 1, 1], [], []>} : vector<8x32xbf16>, vector<32x64xbf16>, vector<8x64xf32> -> vector<8x64xf32>
    %120 = arith.truncf %119 : vector<8x64xf32> to vector<8x64xbf16>
    %c4_109 = arith.constant 4 : index
    %c0_110 = arith.constant 0 : index
    %c0_111 = arith.constant 0 : index
    %121 = vector.load %arg7[%c4_109, %c0_110, %c0_111] : memref<9x64x64xbf16, #tpu.memory_space<vmem>>, vector<1x64x64xbf16>
    %122 = vector.shape_cast %121 : vector<1x64x64xbf16> to vector<64x64xbf16>
    %cst_112 = arith.constant dense<0.000000e+00> : vector<8x64xf32>
    %123 = tpu.matmul %120, %122, %cst_112 {dimension_numbers = #tpu.dot_dimension_numbers<[1], [0], [0], [1], [0, 0, 1, 1], [], []>} : vector<8x64xbf16>, vector<64x64xbf16>, vector<8x64xf32> -> vector<8x64xf32>
    %124 = arith.addf %116, %123 : vector<8x64xf32>
    %c5_113 = arith.constant 5 : index
    %c0_114 = arith.constant 0 : index
    %c0_115 = arith.constant 0 : index
    %125 = vector.load %arg6[%c5_113, %c0_114, %c0_115] : memref<9x8x32xbf16, #tpu.memory_space<vmem>>, vector<1x8x32xbf16>
    %126 = vector.shape_cast %125 : vector<1x8x32xbf16> to vector<8x32xbf16>
    %cst_116 = arith.constant dense<0.000000e+00> : vector<8x64xf32>
    %127 = tpu.matmul %126, %83, %cst_116 {dimension_numbers = #tpu.dot_dimension_numbers<[1], [0], [0], [1], [0, 0, 1, 1], [], []>} : vector<8x32xbf16>, vector<32x64xbf16>, vector<8x64xf32> -> vector<8x64xf32>
    %128 = arith.truncf %127 : vector<8x64xf32> to vector<8x64xbf16>
    %c5_117 = arith.constant 5 : index
    %c0_118 = arith.constant 0 : index
    %c0_119 = arith.constant 0 : index
    %129 = vector.load %arg7[%c5_117, %c0_118, %c0_119] : memref<9x64x64xbf16, #tpu.memory_space<vmem>>, vector<1x64x64xbf16>
    %130 = vector.shape_cast %129 : vector<1x64x64xbf16> to vector<64x64xbf16>
    %cst_120 = arith.constant dense<0.000000e+00> : vector<8x64xf32>
    %131 = tpu.matmul %128, %130, %cst_120 {dimension_numbers = #tpu.dot_dimension_numbers<[1], [0], [0], [1], [0, 0, 1, 1], [], []>} : vector<8x64xbf16>, vector<64x64xbf16>, vector<8x64xf32> -> vector<8x64xf32>
    %132 = arith.addf %124, %131 : vector<8x64xf32>
    %c6_121 = arith.constant 6 : index
    %c0_122 = arith.constant 0 : index
    %c0_123 = arith.constant 0 : index
    %133 = vector.load %arg6[%c6_121, %c0_122, %c0_123] : memref<9x8x32xbf16, #tpu.memory_space<vmem>>, vector<1x8x32xbf16>
    %134 = vector.shape_cast %133 : vector<1x8x32xbf16> to vector<8x32xbf16>
    %cst_124 = arith.constant dense<0.000000e+00> : vector<8x64xf32>
    %135 = tpu.matmul %134, %83, %cst_124 {dimension_numbers = #tpu.dot_dimension_numbers<[1], [0], [0], [1], [0, 0, 1, 1], [], []>} : vector<8x32xbf16>, vector<32x64xbf16>, vector<8x64xf32> -> vector<8x64xf32>
    %136 = arith.truncf %135 : vector<8x64xf32> to vector<8x64xbf16>
    %c6_125 = arith.constant 6 : index
    %c0_126 = arith.constant 0 : index
    %c0_127 = arith.constant 0 : index
    %137 = vector.load %arg7[%c6_125, %c0_126, %c0_127] : memref<9x64x64xbf16, #tpu.memory_space<vmem>>, vector<1x64x64xbf16>
    %138 = vector.shape_cast %137 : vector<1x64x64xbf16> to vector<64x64xbf16>
    %cst_128 = arith.constant dense<0.000000e+00> : vector<8x64xf32>
    %139 = tpu.matmul %136, %138, %cst_128 {dimension_numbers = #tpu.dot_dimension_numbers<[1], [0], [0], [1], [0, 0, 1, 1], [], []>} : vector<8x64xbf16>, vector<64x64xbf16>, vector<8x64xf32> -> vector<8x64xf32>
    %140 = arith.addf %132, %139 : vector<8x64xf32>
    %c7_129 = arith.constant 7 : index
    %c0_130 = arith.constant 0 : index
    %c0_131 = arith.constant 0 : index
    %141 = vector.load %arg6[%c7_129, %c0_130, %c0_131] : memref<9x8x32xbf16, #tpu.memory_space<vmem>>, vector<1x8x32xbf16>
    %142 = vector.shape_cast %141 : vector<1x8x32xbf16> to vector<8x32xbf16>
    %cst_132 = arith.constant dense<0.000000e+00> : vector<8x64xf32>
    %143 = tpu.matmul %142, %83, %cst_132 {dimension_numbers = #tpu.dot_dimension_numbers<[1], [0], [0], [1], [0, 0, 1, 1], [], []>} : vector<8x32xbf16>, vector<32x64xbf16>, vector<8x64xf32> -> vector<8x64xf32>
    %144 = arith.truncf %143 : vector<8x64xf32> to vector<8x64xbf16>
    %c7_133 = arith.constant 7 : index
    %c0_134 = arith.constant 0 : index
    %c0_135 = arith.constant 0 : index
    %145 = vector.load %arg7[%c7_133, %c0_134, %c0_135] : memref<9x64x64xbf16, #tpu.memory_space<vmem>>, vector<1x64x64xbf16>
    %146 = vector.shape_cast %145 : vector<1x64x64xbf16> to vector<64x64xbf16>
    %cst_136 = arith.constant dense<0.000000e+00> : vector<8x64xf32>
    %147 = tpu.matmul %144, %146, %cst_136 {dimension_numbers = #tpu.dot_dimension_numbers<[1], [0], [0], [1], [0, 0, 1, 1], [], []>} : vector<8x64xbf16>, vector<64x64xbf16>, vector<8x64xf32> -> vector<8x64xf32>
    %148 = arith.addf %140, %147 : vector<8x64xf32>
    %c8_137 = arith.constant 8 : index
    %c0_138 = arith.constant 0 : index
    %c0_139 = arith.constant 0 : index
    %149 = vector.load %arg6[%c8_137, %c0_138, %c0_139] : memref<9x8x32xbf16, #tpu.memory_space<vmem>>, vector<1x8x32xbf16>
    %150 = vector.shape_cast %149 : vector<1x8x32xbf16> to vector<8x32xbf16>
    %cst_140 = arith.constant dense<0.000000e+00> : vector<8x64xf32>
    %151 = tpu.matmul %150, %83, %cst_140 {dimension_numbers = #tpu.dot_dimension_numbers<[1], [0], [0], [1], [0, 0, 1, 1], [], []>} : vector<8x32xbf16>, vector<32x64xbf16>, vector<8x64xf32> -> vector<8x64xf32>
    %152 = arith.truncf %151 : vector<8x64xf32> to vector<8x64xbf16>
    %c8_141 = arith.constant 8 : index
    %c0_142 = arith.constant 0 : index
    %c0_143 = arith.constant 0 : index
    %153 = vector.load %arg7[%c8_141, %c0_142, %c0_143] : memref<9x64x64xbf16, #tpu.memory_space<vmem>>, vector<1x64x64xbf16>
    %154 = vector.shape_cast %153 : vector<1x64x64xbf16> to vector<64x64xbf16>
    %cst_144 = arith.constant dense<0.000000e+00> : vector<8x64xf32>
    %155 = tpu.matmul %152, %154, %cst_144 {dimension_numbers = #tpu.dot_dimension_numbers<[1], [0], [0], [1], [0, 0, 1, 1], [], []>} : vector<8x64xbf16>, vector<64x64xbf16>, vector<8x64xf32> -> vector<8x64xf32>
    %156 = arith.addf %148, %155 : vector<8x64xf32>
    %c0_145 = arith.constant 0 : index
    %c0_146 = arith.constant 0 : index
    %157 = vector.load %arg8[%c0_145, %c0_146] : memref<1x64xf32, #tpu.memory_space<vmem>>, vector<1x64xf32>
    %158 = vector.broadcast %157 : vector<1x64xf32> to vector<8x64xf32>
    %159 = arith.addf %156, %158 : vector<8x64xf32>
    %160 = arith.truncf %159 : vector<8x64xf32> to vector<8x64xbf16>
    %c0_147 = arith.constant 0 : index
    %c0_148 = arith.constant 0 : index
    %161 = vector.load %arg9[%c0_147, %c0_148] : memref<8x64xbf16, #tpu.memory_space<vmem>>, vector<8x64xbf16>
    tpu.vector_store %arg9[%c0_147, %c0_148], %160 {strides = array<i32>} : memref<8x64xbf16, #tpu.memory_space<vmem>>, vector<8x64xbf16>,
    return
  }
}

module attributes {stable_mosaic.version = 11 : i64} {
  func.func @_decoder_kernel(%arg0: i32, %arg1: memref<8x64xbf16, #tpu.memory_space<vmem>>, %arg2: memref<4x32x8xbf16, #tpu.memory_space<vmem>>, %arg3: memref<4x128x32xbf16, #tpu.memory_space<vmem>>, %arg4: memref<4x512x128xbf16, #tpu.memory_space<vmem>>, %arg5: memref<1x4x64x64xbf16, #tpu.memory_space<vmem>>, %arg6: memref<1x1x64xf32, #tpu.memory_space<vmem>>, %arg7: memref<1x4x64x64xbf16, #tpu.memory_space<vmem>>, %arg8: memref<1x1x64xf32, #tpu.memory_space<vmem>>, %arg9: memref<1x4x64x3xbf16, #tpu.memory_space<vmem>>, %arg10: memref<1x1x3xf32, #tpu.memory_space<vmem>>, %arg11: memref<1x512x3xf32, #tpu.memory_space<vmem>>) attributes {dimension_semantics = [#tpu.dimension_semantics<parallel>], iteration_bounds = array<i64: 2>, scalar_prefetch = 0 : i64, scratch_operands = 0 : i64, tpu.core_type = #tpu.core_type<tc>, window_params = [{pipeline_mode = #tpu.pipeline_mode<synchronous>, transform_indices = @transform_0, window_bounds = array<i64: 8, 64>}, {pipeline_mode = #tpu.pipeline_mode<synchronous>, transform_indices = @transform_1, window_bounds = array<i64: 4, 32, 8>}, {pipeline_mode = #tpu.pipeline_mode<synchronous>, transform_indices = @transform_2, window_bounds = array<i64: 4, 128, 32>}, {pipeline_mode = #tpu.pipeline_mode<synchronous>, transform_indices = @transform_3, window_bounds = array<i64: 4, 512, 128>}, {transform_indices = @transform_4, window_bounds = array<i64: 1, 4, 64, 64>}, {transform_indices = @transform_5, window_bounds = array<i64: 1, 1, 64>}, {transform_indices = @transform_6, window_bounds = array<i64: 1, 4, 64, 64>}, {transform_indices = @transform_7, window_bounds = array<i64: 1, 1, 64>}, {transform_indices = @transform_8, window_bounds = array<i64: 1, 4, 64, 3>}, {transform_indices = @transform_9, window_bounds = array<i64: 1, 1, 3>}, {transform_indices = @transform_10, window_bounds = array<i64: 1, 512, 3>}]} {
    %c0 = arith.constant 0 : index
    %c0_0 = arith.constant 0 : index
    %0 = vector.load %arg1[%c0, %c0_0] : memref<8x64xbf16, #tpu.memory_space<vmem>>, vector<8x64xbf16>
    %cst = arith.constant 0.000000e+00 : f32
    %1 = vector.broadcast %cst : f32 to vector<32x64xf32>
    %c0_1 = arith.constant 0 : index
    %c0_2 = arith.constant 0 : index
    %c0_3 = arith.constant 0 : index
    %2 = vector.load %arg2[%c0_1, %c0_2, %c0_3] : memref<4x32x8xbf16, #tpu.memory_space<vmem>>, vector<1x32x8xbf16>
    %3 = vector.shape_cast %2 : vector<1x32x8xbf16> to vector<32x8xbf16>
    %cst_4 = arith.constant dense<0.000000e+00> : vector<32x64xf32>
    %4 = tpu.matmul %3, %0, %cst_4 {dimension_numbers = #tpu.dot_dimension_numbers<[1], [0], [0], [1], [0, 0, 1, 1], [], []>} : vector<32x8xbf16>, vector<8x64xbf16>, vector<32x64xf32> -> vector<32x64xf32>
    %5 = arith.truncf %4 : vector<32x64xf32> to vector<32x64xbf16>
    %c0_5 = arith.constant 0 : index
    %c0_6 = arith.constant 0 : index
    %c0_7 = arith.constant 0 : index
    %c0_8 = arith.constant 0 : index
    %6 = vector.load %arg5[%c0_5, %c0_6, %c0_7, %c0_8] : memref<1x4x64x64xbf16, #tpu.memory_space<vmem>>, vector<1x1x64x64xbf16>
    %7 = vector.shape_cast %6 : vector<1x1x64x64xbf16> to vector<64x64xbf16>
    %cst_9 = arith.constant dense<0.000000e+00> : vector<32x64xf32>
    %8 = tpu.matmul %5, %7, %cst_9 {dimension_numbers = #tpu.dot_dimension_numbers<[1], [0], [0], [1], [0, 0, 1, 1], [], []>} : vector<32x64xbf16>, vector<64x64xbf16>, vector<32x64xf32> -> vector<32x64xf32>
    %9 = arith.addf %1, %8 : vector<32x64xf32>
    %c1 = arith.constant 1 : index
    %c0_10 = arith.constant 0 : index
    %c0_11 = arith.constant 0 : index
    %10 = vector.load %arg2[%c1, %c0_10, %c0_11] : memref<4x32x8xbf16, #tpu.memory_space<vmem>>, vector<1x32x8xbf16>
    %11 = vector.shape_cast %10 : vector<1x32x8xbf16> to vector<32x8xbf16>
    %cst_12 = arith.constant dense<0.000000e+00> : vector<32x64xf32>
    %12 = tpu.matmul %11, %0, %cst_12 {dimension_numbers = #tpu.dot_dimension_numbers<[1], [0], [0], [1], [0, 0, 1, 1], [], []>} : vector<32x8xbf16>, vector<8x64xbf16>, vector<32x64xf32> -> vector<32x64xf32>
    %13 = arith.truncf %12 : vector<32x64xf32> to vector<32x64xbf16>
    %c0_13 = arith.constant 0 : index
    %c1_14 = arith.constant 1 : index
    %c0_15 = arith.constant 0 : index
    %c0_16 = arith.constant 0 : index
    %14 = vector.load %arg5[%c0_13, %c1_14, %c0_15, %c0_16] : memref<1x4x64x64xbf16, #tpu.memory_space<vmem>>, vector<1x1x64x64xbf16>
    %15 = vector.shape_cast %14 : vector<1x1x64x64xbf16> to vector<64x64xbf16>
    %cst_17 = arith.constant dense<0.000000e+00> : vector<32x64xf32>
    %16 = tpu.matmul %13, %15, %cst_17 {dimension_numbers = #tpu.dot_dimension_numbers<[1], [0], [0], [1], [0, 0, 1, 1], [], []>} : vector<32x64xbf16>, vector<64x64xbf16>, vector<32x64xf32> -> vector<32x64xf32>
    %17 = arith.addf %9, %16 : vector<32x64xf32>
    %c2 = arith.constant 2 : index
    %c0_18 = arith.constant 0 : index
    %c0_19 = arith.constant 0 : index
    %18 = vector.load %arg2[%c2, %c0_18, %c0_19] : memref<4x32x8xbf16, #tpu.memory_space<vmem>>, vector<1x32x8xbf16>
    %19 = vector.shape_cast %18 : vector<1x32x8xbf16> to vector<32x8xbf16>
    %cst_20 = arith.constant dense<0.000000e+00> : vector<32x64xf32>
    %20 = tpu.matmul %19, %0, %cst_20 {dimension_numbers = #tpu.dot_dimension_numbers<[1], [0], [0], [1], [0, 0, 1, 1], [], []>} : vector<32x8xbf16>, vector<8x64xbf16>, vector<32x64xf32> -> vector<32x64xf32>
    %21 = arith.truncf %20 : vector<32x64xf32> to vector<32x64xbf16>
    %c0_21 = arith.constant 0 : index
    %c2_22 = arith.constant 2 : index
    %c0_23 = arith.constant 0 : index
    %c0_24 = arith.constant 0 : index
    %22 = vector.load %arg5[%c0_21, %c2_22, %c0_23, %c0_24] : memref<1x4x64x64xbf16, #tpu.memory_space<vmem>>, vector<1x1x64x64xbf16>
    %23 = vector.shape_cast %22 : vector<1x1x64x64xbf16> to vector<64x64xbf16>
    %cst_25 = arith.constant dense<0.000000e+00> : vector<32x64xf32>
    %24 = tpu.matmul %21, %23, %cst_25 {dimension_numbers = #tpu.dot_dimension_numbers<[1], [0], [0], [1], [0, 0, 1, 1], [], []>} : vector<32x64xbf16>, vector<64x64xbf16>, vector<32x64xf32> -> vector<32x64xf32>
    %25 = arith.addf %17, %24 : vector<32x64xf32>
    %c3 = arith.constant 3 : index
    %c0_26 = arith.constant 0 : index
    %c0_27 = arith.constant 0 : index
    %26 = vector.load %arg2[%c3, %c0_26, %c0_27] : memref<4x32x8xbf16, #tpu.memory_space<vmem>>, vector<1x32x8xbf16>
    %27 = vector.shape_cast %26 : vector<1x32x8xbf16> to vector<32x8xbf16>
    %cst_28 = arith.constant dense<0.000000e+00> : vector<32x64xf32>
    %28 = tpu.matmul %27, %0, %cst_28 {dimension_numbers = #tpu.dot_dimension_numbers<[1], [0], [0], [1], [0, 0, 1, 1], [], []>} : vector<32x8xbf16>, vector<8x64xbf16>, vector<32x64xf32> -> vector<32x64xf32>
    %29 = arith.truncf %28 : vector<32x64xf32> to vector<32x64xbf16>
    %c0_29 = arith.constant 0 : index
    %c3_30 = arith.constant 3 : index
    %c0_31 = arith.constant 0 : index
    %c0_32 = arith.constant 0 : index
    %30 = vector.load %arg5[%c0_29, %c3_30, %c0_31, %c0_32] : memref<1x4x64x64xbf16, #tpu.memory_space<vmem>>, vector<1x1x64x64xbf16>
    %31 = vector.shape_cast %30 : vector<1x1x64x64xbf16> to vector<64x64xbf16>
    %cst_33 = arith.constant dense<0.000000e+00> : vector<32x64xf32>
    %32 = tpu.matmul %29, %31, %cst_33 {dimension_numbers = #tpu.dot_dimension_numbers<[1], [0], [0], [1], [0, 0, 1, 1], [], []>} : vector<32x64xbf16>, vector<64x64xbf16>, vector<32x64xf32> -> vector<32x64xf32>
    %33 = arith.addf %25, %32 : vector<32x64xf32>
    %c0_34 = arith.constant 0 : index
    %c0_35 = arith.constant 0 : index
    %c0_36 = arith.constant 0 : index
    %34 = vector.load %arg6[%c0_34, %c0_35, %c0_36] : memref<1x1x64xf32, #tpu.memory_space<vmem>>, vector<1x1x64xf32>
    %35 = vector.shape_cast %34 : vector<1x1x64xf32> to vector<1x64xf32>
    %36 = vector.broadcast %35 : vector<1x64xf32> to vector<32x64xf32>
    %37 = arith.addf %33, %36 : vector<32x64xf32>
    %38 = arith.truncf %37 : vector<32x64xf32> to vector<32x64xbf16>
    %cst_37 = arith.constant 0.000000e+00 : f32
    %39 = vector.broadcast %cst_37 : f32 to vector<128x64xf32>
    %c0_38 = arith.constant 0 : index
    %c0_39 = arith.constant 0 : index
    %c0_40 = arith.constant 0 : index
    %40 = vector.load %arg3[%c0_38, %c0_39, %c0_40] : memref<4x128x32xbf16, #tpu.memory_space<vmem>>, vector<1x128x32xbf16>
    %41 = vector.shape_cast %40 : vector<1x128x32xbf16> to vector<128x32xbf16>
    %cst_41 = arith.constant dense<0.000000e+00> : vector<128x64xf32>
    %42 = tpu.matmul %41, %38, %cst_41 {dimension_numbers = #tpu.dot_dimension_numbers<[1], [0], [0], [1], [0, 0, 1, 1], [], []>} : vector<128x32xbf16>, vector<32x64xbf16>, vector<128x64xf32> -> vector<128x64xf32>
    %43 = arith.truncf %42 : vector<128x64xf32> to vector<128x64xbf16>
    %c0_42 = arith.constant 0 : index
    %c0_43 = arith.constant 0 : index
    %c0_44 = arith.constant 0 : index
    %c0_45 = arith.constant 0 : index
    %44 = vector.load %arg7[%c0_42, %c0_43, %c0_44, %c0_45] : memref<1x4x64x64xbf16, #tpu.memory_space<vmem>>, vector<1x1x64x64xbf16>
    %45 = vector.shape_cast %44 : vector<1x1x64x64xbf16> to vector<64x64xbf16>
    %cst_46 = arith.constant dense<0.000000e+00> : vector<128x64xf32>
    %46 = tpu.matmul %43, %45, %cst_46 {dimension_numbers = #tpu.dot_dimension_numbers<[1], [0], [0], [1], [0, 0, 1, 1], [], []>} : vector<128x64xbf16>, vector<64x64xbf16>, vector<128x64xf32> -> vector<128x64xf32>
    %47 = arith.addf %39, %46 : vector<128x64xf32>
    %c1_47 = arith.constant 1 : index
    %c0_48 = arith.constant 0 : index
    %c0_49 = arith.constant 0 : index
    %48 = vector.load %arg3[%c1_47, %c0_48, %c0_49] : memref<4x128x32xbf16, #tpu.memory_space<vmem>>, vector<1x128x32xbf16>
    %49 = vector.shape_cast %48 : vector<1x128x32xbf16> to vector<128x32xbf16>
    %cst_50 = arith.constant dense<0.000000e+00> : vector<128x64xf32>
    %50 = tpu.matmul %49, %38, %cst_50 {dimension_numbers = #tpu.dot_dimension_numbers<[1], [0], [0], [1], [0, 0, 1, 1], [], []>} : vector<128x32xbf16>, vector<32x64xbf16>, vector<128x64xf32> -> vector<128x64xf32>
    %51 = arith.truncf %50 : vector<128x64xf32> to vector<128x64xbf16>
    %c0_51 = arith.constant 0 : index
    %c1_52 = arith.constant 1 : index
    %c0_53 = arith.constant 0 : index
    %c0_54 = arith.constant 0 : index
    %52 = vector.load %arg7[%c0_51, %c1_52, %c0_53, %c0_54] : memref<1x4x64x64xbf16, #tpu.memory_space<vmem>>, vector<1x1x64x64xbf16>
    %53 = vector.shape_cast %52 : vector<1x1x64x64xbf16> to vector<64x64xbf16>
    %cst_55 = arith.constant dense<0.000000e+00> : vector<128x64xf32>
    %54 = tpu.matmul %51, %53, %cst_55 {dimension_numbers = #tpu.dot_dimension_numbers<[1], [0], [0], [1], [0, 0, 1, 1], [], []>} : vector<128x64xbf16>, vector<64x64xbf16>, vector<128x64xf32> -> vector<128x64xf32>
    %55 = arith.addf %47, %54 : vector<128x64xf32>
    %c2_56 = arith.constant 2 : index
    %c0_57 = arith.constant 0 : index
    %c0_58 = arith.constant 0 : index
    %56 = vector.load %arg3[%c2_56, %c0_57, %c0_58] : memref<4x128x32xbf16, #tpu.memory_space<vmem>>, vector<1x128x32xbf16>
    %57 = vector.shape_cast %56 : vector<1x128x32xbf16> to vector<128x32xbf16>
    %cst_59 = arith.constant dense<0.000000e+00> : vector<128x64xf32>
    %58 = tpu.matmul %57, %38, %cst_59 {dimension_numbers = #tpu.dot_dimension_numbers<[1], [0], [0], [1], [0, 0, 1, 1], [], []>} : vector<128x32xbf16>, vector<32x64xbf16>, vector<128x64xf32> -> vector<128x64xf32>
    %59 = arith.truncf %58 : vector<128x64xf32> to vector<128x64xbf16>
    %c0_60 = arith.constant 0 : index
    %c2_61 = arith.constant 2 : index
    %c0_62 = arith.constant 0 : index
    %c0_63 = arith.constant 0 : index
    %60 = vector.load %arg7[%c0_60, %c2_61, %c0_62, %c0_63] : memref<1x4x64x64xbf16, #tpu.memory_space<vmem>>, vector<1x1x64x64xbf16>
    %61 = vector.shape_cast %60 : vector<1x1x64x64xbf16> to vector<64x64xbf16>
    %cst_64 = arith.constant dense<0.000000e+00> : vector<128x64xf32>
    %62 = tpu.matmul %59, %61, %cst_64 {dimension_numbers = #tpu.dot_dimension_numbers<[1], [0], [0], [1], [0, 0, 1, 1], [], []>} : vector<128x64xbf16>, vector<64x64xbf16>, vector<128x64xf32> -> vector<128x64xf32>
    %63 = arith.addf %55, %62 : vector<128x64xf32>
    %c3_65 = arith.constant 3 : index
    %c0_66 = arith.constant 0 : index
    %c0_67 = arith.constant 0 : index
    %64 = vector.load %arg3[%c3_65, %c0_66, %c0_67] : memref<4x128x32xbf16, #tpu.memory_space<vmem>>, vector<1x128x32xbf16>
    %65 = vector.shape_cast %64 : vector<1x128x32xbf16> to vector<128x32xbf16>
    %cst_68 = arith.constant dense<0.000000e+00> : vector<128x64xf32>
    %66 = tpu.matmul %65, %38, %cst_68 {dimension_numbers = #tpu.dot_dimension_numbers<[1], [0], [0], [1], [0, 0, 1, 1], [], []>} : vector<128x32xbf16>, vector<32x64xbf16>, vector<128x64xf32> -> vector<128x64xf32>
    %67 = arith.truncf %66 : vector<128x64xf32> to vector<128x64xbf16>
    %c0_69 = arith.constant 0 : index
    %c3_70 = arith.constant 3 : index
    %c0_71 = arith.constant 0 : index
    %c0_72 = arith.constant 0 : index
    %68 = vector.load %arg7[%c0_69, %c3_70, %c0_71, %c0_72] : memref<1x4x64x64xbf16, #tpu.memory_space<vmem>>, vector<1x1x64x64xbf16>
    %69 = vector.shape_cast %68 : vector<1x1x64x64xbf16> to vector<64x64xbf16>
    %cst_73 = arith.constant dense<0.000000e+00> : vector<128x64xf32>
    %70 = tpu.matmul %67, %69, %cst_73 {dimension_numbers = #tpu.dot_dimension_numbers<[1], [0], [0], [1], [0, 0, 1, 1], [], []>} : vector<128x64xbf16>, vector<64x64xbf16>, vector<128x64xf32> -> vector<128x64xf32>
    %71 = arith.addf %63, %70 : vector<128x64xf32>
    %c0_74 = arith.constant 0 : index
    %c0_75 = arith.constant 0 : index
    %c0_76 = arith.constant 0 : index
    %72 = vector.load %arg8[%c0_74, %c0_75, %c0_76] : memref<1x1x64xf32, #tpu.memory_space<vmem>>, vector<1x1x64xf32>
    %73 = vector.shape_cast %72 : vector<1x1x64xf32> to vector<1x64xf32>
    %74 = vector.broadcast %73 : vector<1x64xf32> to vector<128x64xf32>
    %75 = arith.addf %71, %74 : vector<128x64xf32>
    %76 = arith.truncf %75 : vector<128x64xf32> to vector<128x64xbf16>
    %cst_77 = arith.constant 0.000000e+00 : f32
    %77 = vector.broadcast %cst_77 : f32 to vector<512x3xf32>
    %c0_78 = arith.constant 0 : index
    %c0_79 = arith.constant 0 : index
    %c0_80 = arith.constant 0 : index
    %78 = vector.load %arg4[%c0_78, %c0_79, %c0_80] : memref<4x512x128xbf16, #tpu.memory_space<vmem>>, vector<1x512x128xbf16>
    %79 = vector.shape_cast %78 : vector<1x512x128xbf16> to vector<512x128xbf16>
    %cst_81 = arith.constant dense<0.000000e+00> : vector<512x64xf32>
    %80 = tpu.matmul %79, %76, %cst_81 {dimension_numbers = #tpu.dot_dimension_numbers<[1], [0], [0], [1], [0, 0, 1, 1], [], []>} : vector<512x128xbf16>, vector<128x64xbf16>, vector<512x64xf32> -> vector<512x64xf32>
    %81 = arith.truncf %80 : vector<512x64xf32> to vector<512x64xbf16>
    %c0_82 = arith.constant 0 : index
    %c0_83 = arith.constant 0 : index
    %c0_84 = arith.constant 0 : index
    %c0_85 = arith.constant 0 : index
    %82 = vector.load %arg9[%c0_82, %c0_83, %c0_84, %c0_85] : memref<1x4x64x3xbf16, #tpu.memory_space<vmem>>, vector<1x1x64x3xbf16>
    %83 = vector.shape_cast %82 : vector<1x1x64x3xbf16> to vector<64x3xbf16>
    %cst_86 = arith.constant dense<0.000000e+00> : vector<512x3xf32>
    %84 = tpu.matmul %81, %83, %cst_86 {dimension_numbers = #tpu.dot_dimension_numbers<[1], [0], [0], [1], [0, 0, 1, 1], [], []>} : vector<512x64xbf16>, vector<64x3xbf16>, vector<512x3xf32> -> vector<512x3xf32>
    %85 = arith.addf %77, %84 : vector<512x3xf32>
    %c1_87 = arith.constant 1 : index
    %c0_88 = arith.constant 0 : index
    %c0_89 = arith.constant 0 : index
    %86 = vector.load %arg4[%c1_87, %c0_88, %c0_89] : memref<4x512x128xbf16, #tpu.memory_space<vmem>>, vector<1x512x128xbf16>
    %87 = vector.shape_cast %86 : vector<1x512x128xbf16> to vector<512x128xbf16>
    %cst_90 = arith.constant dense<0.000000e+00> : vector<512x64xf32>
    %88 = tpu.matmul %87, %76, %cst_90 {dimension_numbers = #tpu.dot_dimension_numbers<[1], [0], [0], [1], [0, 0, 1, 1], [], []>} : vector<512x128xbf16>, vector<128x64xbf16>, vector<512x64xf32> -> vector<512x64xf32>
    %89 = arith.truncf %88 : vector<512x64xf32> to vector<512x64xbf16>
    %c0_91 = arith.constant 0 : index
    %c1_92 = arith.constant 1 : index
    %c0_93 = arith.constant 0 : index
    %c0_94 = arith.constant 0 : index
    %90 = vector.load %arg9[%c0_91, %c1_92, %c0_93, %c0_94] : memref<1x4x64x3xbf16, #tpu.memory_space<vmem>>, vector<1x1x64x3xbf16>
    %91 = vector.shape_cast %90 : vector<1x1x64x3xbf16> to vector<64x3xbf16>
    %cst_95 = arith.constant dense<0.000000e+00> : vector<512x3xf32>
    %92 = tpu.matmul %89, %91, %cst_95 {dimension_numbers = #tpu.dot_dimension_numbers<[1], [0], [0], [1], [0, 0, 1, 1], [], []>} : vector<512x64xbf16>, vector<64x3xbf16>, vector<512x3xf32> -> vector<512x3xf32>
    %93 = arith.addf %85, %92 : vector<512x3xf32>
    %c2_96 = arith.constant 2 : index
    %c0_97 = arith.constant 0 : index
    %c0_98 = arith.constant 0 : index
    %94 = vector.load %arg4[%c2_96, %c0_97, %c0_98] : memref<4x512x128xbf16, #tpu.memory_space<vmem>>, vector<1x512x128xbf16>
    %95 = vector.shape_cast %94 : vector<1x512x128xbf16> to vector<512x128xbf16>
    %cst_99 = arith.constant dense<0.000000e+00> : vector<512x64xf32>
    %96 = tpu.matmul %95, %76, %cst_99 {dimension_numbers = #tpu.dot_dimension_numbers<[1], [0], [0], [1], [0, 0, 1, 1], [], []>} : vector<512x128xbf16>, vector<128x64xbf16>, vector<512x64xf32> -> vector<512x64xf32>
    %97 = arith.truncf %96 : vector<512x64xf32> to vector<512x64xbf16>
    %c0_100 = arith.constant 0 : index
    %c2_101 = arith.constant 2 : index
    %c0_102 = arith.constant 0 : index
    %c0_103 = arith.constant 0 : index
    %98 = vector.load %arg9[%c0_100, %c2_101, %c0_102, %c0_103] : memref<1x4x64x3xbf16, #tpu.memory_space<vmem>>, vector<1x1x64x3xbf16>
    %99 = vector.shape_cast %98 : vector<1x1x64x3xbf16> to vector<64x3xbf16>
    %cst_104 = arith.constant dense<0.000000e+00> : vector<512x3xf32>
    %100 = tpu.matmul %97, %99, %cst_104 {dimension_numbers = #tpu.dot_dimension_numbers<[1], [0], [0], [1], [0, 0, 1, 1], [], []>} : vector<512x64xbf16>, vector<64x3xbf16>, vector<512x3xf32> -> vector<512x3xf32>
    %101 = arith.addf %93, %100 : vector<512x3xf32>
    %c3_105 = arith.constant 3 : index
    %c0_106 = arith.constant 0 : index
    %c0_107 = arith.constant 0 : index
    %102 = vector.load %arg4[%c3_105, %c0_106, %c0_107] : memref<4x512x128xbf16, #tpu.memory_space<vmem>>, vector<1x512x128xbf16>
    %103 = vector.shape_cast %102 : vector<1x512x128xbf16> to vector<512x128xbf16>
    %cst_108 = arith.constant dense<0.000000e+00> : vector<512x64xf32>
    %104 = tpu.matmul %103, %76, %cst_108 {dimension_numbers = #tpu.dot_dimension_numbers<[1], [0], [0], [1], [0, 0, 1, 1], [], []>} : vector<512x128xbf16>, vector<128x64xbf16>, vector<512x64xf32> -> vector<512x64xf32>
    %105 = arith.truncf %104 : vector<512x64xf32> to vector<512x64xbf16>
    %c0_109 = arith.constant 0 : index
    %c3_110 = arith.constant 3 : index
    %c0_111 = arith.constant 0 : index
    %c0_112 = arith.constant 0 : index
    %106 = vector.load %arg9[%c0_109, %c3_110, %c0_111, %c0_112] : memref<1x4x64x3xbf16, #tpu.memory_space<vmem>>, vector<1x1x64x3xbf16>
    %107 = vector.shape_cast %106 : vector<1x1x64x3xbf16> to vector<64x3xbf16>
    %cst_113 = arith.constant dense<0.000000e+00> : vector<512x3xf32>
    %108 = tpu.matmul %105, %107, %cst_113 {dimension_numbers = #tpu.dot_dimension_numbers<[1], [0], [0], [1], [0, 0, 1, 1], [], []>} : vector<512x64xbf16>, vector<64x3xbf16>, vector<512x3xf32> -> vector<512x3xf32>
    %109 = arith.addf %101, %108 : vector<512x3xf32>
    %c0_114 = arith.constant 0 : index
    %c0_115 = arith.constant 0 : index
    %c0_116 = arith.constant 0 : index
    %110 = vector.load %arg10[%c0_114, %c0_115, %c0_116] : memref<1x1x3xf32, #tpu.memory_space<vmem>>, vector<1x1x3xf32>
    %111 = vector.shape_cast %110 : vector<1x1x3xf32> to vector<1x3xf32>
    %112 = vector.broadcast %111 : vector<1x3xf32> to vector<512x3xf32>
    %113 = arith.addf %109, %112 : vector<512x3xf32>
    %114 = arith.truncf %113 : vector<512x3xf32> to vector<512x3xbf16>
    %115 = arith.extf %114 : vector<512x3xbf16> to vector<512x3xf32>
    %c0_117 = arith.constant 0 : index
    %c0_118 = arith.constant 0 : index
    %c0_119 = arith.constant 0 : index
    %116 = vector.load %arg11[%c0_117, %c0_118, %c0_119] : memref<1x512x3xf32, #tpu.memory_space<vmem>>, vector<1x512x3xf32>
    %117 = vector.shape_cast %116 : vector<1x512x3xf32> to vector<512x3xf32>
    %118 = vector.shape_cast %115 : vector<512x3xf32> to vector<1x512x3xf32>
    tpu.vector_store %arg11[%c0_117, %c0_118, %c0_119], %118 {strides = array<i32>} : memref<1x512x3xf32, #tpu.memory_space<vmem>>, vector<1x512x3xf32>,
    return
  }
  func.func @transform_0(%arg0: i32) -> (i32, i32) {
    %c0_i32 = arith.constant 0 : i32
    %c0_i32_0 = arith.constant 0 : i32
    %c0_i32_1 = arith.constant 0 : i32
    return %c0_i32, %c0_i32_0 : i32, i32
  }
  func.func @transform_1(%arg0: i32) -> (i32, i32, i32) {
    %c0_i32 = arith.constant 0 : i32
    %c0_i32_0 = arith.constant 0 : i32
    %c0_i32_1 = arith.constant 0 : i32
    %c0_i32_2 = arith.constant 0 : i32
    return %c0_i32, %c0_i32_0, %c0_i32_1 : i32, i32, i32
  }
  func.func @transform_2(%arg0: i32) -> (i32, i32, i32) {
    %c0_i32 = arith.constant 0 : i32
    %c0_i32_0 = arith.constant 0 : i32
    %c0_i32_1 = arith.constant 0 : i32
    %c0_i32_2 = arith.constant 0 : i32
    return %c0_i32, %c0_i32_0, %c0_i32_1 : i32, i32, i32
  }
  func.func @transform_3(%arg0: i32) -> (i32, i32, i32) {
    %c0_i32 = arith.constant 0 : i32
    %c0_i32_0 = arith.constant 0 : i32
    %c0_i32_1 = arith.constant 0 : i32
    %c0_i32_2 = arith.constant 0 : i32
    return %c0_i32, %c0_i32_0, %c0_i32_1 : i32, i32, i32
  }
  func.func @transform_4(%arg0: i32) -> (i32, i32, i32, i32) {
    %c0_i32 = arith.constant 0 : i32
    %c0_i32_0 = arith.constant 0 : i32
    %c0_i32_1 = arith.constant 0 : i32
    %c0_i32_2 = arith.constant 0 : i32
    return %arg0, %c0_i32, %c0_i32_0, %c0_i32_1 : i32, i32, i32, i32
  }
  func.func @transform_5(%arg0: i32) -> (i32, i32, i32) {
    %c0_i32 = arith.constant 0 : i32
    %c0_i32_0 = arith.constant 0 : i32
    %c0_i32_1 = arith.constant 0 : i32
    return %arg0, %c0_i32, %c0_i32_0 : i32, i32, i32
  }
  func.func @transform_6(%arg0: i32) -> (i32, i32, i32, i32) {
    %c0_i32 = arith.constant 0 : i32
    %c0_i32_0 = arith.constant 0 : i32
    %c0_i32_1 = arith.constant 0 : i32
    %c0_i32_2 = arith.constant 0 : i32
    return %arg0, %c0_i32, %c0_i32_0, %c0_i32_1 : i32, i32, i32, i32
  }
  func.func @transform_7(%arg0: i32) -> (i32, i32, i32) {
    %c0_i32 = arith.constant 0 : i32
    %c0_i32_0 = arith.constant 0 : i32
    %c0_i32_1 = arith.constant 0 : i32
    return %arg0, %c0_i32, %c0_i32_0 : i32, i32, i32
  }
  func.func @transform_8(%arg0: i32) -> (i32, i32, i32, i32) {
    %c0_i32 = arith.constant 0 : i32
    %c0_i32_0 = arith.constant 0 : i32
    %c0_i32_1 = arith.constant 0 : i32
    %c0_i32_2 = arith.constant 0 : i32
    return %arg0, %c0_i32, %c0_i32_0, %c0_i32_1 : i32, i32, i32, i32
  }
  func.func @transform_9(%arg0: i32) -> (i32, i32, i32) {
    %c0_i32 = arith.constant 0 : i32
    %c0_i32_0 = arith.constant 0 : i32
    %c0_i32_1 = arith.constant 0 : i32
    return %arg0, %c0_i32, %c0_i32_0 : i32, i32, i32
  }
  func.func @transform_10(%arg0: i32) -> (i32, i32, i32) {
    %c0_i32 = arith.constant 0 : i32
    %c0_i32_0 = arith.constant 0 : i32
    %c0_i32_1 = arith.constant 0 : i32
    return %arg0, %c0_i32, %c0_i32_0 : i32, i32, i32
  }
}

</mosaic_0001>

<llo_original>
// kernel: _lambda_.2
$region0: #{_lambda_.2}
  #allocation0 [shape = 'u32[]', space=smem, size = 0x4, offset = 0x4, fixed_abs, tag = 'smem constant byte address 0x4 - core index']
  #allocation1 [shape = 'u32[144,128]{1,0:T(1,128)}', space=vmem, size = 0x12000, scoped, tag = 'internal scratch']
  %s0 = inlined_call_operand.vmem [shape: bf16[128,27], index: 0, kind: input, shape index: {}]
  %s1 = inlined_call_operand.vmem [shape: bf16[27,64], index: 1, kind: input, shape index: {}]
  %s2 = inlined_call_operand.hbm [shape: f32[1,64], index: 2, kind: input, shape index: {}]
  %s3 = inlined_call_operand.vmem [shape: bf16[9,32,128], index: 3, kind: input, shape index: {}]
  %s4 = inlined_call_operand.vmem [shape: bf16[9,64,64], index: 4, kind: input, shape index: {}]
  %s5 = inlined_call_operand.hbm [shape: f32[1,64], index: 5, kind: input, shape index: {}]
  %s6 = inlined_call_operand.hbm [shape: bf16[9,8,32], index: 6, kind: input, shape index: {}]
  %s7 = inlined_call_operand.vmem [shape: bf16[9,64,64], index: 7, kind: input, shape index: {}]
  %s8 = inlined_call_operand.hbm [shape: f32[1,64], index: 8, kind: input, shape index: {}]
  %s9 = inlined_call_operand.vmem [shape: bf16[8,64], index: 9, kind: output, shape index: {}]
  %s10 = sld [smem:[#allocation0]]
  $region62: #{_lambda_.2} parent=0
    _
  %s12 = ssub.s32 1, %s10
  %s13 = scalar_select 0, %s12, %s10
  $region1: #{_lambda_.2} parent=0
    #allocation2 [shape = 'u8[512]{0}', space=vmem, size = 0x400, scoped, tag = 'input window, operand 2, single buffered']
    #allocation3 [shape = 's32[1]{0}', space=sflag, size = 0x4, scoped, tag = 'scoped memory for _lambda_.2']
    #allocation4 [shape = 'u8[512]{0}', space=vmem, size = 0x400, scoped, tag = 'input window, operand 5, single buffered']
    #allocation5 [shape = 's32[1]{0}', space=sflag, size = 0x4, scoped, tag = 'scoped memory for _lambda_.2']
    #allocation6 [shape = 'u8[18432]{0}', space=vmem, size = 0x4800, scoped, tag = 'input window, operand 6, single buffered']
    #allocation7 [shape = 'u8[512]{0}', space=vmem, size = 0x400, scoped, tag = 'input window, operand 8, single buffered']
    #allocation8 [shape = 's32[1]{0}', space=sflag, size = 0x4, scoped, tag = 'scoped memory for _lambda_.2']
    %14 = vsyncpa [#allocation3], 0
    %15 = vsyncpa [#allocation5], 0
    %16 = vsyncpa [#allocation8], 0
    // Predicated region
    $region2: #{_lambda_.2} parent=1 // pred_check
      _
    $region3: #{_lambda_.2} parent=1 // pred_check_branch
      %18 = sbr.rel (0) target = $region5
    $region4: #{_lambda_.2} parent=1 // pred_region
      _
    $region5: #{_lambda_.2} parent=1 // pred_fallthru
      _
    // Predicated region
    $region6: #{_lambda_.2} parent=1 // pred_check
      _
    $region7: #{_lambda_.2} parent=1 // pred_check_branch
      %20 = sbr.rel (0) target = $region9
    $region8: #{_lambda_.2} parent=1 // pred_region
      _
    $region9: #{_lambda_.2} parent=1 // pred_fallthru
      _
    // Predicated region
    $region10: #{_lambda_.2} parent=1 // pred_check
      _
    $region11: #{_lambda_.2} parent=1 // pred_check_branch
      %22 = sbr.rel (0) target = $region13
    $region12: #{_lambda_.2} parent=1 // pred_region
      %s24 = ssub.s32 16, 16
      %25 = vsyncadd [#allocation3], %s24
      %s27 = sshll.u32 [#allocation2], 4
      %s28 = int_to_ptr.vmem [resolvable:$true] %s27
      %30 = dma.hbm_to_vmem [thread:$0]  %s2, 16, %s28, [#allocation3]
    $region13: #{_lambda_.2} parent=1 // pred_fallthru
      _
    // Predicated region
    $region14: #{_lambda_.2} parent=1 // pred_check
      _
    $region15: #{_lambda_.2} parent=1 // pred_check_branch
      %32 = sbr.rel (0) target = $region17
    $region16: #{_lambda_.2} parent=1 // pred_region
      _
    $region17: #{_lambda_.2} parent=1 // pred_fallthru
      _
    // Predicated region
    $region18: #{_lambda_.2} parent=1 // pred_check
      _
    $region19: #{_lambda_.2} parent=1 // pred_check_branch
      %34 = sbr.rel (0) target = $region21
    $region20: #{_lambda_.2} parent=1 // pred_region
      _
    $region21: #{_lambda_.2} parent=1 // pred_fallthru
      _
    // Predicated region
    $region22: #{_lambda_.2} parent=1 // pred_check
      _
    $region23: #{_lambda_.2} parent=1 // pred_check_branch
      %36 = sbr.rel (0) target = $region25
    $region24: #{_lambda_.2} parent=1 // pred_region
      %s38 = ssub.s32 16, 16
      %39 = vsyncadd [#allocation5], %s38
      %s41 = sshll.u32 [#allocation4], 4
      %s42 = int_to_ptr.vmem [resolvable:$true] %s41
      %44 = dma.hbm_to_vmem [thread:$0]  %s5, 16, %s42, [#allocation5]
    $region25: #{_lambda_.2} parent=1 // pred_fallthru
      _
    // Predicated region
    $region26: #{_lambda_.2} parent=1 // pred_check
      _
    $region27: #{_lambda_.2} parent=1 // pred_check_branch
      %46 = sbr.rel (0) target = $region29
    $region28: #{_lambda_.2} parent=1 // pred_region
      %s48 = ssub.s32 576, 576
      %49 = vsyncadd [#allocation5], %s48
      %s50 = sshll.u32 [#allocation6], 4
      %s51 = int_to_ptr.vmem [resolvable:$true] %s50
      %56 = dma.hbm_to_vmem [thread:$0]  %s6, 576, %s51, [#allocation5], 64, 64, 4
    $region29: #{_lambda_.2} parent=1 // pred_fallthru
      _
    // Predicated region
    $region30: #{_lambda_.2} parent=1 // pred_check
      _
    $region31: #{_lambda_.2} parent=1 // pred_check_branch
      %58 = sbr.rel (0) target = $region33
    $region32: #{_lambda_.2} parent=1 // pred_region
      _
    $region33: #{_lambda_.2} parent=1 // pred_fallthru
      _
    // Predicated region
    $region34: #{_lambda_.2} parent=1 // pred_check
      _
    $region35: #{_lambda_.2} parent=1 // pred_check_branch
      %60 = sbr.rel (0) target = $region37
    $region36: #{_lambda_.2} parent=1 // pred_region
      %s62 = ssub.s32 16, 16
      %63 = vsyncadd [#allocation8], %s62
      %s65 = sshll.u32 [#allocation7], 4
      %s66 = int_to_ptr.vmem [resolvable:$true] %s65
      %68 = dma.hbm_to_vmem [thread:$0]  %s8, 16, %s66, [#allocation8]
    $region37: #{_lambda_.2} parent=1 // pred_fallthru
      _
    // Predicated region
    $region38: #{_lambda_.2} parent=1 // pred_check
      _
    $region39: #{_lambda_.2} parent=1 // pred_check_branch
      %70 = sbr.rel (0) target = $region41
    $region40: #{_lambda_.2} parent=1 // pred_region
      %71 = dma.done [#allocation3], 16
    $region41: #{_lambda_.2} parent=1 // pred_fallthru
      _
    // Predicated region
    $region42: #{_lambda_.2} parent=1 // pred_check
      _
    $region43: #{_lambda_.2} parent=1 // pred_check_branch
      %73 = sbr.rel (0) target = $region45
    $region44: #{_lambda_.2} parent=1 // pred_region
      %74 = dma.done [#allocation5], 16
    $region45: #{_lambda_.2} parent=1 // pred_fallthru
      _
    // Predicated region
    $region46: #{_lambda_.2} parent=1 // pred_check
      _
    $region47: #{_lambda_.2} parent=1 // pred_check_branch
      %76 = sbr.rel (0) target = $region49
    $region48: #{_lambda_.2} parent=1 // pred_region
      %77 = dma.done [#allocation5], 576
    $region49: #{_lambda_.2} parent=1 // pred_fallthru
      _
    // Predicated region
    $region50: #{_lambda_.2} parent=1 // pred_check
      _
    $region51: #{_lambda_.2} parent=1 // pred_check_branch
      %79 = sbr.rel (0) target = $region53
    $region52: #{_lambda_.2} parent=1 // pred_region
      %80 = dma.done [#allocation8], 16
    $region53: #{_lambda_.2} parent=1 // pred_fallthru
      _
    %v82 = vld [vmem:[%s0] sm:$0xf]
    %v83 = vld [vmem:[%s0 + $0x4] sm:$0xf]
    %v84 = vld [vmem:[%s0 + $0x8] sm:$0xf]
    %v85 = vld [vmem:[%s0 + $0xc] sm:$0xf]
    %v86 = vld [vmem:[%s0 + $0x10] sm:$0xf]
    %v87 = vld [vmem:[%s0 + $0x14] sm:$0xf]
    %v88 = vld [vmem:[%s0 + $0x18] sm:$0xf]
    %v89 = vld [vmem:[%s0 + $0x1c] sm:$0xf]
    %v90 = vld [vmem:[%s0 + $0x20] sm:$0xf]
    %v91 = vld [vmem:[%s0 + $0x24] sm:$0xf]
    %v92 = vld [vmem:[%s0 + $0x28] sm:$0xf]
    %v93 = vld [vmem:[%s0 + $0x2c] sm:$0xf]
    %v94 = vld [vmem:[%s0 + $0x30] sm:$0xf]
    %v95 = vld [vmem:[%s0 + $0x34] sm:$0xf]
    %v96 = vld [vmem:[%s0 + $0x38] sm:$0xf]
    %v97 = vld [vmem:[%s0 + $0x3c] sm:$0xf]
    %v98 = vld [vmem:[%s1] sm:$0xf]
    %v99 = vld [vmem:[%s1 + $0x4] sm:$0xf]
    %v100 = vld [vmem:[%s1 + $0x8] sm:$0xf]
    %v101 = vld [vmem:[%s1 + $0xc] sm:$0x3]
    %v102 = vld [vmem:[#allocation2] sm:$0x1]
    %v104 = vlaneseq
    %v105 = vshrl.u32 %v104, 7
    %v106 = vsub.s32 0, %v105
    %v107 = vrot.slane %v102, %v106
    %v125 = vunpack.c.l.b16 %v82
    %v126 = vunpack.c.l.b16 %v83
    %v127 = vunpack.c.l.b16 %v84
    %v128 = vunpack.c.l.b16 %v85
    %v129 = vunpack.c.l.b16 %v86
    %v130 = vunpack.c.l.b16 %v87
    %v131 = vunpack.c.l.b16 %v88
    %v132 = vunpack.c.l.b16 %v89
    %v133 = vunpack.c.l.b16 %v90
    %v134 = vunpack.c.l.b16 %v91
    %v135 = vunpack.c.l.b16 %v92
    %v136 = vunpack.c.l.b16 %v93
    %v137 = vunpack.c.l.b16 %v94
    %v138 = vunpack.c.l.b16 %v95
    %v139 = vunpack.c.l.b16 %v96
    %v140 = vunpack.c.l.b16 %v97
    %v141 = vpack.c.b16 %v126, %v125
    %v142 = vpack.c.b16 %v128, %v127
    %v143 = vpack.c.b16 %v130, %v129
    %v144 = vpack.c.b16 %v132, %v131
    %v145 = vpack.c.b16 %v134, %v133
    %v146 = vpack.c.b16 %v136, %v135
    %v147 = vpack.c.b16 %v138, %v137
    %v148 = vpack.c.b16 %v140, %v139
    %v153 = vunpack.c.l.b16 %v98
    %v154 = vunpack.c.l.b16 %v99
    %v155 = vunpack.c.l.b16 %v100
    %v156 = vunpack.c.l.b16 %v101
    %v157 = vpack.c.b16 %v154, %v153
    %v158 = vpack.c.b16 %v156, %v155
    %vm160 = vcmask 220160
    %v162 = vsel %vm160, %v141, 0
    %v165 = vsel %vm160, %v142, 0
    %v168 = vsel %vm160, %v143, 0
    %v171 = vsel %vm160, %v144, 0
    %v174 = vsel %vm160, %v145, 0
    %v177 = vsel %vm160, %v146, 0
    %v180 = vsel %vm160, %v147, 0
    %v183 = vsel %vm160, %v148, 0
    %vm185 = vcmask 1044480
    %vm186 = vcmask 1045504
    %v187 = vsel %vm185, 4294967295, 65535
    %v188 = vsel %vm186, %v187, 0
    %v190 = vand.u32 %v158, %v188
    %192 = vmatprep.subr.bf16.mxu0 0
    %193 = vmatpush1.bf16.msra.mxu0 %v157
    %194 = vmatprep.subr.bf16.mxu0 0
    %195 = vmatpush1.bf16.msra.mxu0 %v190
    %196 = vmatprep.subr.bf16.mxu0 0
    %197 = vmatpush1.bf16.msra.mxu0 0
    %198 = vmatprep.subr.bf16.mxu0 0
    %199 = vmatpush1.bf16.msra.mxu0 0
    %200 = vmatprep.subr.bf16.mxu0 0
    %201 = vmatpush1.bf16.msra.mxu0 0
    %202 = vmatprep.subr.bf16.mxu0 0
    %203 = vmatpush1.bf16.msra.mxu0 0
    %204 = vmatprep.subr.bf16.mxu0 0
    %205 = vmatpush1.bf16.msra.mxu0 0
    %206 = vmatprep.subr.bf16.mxu0 0
    %207 = vmatpush1.bf16.msra.mxu0 0
    %208 = vmatprep.subr.bf16.mxu0 0
    %209 = vmatpush1.bf16.msra.mxu0 0
    %210 = vmatprep.subr.bf16.mxu0 0
    %211 = vmatpush1.bf16.msra.mxu0 0
    %212 = vmatprep.subr.bf16.mxu0 0
    %213 = vmatpush1.bf16.msra.mxu0 0
    %214 = vmatprep.subr.bf16.mxu0 0
    %215 = vmatpush1.bf16.msra.mxu0 0
    %216 = vmatprep.subr.bf16.mxu0 0
    %217 = vmatpush1.bf16.msra.mxu0 0
    %218 = vmatprep.subr.bf16.mxu0 0
    %219 = vmatpush1.bf16.msra.mxu0 0
    %220 = vmatprep.subr.bf16.mxu0 0
    %221 = vmatpush1.bf16.msra.mxu0 0
    %222 = vmatprep.subr.bf16.mxu0 0
    %223 = vmatpush1.bf16.msra.mxu0 0
    %224 = vmatprep.mubr.bf16.mxu0 0
    %225 = vmatmul.mubr.bf16.gmra.mrb[0].mxu0 %v162
    %v226 = vpop.f32.mrb[0].mxu0
    %v227 = vadd.f32 %v107, %v226
    %v228 = vpop.f32.mrb[0].mxu0
    %v229 = vpop.f32.mrb[0].mxu0
    %v230 = vadd.f32 %v107, %v229
    %v231 = vpop.f32.mrb[0].mxu0
    %232 = vmatprep.mubr.bf16.mxu0 0
    %233 = vmatmul.mubr.bf16.gmra.mrb[0].mxu0 %v165
    %v234 = vpop.f32.mrb[0].mxu0
    %v235 = vadd.f32 %v107, %v234
    %v236 = vpop.f32.mrb[0].mxu0
    %v237 = vpop.f32.mrb[0].mxu0
    %v238 = vadd.f32 %v107, %v237
    %v239 = vpop.f32.mrb[0].mxu0
    %240 = vmatprep.mubr.bf16.mxu0 0
    %241 = vmatmul.mubr.bf16.gmra.mrb[0].mxu0 %v168
    %v242 = vpop.f32.mrb[0].mxu0
    %v243 = vadd.f32 %v107, %v242
    %v244 = vpop.f32.mrb[0].mxu0
    %v245 = vpop.f32.mrb[0].mxu0
    %v246 = vadd.f32 %v107, %v245
    %v247 = vpop.f32.mrb[0].mxu0
    %248 = vmatprep.mubr.bf16.mxu0 0
    %249 = vmatmul.mubr.bf16.gmra.mrb[0].mxu0 %v171
    %v250 = vpop.f32.mrb[0].mxu0
    %v251 = vadd.f32 %v107, %v250
    %v252 = vpop.f32.mrb[0].mxu0
    %v253 = vpop.f32.mrb[0].mxu0
    %v254 = vadd.f32 %v107, %v253
    %v255 = vpop.f32.mrb[0].mxu0
    %256 = vmatprep.mubr.bf16.mxu0 0
    %257 = vmatmul.mubr.bf16.gmra.mrb[0].mxu0 %v174
    %v258 = vpop.f32.mrb[0].mxu0
    %v259 = vadd.f32 %v107, %v258
    %v260 = vpop.f32.mrb[0].mxu0
    %v261 = vpop.f32.mrb[0].mxu0
    %v262 = vadd.f32 %v107, %v261
    %v263 = vpop.f32.mrb[0].mxu0
    %264 = vmatprep.mubr.bf16.mxu0 0
    %265 = vmatmul.mubr.bf16.gmra.mrb[0].mxu0 %v177
    %v266 = vpop.f32.mrb[0].mxu0
    %v267 = vadd.f32 %v107, %v266
    %v268 = vpop.f32.mrb[0].mxu0
    %v269 = vpop.f32.mrb[0].mxu0
    %v270 = vadd.f32 %v107, %v269
    %v271 = vpop.f32.mrb[0].mxu0
    %272 = vmatprep.mubr.bf16.mxu0 0
    %273 = vmatmul.mubr.bf16.gmra.mrb[0].mxu0 %v180
    %v274 = vpop.f32.mrb[0].mxu0
    %v275 = vadd.f32 %v107, %v274
    %v276 = vpop.f32.mrb[0].mxu0
    %v277 = vpop.f32.mrb[0].mxu0
    %v278 = vadd.f32 %v107, %v277
    %v279 = vpop.f32.mrb[0].mxu0
    %280 = vmatprep.mubr.bf16.mxu0 0
    %281 = vmatmul.mubr.bf16.gmra.mrb[0].mxu0 %v183
    %v282 = vpop.f32.mrb[0].mxu0
    %v283 = vadd.f32 %v107, %v282
    %v284 = vpop.f32.mrb[0].mxu0
    %v285 = vpop.f32.mrb[0].mxu0
    %v286 = vadd.f32 %v107, %v285
    %v287 = vpop.f32.mrb[0].mxu0
    %288 = vdwg.mxu0
    %v289 = vpack.c.bf16 %v230, %v227
    %v290 = vpack.c.bf16 %v238, %v235
    %v291 = vpack.c.bf16 %v246, %v243
    %v292 = vpack.c.bf16 %v254, %v251
    %v293 = vpack.c.bf16 %v262, %v259
    %v294 = vpack.c.bf16 %v270, %v267
    %v295 = vpack.c.bf16 %v278, %v275
    %v296 = vpack.c.bf16 %v286, %v283
    %v297 = vld [vmem:[%s3] sm:$0xf]
    %v298 = vld [vmem:[%s3 + $0x4] sm:$0xf]
    %v299 = vld [vmem:[%s3 + $0x8] sm:$0xf]
    %v300 = vld [vmem:[%s3 + $0xc] sm:$0xf]
    %v305 = vunpack.c.l.b16 %v297
    %v306 = vunpack.c.l.b16 %v298
    %v307 = vunpack.c.l.b16 %v299
    %v308 = vunpack.c.l.b16 %v300
    %v309 = vpack.c.b16 %v306, %v305
    %v310 = vpack.c.b16 %v308, %v307
    %313 = vmatprep.subr.bf16.mxu0 0
    %314 = vmatpush1.bf16.msra.mxu0 %v289
    %315 = vmatprep.subr.bf16.mxu0 0
    %316 = vmatpush1.bf16.msra.mxu0 %v290
    %317 = vmatprep.subr.bf16.mxu0 0
    %318 = vmatpush1.bf16.msra.mxu0 %v291
    %319 = vmatprep.subr.bf16.mxu0 0
    %320 = vmatpush1.bf16.msra.mxu0 %v292
    %321 = vmatprep.subr.bf16.mxu0 0
    %322 = vmatpush1.bf16.msra.mxu0 %v293
    %323 = vmatprep.subr.bf16.mxu0 0
    %324 = vmatpush1.bf16.msra.mxu0 %v294
    %325 = vmatprep.subr.bf16.mxu0 0
    %326 = vmatpush1.bf16.msra.mxu0 %v295
    %327 = vmatprep.subr.bf16.mxu0 0
    %328 = vmatpush1.bf16.msra.mxu0 %v296
    %329 = vmatprep.subr.bf16.mxu0 0
    %330 = vmatpush1.bf16.msra.mxu0 0
    %331 = vmatprep.subr.bf16.mxu0 0
    %332 = vmatpush1.bf16.msra.mxu0 0
    %333 = vmatprep.subr.bf16.mxu0 0
    %334 = vmatpush1.bf16.msra.mxu0 0
    %335 = vmatprep.subr.bf16.mxu0 0
    %336 = vmatpush1.bf16.msra.mxu0 0
    %337 = vmatprep.subr.bf16.mxu0 0
    %338 = vmatpush1.bf16.msra.mxu0 0
    %339 = vmatprep.subr.bf16.mxu0 0
    %340 = vmatpush1.bf16.msra.mxu0 0
    %341 = vmatprep.subr.bf16.mxu0 0
    %342 = vmatpush1.bf16.msra.mxu0 0
    %343 = vmatprep.subr.bf16.mxu0 0
    %344 = vmatpush1.bf16.msra.mxu0 0
    %345 = vmatprep.mubr.bf16.mxu0 0
    %346 = vmatmul.mubr.bf16.gmra.mrb[0].mxu0 %v309
    %v347 = vpop.f32.mrb[0].mxu0
    %v348 = vadd.f32 0.0, %v347
    %v349 = vpop.f32.mrb[0].mxu0
    %v350 = vpop.f32.mrb[0].mxu0
    %v351 = vadd.f32 0.0, %v350
    %v352 = vpop.f32.mrb[0].mxu0
    %353 = vmatprep.mubr.bf16.mxu0 0
    %354 = vmatmul.mubr.bf16.gmra.mrb[0].mxu0 %v310
    %v355 = vpop.f32.mrb[0].mxu0
    %v356 = vadd.f32 0.0, %v355
    %v357 = vpop.f32.mrb[0].mxu0
    %v358 = vpop.f32.mrb[0].mxu0
    %v359 = vadd.f32 0.0, %v358
    %v360 = vpop.f32.mrb[0].mxu0
    %361 = vdwg.mxu0
    %v362 = vpack.c.bf16 %v351, %v348
    %v363 = vpack.c.bf16 %v359, %v356
    %v364 = vld [vmem:[%s4] sm:$0xf]
    %v365 = vld [vmem:[%s4 + $0x4] sm:$0xf]
    %v366 = vld [vmem:[%s4 + $0x8] sm:$0xf]
    %v367 = vld [vmem:[%s4 + $0xc] sm:$0xf]
    %v368 = vld [vmem:[%s4 + $0x10] sm:$0xf]
    %v369 = vld [vmem:[%s4 + $0x14] sm:$0xf]
    %v370 = vld [vmem:[%s4 + $0x18] sm:$0xf]
    %v371 = vld [vmem:[%s4 + $0x1c] sm:$0xf]
    %s372 = scalar_lea.vmem %s3, 16
    %v373 = vld [vmem:[%s372] sm:$0xf]
    %v374 = vld [vmem:[%s372 + $0x4] sm:$0xf]
    %v375 = vld [vmem:[%s372 + $0x8] sm:$0xf]
    %v376 = vld [vmem:[%s372 + $0xc] sm:$0xf]
    %v381 = vunpack.c.l.b16 %v373
    %v382 = vunpack.c.l.b16 %v374
    %v383 = vunpack.c.l.b16 %v375
    %v384 = vunpack.c.l.b16 %v376
    %v385 = vpack.c.b16 %v382, %v381
    %v386 = vpack.c.b16 %v384, %v383
    %389 = vmatprep.subr.bf16.mxu0 0
    %390 = vmatpush1.bf16.msra.mxu0 %v289
    %391 = vmatprep.subr.bf16.mxu0 0
    %392 = vmatpush1.bf16.msra.mxu0 %v290
    %393 = vmatprep.subr.bf16.mxu0 0
    %394 = vmatpush1.bf16.msra.mxu0 %v291
    %395 = vmatprep.subr.bf16.mxu0 0
    %396 = vmatpush1.bf16.msra.mxu0 %v292
    %397 = vmatprep.subr.bf16.mxu0 0
    %398 = vmatpush1.bf16.msra.mxu0 %v293
    %399 = vmatprep.subr.bf16.mxu0 0
    %400 = vmatpush1.bf16.msra.mxu0 %v294
    %401 = vmatprep.subr.bf16.mxu0 0
    %402 = vmatpush1.bf16.msra.mxu0 %v295
    %403 = vmatprep.subr.bf16.mxu0 0
    %404 = vmatpush1.bf16.msra.mxu0 %v296
    %405 = vmatprep.subr.bf16.mxu0 0
    %406 = vmatpush1.bf16.msra.mxu0 0
    %407 = vmatprep.subr.bf16.mxu0 0
    %408 = vmatpush1.bf16.msra.mxu0 0
    %409 = vmatprep.subr.bf16.mxu0 0
    %410 = vmatpush1.bf16.msra.mxu0 0
    %411 = vmatprep.subr.bf16.mxu0 0
    %412 = vmatpush1.bf16.msra.mxu0 0
    %413 = vmatprep.subr.bf16.mxu0 0
    %414 = vmatpush1.bf16.msra.mxu0 0
    %415 = vmatprep.subr.bf16.mxu0 0
    %416 = vmatpush1.bf16.msra.mxu0 0
    %417 = vmatprep.subr.bf16.mxu0 0
    %418 = vmatpush1.bf16.msra.mxu0 0
    %419 = vmatprep.subr.bf16.mxu0 0
    %420 = vmatpush1.bf16.msra.mxu0 0
    %421 = vmatprep.mubr.bf16.mxu0 0
    %422 = vmatmul.mubr.bf16.gmra.mrb[0].mxu0 %v385
    %v423 = vpop.f32.mrb[0].mxu0
    %v424 = vadd.f32 0.0, %v423
    %v425 = vpop.f32.mrb[0].mxu0
    %v426 = vpop.f32.mrb[0].mxu0
    %v427 = vadd.f32 0.0, %v426
    %v428 = vpop.f32.mrb[0].mxu0
    %429 = vmatprep.mubr.bf16.mxu0 0
    %430 = vmatmul.mubr.bf16.gmra.mrb[0].mxu0 %v386
    %v431 = vpop.f32.mrb[0].mxu0
    %v432 = vadd.f32 0.0, %v431
    %v433 = vpop.f32.mrb[0].mxu0
    %v434 = vpop.f32.mrb[0].mxu0
    %v435 = vadd.f32 0.0, %v434
    %v436 = vpop.f32.mrb[0].mxu0
    %437 = vdwg.mxu0
    %v438 = vpack.c.bf16 %v427, %v424
    %v439 = vpack.c.bf16 %v435, %v432
    %s440 = scalar_lea.vmem %s4, 32
    %v441 = vld [vmem:[%s440] sm:$0xf]
    %v442 = vld [vmem:[%s440 + $0x4] sm:$0xf]
    %v443 = vld [vmem:[%s440 + $0x8] sm:$0xf]
    %v444 = vld [vmem:[%s440 + $0xc] sm:$0xf]
    %v445 = vld [vmem:[%s440 + $0x10] sm:$0xf]
    %v446 = vld [vmem:[%s440 + $0x14] sm:$0xf]
    %v447 = vld [vmem:[%s440 + $0x18] sm:$0xf]
    %v448 = vld [vmem:[%s440 + $0x1c] sm:$0xf]
    %v457 = vunpack.c.l.b16 %v441
    %v458 = vunpack.c.l.b16 %v442
    %v459 = vunpack.c.l.b16 %v443
    %v460 = vunpack.c.l.b16 %v444
    %v461 = vunpack.c.l.b16 %v445
    %v462 = vunpack.c.l.b16 %v446
    %v463 = vunpack.c.l.b16 %v447
    %v464 = vunpack.c.l.b16 %v448
    %v465 = vpack.c.b16 %v458, %v457
    %v466 = vpack.c.b16 %v460, %v459
    %v467 = vpack.c.b16 %v462, %v461
    %v468 = vpack.c.b16 %v464, %v463
    %vm473 = vcmask 523264
    %v475 = vsel %vm473, %v438, 0
    %v478 = vsel %vm473, %v439, 0
    %480 = vmatprep.subr.bf16.mxu0 0
    %481 = vmatpush1.bf16.msra.mxu0 %v465
    %482 = vmatprep.subr.bf16.mxu0 0
    %483 = vmatpush1.bf16.msra.mxu0 %v466
    %484 = vmatprep.subr.bf16.mxu0 0
    %485 = vmatpush1.bf16.msra.mxu0 %v467
    %486 = vmatprep.subr.bf16.mxu0 0
    %487 = vmatpush1.bf16.msra.mxu0 %v468
    %488 = vmatprep.subr.bf16.mxu0 0
    %489 = vmatpush1.bf16.msra.mxu0 0
    %490 = vmatprep.subr.bf16.mxu0 0
    %491 = vmatpush1.bf16.msra.mxu0 0
    %492 = vmatprep.subr.bf16.mxu0 0
    %493 = vmatpush1.bf16.msra.mxu0 0
    %494 = vmatprep.subr.bf16.mxu0 0
    %495 = vmatpush1.bf16.msra.mxu0 0
    %496 = vmatprep.subr.bf16.mxu0 0
    %497 = vmatpush1.bf16.msra.mxu0 0
    %498 = vmatprep.subr.bf16.mxu0 0
    %499 = vmatpush1.bf16.msra.mxu0 0
    %500 = vmatprep.subr.bf16.mxu0 0
    %501 = vmatpush1.bf16.msra.mxu0 0
    %502 = vmatprep.subr.bf16.mxu0 0
    %503 = vmatpush1.bf16.msra.mxu0 0
    %504 = vmatprep.subr.bf16.mxu0 0
    %505 = vmatpush1.bf16.msra.mxu0 0
    %506 = vmatprep.subr.bf16.mxu0 0
    %507 = vmatpush1.bf16.msra.mxu0 0
    %508 = vmatprep.subr.bf16.mxu0 0
    %509 = vmatpush1.bf16.msra.mxu0 0
    %510 = vmatprep.subr.bf16.mxu0 0
    %511 = vmatpush1.bf16.msra.mxu0 0
    %512 = vmatprep.mubr.bf16.mxu0 0
    %513 = vmatmul.mubr.bf16.gmra.mrb[0].mxu0 %v475
    %v514 = vpop.f32.mrb[0].mxu0
    %v515 = vadd.f32 0.0, %v514
    %v516 = vpop.f32.mrb[0].mxu0
    %v517 = vpop.f32.mrb[0].mxu0
    %v518 = vadd.f32 0.0, %v517
    %v519 = vpop.f32.mrb[0].mxu0
    %520 = vmatprep.mubr.bf16.mxu0 0
    %521 = vmatmul.mubr.bf16.gmra.mrb[0].mxu0 %v478
    %v522 = vpop.f32.mrb[0].mxu0
    %v523 = vadd.f32 0.0, %v522
    %v524 = vpop.f32.mrb[0].mxu0
    %v525 = vpop.f32.mrb[0].mxu0
    %v526 = vadd.f32 0.0, %v525
    %v527 = vpop.f32.mrb[0].mxu0
    %528 = vdwg.mxu0
    %v537 = vunpack.c.l.b16 %v364
    %v538 = vunpack.c.l.b16 %v365
    %v539 = vunpack.c.l.b16 %v366
    %v540 = vunpack.c.l.b16 %v367
    %v541 = vunpack.c.l.b16 %v368
    %v542 = vunpack.c.l.b16 %v369
    %v543 = vunpack.c.l.b16 %v370
    %v544 = vunpack.c.l.b16 %v371
    %v545 = vpack.c.b16 %v538, %v537
    %v546 = vpack.c.b16 %v540, %v539
    %v547 = vpack.c.b16 %v542, %v541
    %v548 = vpack.c.b16 %v544, %v543
    %v554 = vsel %vm473, %v362, 0
    %v557 = vsel %vm473, %v363, 0
    %559 = vmatprep.subr.bf16.mxu0 0
    %560 = vmatpush1.bf16.msra.mxu0 %v545
    %561 = vmatprep.subr.bf16.mxu0 0
    %562 = vmatpush1.bf16.msra.mxu0 %v546
    %563 = vmatprep.subr.bf16.mxu0 0
    %564 = vmatpush1.bf16.msra.mxu0 %v547
    %565 = vmatprep.subr.bf16.mxu0 0
    %566 = vmatpush1.bf16.msra.mxu0 %v548
    %567 = vmatprep.subr.bf16.mxu0 0
    %568 = vmatpush1.bf16.msra.mxu0 0
    %569 = vmatprep.subr.bf16.mxu0 0
    %570 = vmatpush1.bf16.msra.mxu0 0
    %571 = vmatprep.subr.bf16.mxu0 0
    %572 = vmatpush1.bf16.msra.mxu0 0
    %573 = vmatprep.subr.bf16.mxu0 0
    %574 = vmatpush1.bf16.msra.mxu0 0
    %575 = vmatprep.subr.bf16.mxu0 0
    %576 = vmatpush1.bf16.msra.mxu0 0
    %577 = vmatprep.subr.bf16.mxu0 0
    %578 = vmatpush1.bf16.msra.mxu0 0
    %579 = vmatprep.subr.bf16.mxu0 0
    %580 = vmatpush1.bf16.msra.mxu0 0
    %581 = vmatprep.subr.bf16.mxu0 0
    %582 = vmatpush1.bf16.msra.mxu0 0
    %583 = vmatprep.subr.bf16.mxu0 0
    %584 = vmatpush1.bf16.msra.mxu0 0
    %585 = vmatprep.subr.bf16.mxu0 0
    %586 = vmatpush1.bf16.msra.mxu0 0
    %587 = vmatprep.subr.bf16.mxu0 0
    %588 = vmatpush1.bf16.msra.mxu0 0
    %589 = vmatprep.subr.bf16.mxu0 0
    %590 = vmatpush1.bf16.msra.mxu0 0
    %591 = vmatprep.mubr.bf16.mxu0 0
    %592 = vmatmul.mubr.bf16.gmra.mrb[0].mxu0 %v554
    %v593 = vpop.f32.mrb[0].mxu0
    %v594 = vadd.f32 %v515, %v593
    %v595 = vpop.f32.mrb[0].mxu0
    %v596 = vpop.f32.mrb[0].mxu0
    %v597 = vadd.f32 %v518, %v596
    %v598 = vpop.f32.mrb[0].mxu0
    %599 = vmatprep.mubr.bf16.mxu0 0
    %600 = vmatmul.mubr.bf16.gmra.mrb[0].mxu0 %v557
    %v601 = vpop.f32.mrb[0].mxu0
    %v602 = vadd.f32 %v523, %v601
    %v603 = vpop.f32.mrb[0].mxu0
    %v604 = vpop.f32.mrb[0].mxu0
    %v605 = vadd.f32 %v526, %v604
    %v606 = vpop.f32.mrb[0].mxu0
    %607 = vdwg.mxu0
    %s608 = scalar_lea.vmem %s3, 32
    %v609 = vld [vmem:[%s608] sm:$0xf]
    %v610 = vld [vmem:[%s608 + $0x4] sm:$0xf]
    %v611 = vld [vmem:[%s608 + $0x8] sm:$0xf]
    %v612 = vld [vmem:[%s608 + $0xc] sm:$0xf]
    %v617 = vunpack.c.l.b16 %v609
    %v618 = vunpack.c.l.b16 %v610
    %v619 = vunpack.c.l.b16 %v611
    %v620 = vunpack.c.l.b16 %v612
    %v621 = vpack.c.b16 %v618, %v617
    %v622 = vpack.c.b16 %v620, %v619
    %625 = vmatprep.subr.bf16.mxu0 0
    %626 = vmatpush1.bf16.msra.mxu0 %v289
    %627 = vmatprep.subr.bf16.mxu0 0
    %628 = vmatpush1.bf16.msra.mxu0 %v290
    %629 = vmatprep.subr.bf16.mxu0 0
    %630 = vmatpush1.bf16.msra.mxu0 %v291
    %631 = vmatprep.subr.bf16.mxu0 0
    %632 = vmatpush1.bf16.msra.mxu0 %v292
    %633 = vmatprep.subr.bf16.mxu0 0
    %634 = vmatpush1.bf16.msra.mxu0 %v293
    %635 = vmatprep.subr.bf16.mxu0 0
    %636 = vmatpush1.bf16.msra.mxu0 %v294
    %637 = vmatprep.subr.bf16.mxu0 0
    %638 = vmatpush1.bf16.msra.mxu0 %v295
    %639 = vmatprep.subr.bf16.mxu0 0
    %640 = vmatpush1.bf16.msra.mxu0 %v296
    %641 = vmatprep.subr.bf16.mxu0 0
    %642 = vmatpush1.bf16.msra.mxu0 0
    %643 = vmatprep.subr.bf16.mxu0 0
    %644 = vmatpush1.bf16.msra.mxu0 0
    %645 = vmatprep.subr.bf16.mxu0 0
    %646 = vmatpush1.bf16.msra.mxu0 0
    %647 = vmatprep.subr.bf16.mxu0 0
    %648 = vmatpush1.bf16.msra.mxu0 0
    %649 = vmatprep.subr.bf16.mxu0 0
    %650 = vmatpush1.bf16.msra.mxu0 0
    %651 = vmatprep.subr.bf16.mxu0 0
    %652 = vmatpush1.bf16.msra.mxu0 0
    %653 = vmatprep.subr.bf16.mxu0 0
    %654 = vmatpush1.bf16.msra.mxu0 0
    %655 = vmatprep.subr.bf16.mxu0 0
    %656 = vmatpush1.bf16.msra.mxu0 0
    %657 = vmatprep.mubr.bf16.mxu0 0
    %658 = vmatmul.mubr.bf16.gmra.mrb[0].mxu0 %v621
    %v659 = vpop.f32.mrb[0].mxu0
    %v660 = vadd.f32 0.0, %v659
    %v661 = vpop.f32.mrb[0].mxu0
    %v662 = vpop.f32.mrb[0].mxu0
    %v663 = vadd.f32 0.0, %v662
    %v664 = vpop.f32.mrb[0].mxu0
    %665 = vmatprep.mubr.bf16.mxu0 0
    %666 = vmatmul.mubr.bf16.gmra.mrb[0].mxu0 %v622
    %v667 = vpop.f32.mrb[0].mxu0
    %v668 = vadd.f32 0.0, %v667
    %v669 = vpop.f32.mrb[0].mxu0
    %v670 = vpop.f32.mrb[0].mxu0
    %v671 = vadd.f32 0.0, %v670
    %v672 = vpop.f32.mrb[0].mxu0
    %673 = vdwg.mxu0
    %v674 = vpack.c.bf16 %v663, %v660
    %v675 = vpack.c.bf16 %v671, %v668
    %s676 = scalar_lea.vmem %s4, 64
    %v677 = vld [vmem:[%s676] sm:$0xf]
    %v678 = vld [vmem:[%s676 + $0x4] sm:$0xf]
    %v679 = vld [vmem:[%s676 + $0x8] sm:$0xf]
    %v680 = vld [vmem:[%s676 + $0xc] sm:$0xf]
    %v681 = vld [vmem:[%s676 + $0x10] sm:$0xf]
    %v682 = vld [vmem:[%s676 + $0x14] sm:$0xf]
    %v683 = vld [vmem:[%s676 + $0x18] sm:$0xf]
    %v684 = vld [vmem:[%s676 + $0x1c] sm:$0xf]
    %v693 = vunpack.c.l.b16 %v677
    %v694 = vunpack.c.l.b16 %v678
    %v695 = vunpack.c.l.b16 %v679
    %v696 = vunpack.c.l.b16 %v680
    %v697 = vunpack.c.l.b16 %v681
    %v698 = vunpack.c.l.b16 %v682
    %v699 = vunpack.c.l.b16 %v683
    %v700 = vunpack.c.l.b16 %v684
    %v701 = vpack.c.b16 %v694, %v693
    %v702 = vpack.c.b16 %v696, %v695
    %v703 = vpack.c.b16 %v698, %v697
    %v704 = vpack.c.b16 %v700, %v699
    %v710 = vsel %vm473, %v674, 0
    %v713 = vsel %vm473, %v675, 0
    %715 = vmatprep.subr.bf16.mxu0 0
    %716 = vmatpush1.bf16.msra.mxu0 %v701
    %717 = vmatprep.subr.bf16.mxu0 0
    %718 = vmatpush1.bf16.msra.mxu0 %v702
    %719 = vmatprep.subr.bf16.mxu0 0
    %720 = vmatpush1.bf16.msra.mxu0 %v703
    %721 = vmatprep.subr.bf16.mxu0 0
    %722 = vmatpush1.bf16.msra.mxu0 %v704
    %723 = vmatprep.subr.bf16.mxu0 0
    %724 = vmatpush1.bf16.msra.mxu0 0
    %725 = vmatprep.subr.bf16.mxu0 0
    %726 = vmatpush1.bf16.msra.mxu0 0
    %727 = vmatprep.subr.bf16.mxu0 0
    %728 = vmatpush1.bf16.msra.mxu0 0
    %729 = vmatprep.subr.bf16.mxu0 0
    %730 = vmatpush1.bf16.msra.mxu0 0
    %731 = vmatprep.subr.bf16.mxu0 0
    %732 = vmatpush1.bf16.msra.mxu0 0
    %733 = vmatprep.subr.bf16.mxu0 0
    %734 = vmatpush1.bf16.msra.mxu0 0
    %735 = vmatprep.subr.bf16.mxu0 0
    %736 = vmatpush1.bf16.msra.mxu0 0
    %737 = vmatprep.subr.bf16.mxu0 0
    %738 = vmatpush1.bf16.msra.mxu0 0
    %739 = vmatprep.subr.bf16.mxu0 0
    %740 = vmatpush1.bf16.msra.mxu0 0
    %741 = vmatprep.subr.bf16.mxu0 0
    %742 = vmatpush1.bf16.msra.mxu0 0
    %743 = vmatprep.subr.bf16.mxu0 0
    %744 = vmatpush1.bf16.msra.mxu0 0
    %745 = vmatprep.subr.bf16.mxu0 0
    %746 = vmatpush1.bf16.msra.mxu0 0
    %747 = vmatprep.mubr.bf16.mxu0 0
    %748 = vmatmul.mubr.bf16.gmra.mrb[0].mxu0 %v710
    %v749 = vpop.f32.mrb[0].mxu0
    %v750 = vadd.f32 0.0, %v749
    %v751 = vpop.f32.mrb[0].mxu0
    %v752 = vpop.f32.mrb[0].mxu0
    %v753 = vadd.f32 0.0, %v752
    %v754 = vpop.f32.mrb[0].mxu0
    %755 = vmatprep.mubr.bf16.mxu0 0
    %756 = vmatmul.mubr.bf16.gmra.mrb[0].mxu0 %v713
    %v757 = vpop.f32.mrb[0].mxu0
    %v758 = vadd.f32 0.0, %v757
    %v759 = vpop.f32.mrb[0].mxu0
    %v760 = vpop.f32.mrb[0].mxu0
    %v761 = vadd.f32 0.0, %v760
    %v762 = vpop.f32.mrb[0].mxu0
    %763 = vdwg.mxu0
    %v764 = vadd.f32 %v594, %v750
    %v765 = vadd.f32 %v597, %v753
    %v766 = vadd.f32 %v602, %v758
    %v767 = vadd.f32 %v605, %v761
    %s768 = scalar_lea.vmem %s3, 48
    %v769 = vld [vmem:[%s768] sm:$0xf]
    %v770 = vld [vmem:[%s768 + $0x4] sm:$0xf]
    %v771 = vld [vmem:[%s768 + $0x8] sm:$0xf]
    %v772 = vld [vmem:[%s768 + $0xc] sm:$0xf]
    %v777 = vunpack.c.l.b16 %v769
    %v778 = vunpack.c.l.b16 %v770
    %v779 = vunpack.c.l.b16 %v771
    %v780 = vunpack.c.l.b16 %v772
    %v781 = vpack.c.b16 %v778, %v777
    %v782 = vpack.c.b16 %v780, %v779
    %785 = vmatprep.subr.bf16.mxu0 0
    %786 = vmatpush1.bf16.msra.mxu0 %v289
    %787 = vmatprep.subr.bf16.mxu0 0
    %788 = vmatpush1.bf16.msra.mxu0 %v290
    %789 = vmatprep.subr.bf16.mxu0 0
    %790 = vmatpush1.bf16.msra.mxu0 %v291
    %791 = vmatprep.subr.bf16.mxu0 0
    %792 = vmatpush1.bf16.msra.mxu0 %v292
    %793 = vmatprep.subr.bf16.mxu0 0
    %794 = vmatpush1.bf16.msra.mxu0 %v293
    %795 = vmatprep.subr.bf16.mxu0 0
    %796 = vmatpush1.bf16.msra.mxu0 %v294
    %797 = vmatprep.subr.bf16.mxu0 0
    %798 = vmatpush1.bf16.msra.mxu0 %v295
    %799 = vmatprep.subr.bf16.mxu0 0
    %800 = vmatpush1.bf16.msra.mxu0 %v296
    %801 = vmatprep.subr.bf16.mxu0 0
    %802 = vmatpush1.bf16.msra.mxu0 0
    %803 = vmatprep.subr.bf16.mxu0 0
    %804 = vmatpush1.bf16.msra.mxu0 0
    %805 = vmatprep.subr.bf16.mxu0 0
    %806 = vmatpush1.bf16.msra.mxu0 0
    %807 = vmatprep.subr.bf16.mxu0 0
    %808 = vmatpush1.bf16.msra.mxu0 0
    %809 = vmatprep.subr.bf16.mxu0 0
    %810 = vmatpush1.bf16.msra.mxu0 0
    %811 = vmatprep.subr.bf16.mxu0 0
    %812 = vmatpush1.bf16.msra.mxu0 0
    %813 = vmatprep.subr.bf16.mxu0 0
    %814 = vmatpush1.bf16.msra.mxu0 0
    %815 = vmatprep.subr.bf16.mxu0 0
    %816 = vmatpush1.bf16.msra.mxu0 0
    %817 = vmatprep.mubr.bf16.mxu0 0
    %818 = vmatmul.mubr.bf16.gmra.mrb[0].mxu0 %v781
    %v819 = vpop.f32.mrb[0].mxu0
    %v820 = vadd.f32 0.0, %v819
    %v821 = vpop.f32.mrb[0].mxu0
    %v822 = vpop.f32.mrb[0].mxu0
    %v823 = vadd.f32 0.0, %v822
    %v824 = vpop.f32.mrb[0].mxu0
    %825 = vmatprep.mubr.bf16.mxu0 0
    %826 = vmatmul.mubr.bf16.gmra.mrb[0].mxu0 %v782
    %v827 = vpop.f32.mrb[0].mxu0
    %v828 = vadd.f32 0.0, %v827
    %v829 = vpop.f32.mrb[0].mxu0
    %v830 = vpop.f32.mrb[0].mxu0
    %v831 = vadd.f32 0.0, %v830
    %v832 = vpop.f32.mrb[0].mxu0
    %833 = vdwg.mxu0
    %v834 = vpack.c.bf16 %v823, %v820
    %v835 = vpack.c.bf16 %v831, %v828
    %s836 = scalar_lea.vmem %s4, 96
    %v837 = vld [vmem:[%s836] sm:$0xf]
    %v838 = vld [vmem:[%s836 + $0x4] sm:$0xf]
    %v839 = vld [vmem:[%s836 + $0x8] sm:$0xf]
    %v840 = vld [vmem:[%s836 + $0xc] sm:$0xf]
    %v841 = vld [vmem:[%s836 + $0x10] sm:$0xf]
    %v842 = vld [vmem:[%s836 + $0x14] sm:$0xf]
    %v843 = vld [vmem:[%s836 + $0x18] sm:$0xf]
    %v844 = vld [vmem:[%s836 + $0x1c] sm:$0xf]
    %v853 = vunpack.c.l.b16 %v837
    %v854 = vunpack.c.l.b16 %v838
    %v855 = vunpack.c.l.b16 %v839
    %v856 = vunpack.c.l.b16 %v840
    %v857 = vunpack.c.l.b16 %v841
    %v858 = vunpack.c.l.b16 %v842
    %v859 = vunpack.c.l.b16 %v843
    %v860 = vunpack.c.l.b16 %v844
    %v861 = vpack.c.b16 %v854, %v853
    %v862 = vpack.c.b16 %v856, %v855
    %v863 = vpack.c.b16 %v858, %v857
    %v864 = vpack.c.b16 %v860, %v859
    %v870 = vsel %vm473, %v834, 0
    %v873 = vsel %vm473, %v835, 0
    %875 = vmatprep.subr.bf16.mxu0 0
    %876 = vmatpush1.bf16.msra.mxu0 %v861
    %877 = vmatprep.subr.bf16.mxu0 0
    %878 = vmatpush1.bf16.msra.mxu0 %v862
    %879 = vmatprep.subr.bf16.mxu0 0
    %880 = vmatpush1.bf16.msra.mxu0 %v863
    %881 = vmatprep.subr.bf16.mxu0 0
    %882 = vmatpush1.bf16.msra.mxu0 %v864
    %883 = vmatprep.subr.bf16.mxu0 0
    %884 = vmatpush1.bf16.msra.mxu0 0
    %885 = vmatprep.subr.bf16.mxu0 0
    %886 = vmatpush1.bf16.msra.mxu0 0
    %887 = vmatprep.subr.bf16.mxu0 0
    %888 = vmatpush1.bf16.msra.mxu0 0
    %889 = vmatprep.subr.bf16.mxu0 0
    %890 = vmatpush1.bf16.msra.mxu0 0
    %891 = vmatprep.subr.bf16.mxu0 0
    %892 = vmatpush1.bf16.msra.mxu0 0
    %893 = vmatprep.subr.bf16.mxu0 0
    %894 = vmatpush1.bf16.msra.mxu0 0
    %895 = vmatprep.subr.bf16.mxu0 0
    %896 = vmatpush1.bf16.msra.mxu0 0
    %897 = vmatprep.subr.bf16.mxu0 0
    %898 = vmatpush1.bf16.msra.mxu0 0
    %899 = vmatprep.subr.bf16.mxu0 0
    %900 = vmatpush1.bf16.msra.mxu0 0
    %901 = vmatprep.subr.bf16.mxu0 0
    %902 = vmatpush1.bf16.msra.mxu0 0
    %903 = vmatprep.subr.bf16.mxu0 0
    %904 = vmatpush1.bf16.msra.mxu0 0
    %905 = vmatprep.subr.bf16.mxu0 0
    %906 = vmatpush1.bf16.msra.mxu0 0
    %907 = vmatprep.mubr.bf16.mxu0 0
    %908 = vmatmul.mubr.bf16.gmra.mrb[0].mxu0 %v870
    %v909 = vpop.f32.mrb[0].mxu0
    %v910 = vadd.f32 0.0, %v909
    %v911 = vpop.f32.mrb[0].mxu0
    %v912 = vpop.f32.mrb[0].mxu0
    %v913 = vadd.f32 0.0, %v912
    %v914 = vpop.f32.mrb[0].mxu0
    %915 = vmatprep.mubr.bf16.mxu0 0
    %916 = vmatmul.mubr.bf16.gmra.mrb[0].mxu0 %v873
    %v917 = vpop.f32.mrb[0].mxu0
    %v918 = vadd.f32 0.0, %v917
    %v919 = vpop.f32.mrb[0].mxu0
    %v920 = vpop.f32.mrb[0].mxu0
    %v921 = vadd.f32 0.0, %v920
    %v922 = vpop.f32.mrb[0].mxu0
    %923 = vdwg.mxu0
    %v924 = vadd.f32 %v764, %v910
    %v925 = vadd.f32 %v765, %v913
    %v926 = vadd.f32 %v766, %v918
    %v927 = vadd.f32 %v767, %v921
    %s928 = scalar_lea.vmem %s3, 64
    %v929 = vld [vmem:[%s928] sm:$0xf]
    %v930 = vld [vmem:[%s928 + $0x4] sm:$0xf]
    %v931 = vld [vmem:[%s928 + $0x8] sm:$0xf]
    %v932 = vld [vmem:[%s928 + $0xc] sm:$0xf]
    %v937 = vunpack.c.l.b16 %v929
    %v938 = vunpack.c.l.b16 %v930
    %v939 = vunpack.c.l.b16 %v931
    %v940 = vunpack.c.l.b16 %v932
    %v941 = vpack.c.b16 %v938, %v937
    %v942 = vpack.c.b16 %v940, %v939
    %945 = vmatprep.subr.bf16.mxu0 0
    %946 = vmatpush1.bf16.msra.mxu0 %v289
    %947 = vmatprep.subr.bf16.mxu0 0
    %948 = vmatpush1.bf16.msra.mxu0 %v290
    %949 = vmatprep.subr.bf16.mxu0 0
    %950 = vmatpush1.bf16.msra.mxu0 %v291
    %951 = vmatprep.subr.bf16.mxu0 0
    %952 = vmatpush1.bf16.msra.mxu0 %v292
    %953 = vmatprep.subr.bf16.mxu0 0
    %954 = vmatpush1.bf16.msra.mxu0 %v293
    %955 = vmatprep.subr.bf16.mxu0 0
    %956 = vmatpush1.bf16.msra.mxu0 %v294
    %957 = vmatprep.subr.bf16.mxu0 0
    %958 = vmatpush1.bf16.msra.mxu0 %v295
    %959 = vmatprep.subr.bf16.mxu0 0
    %960 = vmatpush1.bf16.msra.mxu0 %v296
    %961 = vmatprep.subr.bf16.mxu0 0
    %962 = vmatpush1.bf16.msra.mxu0 0
    %963 = vmatprep.subr.bf16.mxu0 0
    %964 = vmatpush1.bf16.msra.mxu0 0
    %965 = vmatprep.subr.bf16.mxu0 0
    %966 = vmatpush1.bf16.msra.mxu0 0
    %967 = vmatprep.subr.bf16.mxu0 0
    %968 = vmatpush1.bf16.msra.mxu0 0
    %969 = vmatprep.subr.bf16.mxu0 0
    %970 = vmatpush1.bf16.msra.mxu0 0
    %971 = vmatprep.subr.bf16.mxu0 0
    %972 = vmatpush1.bf16.msra.mxu0 0
    %973 = vmatprep.subr.bf16.mxu0 0
    %974 = vmatpush1.bf16.msra.mxu0 0
    %975 = vmatprep.subr.bf16.mxu0 0
    %976 = vmatpush1.bf16.msra.mxu0 0
    %977 = vmatprep.mubr.bf16.mxu0 0
    %978 = vmatmul.mubr.bf16.gmra.mrb[0].mxu0 %v941
    %v979 = vpop.f32.mrb[0].mxu0
    %v980 = vadd.f32 0.0, %v979
    %v981 = vpop.f32.mrb[0].mxu0
    %v982 = vpop.f32.mrb[0].mxu0
    %v983 = vadd.f32 0.0, %v982
    %v984 = vpop.f32.mrb[0].mxu0
    %985 = vmatprep.mubr.bf16.mxu0 0
    %986 = vmatmul.mubr.bf16.gmra.mrb[0].mxu0 %v942
    %v987 = vpop.f32.mrb[0].mxu0
    %v988 = vadd.f32 0.0, %v987
    %v989 = vpop.f32.mrb[0].mxu0
    %v990 = vpop.f32.mrb[0].mxu0
    %v991 = vadd.f32 0.0, %v990
    %v992 = vpop.f32.mrb[0].mxu0
    %993 = vdwg.mxu0
    %v994 = vpack.c.bf16 %v983, %v980
    %v995 = vpack.c.bf16 %v991, %v988
    %s996 = scalar_lea.vmem %s4, 128
    %v997 = vld [vmem:[%s996] sm:$0xf]
    %v998 = vld [vmem:[%s996 + $0x4] sm:$0xf]
    %v999 = vld [vmem:[%s996 + $0x8] sm:$0xf]
    %v1000 = vld [vmem:[%s996 + $0xc] sm:$0xf]
    %v1001 = vld [vmem:[%s996 + $0x10] sm:$0xf]
    %v1002 = vld [vmem:[%s996 + $0x14] sm:$0xf]
    %v1003 = vld [vmem:[%s996 + $0x18] sm:$0xf]
    %v1004 = vld [vmem:[%s996 + $0x1c] sm:$0xf]
    %v1013 = vunpack.c.l.b16 %v997
    %v1014 = vunpack.c.l.b16 %v998
    %v1015 = vunpack.c.l.b16 %v999
    %v1016 = vunpack.c.l.b16 %v1000
    %v1017 = vunpack.c.l.b16 %v1001
    %v1018 = vunpack.c.l.b16 %v1002
    %v1019 = vunpack.c.l.b16 %v1003
    %v1020 = vunpack.c.l.b16 %v1004
    %v1021 = vpack.c.b16 %v1014, %v1013
    %v1022 = vpack.c.b16 %v1016, %v1015
    %v1023 = vpack.c.b16 %v1018, %v1017
    %v1024 = vpack.c.b16 %v1020, %v1019
    %v1030 = vsel %vm473, %v994, 0
    %v1033 = vsel %vm473, %v995, 0
    %1035 = vmatprep.subr.bf16.mxu0 0
    %1036 = vmatpush1.bf16.msra.mxu0 %v1021
    %1037 = vmatprep.subr.bf16.mxu0 0
    %1038 = vmatpush1.bf16.msra.mxu0 %v1022
    %1039 = vmatprep.subr.bf16.mxu0 0
    %1040 = vmatpush1.bf16.msra.mxu0 %v1023
    %1041 = vmatprep.subr.bf16.mxu0 0
    %1042 = vmatpush1.bf16.msra.mxu0 %v1024
    %1043 = vmatprep.subr.bf16.mxu0 0
    %1044 = vmatpush1.bf16.msra.mxu0 0
    %1045 = vmatprep.subr.bf16.mxu0 0
    %1046 = vmatpush1.bf16.msra.mxu0 0
    %1047 = vmatprep.subr.bf16.mxu0 0
    %1048 = vmatpush1.bf16.msra.mxu0 0
    %1049 = vmatprep.subr.bf16.mxu0 0
    %1050 = vmatpush1.bf16.msra.mxu0 0
    %1051 = vmatprep.subr.bf16.mxu0 0
    %1052 = vmatpush1.bf16.msra.mxu0 0
    %1053 = vmatprep.subr.bf16.mxu0 0
    %1054 = vmatpush1.bf16.msra.mxu0 0
    %1055 = vmatprep.subr.bf16.mxu0 0
    %1056 = vmatpush1.bf16.msra.mxu0 0
    %1057 = vmatprep.subr.bf16.mxu0 0
    %1058 = vmatpush1.bf16.msra.mxu0 0
    %1059 = vmatprep.subr.bf16.mxu0 0
    %1060 = vmatpush1.bf16.msra.mxu0 0
    %1061 = vmatprep.subr.bf16.mxu0 0
    %1062 = vmatpush1.bf16.msra.mxu0 0
    %1063 = vmatprep.subr.bf16.mxu0 0
    %1064 = vmatpush1.bf16.msra.mxu0 0
    %1065 = vmatprep.subr.bf16.mxu0 0
    %1066 = vmatpush1.bf16.msra.mxu0 0
    %1067 = vmatprep.mubr.bf16.mxu0 0
    %1068 = vmatmul.mubr.bf16.gmra.mrb[0].mxu0 %v1030
    %v1069 = vpop.f32.mrb[0].mxu0
    %v1070 = vadd.f32 0.0, %v1069
    %v1071 = vpop.f32.mrb[0].mxu0
    %v1072 = vpop.f32.mrb[0].mxu0
    %v1073 = vadd.f32 0.0, %v1072
    %v1074 = vpop.f32.mrb[0].mxu0
    %1075 = vmatprep.mubr.bf16.mxu0 0
    %1076 = vmatmul.mubr.bf16.gmra.mrb[0].mxu0 %v1033
    %v1077 = vpop.f32.mrb[0].mxu0
    %v1078 = vadd.f32 0.0, %v1077
    %v1079 = vpop.f32.mrb[0].mxu0
    %v1080 = vpop.f32.mrb[0].mxu0
    %v1081 = vadd.f32 0.0, %v1080
    %v1082 = vpop.f32.mrb[0].mxu0
    %1083 = vdwg.mxu0
    %v1084 = vadd.f32 %v924, %v1070
    %v1085 = vadd.f32 %v925, %v1073
    %v1086 = vadd.f32 %v926, %v1078
    %v1087 = vadd.f32 %v927, %v1081
    %s1088 = scalar_lea.vmem %s3, 80
    %v1089 = vld [vmem:[%s1088] sm:$0xf]
    %v1090 = vld [vmem:[%s1088 + $0x4] sm:$0xf]
    %v1091 = vld [vmem:[%s1088 + $0x8] sm:$0xf]
    %v1092 = vld [vmem:[%s1088 + $0xc] sm:$0xf]
    %v1097 = vunpack.c.l.b16 %v1089
    %v1098 = vunpack.c.l.b16 %v1090
    %v1099 = vunpack.c.l.b16 %v1091
    %v1100 = vunpack.c.l.b16 %v1092
    %v1101 = vpack.c.b16 %v1098, %v1097
    %v1102 = vpack.c.b16 %v1100, %v1099
    %1105 = vmatprep.subr.bf16.mxu0 0
    %1106 = vmatpush1.bf16.msra.mxu0 %v289
    %1107 = vmatprep.subr.bf16.mxu0 0
    %1108 = vmatpush1.bf16.msra.mxu0 %v290
    %1109 = vmatprep.subr.bf16.mxu0 0
    %1110 = vmatpush1.bf16.msra.mxu0 %v291
    %1111 = vmatprep.subr.bf16.mxu0 0
    %1112 = vmatpush1.bf16.msra.mxu0 %v292
    %1113 = vmatprep.subr.bf16.mxu0 0
    %1114 = vmatpush1.bf16.msra.mxu0 %v293
    %1115 = vmatprep.subr.bf16.mxu0 0
    %1116 = vmatpush1.bf16.msra.mxu0 %v294
    %1117 = vmatprep.subr.bf16.mxu0 0
    %1118 = vmatpush1.bf16.msra.mxu0 %v295
    %1119 = vmatprep.subr.bf16.mxu0 0
    %1120 = vmatpush1.bf16.msra.mxu0 %v296
    %1121 = vmatprep.subr.bf16.mxu0 0
    %1122 = vmatpush1.bf16.msra.mxu0 0
    %1123 = vmatprep.subr.bf16.mxu0 0
    %1124 = vmatpush1.bf16.msra.mxu0 0
    %1125 = vmatprep.subr.bf16.mxu0 0
    %1126 = vmatpush1.bf16.msra.mxu0 0
    %1127 = vmatprep.subr.bf16.mxu0 0
    %1128 = vmatpush1.bf16.msra.mxu0 0
    %1129 = vmatprep.subr.bf16.mxu0 0
    %1130 = vmatpush1.bf16.msra.mxu0 0
    %1131 = vmatprep.subr.bf16.mxu0 0
    %1132 = vmatpush1.bf16.msra.mxu0 0
    %1133 = vmatprep.subr.bf16.mxu0 0
    %1134 = vmatpush1.bf16.msra.mxu0 0
    %1135 = vmatprep.subr.bf16.mxu0 0
    %1136 = vmatpush1.bf16.msra.mxu0 0
    %1137 = vmatprep.mubr.bf16.mxu0 0
    %1138 = vmatmul.mubr.bf16.gmra.mrb[0].mxu0 %v1101
    %v1139 = vpop.f32.mrb[0].mxu0
    %v1140 = vadd.f32 0.0, %v1139
    %v1141 = vpop.f32.mrb[0].mxu0
    %v1142 = vpop.f32.mrb[0].mxu0
    %v1143 = vadd.f32 0.0, %v1142
    %v1144 = vpop.f32.mrb[0].mxu0
    %1145 = vmatprep.mubr.bf16.mxu0 0
    %1146 = vmatmul.mubr.bf16.gmra.mrb[0].mxu0 %v1102
    %v1147 = vpop.f32.mrb[0].mxu0
    %v1148 = vadd.f32 0.0, %v1147
    %v1149 = vpop.f32.mrb[0].mxu0
    %v1150 = vpop.f32.mrb[0].mxu0
    %v1151 = vadd.f32 0.0, %v1150
    %v1152 = vpop.f32.mrb[0].mxu0
    %1153 = vdwg.mxu0
    %v1154 = vpack.c.bf16 %v1143, %v1140
    %v1155 = vpack.c.bf16 %v1151, %v1148
    %s1156 = scalar_lea.vmem %s4, 160
    %v1157 = vld [vmem:[%s1156] sm:$0xf]
    %v1158 = vld [vmem:[%s1156 + $0x4] sm:$0xf]
    %v1159 = vld [vmem:[%s1156 + $0x8] sm:$0xf]
    %v1160 = vld [vmem:[%s1156 + $0xc] sm:$0xf]
    %v1161 = vld [vmem:[%s1156 + $0x10] sm:$0xf]
    %v1162 = vld [vmem:[%s1156 + $0x14] sm:$0xf]
    %v1163 = vld [vmem:[%s1156 + $0x18] sm:$0xf]
    %v1164 = vld [vmem:[%s1156 + $0x1c] sm:$0xf]
    %v1173 = vunpack.c.l.b16 %v1157
    %v1174 = vunpack.c.l.b16 %v1158
    %v1175 = vunpack.c.l.b16 %v1159
    %v1176 = vunpack.c.l.b16 %v1160
    %v1177 = vunpack.c.l.b16 %v1161
    %v1178 = vunpack.c.l.b16 %v1162
    %v1179 = vunpack.c.l.b16 %v1163
    %v1180 = vunpack.c.l.b16 %v1164
    %v1181 = vpack.c.b16 %v1174, %v1173
    %v1182 = vpack.c.b16 %v1176, %v1175
    %v1183 = vpack.c.b16 %v1178, %v1177
    %v1184 = vpack.c.b16 %v1180, %v1179
    %v1190 = vsel %vm473, %v1154, 0
    %v1193 = vsel %vm473, %v1155, 0
    %1195 = vmatprep.subr.bf16.mxu0 0
    %1196 = vmatpush1.bf16.msra.mxu0 %v1181
    %1197 = vmatprep.subr.bf16.mxu0 0
    %1198 = vmatpush1.bf16.msra.mxu0 %v1182
    %1199 = vmatprep.subr.bf16.mxu0 0
    %1200 = vmatpush1.bf16.msra.mxu0 %v1183
    %1201 = vmatprep.subr.bf16.mxu0 0
    %1202 = vmatpush1.bf16.msra.mxu0 %v1184
    %1203 = vmatprep.subr.bf16.mxu0 0
    %1204 = vmatpush1.bf16.msra.mxu0 0
    %1205 = vmatprep.subr.bf16.mxu0 0
    %1206 = vmatpush1.bf16.msra.mxu0 0
    %1207 = vmatprep.subr.bf16.mxu0 0
    %1208 = vmatpush1.bf16.msra.mxu0 0
    %1209 = vmatprep.subr.bf16.mxu0 0
    %1210 = vmatpush1.bf16.msra.mxu0 0
    %1211 = vmatprep.subr.bf16.mxu0 0
    %1212 = vmatpush1.bf16.msra.mxu0 0
    %1213 = vmatprep.subr.bf16.mxu0 0
    %1214 = vmatpush1.bf16.msra.mxu0 0
    %1215 = vmatprep.subr.bf16.mxu0 0
    %1216 = vmatpush1.bf16.msra.mxu0 0
    %1217 = vmatprep.subr.bf16.mxu0 0
    %1218 = vmatpush1.bf16.msra.mxu0 0
    %1219 = vmatprep.subr.bf16.mxu0 0
    %1220 = vmatpush1.bf16.msra.mxu0 0
    %1221 = vmatprep.subr.bf16.mxu0 0
    %1222 = vmatpush1.bf16.msra.mxu0 0
    %1223 = vmatprep.subr.bf16.mxu0 0
    %1224 = vmatpush1.bf16.msra.mxu0 0
    %1225 = vmatprep.subr.bf16.mxu0 0
    %1226 = vmatpush1.bf16.msra.mxu0 0
    %1227 = vmatprep.mubr.bf16.mxu0 0
    %1228 = vmatmul.mubr.bf16.gmra.mrb[0].mxu0 %v1190
    %v1229 = vpop.f32.mrb[0].mxu0
    %v1230 = vadd.f32 0.0, %v1229
    %v1231 = vpop.f32.mrb[0].mxu0
    %v1232 = vpop.f32.mrb[0].mxu0
    %v1233 = vadd.f32 0.0, %v1232
    %v1234 = vpop.f32.mrb[0].mxu0
    %1235 = vmatprep.mubr.bf16.mxu0 0
    %1236 = vmatmul.mubr.bf16.gmra.mrb[0].mxu0 %v1193
    %v1237 = vpop.f32.mrb[0].mxu0
    %v1238 = vadd.f32 0.0, %v1237
    %v1239 = vpop.f32.mrb[0].mxu0
    %v1240 = vpop.f32.mrb[0].mxu0
    %v1241 = vadd.f32 0.0, %v1240
    %v1242 = vpop.f32.mrb[0].mxu0
    %1243 = vdwg.mxu0
    %v1244 = vadd.f32 %v1084, %v1230
    %v1245 = vadd.f32 %v1085, %v1233
    %v1246 = vadd.f32 %v1086, %v1238
    %v1247 = vadd.f32 %v1087, %v1241
    %s1248 = scalar_lea.vmem %s3, 96
    %v1249 = vld [vmem:[%s1248] sm:$0xf]
    %v1250 = vld [vmem:[%s1248 + $0x4] sm:$0xf]
    %v1251 = vld [vmem:[%s1248 + $0x8] sm:$0xf]
    %v1252 = vld [vmem:[%s1248 + $0xc] sm:$0xf]
    %v1257 = vunpack.c.l.b16 %v1249
    %v1258 = vunpack.c.l.b16 %v1250
    %v1259 = vunpack.c.l.b16 %v1251
    %v1260 = vunpack.c.l.b16 %v1252
    %v1261 = vpack.c.b16 %v1258, %v1257
    %v1262 = vpack.c.b16 %v1260, %v1259
    %1265 = vmatprep.subr.bf16.mxu0 0
    %1266 = vmatpush1.bf16.msra.mxu0 %v289
    %1267 = vmatprep.subr.bf16.mxu0 0
    %1268 = vmatpush1.bf16.msra.mxu0 %v290
    %1269 = vmatprep.subr.bf16.mxu0 0
    %1270 = vmatpush1.bf16.msra.mxu0 %v291
    %1271 = vmatprep.subr.bf16.mxu0 0
    %1272 = vmatpush1.bf16.msra.mxu0 %v292
    %1273 = vmatprep.subr.bf16.mxu0 0
    %1274 = vmatpush1.bf16.msra.mxu0 %v293
    %1275 = vmatprep.subr.bf16.mxu0 0
    %1276 = vmatpush1.bf16.msra.mxu0 %v294
    %1277 = vmatprep.subr.bf16.mxu0 0
    %1278 = vmatpush1.bf16.msra.mxu0 %v295
    %1279 = vmatprep.subr.bf16.mxu0 0
    %1280 = vmatpush1.bf16.msra.mxu0 %v296
    %1281 = vmatprep.subr.bf16.mxu0 0
    %1282 = vmatpush1.bf16.msra.mxu0 0
    %1283 = vmatprep.subr.bf16.mxu0 0
    %1284 = vmatpush1.bf16.msra.mxu0 0
    %1285 = vmatprep.subr.bf16.mxu0 0
    %1286 = vmatpush1.bf16.msra.mxu0 0
    %1287 = vmatprep.subr.bf16.mxu0 0
    %1288 = vmatpush1.bf16.msra.mxu0 0
    %1289 = vmatprep.subr.bf16.mxu0 0
    %1290 = vmatpush1.bf16.msra.mxu0 0
    %1291 = vmatprep.subr.bf16.mxu0 0
    %1292 = vmatpush1.bf16.msra.mxu0 0
    %1293 = vmatprep.subr.bf16.mxu0 0
    %1294 = vmatpush1.bf16.msra.mxu0 0
    %1295 = vmatprep.subr.bf16.mxu0 0
    %1296 = vmatpush1.bf16.msra.mxu0 0
    %1297 = vmatprep.mubr.bf16.mxu0 0
    %1298 = vmatmul.mubr.bf16.gmra.mrb[0].mxu0 %v1261
    %v1299 = vpop.f32.mrb[0].mxu0
    %v1300 = vadd.f32 0.0, %v1299
    %v1301 = vpop.f32.mrb[0].mxu0
    %v1302 = vpop.f32.mrb[0].mxu0
    %v1303 = vadd.f32 0.0, %v1302
    %v1304 = vpop.f32.mrb[0].mxu0
    %1305 = vmatprep.mubr.bf16.mxu0 0
    %1306 = vmatmul.mubr.bf16.gmra.mrb[0].mxu0 %v1262
    %v1307 = vpop.f32.mrb[0].mxu0
    %v1308 = vadd.f32 0.0, %v1307
    %v1309 = vpop.f32.mrb[0].mxu0
    %v1310 = vpop.f32.mrb[0].mxu0
    %v1311 = vadd.f32 0.0, %v1310
    %v1312 = vpop.f32.mrb[0].mxu0
    %1313 = vdwg.mxu0
    %v1314 = vpack.c.bf16 %v1303, %v1300
    %v1315 = vpack.c.bf16 %v1311, %v1308
    %s1316 = scalar_lea.vmem %s4, 192
    %v1317 = vld [vmem:[%s1316] sm:$0xf]
    %v1318 = vld [vmem:[%s1316 + $0x4] sm:$0xf]
    %v1319 = vld [vmem:[%s1316 + $0x8] sm:$0xf]
    %v1320 = vld [vmem:[%s1316 + $0xc] sm:$0xf]
    %v1321 = vld [vmem:[%s1316 + $0x10] sm:$0xf]
    %v1322 = vld [vmem:[%s1316 + $0x14] sm:$0xf]
    %v1323 = vld [vmem:[%s1316 + $0x18] sm:$0xf]
    %v1324 = vld [vmem:[%s1316 + $0x1c] sm:$0xf]
    %v1333 = vunpack.c.l.b16 %v1317
    %v1334 = vunpack.c.l.b16 %v1318
    %v1335 = vunpack.c.l.b16 %v1319
    %v1336 = vunpack.c.l.b16 %v1320
    %v1337 = vunpack.c.l.b16 %v1321
    %v1338 = vunpack.c.l.b16 %v1322
    %v1339 = vunpack.c.l.b16 %v1323
    %v1340 = vunpack.c.l.b16 %v1324
    %v1341 = vpack.c.b16 %v1334, %v1333
    %v1342 = vpack.c.b16 %v1336, %v1335
    %v1343 = vpack.c.b16 %v1338, %v1337
    %v1344 = vpack.c.b16 %v1340, %v1339
    %v1350 = vsel %vm473, %v1314, 0
    %v1353 = vsel %vm473, %v1315, 0
    %1355 = vmatprep.subr.bf16.mxu0 0
    %1356 = vmatpush1.bf16.msra.mxu0 %v1341
    %1357 = vmatprep.subr.bf16.mxu0 0
    %1358 = vmatpush1.bf16.msra.mxu0 %v1342
    %1359 = vmatprep.subr.bf16.mxu0 0
    %1360 = vmatpush1.bf16.msra.mxu0 %v1343
    %1361 = vmatprep.subr.bf16.mxu0 0
    %1362 = vmatpush1.bf16.msra.mxu0 %v1344
    %1363 = vmatprep.subr.bf16.mxu0 0
    %1364 = vmatpush1.bf16.msra.mxu0 0
    %1365 = vmatprep.subr.bf16.mxu0 0
    %1366 = vmatpush1.bf16.msra.mxu0 0
    %1367 = vmatprep.subr.bf16.mxu0 0
    %1368 = vmatpush1.bf16.msra.mxu0 0
    %1369 = vmatprep.subr.bf16.mxu0 0
    %1370 = vmatpush1.bf16.msra.mxu0 0
    %1371 = vmatprep.subr.bf16.mxu0 0
    %1372 = vmatpush1.bf16.msra.mxu0 0
    %1373 = vmatprep.subr.bf16.mxu0 0
    %1374 = vmatpush1.bf16.msra.mxu0 0
    %1375 = vmatprep.subr.bf16.mxu0 0
    %1376 = vmatpush1.bf16.msra.mxu0 0
    %1377 = vmatprep.subr.bf16.mxu0 0
    %1378 = vmatpush1.bf16.msra.mxu0 0
    %1379 = vmatprep.subr.bf16.mxu0 0
    %1380 = vmatpush1.bf16.msra.mxu0 0
    %1381 = vmatprep.subr.bf16.mxu0 0
    %1382 = vmatpush1.bf16.msra.mxu0 0
    %1383 = vmatprep.subr.bf16.mxu0 0
    %1384 = vmatpush1.bf16.msra.mxu0 0
    %1385 = vmatprep.subr.bf16.mxu0 0
    %1386 = vmatpush1.bf16.msra.mxu0 0
    %1387 = vmatprep.mubr.bf16.mxu0 0
    %1388 = vmatmul.mubr.bf16.gmra.mrb[0].mxu0 %v1350
    %v1389 = vpop.f32.mrb[0].mxu0
    %v1390 = vadd.f32 0.0, %v1389
    %v1391 = vpop.f32.mrb[0].mxu0
    %v1392 = vpop.f32.mrb[0].mxu0
    %v1393 = vadd.f32 0.0, %v1392
    %v1394 = vpop.f32.mrb[0].mxu0
    %1395 = vmatprep.mubr.bf16.mxu0 0
    %1396 = vmatmul.mubr.bf16.gmra.mrb[0].mxu0 %v1353
    %v1397 = vpop.f32.mrb[0].mxu0
    %v1398 = vadd.f32 0.0, %v1397
    %v1399 = vpop.f32.mrb[0].mxu0
    %v1400 = vpop.f32.mrb[0].mxu0
    %v1401 = vadd.f32 0.0, %v1400
    %v1402 = vpop.f32.mrb[0].mxu0
    %1403 = vdwg.mxu0
    %v1404 = vadd.f32 %v1244, %v1390
    %v1405 = vadd.f32 %v1245, %v1393
    %v1406 = vadd.f32 %v1246, %v1398
    %v1407 = vadd.f32 %v1247, %v1401
    %s1408 = scalar_lea.vmem %s3, 112
    %v1409 = vld [vmem:[%s1408] sm:$0xf]
    %v1410 = vld [vmem:[%s1408 + $0x4] sm:$0xf]
    %v1411 = vld [vmem:[%s1408 + $0x8] sm:$0xf]
    %v1412 = vld [vmem:[%s1408 + $0xc] sm:$0xf]
    %v1417 = vunpack.c.l.b16 %v1409
    %v1418 = vunpack.c.l.b16 %v1410
    %v1419 = vunpack.c.l.b16 %v1411
    %v1420 = vunpack.c.l.b16 %v1412
    %v1421 = vpack.c.b16 %v1418, %v1417
    %v1422 = vpack.c.b16 %v1420, %v1419
    %1425 = vmatprep.subr.bf16.mxu0 0
    %1426 = vmatpush1.bf16.msra.mxu0 %v289
    %1427 = vmatprep.subr.bf16.mxu0 0
    %1428 = vmatpush1.bf16.msra.mxu0 %v290
    %1429 = vmatprep.subr.bf16.mxu0 0
    %1430 = vmatpush1.bf16.msra.mxu0 %v291
    %1431 = vmatprep.subr.bf16.mxu0 0
    %1432 = vmatpush1.bf16.msra.mxu0 %v292
    %1433 = vmatprep.subr.bf16.mxu0 0
    %1434 = vmatpush1.bf16.msra.mxu0 %v293
    %1435 = vmatprep.subr.bf16.mxu0 0
    %1436 = vmatpush1.bf16.msra.mxu0 %v294
    %1437 = vmatprep.subr.bf16.mxu0 0
    %1438 = vmatpush1.bf16.msra.mxu0 %v295
    %1439 = vmatprep.subr.bf16.mxu0 0
    %1440 = vmatpush1.bf16.msra.mxu0 %v296
    %1441 = vmatprep.subr.bf16.mxu0 0
    %1442 = vmatpush1.bf16.msra.mxu0 0
    %1443 = vmatprep.subr.bf16.mxu0 0
    %1444 = vmatpush1.bf16.msra.mxu0 0
    %1445 = vmatprep.subr.bf16.mxu0 0
    %1446 = vmatpush1.bf16.msra.mxu0 0
    %1447 = vmatprep.subr.bf16.mxu0 0
    %1448 = vmatpush1.bf16.msra.mxu0 0
    %1449 = vmatprep.subr.bf16.mxu0 0
    %1450 = vmatpush1.bf16.msra.mxu0 0
    %1451 = vmatprep.subr.bf16.mxu0 0
    %1452 = vmatpush1.bf16.msra.mxu0 0
    %1453 = vmatprep.subr.bf16.mxu0 0
    %1454 = vmatpush1.bf16.msra.mxu0 0
    %1455 = vmatprep.subr.bf16.mxu0 0
    %1456 = vmatpush1.bf16.msra.mxu0 0
    %1457 = vmatprep.mubr.bf16.mxu0 0
    %1458 = vmatmul.mubr.bf16.gmra.mrb[0].mxu0 %v1421
    %v1459 = vpop.f32.mrb[0].mxu0
    %v1460 = vadd.f32 0.0, %v1459
    %v1461 = vpop.f32.mrb[0].mxu0
    %v1462 = vpop.f32.mrb[0].mxu0
    %v1463 = vadd.f32 0.0, %v1462
    %v1464 = vpop.f32.mrb[0].mxu0
    %1465 = vmatprep.mubr.bf16.mxu0 0
    %1466 = vmatmul.mubr.bf16.gmra.mrb[0].mxu0 %v1422
    %v1467 = vpop.f32.mrb[0].mxu0
    %v1468 = vadd.f32 0.0, %v1467
    %v1469 = vpop.f32.mrb[0].mxu0
    %v1470 = vpop.f32.mrb[0].mxu0
    %v1471 = vadd.f32 0.0, %v1470
    %v1472 = vpop.f32.mrb[0].mxu0
    %1473 = vdwg.mxu0
    %v1474 = vpack.c.bf16 %v1463, %v1460
    %v1475 = vpack.c.bf16 %v1471, %v1468
    %s1476 = scalar_lea.vmem %s4, 224
    %v1477 = vld [vmem:[%s1476] sm:$0xf]
    %v1478 = vld [vmem:[%s1476 + $0x4] sm:$0xf]
    %v1479 = vld [vmem:[%s1476 + $0x8] sm:$0xf]
    %v1480 = vld [vmem:[%s1476 + $0xc] sm:$0xf]
    %v1481 = vld [vmem:[%s1476 + $0x10] sm:$0xf]
    %v1482 = vld [vmem:[%s1476 + $0x14] sm:$0xf]
    %v1483 = vld [vmem:[%s1476 + $0x18] sm:$0xf]
    %v1484 = vld [vmem:[%s1476 + $0x1c] sm:$0xf]
    %v1493 = vunpack.c.l.b16 %v1477
    %v1494 = vunpack.c.l.b16 %v1478
    %v1495 = vunpack.c.l.b16 %v1479
    %v1496 = vunpack.c.l.b16 %v1480
    %v1497 = vunpack.c.l.b16 %v1481
    %v1498 = vunpack.c.l.b16 %v1482
    %v1499 = vunpack.c.l.b16 %v1483
    %v1500 = vunpack.c.l.b16 %v1484
    %v1501 = vpack.c.b16 %v1494, %v1493
    %v1502 = vpack.c.b16 %v1496, %v1495
    %v1503 = vpack.c.b16 %v1498, %v1497
    %v1504 = vpack.c.b16 %v1500, %v1499
    %v1510 = vsel %vm473, %v1474, 0
    %v1513 = vsel %vm473, %v1475, 0
    %1515 = vmatprep.subr.bf16.mxu0 0
    %1516 = vmatpush1.bf16.msra.mxu0 %v1501
    %1517 = vmatprep.subr.bf16.mxu0 0
    %1518 = vmatpush1.bf16.msra.mxu0 %v1502
    %1519 = vmatprep.subr.bf16.mxu0 0
    %1520 = vmatpush1.bf16.msra.mxu0 %v1503
    %1521 = vmatprep.subr.bf16.mxu0 0
    %1522 = vmatpush1.bf16.msra.mxu0 %v1504
    %1523 = vmatprep.subr.bf16.mxu0 0
    %1524 = vmatpush1.bf16.msra.mxu0 0
    %1525 = vmatprep.subr.bf16.mxu0 0
    %1526 = vmatpush1.bf16.msra.mxu0 0
    %1527 = vmatprep.subr.bf16.mxu0 0
    %1528 = vmatpush1.bf16.msra.mxu0 0
    %1529 = vmatprep.subr.bf16.mxu0 0
    %1530 = vmatpush1.bf16.msra.mxu0 0
    %1531 = vmatprep.subr.bf16.mxu0 0
    %1532 = vmatpush1.bf16.msra.mxu0 0
    %1533 = vmatprep.subr.bf16.mxu0 0
    %1534 = vmatpush1.bf16.msra.mxu0 0
    %1535 = vmatprep.subr.bf16.mxu0 0
    %1536 = vmatpush1.bf16.msra.mxu0 0
    %1537 = vmatprep.subr.bf16.mxu0 0
    %1538 = vmatpush1.bf16.msra.mxu0 0
    %1539 = vmatprep.subr.bf16.mxu0 0
    %1540 = vmatpush1.bf16.msra.mxu0 0
    %1541 = vmatprep.subr.bf16.mxu0 0
    %1542 = vmatpush1.bf16.msra.mxu0 0
    %1543 = vmatprep.subr.bf16.mxu0 0
    %1544 = vmatpush1.bf16.msra.mxu0 0
    %1545 = vmatprep.subr.bf16.mxu0 0
    %1546 = vmatpush1.bf16.msra.mxu0 0
    %1547 = vmatprep.mubr.bf16.mxu0 0
    %1548 = vmatmul.mubr.bf16.gmra.mrb[0].mxu0 %v1510
    %v1549 = vpop.f32.mrb[0].mxu0
    %v1550 = vadd.f32 0.0, %v1549
    %v1551 = vpop.f32.mrb[0].mxu0
    %v1552 = vpop.f32.mrb[0].mxu0
    %v1553 = vadd.f32 0.0, %v1552
    %v1554 = vpop.f32.mrb[0].mxu0
    %1555 = vmatprep.mubr.bf16.mxu0 0
    %1556 = vmatmul.mubr.bf16.gmra.mrb[0].mxu0 %v1513
    %v1557 = vpop.f32.mrb[0].mxu0
    %v1558 = vadd.f32 0.0, %v1557
    %v1559 = vpop.f32.mrb[0].mxu0
    %v1560 = vpop.f32.mrb[0].mxu0
    %v1561 = vadd.f32 0.0, %v1560
    %v1562 = vpop.f32.mrb[0].mxu0
    %1563 = vdwg.mxu0
    %v1564 = vadd.f32 %v1404, %v1550
    %v1565 = vadd.f32 %v1405, %v1553
    %v1566 = vadd.f32 %v1406, %v1558
    %v1567 = vadd.f32 %v1407, %v1561
    %s1568 = scalar_lea.vmem %s3, 128
    %v1569 = vld [vmem:[%s1568] sm:$0xf]
    %v1570 = vld [vmem:[%s1568 + $0x4] sm:$0xf]
    %v1571 = vld [vmem:[%s1568 + $0x8] sm:$0xf]
    %v1572 = vld [vmem:[%s1568 + $0xc] sm:$0xf]
    %v1577 = vunpack.c.l.b16 %v1569
    %v1578 = vunpack.c.l.b16 %v1570
    %v1579 = vunpack.c.l.b16 %v1571
    %v1580 = vunpack.c.l.b16 %v1572
    %v1581 = vpack.c.b16 %v1578, %v1577
    %v1582 = vpack.c.b16 %v1580, %v1579
    %1585 = vmatprep.subr.bf16.mxu0 0
    %1586 = vmatpush1.bf16.msra.mxu0 %v289
    %1587 = vmatprep.subr.bf16.mxu0 0
    %1588 = vmatpush1.bf16.msra.mxu0 %v290
    %1589 = vmatprep.subr.bf16.mxu0 0
    %1590 = vmatpush1.bf16.msra.mxu0 %v291
    %1591 = vmatprep.subr.bf16.mxu0 0
    %1592 = vmatpush1.bf16.msra.mxu0 %v292
    %1593 = vmatprep.subr.bf16.mxu0 0
    %1594 = vmatpush1.bf16.msra.mxu0 %v293
    %1595 = vmatprep.subr.bf16.mxu0 0
    %1596 = vmatpush1.bf16.msra.mxu0 %v294
    %1597 = vmatprep.subr.bf16.mxu0 0
    %1598 = vmatpush1.bf16.msra.mxu0 %v295
    %1599 = vmatprep.subr.bf16.mxu0 0
    %1600 = vmatpush1.bf16.msra.mxu0 %v296
    %1601 = vmatprep.subr.bf16.mxu0 0
    %1602 = vmatpush1.bf16.msra.mxu0 0
    %1603 = vmatprep.subr.bf16.mxu0 0
    %1604 = vmatpush1.bf16.msra.mxu0 0
    %1605 = vmatprep.subr.bf16.mxu0 0
    %1606 = vmatpush1.bf16.msra.mxu0 0
    %1607 = vmatprep.subr.bf16.mxu0 0
    %1608 = vmatpush1.bf16.msra.mxu0 0
    %1609 = vmatprep.subr.bf16.mxu0 0
    %1610 = vmatpush1.bf16.msra.mxu0 0
    %1611 = vmatprep.subr.bf16.mxu0 0
    %1612 = vmatpush1.bf16.msra.mxu0 0
    %1613 = vmatprep.subr.bf16.mxu0 0
    %1614 = vmatpush1.bf16.msra.mxu0 0
    %1615 = vmatprep.subr.bf16.mxu0 0
    %1616 = vmatpush1.bf16.msra.mxu0 0
    %1617 = vmatprep.mubr.bf16.mxu0 0
    %1618 = vmatmul.mubr.bf16.gmra.mrb[0].mxu0 %v1581
    %v1619 = vpop.f32.mrb[0].mxu0
    %v1620 = vadd.f32 0.0, %v1619
    %v1621 = vpop.f32.mrb[0].mxu0
    %v1622 = vpop.f32.mrb[0].mxu0
    %v1623 = vadd.f32 0.0, %v1622
    %v1624 = vpop.f32.mrb[0].mxu0
    %1625 = vmatprep.mubr.bf16.mxu0 0
    %1626 = vmatmul.mubr.bf16.gmra.mrb[0].mxu0 %v1582
    %v1627 = vpop.f32.mrb[0].mxu0
    %v1628 = vadd.f32 0.0, %v1627
    %v1629 = vpop.f32.mrb[0].mxu0
    %v1630 = vpop.f32.mrb[0].mxu0
    %v1631 = vadd.f32 0.0, %v1630
    %v1632 = vpop.f32.mrb[0].mxu0
    %1633 = vdwg.mxu0
    %v1634 = vpack.c.bf16 %v1623, %v1620
    %v1635 = vpack.c.bf16 %v1631, %v1628
    %s1636 = scalar_lea.vmem %s4, 256
    %v1637 = vld [vmem:[%s1636] sm:$0xf]
    %v1638 = vld [vmem:[%s1636 + $0x4] sm:$0xf]
    %v1639 = vld [vmem:[%s1636 + $0x8] sm:$0xf]
    %v1640 = vld [vmem:[%s1636 + $0xc] sm:$0xf]
    %v1641 = vld [vmem:[%s1636 + $0x10] sm:$0xf]
    %v1642 = vld [vmem:[%s1636 + $0x14] sm:$0xf]
    %v1643 = vld [vmem:[%s1636 + $0x18] sm:$0xf]
    %v1644 = vld [vmem:[%s1636 + $0x1c] sm:$0xf]
    %v1653 = vunpack.c.l.b16 %v1637
    %v1654 = vunpack.c.l.b16 %v1638
    %v1655 = vunpack.c.l.b16 %v1639
    %v1656 = vunpack.c.l.b16 %v1640
    %v1657 = vunpack.c.l.b16 %v1641
    %v1658 = vunpack.c.l.b16 %v1642
    %v1659 = vunpack.c.l.b16 %v1643
    %v1660 = vunpack.c.l.b16 %v1644
    %v1661 = vpack.c.b16 %v1654, %v1653
    %v1662 = vpack.c.b16 %v1656, %v1655
    %v1663 = vpack.c.b16 %v1658, %v1657
    %v1664 = vpack.c.b16 %v1660, %v1659
    %v1670 = vsel %vm473, %v1634, 0
    %v1673 = vsel %vm473, %v1635, 0
    %1675 = vmatprep.subr.bf16.mxu0 0
    %1676 = vmatpush1.bf16.msra.mxu0 %v1661
    %1677 = vmatprep.subr.bf16.mxu0 0
    %1678 = vmatpush1.bf16.msra.mxu0 %v1662
    %1679 = vmatprep.subr.bf16.mxu0 0
    %1680 = vmatpush1.bf16.msra.mxu0 %v1663
    %1681 = vmatprep.subr.bf16.mxu0 0
    %1682 = vmatpush1.bf16.msra.mxu0 %v1664
    %1683 = vmatprep.subr.bf16.mxu0 0
    %1684 = vmatpush1.bf16.msra.mxu0 0
    %1685 = vmatprep.subr.bf16.mxu0 0
    %1686 = vmatpush1.bf16.msra.mxu0 0
    %1687 = vmatprep.subr.bf16.mxu0 0
    %1688 = vmatpush1.bf16.msra.mxu0 0
    %1689 = vmatprep.subr.bf16.mxu0 0
    %1690 = vmatpush1.bf16.msra.mxu0 0
    %1691 = vmatprep.subr.bf16.mxu0 0
    %1692 = vmatpush1.bf16.msra.mxu0 0
    %1693 = vmatprep.subr.bf16.mxu0 0
    %1694 = vmatpush1.bf16.msra.mxu0 0
    %1695 = vmatprep.subr.bf16.mxu0 0
    %1696 = vmatpush1.bf16.msra.mxu0 0
    %1697 = vmatprep.subr.bf16.mxu0 0
    %1698 = vmatpush1.bf16.msra.mxu0 0
    %1699 = vmatprep.subr.bf16.mxu0 0
    %1700 = vmatpush1.bf16.msra.mxu0 0
    %1701 = vmatprep.subr.bf16.mxu0 0
    %1702 = vmatpush1.bf16.msra.mxu0 0
    %1703 = vmatprep.subr.bf16.mxu0 0
    %1704 = vmatpush1.bf16.msra.mxu0 0
    %1705 = vmatprep.subr.bf16.mxu0 0
    %1706 = vmatpush1.bf16.msra.mxu0 0
    %1707 = vmatprep.mubr.bf16.mxu0 0
    %1708 = vmatmul.mubr.bf16.gmra.mrb[0].mxu0 %v1670
    %v1709 = vpop.f32.mrb[0].mxu0
    %v1710 = vadd.f32 0.0, %v1709
    %v1711 = vpop.f32.mrb[0].mxu0
    %v1712 = vpop.f32.mrb[0].mxu0
    %v1713 = vadd.f32 0.0, %v1712
    %v1714 = vpop.f32.mrb[0].mxu0
    %1715 = vmatprep.mubr.bf16.mxu0 0
    %1716 = vmatmul.mubr.bf16.gmra.mrb[0].mxu0 %v1673
    %v1717 = vpop.f32.mrb[0].mxu0
    %v1718 = vadd.f32 0.0, %v1717
    %v1719 = vpop.f32.mrb[0].mxu0
    %v1720 = vpop.f32.mrb[0].mxu0
    %v1721 = vadd.f32 0.0, %v1720
    %v1722 = vpop.f32.mrb[0].mxu0
    %1723 = vdwg.mxu0
    %v1724 = vadd.f32 %v1564, %v1710
    %v1725 = vadd.f32 %v1565, %v1713
    %v1726 = vadd.f32 %v1566, %v1718
    %v1727 = vadd.f32 %v1567, %v1721
    %v1728 = vld [vmem:[#allocation4] sm:$0x1]
    %v1730 = vlaneseq
    %v1731 = vshrl.u32 %v1730, 7
    %v1732 = vsub.s32 0, %v1731
    %v1733 = vrot.slane %v1728, %v1732
    %v1735 = vadd.f32 %v1724, %v1733
    %v1736 = vadd.f32 %v1725, %v1733
    %v1737 = vadd.f32 %v1726, %v1733
    %v1738 = vadd.f32 %v1727, %v1733
    %v1739 = vpack.c.bf16 %v1736, %v1735
    %v1740 = vpack.c.bf16 %v1738, %v1737
    %v1741 = vld [vmem:[#allocation6] sm:$0xf]
    %vm1742 = vcmask 261120
    %v1744 = vsel %vm1742, %v1741, 0
    %1746 = vmatprep.subr.bf16.mxu0 0
    %1747 = vmatpush1.bf16.msra.mxu0 %v1739
    %1748 = vmatprep.subr.bf16.mxu0 0
    %1749 = vmatpush1.bf16.msra.mxu0 %v1740
    %1750 = vmatprep.subr.bf16.mxu0 0
    %1751 = vmatpush1.bf16.msra.mxu0 0
    %1752 = vmatprep.subr.bf16.mxu0 0
    %1753 = vmatpush1.bf16.msra.mxu0 0
    %1754 = vmatprep.subr.bf16.mxu0 0
    %1755 = vmatpush1.bf16.msra.mxu0 0
    %1756 = vmatprep.subr.bf16.mxu0 0
    %1757 = vmatpush1.bf16.msra.mxu0 0
    %1758 = vmatprep.subr.bf16.mxu0 0
    %1759 = vmatpush1.bf16.msra.mxu0 0
    %1760 = vmatprep.subr.bf16.mxu0 0
    %1761 = vmatpush1.bf16.msra.mxu0 0
    %1762 = vmatprep.subr.bf16.mxu0 0
    %1763 = vmatpush1.bf16.msra.mxu0 0
    %1764 = vmatprep.subr.bf16.mxu0 0
    %1765 = vmatpush1.bf16.msra.mxu0 0
    %1766 = vmatprep.subr.bf16.mxu0 0
    %1767 = vmatpush1.bf16.msra.mxu0 0
    %1768 = vmatprep.subr.bf16.mxu0 0
    %1769 = vmatpush1.bf16.msra.mxu0 0
    %1770 = vmatprep.subr.bf16.mxu0 0
    %1771 = vmatpush1.bf16.msra.mxu0 0
    %1772 = vmatprep.subr.bf16.mxu0 0
    %1773 = vmatpush1.bf16.msra.mxu0 0
    %1774 = vmatprep.subr.bf16.mxu0 0
    %1775 = vmatpush1.bf16.msra.mxu0 0
    %1776 = vmatprep.subr.bf16.mxu0 0
    %1777 = vmatpush1.bf16.msra.mxu0 0
    %1778 = vmatprep.mubr.bf16.mxu0 0
    %1779 = vmatmul.mubr.bf16.gmra.mrb[0].mxu0 %v1744
    %v1780 = vpop.f32.mrb[0].mxu0
    %v1781 = vadd.f32 0.0, %v1780
    %v1782 = vpop.f32.mrb[0].mxu0
    %v1783 = vpop.f32.mrb[0].mxu0
    %v1784 = vpop.f32.mrb[0].mxu0
    %1785 = vdwg.mxu0
    %v1786 = vpack.c.bf16 %v1781, %v1781
    %v1787 = vld [vmem:[%s7] sm:$0xf]
    %v1788 = vld [vmem:[%s7 + $0x4] sm:$0xf]
    %v1789 = vld [vmem:[%s7 + $0x8] sm:$0xf]
    %v1790 = vld [vmem:[%s7 + $0xc] sm:$0xf]
    %v1791 = vld [vmem:[%s7 + $0x10] sm:$0xf]
    %v1792 = vld [vmem:[%s7 + $0x14] sm:$0xf]
    %v1793 = vld [vmem:[%s7 + $0x18] sm:$0xf]
    %v1794 = vld [vmem:[%s7 + $0x1c] sm:$0xf]
    %s1795 = scalar_lea.vmem [#allocation6], 4
    %v1796 = vld [vmem:[%s1795] sm:$0xf]
    %v1798 = vsel %vm1742, %v1796, 0
    %1800 = vmatprep.subr.bf16.mxu0 0
    %1801 = vmatpush1.bf16.msra.mxu0 %v1739
    %1802 = vmatprep.subr.bf16.mxu0 0
    %1803 = vmatpush1.bf16.msra.mxu0 %v1740
    %1804 = vmatprep.subr.bf16.mxu0 0
    %1805 = vmatpush1.bf16.msra.mxu0 0
    %1806 = vmatprep.subr.bf16.mxu0 0
    %1807 = vmatpush1.bf16.msra.mxu0 0
    %1808 = vmatprep.subr.bf16.mxu0 0
    %1809 = vmatpush1.bf16.msra.mxu0 0
    %1810 = vmatprep.subr.bf16.mxu0 0
    %1811 = vmatpush1.bf16.msra.mxu0 0
    %1812 = vmatprep.subr.bf16.mxu0 0
    %1813 = vmatpush1.bf16.msra.mxu0 0
    %1814 = vmatprep.subr.bf16.mxu0 0
    %1815 = vmatpush1.bf16.msra.mxu0 0
    %1816 = vmatprep.subr.bf16.mxu0 0
    %1817 = vmatpush1.bf16.msra.mxu0 0
    %1818 = vmatprep.subr.bf16.mxu0 0
    %1819 = vmatpush1.bf16.msra.mxu0 0
    %1820 = vmatprep.subr.bf16.mxu0 0
    %1821 = vmatpush1.bf16.msra.mxu0 0
    %1822 = vmatprep.subr.bf16.mxu0 0
    %1823 = vmatpush1.bf16.msra.mxu0 0
    %1824 = vmatprep.subr.bf16.mxu0 0
    %1825 = vmatpush1.bf16.msra.mxu0 0
    %1826 = vmatprep.subr.bf16.mxu0 0
    %1827 = vmatpush1.bf16.msra.mxu0 0
    %1828 = vmatprep.subr.bf16.mxu0 0
    %1829 = vmatpush1.bf16.msra.mxu0 0
    %1830 = vmatprep.subr.bf16.mxu0 0
    %1831 = vmatpush1.bf16.msra.mxu0 0
    %1832 = vmatprep.mubr.bf16.mxu0 0
    %1833 = vmatmul.mubr.bf16.gmra.mrb[0].mxu0 %v1798
    %v1834 = vpop.f32.mrb[0].mxu0
    %v1835 = vadd.f32 0.0, %v1834
    %v1836 = vpop.f32.mrb[0].mxu0
    %v1837 = vpop.f32.mrb[0].mxu0
    %v1838 = vpop.f32.mrb[0].mxu0
    %1839 = vdwg.mxu0
    %v1840 = vpack.c.bf16 %v1835, %v1835
    %s1841 = scalar_lea.vmem %s7, 32
    %v1842 = vld [vmem:[%s1841] sm:$0xf]
    %v1843 = vld [vmem:[%s1841 + $0x4] sm:$0xf]
    %v1844 = vld [vmem:[%s1841 + $0x8] sm:$0xf]
    %v1845 = vld [vmem:[%s1841 + $0xc] sm:$0xf]
    %v1846 = vld [vmem:[%s1841 + $0x10] sm:$0xf]
    %v1847 = vld [vmem:[%s1841 + $0x14] sm:$0xf]
    %v1848 = vld [vmem:[%s1841 + $0x18] sm:$0xf]
    %v1849 = vld [vmem:[%s1841 + $0x1c] sm:$0xf]
    %v1858 = vunpack.c.l.b16 %v1842
    %v1859 = vunpack.c.l.b16 %v1843
    %v1860 = vunpack.c.l.b16 %v1844
    %v1861 = vunpack.c.l.b16 %v1845
    %v1862 = vunpack.c.l.b16 %v1846
    %v1863 = vunpack.c.l.b16 %v1847
    %v1864 = vunpack.c.l.b16 %v1848
    %v1865 = vunpack.c.l.b16 %v1849
    %v1866 = vpack.c.b16 %v1859, %v1858
    %v1867 = vpack.c.b16 %v1861, %v1860
    %v1868 = vpack.c.b16 %v1863, %v1862
    %v1869 = vpack.c.b16 %v1865, %v1864
    %v1875 = vsel %vm473, %v1840, 0
    %1877 = vmatprep.subr.bf16.mxu0 0
    %1878 = vmatpush1.bf16.msra.mxu0 %v1866
    %1879 = vmatprep.subr.bf16.mxu0 0
    %1880 = vmatpush1.bf16.msra.mxu0 %v1867
    %1881 = vmatprep.subr.bf16.mxu0 0
    %1882 = vmatpush1.bf16.msra.mxu0 %v1868
    %1883 = vmatprep.subr.bf16.mxu0 0
    %1884 = vmatpush1.bf16.msra.mxu0 %v1869
    %1885 = vmatprep.subr.bf16.mxu0 0
    %1886 = vmatpush1.bf16.msra.mxu0 0
    %1887 = vmatprep.subr.bf16.mxu0 0
    %1888 = vmatpush1.bf16.msra.mxu0 0
    %1889 = vmatprep.subr.bf16.mxu0 0
    %1890 = vmatpush1.bf16.msra.mxu0 0
    %1891 = vmatprep.subr.bf16.mxu0 0
    %1892 = vmatpush1.bf16.msra.mxu0 0
    %1893 = vmatprep.subr.bf16.mxu0 0
    %1894 = vmatpush1.bf16.msra.mxu0 0
    %1895 = vmatprep.subr.bf16.mxu0 0
    %1896 = vmatpush1.bf16.msra.mxu0 0
    %1897 = vmatprep.subr.bf16.mxu0 0
    %1898 = vmatpush1.bf16.msra.mxu0 0
    %1899 = vmatprep.subr.bf16.mxu0 0
    %1900 = vmatpush1.bf16.msra.mxu0 0
    %1901 = vmatprep.subr.bf16.mxu0 0
    %1902 = vmatpush1.bf16.msra.mxu0 0
    %1903 = vmatprep.subr.bf16.mxu0 0
    %1904 = vmatpush1.bf16.msra.mxu0 0
    %1905 = vmatprep.subr.bf16.mxu0 0
    %1906 = vmatpush1.bf16.msra.mxu0 0
    %1907 = vmatprep.subr.bf16.mxu0 0
    %1908 = vmatpush1.bf16.msra.mxu0 0
    %1909 = vmatprep.mubr.bf16.mxu0 0
    %1910 = vmatmul.mubr.bf16.gmra.mrb[0].mxu0 %v1875
    %v1911 = vpop.f32.mrb[0].mxu0
    %v1912 = vadd.f32 0.0, %v1911
    %v1913 = vpop.f32.mrb[0].mxu0
    %v1914 = vpop.f32.mrb[0].mxu0
    %v1915 = vpop.f32.mrb[0].mxu0
    %1916 = vdwg.mxu0
    %v1925 = vunpack.c.l.b16 %v1787
    %v1926 = vunpack.c.l.b16 %v1788
    %v1927 = vunpack.c.l.b16 %v1789
    %v1928 = vunpack.c.l.b16 %v1790
    %v1929 = vunpack.c.l.b16 %v1791
    %v1930 = vunpack.c.l.b16 %v1792
    %v1931 = vunpack.c.l.b16 %v1793
    %v1932 = vunpack.c.l.b16 %v1794
    %v1933 = vpack.c.b16 %v1926, %v1925
    %v1934 = vpack.c.b16 %v1928, %v1927
    %v1935 = vpack.c.b16 %v1930, %v1929
    %v1936 = vpack.c.b16 %v1932, %v1931
    %v1942 = vsel %vm473, %v1786, 0
    %1944 = vmatprep.subr.bf16.mxu0 0
    %1945 = vmatpush1.bf16.msra.mxu0 %v1933
    %1946 = vmatprep.subr.bf16.mxu0 0
    %1947 = vmatpush1.bf16.msra.mxu0 %v1934
    %1948 = vmatprep.subr.bf16.mxu0 0
    %1949 = vmatpush1.bf16.msra.mxu0 %v1935
    %1950 = vmatprep.subr.bf16.mxu0 0
    %1951 = vmatpush1.bf16.msra.mxu0 %v1936
    %1952 = vmatprep.subr.bf16.mxu0 0
    %1953 = vmatpush1.bf16.msra.mxu0 0
    %1954 = vmatprep.subr.bf16.mxu0 0
    %1955 = vmatpush1.bf16.msra.mxu0 0
    %1956 = vmatprep.subr.bf16.mxu0 0
    %1957 = vmatpush1.bf16.msra.mxu0 0
    %1958 = vmatprep.subr.bf16.mxu0 0
    %1959 = vmatpush1.bf16.msra.mxu0 0
    %1960 = vmatprep.subr.bf16.mxu0 0
    %1961 = vmatpush1.bf16.msra.mxu0 0
    %1962 = vmatprep.subr.bf16.mxu0 0
    %1963 = vmatpush1.bf16.msra.mxu0 0
    %1964 = vmatprep.subr.bf16.mxu0 0
    %1965 = vmatpush1.bf16.msra.mxu0 0
    %1966 = vmatprep.subr.bf16.mxu0 0
    %1967 = vmatpush1.bf16.msra.mxu0 0
    %1968 = vmatprep.subr.bf16.mxu0 0
    %1969 = vmatpush1.bf16.msra.mxu0 0
    %1970 = vmatprep.subr.bf16.mxu0 0
    %1971 = vmatpush1.bf16.msra.mxu0 0
    %1972 = vmatprep.subr.bf16.mxu0 0
    %1973 = vmatpush1.bf16.msra.mxu0 0
    %1974 = vmatprep.subr.bf16.mxu0 0
    %1975 = vmatpush1.bf16.msra.mxu0 0
    %1976 = vmatprep.mubr.bf16.mxu0 0
    %1977 = vmatmul.mubr.bf16.gmra.mrb[0].mxu0 %v1942
    %v1978 = vpop.f32.mrb[0].mxu0
    %v1979 = vadd.f32 %v1912, %v1978
    %v1980 = vpop.f32.mrb[0].mxu0
    %v1981 = vpop.f32.mrb[0].mxu0
    %v1982 = vpop.f32.mrb[0].mxu0
    %1983 = vdwg.mxu0
    %s1984 = scalar_lea.vmem [#allocation6], 8
    %v1985 = vld [vmem:[%s1984] sm:$0xf]
    %v1987 = vsel %vm1742, %v1985, 0
    %1989 = vmatprep.subr.bf16.mxu0 0
    %1990 = vmatpush1.bf16.msra.mxu0 %v1739
    %1991 = vmatprep.subr.bf16.mxu0 0
    %1992 = vmatpush1.bf16.msra.mxu0 %v1740
    %1993 = vmatprep.subr.bf16.mxu0 0
    %1994 = vmatpush1.bf16.msra.mxu0 0
    %1995 = vmatprep.subr.bf16.mxu0 0
    %1996 = vmatpush1.bf16.msra.mxu0 0
    %1997 = vmatprep.subr.bf16.mxu0 0
    %1998 = vmatpush1.bf16.msra.mxu0 0
    %1999 = vmatprep.subr.bf16.mxu0 0
    %2000 = vmatpush1.bf16.msra.mxu0 0
    %2001 = vmatprep.subr.bf16.mxu0 0
    %2002 = vmatpush1.bf16.msra.mxu0 0
    %2003 = vmatprep.subr.bf16.mxu0 0
    %2004 = vmatpush1.bf16.msra.mxu0 0
    %2005 = vmatprep.subr.bf16.mxu0 0
    %2006 = vmatpush1.bf16.msra.mxu0 0
    %2007 = vmatprep.subr.bf16.mxu0 0
    %2008 = vmatpush1.bf16.msra.mxu0 0
    %2009 = vmatprep.subr.bf16.mxu0 0
    %2010 = vmatpush1.bf16.msra.mxu0 0
    %2011 = vmatprep.subr.bf16.mxu0 0
    %2012 = vmatpush1.bf16.msra.mxu0 0
    %2013 = vmatprep.subr.bf16.mxu0 0
    %2014 = vmatpush1.bf16.msra.mxu0 0
    %2015 = vmatprep.subr.bf16.mxu0 0
    %2016 = vmatpush1.bf16.msra.mxu0 0
    %2017 = vmatprep.subr.bf16.mxu0 0
    %2018 = vmatpush1.bf16.msra.mxu0 0
    %2019 = vmatprep.subr.bf16.mxu0 0
    %2020 = vmatpush1.bf16.msra.mxu0 0
    %2021 = vmatprep.mubr.bf16.mxu0 0
    %2022 = vmatmul.mubr.bf16.gmra.mrb[0].mxu0 %v1987
    %v2023 = vpop.f32.mrb[0].mxu0
    %v2024 = vadd.f32 0.0, %v2023
    %v2025 = vpop.f32.mrb[0].mxu0
    %v2026 = vpop.f32.mrb[0].mxu0
    %v2027 = vpop.f32.mrb[0].mxu0
    %2028 = vdwg.mxu0
    %v2029 = vpack.c.bf16 %v2024, %v2024
    %s2030 = scalar_lea.vmem %s7, 64
    %v2031 = vld [vmem:[%s2030] sm:$0xf]
    %v2032 = vld [vmem:[%s2030 + $0x4] sm:$0xf]
    %v2033 = vld [vmem:[%s2030 + $0x8] sm:$0xf]
    %v2034 = vld [vmem:[%s2030 + $0xc] sm:$0xf]
    %v2035 = vld [vmem:[%s2030 + $0x10] sm:$0xf]
    %v2036 = vld [vmem:[%s2030 + $0x14] sm:$0xf]
    %v2037 = vld [vmem:[%s2030 + $0x18] sm:$0xf]
    %v2038 = vld [vmem:[%s2030 + $0x1c] sm:$0xf]
    %v2047 = vunpack.c.l.b16 %v2031
    %v2048 = vunpack.c.l.b16 %v2032
    %v2049 = vunpack.c.l.b16 %v2033
    %v2050 = vunpack.c.l.b16 %v2034
    %v2051 = vunpack.c.l.b16 %v2035
    %v2052 = vunpack.c.l.b16 %v2036
    %v2053 = vunpack.c.l.b16 %v2037
    %v2054 = vunpack.c.l.b16 %v2038
    %v2055 = vpack.c.b16 %v2048, %v2047
    %v2056 = vpack.c.b16 %v2050, %v2049
    %v2057 = vpack.c.b16 %v2052, %v2051
    %v2058 = vpack.c.b16 %v2054, %v2053
    %v2064 = vsel %vm473, %v2029, 0
    %2066 = vmatprep.subr.bf16.mxu0 0
    %2067 = vmatpush1.bf16.msra.mxu0 %v2055
    %2068 = vmatprep.subr.bf16.mxu0 0
    %2069 = vmatpush1.bf16.msra.mxu0 %v2056
    %2070 = vmatprep.subr.bf16.mxu0 0
    %2071 = vmatpush1.bf16.msra.mxu0 %v2057
    %2072 = vmatprep.subr.bf16.mxu0 0
    %2073 = vmatpush1.bf16.msra.mxu0 %v2058
    %2074 = vmatprep.subr.bf16.mxu0 0
    %2075 = vmatpush1.bf16.msra.mxu0 0
    %2076 = vmatprep.subr.bf16.mxu0 0
    %2077 = vmatpush1.bf16.msra.mxu0 0
    %2078 = vmatprep.subr.bf16.mxu0 0
    %2079 = vmatpush1.bf16.msra.mxu0 0
    %2080 = vmatprep.subr.bf16.mxu0 0
    %2081 = vmatpush1.bf16.msra.mxu0 0
    %2082 = vmatprep.subr.bf16.mxu0 0
    %2083 = vmatpush1.bf16.msra.mxu0 0
    %2084 = vmatprep.subr.bf16.mxu0 0
    %2085 = vmatpush1.bf16.msra.mxu0 0
    %2086 = vmatprep.subr.bf16.mxu0 0
    %2087 = vmatpush1.bf16.msra.mxu0 0
    %2088 = vmatprep.subr.bf16.mxu0 0
    %2089 = vmatpush1.bf16.msra.mxu0 0
    %2090 = vmatprep.subr.bf16.mxu0 0
    %2091 = vmatpush1.bf16.msra.mxu0 0
    %2092 = vmatprep.subr.bf16.mxu0 0
    %2093 = vmatpush1.bf16.msra.mxu0 0
    %2094 = vmatprep.subr.bf16.mxu0 0
    %2095 = vmatpush1.bf16.msra.mxu0 0
    %2096 = vmatprep.subr.bf16.mxu0 0
    %2097 = vmatpush1.bf16.msra.mxu0 0
    %2098 = vmatprep.mubr.bf16.mxu0 0
    %2099 = vmatmul.mubr.bf16.gmra.mrb[0].mxu0 %v2064
    %v2100 = vpop.f32.mrb[0].mxu0
    %v2101 = vadd.f32 0.0, %v2100
    %v2102 = vpop.f32.mrb[0].mxu0
    %v2103 = vpop.f32.mrb[0].mxu0
    %v2104 = vpop.f32.mrb[0].mxu0
    %2105 = vdwg.mxu0
    %v2106 = vadd.f32 %v1979, %v2101
    %s2107 = scalar_lea.vmem [#allocation6], 12
    %v2108 = vld [vmem:[%s2107] sm:$0xf]
    %v2110 = vsel %vm1742, %v2108, 0
    %2112 = vmatprep.subr.bf16.mxu0 0
    %2113 = vmatpush1.bf16.msra.mxu0 %v1739
    %2114 = vmatprep.subr.bf16.mxu0 0
    %2115 = vmatpush1.bf16.msra.mxu0 %v1740
    %2116 = vmatprep.subr.bf16.mxu0 0
    %2117 = vmatpush1.bf16.msra.mxu0 0
    %2118 = vmatprep.subr.bf16.mxu0 0
    %2119 = vmatpush1.bf16.msra.mxu0 0
    %2120 = vmatprep.subr.bf16.mxu0 0
    %2121 = vmatpush1.bf16.msra.mxu0 0
    %2122 = vmatprep.subr.bf16.mxu0 0
    %2123 = vmatpush1.bf16.msra.mxu0 0
    %2124 = vmatprep.subr.bf16.mxu0 0
    %2125 = vmatpush1.bf16.msra.mxu0 0
    %2126 = vmatprep.subr.bf16.mxu0 0
    %2127 = vmatpush1.bf16.msra.mxu0 0
    %2128 = vmatprep.subr.bf16.mxu0 0
    %2129 = vmatpush1.bf16.msra.mxu0 0
    %2130 = vmatprep.subr.bf16.mxu0 0
    %2131 = vmatpush1.bf16.msra.mxu0 0
    %2132 = vmatprep.subr.bf16.mxu0 0
    %2133 = vmatpush1.bf16.msra.mxu0 0
    %2134 = vmatprep.subr.bf16.mxu0 0
    %2135 = vmatpush1.bf16.msra.mxu0 0
    %2136 = vmatprep.subr.bf16.mxu0 0
    %2137 = vmatpush1.bf16.msra.mxu0 0
    %2138 = vmatprep.subr.bf16.mxu0 0
    %2139 = vmatpush1.bf16.msra.mxu0 0
    %2140 = vmatprep.subr.bf16.mxu0 0
    %2141 = vmatpush1.bf16.msra.mxu0 0
    %2142 = vmatprep.subr.bf16.mxu0 0
    %2143 = vmatpush1.bf16.msra.mxu0 0
    %2144 = vmatprep.mubr.bf16.mxu0 0
    %2145 = vmatmul.mubr.bf16.gmra.mrb[0].mxu0 %v2110
    %v2146 = vpop.f32.mrb[0].mxu0
    %v2147 = vadd.f32 0.0, %v2146
    %v2148 = vpop.f32.mrb[0].mxu0
    %v2149 = vpop.f32.mrb[0].mxu0
    %v2150 = vpop.f32.mrb[0].mxu0
    %2151 = vdwg.mxu0
    %v2152 = vpack.c.bf16 %v2147, %v2147
    %s2153 = scalar_lea.vmem %s7, 96
    %v2154 = vld [vmem:[%s2153] sm:$0xf]
    %v2155 = vld [vmem:[%s2153 + $0x4] sm:$0xf]
    %v2156 = vld [vmem:[%s2153 + $0x8] sm:$0xf]
    %v2157 = vld [vmem:[%s2153 + $0xc] sm:$0xf]
    %v2158 = vld [vmem:[%s2153 + $0x10] sm:$0xf]
    %v2159 = vld [vmem:[%s2153 + $0x14] sm:$0xf]
    %v2160 = vld [vmem:[%s2153 + $0x18] sm:$0xf]
    %v2161 = vld [vmem:[%s2153 + $0x1c] sm:$0xf]
    %v2170 = vunpack.c.l.b16 %v2154
    %v2171 = vunpack.c.l.b16 %v2155
    %v2172 = vunpack.c.l.b16 %v2156
    %v2173 = vunpack.c.l.b16 %v2157
    %v2174 = vunpack.c.l.b16 %v2158
    %v2175 = vunpack.c.l.b16 %v2159
    %v2176 = vunpack.c.l.b16 %v2160
    %v2177 = vunpack.c.l.b16 %v2161
    %v2178 = vpack.c.b16 %v2171, %v2170
    %v2179 = vpack.c.b16 %v2173, %v2172
    %v2180 = vpack.c.b16 %v2175, %v2174
    %v2181 = vpack.c.b16 %v2177, %v2176
    %v2187 = vsel %vm473, %v2152, 0
    %2189 = vmatprep.subr.bf16.mxu0 0
    %2190 = vmatpush1.bf16.msra.mxu0 %v2178
    %2191 = vmatprep.subr.bf16.mxu0 0
    %2192 = vmatpush1.bf16.msra.mxu0 %v2179
    %2193 = vmatprep.subr.bf16.mxu0 0
    %2194 = vmatpush1.bf16.msra.mxu0 %v2180
    %2195 = vmatprep.subr.bf16.mxu0 0
    %2196 = vmatpush1.bf16.msra.mxu0 %v2181
    %2197 = vmatprep.subr.bf16.mxu0 0
    %2198 = vmatpush1.bf16.msra.mxu0 0
    %2199 = vmatprep.subr.bf16.mxu0 0
    %2200 = vmatpush1.bf16.msra.mxu0 0
    %2201 = vmatprep.subr.bf16.mxu0 0
    %2202 = vmatpush1.bf16.msra.mxu0 0
    %2203 = vmatprep.subr.bf16.mxu0 0
    %2204 = vmatpush1.bf16.msra.mxu0 0
    %2205 = vmatprep.subr.bf16.mxu0 0
    %2206 = vmatpush1.bf16.msra.mxu0 0
    %2207 = vmatprep.subr.bf16.mxu0 0
    %2208 = vmatpush1.bf16.msra.mxu0 0
    %2209 = vmatprep.subr.bf16.mxu0 0
    %2210 = vmatpush1.bf16.msra.mxu0 0
    %2211 = vmatprep.subr.bf16.mxu0 0
    %2212 = vmatpush1.bf16.msra.mxu0 0
    %2213 = vmatprep.subr.bf16.mxu0 0
    %2214 = vmatpush1.bf16.msra.mxu0 0
    %2215 = vmatprep.subr.bf16.mxu0 0
    %2216 = vmatpush1.bf16.msra.mxu0 0
    %2217 = vmatprep.subr.bf16.mxu0 0
    %2218 = vmatpush1.bf16.msra.mxu0 0
    %2219 = vmatprep.subr.bf16.mxu0 0
    %2220 = vmatpush1.bf16.msra.mxu0 0
    %2221 = vmatprep.mubr.bf16.mxu0 0
    %2222 = vmatmul.mubr.bf16.gmra.mrb[0].mxu0 %v2187
    %v2223 = vpop.f32.mrb[0].mxu0
    %v2224 = vadd.f32 0.0, %v2223
    %v2225 = vpop.f32.mrb[0].mxu0
    %v2226 = vpop.f32.mrb[0].mxu0
    %v2227 = vpop.f32.mrb[0].mxu0
    %2228 = vdwg.mxu0
    %v2229 = vadd.f32 %v2106, %v2224
    %s2230 = scalar_lea.vmem [#allocation6], 16
    %v2231 = vld [vmem:[%s2230] sm:$0xf]
    %v2233 = vsel %vm1742, %v2231, 0
    %2235 = vmatprep.subr.bf16.mxu0 0
    %2236 = vmatpush1.bf16.msra.mxu0 %v1739
    %2237 = vmatprep.subr.bf16.mxu0 0
    %2238 = vmatpush1.bf16.msra.mxu0 %v1740
    %2239 = vmatprep.subr.bf16.mxu0 0
    %2240 = vmatpush1.bf16.msra.mxu0 0
    %2241 = vmatprep.subr.bf16.mxu0 0
    %2242 = vmatpush1.bf16.msra.mxu0 0
    %2243 = vmatprep.subr.bf16.mxu0 0
    %2244 = vmatpush1.bf16.msra.mxu0 0
    %2245 = vmatprep.subr.bf16.mxu0 0
    %2246 = vmatpush1.bf16.msra.mxu0 0
    %2247 = vmatprep.subr.bf16.mxu0 0
    %2248 = vmatpush1.bf16.msra.mxu0 0
    %2249 = vmatprep.subr.bf16.mxu0 0
    %2250 = vmatpush1.bf16.msra.mxu0 0
    %2251 = vmatprep.subr.bf16.mxu0 0
    %2252 = vmatpush1.bf16.msra.mxu0 0
    %2253 = vmatprep.subr.bf16.mxu0 0
    %2254 = vmatpush1.bf16.msra.mxu0 0
    %2255 = vmatprep.subr.bf16.mxu0 0
    %2256 = vmatpush1.bf16.msra.mxu0 0
    %2257 = vmatprep.subr.bf16.mxu0 0
    %2258 = vmatpush1.bf16.msra.mxu0 0
    %2259 = vmatprep.subr.bf16.mxu0 0
    %2260 = vmatpush1.bf16.msra.mxu0 0
    %2261 = vmatprep.subr.bf16.mxu0 0
    %2262 = vmatpush1.bf16.msra.mxu0 0
    %2263 = vmatprep.subr.bf16.mxu0 0
    %2264 = vmatpush1.bf16.msra.mxu0 0
    %2265 = vmatprep.subr.bf16.mxu0 0
    %2266 = vmatpush1.bf16.msra.mxu0 0
    %2267 = vmatprep.mubr.bf16.mxu0 0
    %2268 = vmatmul.mubr.bf16.gmra.mrb[0].mxu0 %v2233
    %v2269 = vpop.f32.mrb[0].mxu0
    %v2270 = vadd.f32 0.0, %v2269
    %v2271 = vpop.f32.mrb[0].mxu0
    %v2272 = vpop.f32.mrb[0].mxu0
    %v2273 = vpop.f32.mrb[0].mxu0
    %2274 = vdwg.mxu0
    %v2275 = vpack.c.bf16 %v2270, %v2270
    %s2276 = scalar_lea.vmem %s7, 128
    %v2277 = vld [vmem:[%s2276] sm:$0xf]
    %v2278 = vld [vmem:[%s2276 + $0x4] sm:$0xf]
    %v2279 = vld [vmem:[%s2276 + $0x8] sm:$0xf]
    %v2280 = vld [vmem:[%s2276 + $0xc] sm:$0xf]
    %v2281 = vld [vmem:[%s2276 + $0x10] sm:$0xf]
    %v2282 = vld [vmem:[%s2276 + $0x14] sm:$0xf]
    %v2283 = vld [vmem:[%s2276 + $0x18] sm:$0xf]
    %v2284 = vld [vmem:[%s2276 + $0x1c] sm:$0xf]
    %v2293 = vunpack.c.l.b16 %v2277
    %v2294 = vunpack.c.l.b16 %v2278
    %v2295 = vunpack.c.l.b16 %v2279
    %v2296 = vunpack.c.l.b16 %v2280
    %v2297 = vunpack.c.l.b16 %v2281
    %v2298 = vunpack.c.l.b16 %v2282
    %v2299 = vunpack.c.l.b16 %v2283
    %v2300 = vunpack.c.l.b16 %v2284
    %v2301 = vpack.c.b16 %v2294, %v2293
    %v2302 = vpack.c.b16 %v2296, %v2295
    %v2303 = vpack.c.b16 %v2298, %v2297
    %v2304 = vpack.c.b16 %v2300, %v2299
    %v2310 = vsel %vm473, %v2275, 0
    %2312 = vmatprep.subr.bf16.mxu0 0
    %2313 = vmatpush1.bf16.msra.mxu0 %v2301
    %2314 = vmatprep.subr.bf16.mxu0 0
    %2315 = vmatpush1.bf16.msra.mxu0 %v2302
    %2316 = vmatprep.subr.bf16.mxu0 0
    %2317 = vmatpush1.bf16.msra.mxu0 %v2303
    %2318 = vmatprep.subr.bf16.mxu0 0
    %2319 = vmatpush1.bf16.msra.mxu0 %v2304
    %2320 = vmatprep.subr.bf16.mxu0 0
    %2321 = vmatpush1.bf16.msra.mxu0 0
    %2322 = vmatprep.subr.bf16.mxu0 0
    %2323 = vmatpush1.bf16.msra.mxu0 0
    %2324 = vmatprep.subr.bf16.mxu0 0
    %2325 = vmatpush1.bf16.msra.mxu0 0
    %2326 = vmatprep.subr.bf16.mxu0 0
    %2327 = vmatpush1.bf16.msra.mxu0 0
    %2328 = vmatprep.subr.bf16.mxu0 0
    %2329 = vmatpush1.bf16.msra.mxu0 0
    %2330 = vmatprep.subr.bf16.mxu0 0
    %2331 = vmatpush1.bf16.msra.mxu0 0
    %2332 = vmatprep.subr.bf16.mxu0 0
    %2333 = vmatpush1.bf16.msra.mxu0 0
    %2334 = vmatprep.subr.bf16.mxu0 0
    %2335 = vmatpush1.bf16.msra.mxu0 0
    %2336 = vmatprep.subr.bf16.mxu0 0
    %2337 = vmatpush1.bf16.msra.mxu0 0
    %2338 = vmatprep.subr.bf16.mxu0 0
    %2339 = vmatpush1.bf16.msra.mxu0 0
    %2340 = vmatprep.subr.bf16.mxu0 0
    %2341 = vmatpush1.bf16.msra.mxu0 0
    %2342 = vmatprep.subr.bf16.mxu0 0
    %2343 = vmatpush1.bf16.msra.mxu0 0
    %2344 = vmatprep.mubr.bf16.mxu0 0
    %2345 = vmatmul.mubr.bf16.gmra.mrb[0].mxu0 %v2310
    %v2346 = vpop.f32.mrb[0].mxu0
    %v2347 = vadd.f32 0.0, %v2346
    %v2348 = vpop.f32.mrb[0].mxu0
    %v2349 = vpop.f32.mrb[0].mxu0
    %v2350 = vpop.f32.mrb[0].mxu0
    %2351 = vdwg.mxu0
    %v2352 = vadd.f32 %v2229, %v2347
    %s2353 = scalar_lea.vmem [#allocation6], 20
    %v2354 = vld [vmem:[%s2353] sm:$0xf]
    %v2356 = vsel %vm1742, %v2354, 0
    %2358 = vmatprep.subr.bf16.mxu0 0
    %2359 = vmatpush1.bf16.msra.mxu0 %v1739
    %2360 = vmatprep.subr.bf16.mxu0 0
    %2361 = vmatpush1.bf16.msra.mxu0 %v1740
    %2362 = vmatprep.subr.bf16.mxu0 0
    %2363 = vmatpush1.bf16.msra.mxu0 0
    %2364 = vmatprep.subr.bf16.mxu0 0
    %2365 = vmatpush1.bf16.msra.mxu0 0
    %2366 = vmatprep.subr.bf16.mxu0 0
    %2367 = vmatpush1.bf16.msra.mxu0 0
    %2368 = vmatprep.subr.bf16.mxu0 0
    %2369 = vmatpush1.bf16.msra.mxu0 0
    %2370 = vmatprep.subr.bf16.mxu0 0
    %2371 = vmatpush1.bf16.msra.mxu0 0
    %2372 = vmatprep.subr.bf16.mxu0 0
    %2373 = vmatpush1.bf16.msra.mxu0 0
    %2374 = vmatprep.subr.bf16.mxu0 0
    %2375 = vmatpush1.bf16.msra.mxu0 0
    %2376 = vmatprep.subr.bf16.mxu0 0
    %2377 = vmatpush1.bf16.msra.mxu0 0
    %2378 = vmatprep.subr.bf16.mxu0 0
    %2379 = vmatpush1.bf16.msra.mxu0 0
    %2380 = vmatprep.subr.bf16.mxu0 0
    %2381 = vmatpush1.bf16.msra.mxu0 0
    %2382 = vmatprep.subr.bf16.mxu0 0
    %2383 = vmatpush1.bf16.msra.mxu0 0
    %2384 = vmatprep.subr.bf16.mxu0 0
    %2385 = vmatpush1.bf16.msra.mxu0 0
    %2386 = vmatprep.subr.bf16.mxu0 0
    %2387 = vmatpush1.bf16.msra.mxu0 0
    %2388 = vmatprep.subr.bf16.mxu0 0
    %2389 = vmatpush1.bf16.msra.mxu0 0
    %2390 = vmatprep.mubr.bf16.mxu0 0
    %2391 = vmatmul.mubr.bf16.gmra.mrb[0].mxu0 %v2356
    %v2392 = vpop.f32.mrb[0].mxu0
    %v2393 = vadd.f32 0.0, %v2392
    %v2394 = vpop.f32.mrb[0].mxu0
    %v2395 = vpop.f32.mrb[0].mxu0
    %v2396 = vpop.f32.mrb[0].mxu0
    %2397 = vdwg.mxu0
    %v2398 = vpack.c.bf16 %v2393, %v2393
    %s2399 = scalar_lea.vmem %s7, 160
    %v2400 = vld [vmem:[%s2399] sm:$0xf]
    %v2401 = vld [vmem:[%s2399 + $0x4] sm:$0xf]
    %v2402 = vld [vmem:[%s2399 + $0x8] sm:$0xf]
    %v2403 = vld [vmem:[%s2399 + $0xc] sm:$0xf]
    %v2404 = vld [vmem:[%s2399 + $0x10] sm:$0xf]
    %v2405 = vld [vmem:[%s2399 + $0x14] sm:$0xf]
    %v2406 = vld [vmem:[%s2399 + $0x18] sm:$0xf]
    %v2407 = vld [vmem:[%s2399 + $0x1c] sm:$0xf]
    %v2416 = vunpack.c.l.b16 %v2400
    %v2417 = vunpack.c.l.b16 %v2401
    %v2418 = vunpack.c.l.b16 %v2402
    %v2419 = vunpack.c.l.b16 %v2403
    %v2420 = vunpack.c.l.b16 %v2404
    %v2421 = vunpack.c.l.b16 %v2405
    %v2422 = vunpack.c.l.b16 %v2406
    %v2423 = vunpack.c.l.b16 %v2407
    %v2424 = vpack.c.b16 %v2417, %v2416
    %v2425 = vpack.c.b16 %v2419, %v2418
    %v2426 = vpack.c.b16 %v2421, %v2420
    %v2427 = vpack.c.b16 %v2423, %v2422
    %v2433 = vsel %vm473, %v2398, 0
    %2435 = vmatprep.subr.bf16.mxu0 0
    %2436 = vmatpush1.bf16.msra.mxu0 %v2424
    %2437 = vmatprep.subr.bf16.mxu0 0
    %2438 = vmatpush1.bf16.msra.mxu0 %v2425
    %2439 = vmatprep.subr.bf16.mxu0 0
    %2440 = vmatpush1.bf16.msra.mxu0 %v2426
    %2441 = vmatprep.subr.bf16.mxu0 0
    %2442 = vmatpush1.bf16.msra.mxu0 %v2427
    %2443 = vmatprep.subr.bf16.mxu0 0
    %2444 = vmatpush1.bf16.msra.mxu0 0
    %2445 = vmatprep.subr.bf16.mxu0 0
    %2446 = vmatpush1.bf16.msra.mxu0 0
    %2447 = vmatprep.subr.bf16.mxu0 0
    %2448 = vmatpush1.bf16.msra.mxu0 0
    %2449 = vmatprep.subr.bf16.mxu0 0
    %2450 = vmatpush1.bf16.msra.mxu0 0
    %2451 = vmatprep.subr.bf16.mxu0 0
    %2452 = vmatpush1.bf16.msra.mxu0 0
    %2453 = vmatprep.subr.bf16.mxu0 0
    %2454 = vmatpush1.bf16.msra.mxu0 0
    %2455 = vmatprep.subr.bf16.mxu0 0
    %2456 = vmatpush1.bf16.msra.mxu0 0
    %2457 = vmatprep.subr.bf16.mxu0 0
    %2458 = vmatpush1.bf16.msra.mxu0 0
    %2459 = vmatprep.subr.bf16.mxu0 0
    %2460 = vmatpush1.bf16.msra.mxu0 0
    %2461 = vmatprep.subr.bf16.mxu0 0
    %2462 = vmatpush1.bf16.msra.mxu0 0
    %2463 = vmatprep.subr.bf16.mxu0 0
    %2464 = vmatpush1.bf16.msra.mxu0 0
    %2465 = vmatprep.subr.bf16.mxu0 0
    %2466 = vmatpush1.bf16.msra.mxu0 0
    %2467 = vmatprep.mubr.bf16.mxu0 0
    %2468 = vmatmul.mubr.bf16.gmra.mrb[0].mxu0 %v2433
    %v2469 = vpop.f32.mrb[0].mxu0
    %v2470 = vadd.f32 0.0, %v2469
    %v2471 = vpop.f32.mrb[0].mxu0
    %v2472 = vpop.f32.mrb[0].mxu0
    %v2473 = vpop.f32.mrb[0].mxu0
    %2474 = vdwg.mxu0
    %v2475 = vadd.f32 %v2352, %v2470
    %s2476 = scalar_lea.vmem [#allocation6], 24
    %v2477 = vld [vmem:[%s2476] sm:$0xf]
    %v2479 = vsel %vm1742, %v2477, 0
    %2481 = vmatprep.subr.bf16.mxu0 0
    %2482 = vmatpush1.bf16.msra.mxu0 %v1739
    %2483 = vmatprep.subr.bf16.mxu0 0
    %2484 = vmatpush1.bf16.msra.mxu0 %v1740
    %2485 = vmatprep.subr.bf16.mxu0 0
    %2486 = vmatpush1.bf16.msra.mxu0 0
    %2487 = vmatprep.subr.bf16.mxu0 0
    %2488 = vmatpush1.bf16.msra.mxu0 0
    %2489 = vmatprep.subr.bf16.mxu0 0
    %2490 = vmatpush1.bf16.msra.mxu0 0
    %2491 = vmatprep.subr.bf16.mxu0 0
    %2492 = vmatpush1.bf16.msra.mxu0 0
    %2493 = vmatprep.subr.bf16.mxu0 0
    %2494 = vmatpush1.bf16.msra.mxu0 0
    %2495 = vmatprep.subr.bf16.mxu0 0
    %2496 = vmatpush1.bf16.msra.mxu0 0
    %2497 = vmatprep.subr.bf16.mxu0 0
    %2498 = vmatpush1.bf16.msra.mxu0 0
    %2499 = vmatprep.subr.bf16.mxu0 0
    %2500 = vmatpush1.bf16.msra.mxu0 0
    %2501 = vmatprep.subr.bf16.mxu0 0
    %2502 = vmatpush1.bf16.msra.mxu0 0
    %2503 = vmatprep.subr.bf16.mxu0 0
    %2504 = vmatpush1.bf16.msra.mxu0 0
    %2505 = vmatprep.subr.bf16.mxu0 0
    %2506 = vmatpush1.bf16.msra.mxu0 0
    %2507 = vmatprep.subr.bf16.mxu0 0
    %2508 = vmatpush1.bf16.msra.mxu0 0
    %2509 = vmatprep.subr.bf16.mxu0 0
    %2510 = vmatpush1.bf16.msra.mxu0 0
    %2511 = vmatprep.subr.bf16.mxu0 0
    %2512 = vmatpush1.bf16.msra.mxu0 0
    %2513 = vmatprep.mubr.bf16.mxu0 0
    %2514 = vmatmul.mubr.bf16.gmra.mrb[0].mxu0 %v2479
    %v2515 = vpop.f32.mrb[0].mxu0
    %v2516 = vadd.f32 0.0, %v2515
    %v2517 = vpop.f32.mrb[0].mxu0
    %v2518 = vpop.f32.mrb[0].mxu0
    %v2519 = vpop.f32.mrb[0].mxu0
    %2520 = vdwg.mxu0
    %v2521 = vpack.c.bf16 %v2516, %v2516
    %s2522 = scalar_lea.vmem %s7, 192
    %v2523 = vld [vmem:[%s2522] sm:$0xf]
    %v2524 = vld [vmem:[%s2522 + $0x4] sm:$0xf]
    %v2525 = vld [vmem:[%s2522 + $0x8] sm:$0xf]
    %v2526 = vld [vmem:[%s2522 + $0xc] sm:$0xf]
    %v2527 = vld [vmem:[%s2522 + $0x10] sm:$0xf]
    %v2528 = vld [vmem:[%s2522 + $0x14] sm:$0xf]
    %v2529 = vld [vmem:[%s2522 + $0x18] sm:$0xf]
    %v2530 = vld [vmem:[%s2522 + $0x1c] sm:$0xf]
    %v2539 = vunpack.c.l.b16 %v2523
    %v2540 = vunpack.c.l.b16 %v2524
    %v2541 = vunpack.c.l.b16 %v2525
    %v2542 = vunpack.c.l.b16 %v2526
    %v2543 = vunpack.c.l.b16 %v2527
    %v2544 = vunpack.c.l.b16 %v2528
    %v2545 = vunpack.c.l.b16 %v2529
    %v2546 = vunpack.c.l.b16 %v2530
    %v2547 = vpack.c.b16 %v2540, %v2539
    %v2548 = vpack.c.b16 %v2542, %v2541
    %v2549 = vpack.c.b16 %v2544, %v2543
    %v2550 = vpack.c.b16 %v2546, %v2545
    %v2556 = vsel %vm473, %v2521, 0
    %2558 = vmatprep.subr.bf16.mxu0 0
    %2559 = vmatpush1.bf16.msra.mxu0 %v2547
    %2560 = vmatprep.subr.bf16.mxu0 0
    %2561 = vmatpush1.bf16.msra.mxu0 %v2548
    %2562 = vmatprep.subr.bf16.mxu0 0
    %2563 = vmatpush1.bf16.msra.mxu0 %v2549
    %2564 = vmatprep.subr.bf16.mxu0 0
    %2565 = vmatpush1.bf16.msra.mxu0 %v2550
    %2566 = vmatprep.subr.bf16.mxu0 0
    %2567 = vmatpush1.bf16.msra.mxu0 0
    %2568 = vmatprep.subr.bf16.mxu0 0
    %2569 = vmatpush1.bf16.msra.mxu0 0
    %2570 = vmatprep.subr.bf16.mxu0 0
    %2571 = vmatpush1.bf16.msra.mxu0 0
    %2572 = vmatprep.subr.bf16.mxu0 0
    %2573 = vmatpush1.bf16.msra.mxu0 0
    %2574 = vmatprep.subr.bf16.mxu0 0
    %2575 = vmatpush1.bf16.msra.mxu0 0
    %2576 = vmatprep.subr.bf16.mxu0 0
    %2577 = vmatpush1.bf16.msra.mxu0 0
    %2578 = vmatprep.subr.bf16.mxu0 0
    %2579 = vmatpush1.bf16.msra.mxu0 0
    %2580 = vmatprep.subr.bf16.mxu0 0
    %2581 = vmatpush1.bf16.msra.mxu0 0
    %2582 = vmatprep.subr.bf16.mxu0 0
    %2583 = vmatpush1.bf16.msra.mxu0 0
    %2584 = vmatprep.subr.bf16.mxu0 0
    %2585 = vmatpush1.bf16.msra.mxu0 0
    %2586 = vmatprep.subr.bf16.mxu0 0
    %2587 = vmatpush1.bf16.msra.mxu0 0
    %2588 = vmatprep.subr.bf16.mxu0 0
    %2589 = vmatpush1.bf16.msra.mxu0 0
    %2590 = vmatprep.mubr.bf16.mxu0 0
    %2591 = vmatmul.mubr.bf16.gmra.mrb[0].mxu0 %v2556
    %v2592 = vpop.f32.mrb[0].mxu0
    %v2593 = vadd.f32 0.0, %v2592
    %v2594 = vpop.f32.mrb[0].mxu0
    %v2595 = vpop.f32.mrb[0].mxu0
    %v2596 = vpop.f32.mrb[0].mxu0
    %2597 = vdwg.mxu0
    %v2598 = vadd.f32 %v2475, %v2593
    %s2599 = scalar_lea.vmem [#allocation6], 28
    %v2600 = vld [vmem:[%s2599] sm:$0xf]
    %v2602 = vsel %vm1742, %v2600, 0
    %2604 = vmatprep.subr.bf16.mxu0 0
    %2605 = vmatpush1.bf16.msra.mxu0 %v1739
    %2606 = vmatprep.subr.bf16.mxu0 0
    %2607 = vmatpush1.bf16.msra.mxu0 %v1740
    %2608 = vmatprep.subr.bf16.mxu0 0
    %2609 = vmatpush1.bf16.msra.mxu0 0
    %2610 = vmatprep.subr.bf16.mxu0 0
    %2611 = vmatpush1.bf16.msra.mxu0 0
    %2612 = vmatprep.subr.bf16.mxu0 0
    %2613 = vmatpush1.bf16.msra.mxu0 0
    %2614 = vmatprep.subr.bf16.mxu0 0
    %2615 = vmatpush1.bf16.msra.mxu0 0
    %2616 = vmatprep.subr.bf16.mxu0 0
    %2617 = vmatpush1.bf16.msra.mxu0 0
    %2618 = vmatprep.subr.bf16.mxu0 0
    %2619 = vmatpush1.bf16.msra.mxu0 0
    %2620 = vmatprep.subr.bf16.mxu0 0
    %2621 = vmatpush1.bf16.msra.mxu0 0
    %2622 = vmatprep.subr.bf16.mxu0 0
    %2623 = vmatpush1.bf16.msra.mxu0 0
    %2624 = vmatprep.subr.bf16.mxu0 0
    %2625 = vmatpush1.bf16.msra.mxu0 0
    %2626 = vmatprep.subr.bf16.mxu0 0
    %2627 = vmatpush1.bf16.msra.mxu0 0
    %2628 = vmatprep.subr.bf16.mxu0 0
    %2629 = vmatpush1.bf16.msra.mxu0 0
    %2630 = vmatprep.subr.bf16.mxu0 0
    %2631 = vmatpush1.bf16.msra.mxu0 0
    %2632 = vmatprep.subr.bf16.mxu0 0
    %2633 = vmatpush1.bf16.msra.mxu0 0
    %2634 = vmatprep.subr.bf16.mxu0 0
    %2635 = vmatpush1.bf16.msra.mxu0 0
    %2636 = vmatprep.mubr.bf16.mxu0 0
    %2637 = vmatmul.mubr.bf16.gmra.mrb[0].mxu0 %v2602
    %v2638 = vpop.f32.mrb[0].mxu0
    %v2639 = vadd.f32 0.0, %v2638
    %v2640 = vpop.f32.mrb[0].mxu0
    %v2641 = vpop.f32.mrb[0].mxu0
    %v2642 = vpop.f32.mrb[0].mxu0
    %2643 = vdwg.mxu0
    %v2644 = vpack.c.bf16 %v2639, %v2639
    %s2645 = scalar_lea.vmem %s7, 224
    %v2646 = vld [vmem:[%s2645] sm:$0xf]
    %v2647 = vld [vmem:[%s2645 + $0x4] sm:$0xf]
    %v2648 = vld [vmem:[%s2645 + $0x8] sm:$0xf]
    %v2649 = vld [vmem:[%s2645 + $0xc] sm:$0xf]
    %v2650 = vld [vmem:[%s2645 + $0x10] sm:$0xf]
    %v2651 = vld [vmem:[%s2645 + $0x14] sm:$0xf]
    %v2652 = vld [vmem:[%s2645 + $0x18] sm:$0xf]
    %v2653 = vld [vmem:[%s2645 + $0x1c] sm:$0xf]
    %v2662 = vunpack.c.l.b16 %v2646
    %v2663 = vunpack.c.l.b16 %v2647
    %v2664 = vunpack.c.l.b16 %v2648
    %v2665 = vunpack.c.l.b16 %v2649
    %v2666 = vunpack.c.l.b16 %v2650
    %v2667 = vunpack.c.l.b16 %v2651
    %v2668 = vunpack.c.l.b16 %v2652
    %v2669 = vunpack.c.l.b16 %v2653
    %v2670 = vpack.c.b16 %v2663, %v2662
    %v2671 = vpack.c.b16 %v2665, %v2664
    %v2672 = vpack.c.b16 %v2667, %v2666
    %v2673 = vpack.c.b16 %v2669, %v2668
    %v2679 = vsel %vm473, %v2644, 0
    %2681 = vmatprep.subr.bf16.mxu0 0
    %2682 = vmatpush1.bf16.msra.mxu0 %v2670
    %2683 = vmatprep.subr.bf16.mxu0 0
    %2684 = vmatpush1.bf16.msra.mxu0 %v2671
    %2685 = vmatprep.subr.bf16.mxu0 0
    %2686 = vmatpush1.bf16.msra.mxu0 %v2672
    %2687 = vmatprep.subr.bf16.mxu0 0
    %2688 = vmatpush1.bf16.msra.mxu0 %v2673
    %2689 = vmatprep.subr.bf16.mxu0 0
    %2690 = vmatpush1.bf16.msra.mxu0 0
    %2691 = vmatprep.subr.bf16.mxu0 0
    %2692 = vmatpush1.bf16.msra.mxu0 0
    %2693 = vmatprep.subr.bf16.mxu0 0
    %2694 = vmatpush1.bf16.msra.mxu0 0
    %2695 = vmatprep.subr.bf16.mxu0 0
    %2696 = vmatpush1.bf16.msra.mxu0 0
    %2697 = vmatprep.subr.bf16.mxu0 0
    %2698 = vmatpush1.bf16.msra.mxu0 0
    %2699 = vmatprep.subr.bf16.mxu0 0
    %2700 = vmatpush1.bf16.msra.mxu0 0
    %2701 = vmatprep.subr.bf16.mxu0 0
    %2702 = vmatpush1.bf16.msra.mxu0 0
    %2703 = vmatprep.subr.bf16.mxu0 0
    %2704 = vmatpush1.bf16.msra.mxu0 0
    %2705 = vmatprep.subr.bf16.mxu0 0
    %2706 = vmatpush1.bf16.msra.mxu0 0
    %2707 = vmatprep.subr.bf16.mxu0 0
    %2708 = vmatpush1.bf16.msra.mxu0 0
    %2709 = vmatprep.subr.bf16.mxu0 0
    %2710 = vmatpush1.bf16.msra.mxu0 0
    %2711 = vmatprep.subr.bf16.mxu0 0
    %2712 = vmatpush1.bf16.msra.mxu0 0
    %2713 = vmatprep.mubr.bf16.mxu0 0
    %2714 = vmatmul.mubr.bf16.gmra.mrb[0].mxu0 %v2679
    %v2715 = vpop.f32.mrb[0].mxu0
    %v2716 = vadd.f32 0.0, %v2715
    %v2717 = vpop.f32.mrb[0].mxu0
    %v2718 = vpop.f32.mrb[0].mxu0
    %v2719 = vpop.f32.mrb[0].mxu0
    %2720 = vdwg.mxu0
    %v2721 = vadd.f32 %v2598, %v2716
    %s2722 = scalar_lea.vmem [#allocation6], 32
    %v2723 = vld [vmem:[%s2722] sm:$0xf]
    %v2725 = vsel %vm1742, %v2723, 0
    %2727 = vmatprep.subr.bf16.mxu0 0
    %2728 = vmatpush1.bf16.msra.mxu0 %v1739
    %2729 = vmatprep.subr.bf16.mxu0 0
    %2730 = vmatpush1.bf16.msra.mxu0 %v1740
    %2731 = vmatprep.subr.bf16.mxu0 0
    %2732 = vmatpush1.bf16.msra.mxu0 0
    %2733 = vmatprep.subr.bf16.mxu0 0
    %2734 = vmatpush1.bf16.msra.mxu0 0
    %2735 = vmatprep.subr.bf16.mxu0 0
    %2736 = vmatpush1.bf16.msra.mxu0 0
    %2737 = vmatprep.subr.bf16.mxu0 0
    %2738 = vmatpush1.bf16.msra.mxu0 0
    %2739 = vmatprep.subr.bf16.mxu0 0
    %2740 = vmatpush1.bf16.msra.mxu0 0
    %2741 = vmatprep.subr.bf16.mxu0 0
    %2742 = vmatpush1.bf16.msra.mxu0 0
    %2743 = vmatprep.subr.bf16.mxu0 0
    %2744 = vmatpush1.bf16.msra.mxu0 0
    %2745 = vmatprep.subr.bf16.mxu0 0
    %2746 = vmatpush1.bf16.msra.mxu0 0
    %2747 = vmatprep.subr.bf16.mxu0 0
    %2748 = vmatpush1.bf16.msra.mxu0 0
    %2749 = vmatprep.subr.bf16.mxu0 0
    %2750 = vmatpush1.bf16.msra.mxu0 0
    %2751 = vmatprep.subr.bf16.mxu0 0
    %2752 = vmatpush1.bf16.msra.mxu0 0
    %2753 = vmatprep.subr.bf16.mxu0 0
    %2754 = vmatpush1.bf16.msra.mxu0 0
    %2755 = vmatprep.subr.bf16.mxu0 0
    %2756 = vmatpush1.bf16.msra.mxu0 0
    %2757 = vmatprep.subr.bf16.mxu0 0
    %2758 = vmatpush1.bf16.msra.mxu0 0
    %2759 = vmatprep.mubr.bf16.mxu0 0
    %2760 = vmatmul.mubr.bf16.gmra.mrb[0].mxu0 %v2725
    %v2761 = vpop.f32.mrb[0].mxu0
    %v2762 = vadd.f32 0.0, %v2761
    %v2763 = vpop.f32.mrb[0].mxu0
    %v2764 = vpop.f32.mrb[0].mxu0
    %v2765 = vpop.f32.mrb[0].mxu0
    %2766 = vdwg.mxu0
    %v2767 = vpack.c.bf16 %v2762, %v2762
    %s2768 = scalar_lea.vmem %s7, 256
    %v2769 = vld [vmem:[%s2768] sm:$0xf]
    %v2770 = vld [vmem:[%s2768 + $0x4] sm:$0xf]
    %v2771 = vld [vmem:[%s2768 + $0x8] sm:$0xf]
    %v2772 = vld [vmem:[%s2768 + $0xc] sm:$0xf]
    %v2773 = vld [vmem:[%s2768 + $0x10] sm:$0xf]
    %v2774 = vld [vmem:[%s2768 + $0x14] sm:$0xf]
    %v2775 = vld [vmem:[%s2768 + $0x18] sm:$0xf]
    %v2776 = vld [vmem:[%s2768 + $0x1c] sm:$0xf]
    %v2785 = vunpack.c.l.b16 %v2769
    %v2786 = vunpack.c.l.b16 %v2770
    %v2787 = vunpack.c.l.b16 %v2771
    %v2788 = vunpack.c.l.b16 %v2772
    %v2789 = vunpack.c.l.b16 %v2773
    %v2790 = vunpack.c.l.b16 %v2774
    %v2791 = vunpack.c.l.b16 %v2775
    %v2792 = vunpack.c.l.b16 %v2776
    %v2793 = vpack.c.b16 %v2786, %v2785
    %v2794 = vpack.c.b16 %v2788, %v2787
    %v2795 = vpack.c.b16 %v2790, %v2789
    %v2796 = vpack.c.b16 %v2792, %v2791
    %v2802 = vsel %vm473, %v2767, 0
    %2804 = vmatprep.subr.bf16.mxu0 0
    %2805 = vmatpush1.bf16.msra.mxu0 %v2793
    %2806 = vmatprep.subr.bf16.mxu0 0
    %2807 = vmatpush1.bf16.msra.mxu0 %v2794
    %2808 = vmatprep.subr.bf16.mxu0 0
    %2809 = vmatpush1.bf16.msra.mxu0 %v2795
    %2810 = vmatprep.subr.bf16.mxu0 0
    %2811 = vmatpush1.bf16.msra.mxu0 %v2796
    %2812 = vmatprep.subr.bf16.mxu0 0
    %2813 = vmatpush1.bf16.msra.mxu0 0
    %2814 = vmatprep.subr.bf16.mxu0 0
    %2815 = vmatpush1.bf16.msra.mxu0 0
    %2816 = vmatprep.subr.bf16.mxu0 0
    %2817 = vmatpush1.bf16.msra.mxu0 0
    %2818 = vmatprep.subr.bf16.mxu0 0
    %2819 = vmatpush1.bf16.msra.mxu0 0
    %2820 = vmatprep.subr.bf16.mxu0 0
    %2821 = vmatpush1.bf16.msra.mxu0 0
    %2822 = vmatprep.subr.bf16.mxu0 0
    %2823 = vmatpush1.bf16.msra.mxu0 0
    %2824 = vmatprep.subr.bf16.mxu0 0
    %2825 = vmatpush1.bf16.msra.mxu0 0
    %2826 = vmatprep.subr.bf16.mxu0 0
    %2827 = vmatpush1.bf16.msra.mxu0 0
    %2828 = vmatprep.subr.bf16.mxu0 0
    %2829 = vmatpush1.bf16.msra.mxu0 0
    %2830 = vmatprep.subr.bf16.mxu0 0
    %2831 = vmatpush1.bf16.msra.mxu0 0
    %2832 = vmatprep.subr.bf16.mxu0 0
    %2833 = vmatpush1.bf16.msra.mxu0 0
    %2834 = vmatprep.subr.bf16.mxu0 0
    %2835 = vmatpush1.bf16.msra.mxu0 0
    %2836 = vmatprep.mubr.bf16.mxu0 0
    %2837 = vmatmul.mubr.bf16.gmra.mrb[0].mxu0 %v2802
    %v2838 = vpop.f32.mrb[0].mxu0
    %v2839 = vadd.f32 0.0, %v2838
    %v2840 = vpop.f32.mrb[0].mxu0
    %v2841 = vpop.f32.mrb[0].mxu0
    %v2842 = vpop.f32.mrb[0].mxu0
    %2843 = vdwg.mxu0
    %v2844 = vadd.f32 %v2721, %v2839
    %v2845 = vld [vmem:[#allocation7] sm:$0x1]
    %v2847 = vlaneseq
    %v2848 = vshrl.u32 %v2847, 7
    %v2849 = vsub.s32 0, %v2848
    %v2850 = vrot.slane %v2845, %v2849
    %v2852 = vadd.f32 %v2844, %v2850
    %v2853 = vpack.c.bf16 %v2852, %v2852
    %vm2854 = vcmask 519168
    %2855 = vst.msk [vmem:[%s9] sm:$0xf] %vm2854, %v2853
    // Predicated region
    $region54: #{_lambda_.2} parent=1 // pred_check
      _
    $region55: #{_lambda_.2} parent=1 // pred_check_branch
      %2857 = sbr.rel (0) target = $region57
    $region56: #{_lambda_.2} parent=1 // pred_region
      _
    $region57: #{_lambda_.2} parent=1 // pred_fallthru
      _
    // Predicated region
    $region58: #{_lambda_.2} parent=1 // pred_check
      _
    $region59: #{_lambda_.2} parent=1 // pred_check_branch
      %2859 = sbr.rel (0) target = $region61
    $region60: #{_lambda_.2} parent=1 // pred_region
      _
    $region61: #{_lambda_.2} parent=1 // pred_fallthru
      _
    %2860 = vsyncpa [#allocation3], 1
    %2861 = vsyncpa [#allocation5], 1
    %2862 = vsyncpa [#allocation8], 1

// kernel: _lambda_.3
$region0: #{_lambda_.3}
  #allocation0 [shape = 'u32[]', space=smem, size = 0x4, offset = 0x4, fixed_abs, tag = 'smem constant byte address 0x4 - core index']
  #allocation1 [shape = 'u32[144,128]{1,0:T(1,128)}', space=vmem, size = 0x12000, scoped, tag = 'internal scratch']
  %s0 = inlined_call_operand.vmem [shape: bf16[8,64], index: 0, kind: input, shape index: {}]
  %s1 = inlined_call_operand.hbm [shape: bf16[4,32,8], index: 1, kind: input, shape index: {}]
  %s2 = inlined_call_operand.vmem [shape: bf16[4,128,32], index: 2, kind: input, shape index: {}]
  %s3 = inlined_call_operand.vmem [shape: bf16[4,512,128], index: 3, kind: input, shape index: {}]
  %s4 = inlined_call_operand.vmem [shape: bf16[2,4,64,64], index: 4, kind: input, shape index: {}]
  %s5 = inlined_call_operand.hbm [shape: f32[2,1,64], index: 5, kind: input, shape index: {}]
  %s6 = inlined_call_operand.vmem [shape: bf16[2,4,64,64], index: 6, kind: input, shape index: {}]
  %s7 = inlined_call_operand.hbm [shape: f32[2,1,64], index: 7, kind: input, shape index: {}]
  %s8 = inlined_call_operand.vmem [shape: bf16[2,4,64,3], index: 8, kind: input, shape index: {}]
  %s9 = inlined_call_operand.hbm [shape: f32[2,1,3], index: 9, kind: input, shape index: {}]
  %s10 = inlined_call_operand.vmem [shape: f32[2,512,3], index: 10, kind: output, shape index: {}]
  %s11 = sld [smem:[#allocation0]]
  $region89: #{_lambda_.3} parent=0
    _
  %s13 = ssub.s32 1, %s11
  %s14 = scalar_select 0, %s13, %s11
  $region1: #{_lambda_.3} parent=0
    #allocation2 [shape = 'u8[32768]{0}', space=vmem, size = 0x8000, scoped, tag = 'input window, operand 1, single buffered']
    #allocation3 [shape = 's32[2]{0}', space=sflag, size = 0x8, scoped, tag = 'scoped memory for _lambda_.3']
    #allocation4 [shape = 'u8[1024]{0}', space=vmem, size = 0x400, scoped, tag = 'input window, operand 5']
    #allocation5 [shape = 's32[2]{0}', space=sflag, size = 0x8, scoped, tag = 'scoped memory for _lambda_.3']
    #allocation6 [shape = 'u8[1024]{0}', space=vmem, size = 0x400, scoped, tag = 'input window, operand 7']
    #allocation7 [shape = 'u8[1024]{0}', space=vmem, size = 0x400, scoped, tag = 'input window, operand 9']
    #allocation8 [shape = 's32[2]{0}', space=sflag, size = 0x8, scoped, tag = 'scoped memory for _lambda_.3']
    %15 = vsyncpa [#allocation3], 0
    %16 = vsyncpa [#allocation5], 0
    %s17 = scalar_lea.sflag [#allocation5], 1
    %18 = vsyncpa %s17, 0
    %19 = vsyncpa [#allocation8], 0
    %s20 = scalar_lea.sflag [#allocation8], 1
    %21 = vsyncpa %s20, 0
    loop: start=0, step=1, limit=4
    $region2: #{_lambda_.3} parent=1 // loop_pre_header
      _
    $region3: #{_lambda_.3} parent=1 // loop_header
      %s23 = sphi 0, %s27
      %p24 = scmp.ge.s32.totalorder %s23, 4
      %s31 = sphi 0, %s31
      %s33 = sphi 0, %s31
      %s34 = sphi 0, %s33
      %s48 = sphi 0, %s34
      %s52 = sphi 0, %s52
      %s54 = sphi 0, %s52
      %s55 = sphi 0, %s54
      %s69 = sphi 0, %s55
      %s73 = sphi 0, %s73
      %s75 = sphi 0, %s73
      %s76 = sphi 0, %s75
      %s90 = sphi 0, %s76
      %s94 = sphi 0, %s94
      %s96 = sphi 0, %s94
      %s97 = sphi 0, %s96
      %s111 = sphi 0, %s97
      %s117 = sphi 0, %s119
      %s120 = sphi 0, %s117
      %s121 = sphi 0, %s120
      %s137 = sphi 0, %s121
      %s143 = sphi 0, %s145
      %s146 = sphi 0, %s143
      %s147 = sphi 0, %s146
      %s163 = sphi 0, %s147
      %s169 = sphi 0, %s171
      %s172 = sphi 0, %s169
      %s173 = sphi 0, %s172
      %s189 = sphi 0, %s173
      %s195 = sphi 0, %s197
      %s198 = sphi 0, %s195
      %s199 = sphi 0, %s198
      %s215 = sphi 0, %s199
      %s221 = sphi 0, %s223
      %s224 = sphi 0, %s221
      %s225 = sphi 0, %s224
      %s241 = sphi 0, %s225
      %s247 = sphi 0, %s249
      %s250 = sphi 0, %s247
      %s251 = sphi 0, %s250
      %s267 = sphi 0, %s251
      %s273 = sphi 0, %s275
      %s276 = sphi 0, %s273
      %s277 = sphi 0, %s276
      %s293 = sphi 0, %s277
    $region4: #{_lambda_.3} parent=1 // loop_header_branch
      %26 = sbr.rel (%p24) target = $region8
    $region5: #{_lambda_.3} parent=1 // loop_body
      %s28 = ssub.s32 %s23, 1
      %s29 = ssub.s32 %s23, 2
      %s30 = sadd.s32 %s23, 1
      %s32 = sadd.s32 %s31, 1
      %p35 = scmp.eq.s32.totalorder %s23, 1
      %p36 = scmp.ne.s32.totalorder %s31, %s33
      %p37 = scmp.eq.s32.totalorder %s23, 0
      %p38 = por %p36, %p37
      %p39 = scmp.ne.s32.totalorder %s31, %s33
      %p40 = scmp.eq.s32.totalorder %s28, 1
      %p41 = por %p39, %p40
      %p42 = scmp.ne.s32.totalorder %s33, %s34
      %p43 = scmp.eq.s32.totalorder %s28, 0
      %p44 = por %p42, %p43
      %p45 = scmp.ne.s32.totalorder %s33, %s34
      %p46 = scmp.eq.s32.totalorder %s29, 1
      %p47 = por %p45, %p46
      %p49 = scmp.ne.s32.totalorder %s34, %s48
      %p50 = scmp.eq.s32.totalorder %s29, 0
      %p51 = por %p49, %p50
      %s53 = sadd.s32 %s52, 1
      %p56 = scmp.eq.s32.totalorder %s23, 1
      %p57 = scmp.ne.s32.totalorder %s52, %s54
      %p58 = scmp.eq.s32.totalorder %s23, 0
      %p59 = por %p57, %p58
      %p60 = scmp.ne.s32.totalorder %s52, %s54
      %p61 = scmp.eq.s32.totalorder %s28, 1
      %p62 = por %p60, %p61
      %p63 = scmp.ne.s32.totalorder %s54, %s55
      %p64 = scmp.eq.s32.totalorder %s28, 0
      %p65 = por %p63, %p64
      %p66 = scmp.ne.s32.totalorder %s54, %s55
      %p67 = scmp.eq.s32.totalorder %s29, 1
      %p68 = por %p66, %p67
      %p70 = scmp.ne.s32.totalorder %s55, %s69
      %p71 = scmp.eq.s32.totalorder %s29, 0
      %p72 = por %p70, %p71
      %s74 = sadd.s32 %s73, 1
      %p77 = scmp.eq.s32.totalorder %s23, 1
      %p78 = scmp.ne.s32.totalorder %s73, %s75
      %p79 = scmp.eq.s32.totalorder %s23, 0
      %p80 = por %p78, %p79
      %p81 = scmp.ne.s32.totalorder %s73, %s75
      %p82 = scmp.eq.s32.totalorder %s28, 1
      %p83 = por %p81, %p82
      %p84 = scmp.ne.s32.totalorder %s75, %s76
      %p85 = scmp.eq.s32.totalorder %s28, 0
      %p86 = por %p84, %p85
      %p87 = scmp.ne.s32.totalorder %s75, %s76
      %p88 = scmp.eq.s32.totalorder %s29, 1
      %p89 = por %p87, %p88
      %p91 = scmp.ne.s32.totalorder %s76, %s90
      %p92 = scmp.eq.s32.totalorder %s29, 0
      %p93 = por %p91, %p92
      %s95 = sadd.s32 %s94, 1
      %p98 = scmp.eq.s32.totalorder %s23, 1
      %p99 = scmp.ne.s32.totalorder %s94, %s96
      %p100 = scmp.eq.s32.totalorder %s23, 0
      %p101 = por %p99, %p100
      %p102 = scmp.ne.s32.totalorder %s94, %s96
      %p103 = scmp.eq.s32.totalorder %s28, 1
      %p104 = por %p102, %p103
      %p105 = scmp.ne.s32.totalorder %s96, %s97
      %p106 = scmp.eq.s32.totalorder %s28, 0
      %p107 = por %p105, %p106
      %p108 = scmp.ne.s32.totalorder %s96, %s97
      %p109 = scmp.eq.s32.totalorder %s29, 1
      %p110 = por %p108, %p109
      %p112 = scmp.ne.s32.totalorder %s97, %s111
      %p113 = scmp.eq.s32.totalorder %s29, 0
      %p114 = por %p112, %p113
      %s115 = ssub.s32 %s23, %s30
      %p116 = scmp.eq.s32.totalorder %s115, 0
      %s118 = sadd.s32 %s117, 1
      %s119 = scalar_select %p116, %s117, %s118
      %p122 = pneg %p116
      %p123 = scmp.eq.s32.totalorder %s23, 1
      %p124 = por %p122, %p123
      %p125 = scmp.ne.s32.totalorder %s117, %s120
      %p126 = scmp.eq.s32.totalorder %s23, 0
      %p127 = por %p125, %p126
      %p128 = scmp.ne.s32.totalorder %s117, %s120
      %p129 = scmp.eq.s32.totalorder %s28, 1
      %p130 = por %p128, %p129
      %p131 = scmp.ne.s32.totalorder %s120, %s121
      %p132 = scmp.eq.s32.totalorder %s28, 0
      %p133 = por %p131, %p132
      %p134 = scmp.ne.s32.totalorder %s120, %s121
      %p135 = scmp.eq.s32.totalorder %s29, 1
      %p136 = por %p134, %p135
      %p138 = scmp.ne.s32.totalorder %s121, %s137
      %p139 = scmp.eq.s32.totalorder %s29, 0
      %p140 = por %p138, %p139
      %s141 = ssub.s32 %s23, %s30
      %p142 = scmp.eq.s32.totalorder %s141, 0
      %s144 = sadd.s32 %s143, 1
      %s145 = scalar_select %p142, %s143, %s144
      %p148 = pneg %p142
      %p149 = scmp.eq.s32.totalorder %s23, 1
      %p150 = por %p148, %p149
      %p151 = scmp.ne.s32.totalorder %s143, %s146
      %p152 = scmp.eq.s32.totalorder %s23, 0
      %p153 = por %p151, %p152
      %p154 = scmp.ne.s32.totalorder %s143, %s146
      %p155 = scmp.eq.s32.totalorder %s28, 1
      %p156 = por %p154, %p155
      %p157 = scmp.ne.s32.totalorder %s146, %s147
      %p158 = scmp.eq.s32.totalorder %s28, 0
      %p159 = por %p157, %p158
      %p160 = scmp.ne.s32.totalorder %s146, %s147
      %p161 = scmp.eq.s32.totalorder %s29, 1
      %p162 = por %p160, %p161
      %p164 = scmp.ne.s32.totalorder %s147, %s163
      %p165 = scmp.eq.s32.totalorder %s29, 0
      %p166 = por %p164, %p165
      %s167 = ssub.s32 %s23, %s30
      %p168 = scmp.eq.s32.totalorder %s167, 0
      %s170 = sadd.s32 %s169, 1
      %s171 = scalar_select %p168, %s169, %s170
      %p174 = pneg %p168
      %p175 = scmp.eq.s32.totalorder %s23, 1
      %p176 = por %p174, %p175
      %p177 = scmp.ne.s32.totalorder %s169, %s172
      %p178 = scmp.eq.s32.totalorder %s23, 0
      %p179 = por %p177, %p178
      %p180 = scmp.ne.s32.totalorder %s169, %s172
      %p181 = scmp.eq.s32.totalorder %s28, 1
      %p182 = por %p180, %p181
      %p183 = scmp.ne.s32.totalorder %s172, %s173
      %p184 = scmp.eq.s32.totalorder %s28, 0
      %p185 = por %p183, %p184
      %p186 = scmp.ne.s32.totalorder %s172, %s173
      %p187 = scmp.eq.s32.totalorder %s29, 1
      %p188 = por %p186, %p187
      %p190 = scmp.ne.s32.totalorder %s173, %s189
      %p191 = scmp.eq.s32.totalorder %s29, 0
      %p192 = por %p190, %p191
      %s193 = ssub.s32 %s23, %s30
      %p194 = scmp.eq.s32.totalorder %s193, 0
      %s196 = sadd.s32 %s195, 1
      %s197 = scalar_select %p194, %s195, %s196
      %p200 = pneg %p194
      %p201 = scmp.eq.s32.totalorder %s23, 1
      %p202 = por %p200, %p201
      %p203 = scmp.ne.s32.totalorder %s195, %s198
      %p204 = scmp.eq.s32.totalorder %s23, 0
      %p205 = por %p203, %p204
      %p206 = scmp.ne.s32.totalorder %s195, %s198
      %p207 = scmp.eq.s32.totalorder %s28, 1
      %p208 = por %p206, %p207
      %p209 = scmp.ne.s32.totalorder %s198, %s199
      %p210 = scmp.eq.s32.totalorder %s28, 0
      %p211 = por %p209, %p210
      %p212 = scmp.ne.s32.totalorder %s198, %s199
      %p213 = scmp.eq.s32.totalorder %s29, 1
      %p214 = por %p212, %p213
      %p216 = scmp.ne.s32.totalorder %s199, %s215
      %p217 = scmp.eq.s32.totalorder %s29, 0
      %p218 = por %p216, %p217
      %s219 = ssub.s32 %s23, %s30
      %p220 = scmp.eq.s32.totalorder %s219, 0
      %s222 = sadd.s32 %s221, 1
      %s223 = scalar_select %p220, %s221, %s222
      %p226 = pneg %p220
      %p227 = scmp.eq.s32.totalorder %s23, 1
      %p228 = por %p226, %p227
      %p229 = scmp.ne.s32.totalorder %s221, %s224
      %p230 = scmp.eq.s32.totalorder %s23, 0
      %p231 = por %p229, %p230
      %p232 = scmp.ne.s32.totalorder %s221, %s224
      %p233 = scmp.eq.s32.totalorder %s28, 1
      %p234 = por %p232, %p233
      %p235 = scmp.ne.s32.totalorder %s224, %s225
      %p236 = scmp.eq.s32.totalorder %s28, 0
      %p237 = por %p235, %p236
      %p238 = scmp.ne.s32.totalorder %s224, %s225
      %p239 = scmp.eq.s32.totalorder %s29, 1
      %p240 = por %p238, %p239
      %p242 = scmp.ne.s32.totalorder %s225, %s241
      %p243 = scmp.eq.s32.totalorder %s29, 0
      %p244 = por %p242, %p243
      %s245 = ssub.s32 %s23, %s30
      %p246 = scmp.eq.s32.totalorder %s245, 0
      %s248 = sadd.s32 %s247, 1
      %s249 = scalar_select %p246, %s247, %s248
      %p252 = pneg %p246
      %p253 = scmp.eq.s32.totalorder %s23, 1
      %p254 = por %p252, %p253
      %p255 = scmp.ne.s32.totalorder %s247, %s250
      %p256 = scmp.eq.s32.totalorder %s23, 0
      %p257 = por %p255, %p256
      %p258 = scmp.ne.s32.totalorder %s247, %s250
      %p259 = scmp.eq.s32.totalorder %s28, 1
      %p260 = por %p258, %p259
      %p261 = scmp.ne.s32.totalorder %s250, %s251
      %p262 = scmp.eq.s32.totalorder %s28, 0
      %p263 = por %p261, %p262
      %p264 = scmp.ne.s32.totalorder %s250, %s251
      %p265 = scmp.eq.s32.totalorder %s29, 1
      %p266 = por %p264, %p265
      %p268 = scmp.ne.s32.totalorder %s251, %s267
      %p269 = scmp.eq.s32.totalorder %s29, 0
      %p270 = por %p268, %p269
      %s271 = ssub.s32 %s23, %s30
      %p272 = scmp.eq.s32.totalorder %s271, 0
      %s274 = sadd.s32 %s273, 1
      %s275 = scalar_select %p272, %s273, %s274
      %p278 = pneg %p272
      %p279 = scmp.eq.s32.totalorder %s23, 1
      %p280 = por %p278, %p279
      %p281 = scmp.ne.s32.totalorder %s273, %s276
      %p282 = scmp.eq.s32.totalorder %s23, 0
      %p283 = por %p281, %p282
      %p284 = scmp.ne.s32.totalorder %s273, %s276
      %p285 = scmp.eq.s32.totalorder %s28, 1
      %p286 = por %p284, %p285
      %p287 = scmp.ne.s32.totalorder %s276, %s277
      %p288 = scmp.eq.s32.totalorder %s28, 0
      %p289 = por %p287, %p288
      %p290 = scmp.ne.s32.totalorder %s276, %s277
      %p291 = scmp.eq.s32.totalorder %s29, 1
      %p292 = por %p290, %p291
      %p294 = scmp.ne.s32.totalorder %s277, %s293
      %p295 = scmp.eq.s32.totalorder %s29, 0
      %p296 = por %p294, %p295
      %p297 = scmp.le.s32.totalorder 1, %s23
      %p298 = scmp.lt.s32.totalorder %s23, 3
      %p299 = pnand %p297, %p298
      %p300 = pneg %p299
      // Predicated region
      $region9: #{_lambda_.3} parent=5 // pred_check
        _
      $region10: #{_lambda_.3} parent=5 // pred_check_branch
        %302 = sbr.rel (%p299) target = $region12
      $region11: #{_lambda_.3} parent=5 // pred_region
        %s303 = ssub.s32 %s23, 1
        // Predicated region
        $region13: #{_lambda_.3} parent=11 // pred_check
          %p304 = pneg %p44
        $region14: #{_lambda_.3} parent=11 // pred_check_branch
          %306 = sbr.rel (%p304) target = $region16
        $region15: #{_lambda_.3} parent=11 // pred_region
          _
        $region16: #{_lambda_.3} parent=11 // pred_fallthru
          _
        // Predicated region
        $region17: #{_lambda_.3} parent=11 // pred_check
          %p307 = pneg %p65
        $region18: #{_lambda_.3} parent=11 // pred_check_branch
          %309 = sbr.rel (%p307) target = $region20
        $region19: #{_lambda_.3} parent=11 // pred_region
          %s311 = ssub.s32 1024, 1024
          %312 = vsyncadd [#allocation3], %s311
          %s313 = sshll.u32 [#allocation2], 4
          %s314 = int_to_ptr.vmem [resolvable:$true] %s313
          %319 = dma.hbm_to_vmem [thread:$0]  %s1, 1024, %s314, [#allocation3], 64, 64, 4
        $region20: #{_lambda_.3} parent=11 // pred_fallthru
          _
        // Predicated region
        $region21: #{_lambda_.3} parent=11 // pred_check
          %p320 = pneg %p86
        $region22: #{_lambda_.3} parent=11 // pred_check_branch
          %322 = sbr.rel (%p320) target = $region24
        $region23: #{_lambda_.3} parent=11 // pred_region
          _
        $region24: #{_lambda_.3} parent=11 // pred_fallthru
          _
        // Predicated region
        $region25: #{_lambda_.3} parent=11 // pred_check
          %p323 = pneg %p107
        $region26: #{_lambda_.3} parent=11 // pred_check_branch
          %325 = sbr.rel (%p323) target = $region28
        $region27: #{_lambda_.3} parent=11 // pred_region
          _
        $region28: #{_lambda_.3} parent=11 // pred_fallthru
          _
      $region12: #{_lambda_.3} parent=5 // pred_fallthru
        _
      %p326 = scmp.lt.s32.totalorder %s23, 2
      // Predicated region
      $region29: #{_lambda_.3} parent=5 // pred_check
        %p327 = pneg %p326
      $region30: #{_lambda_.3} parent=5 // pred_check_branch
        %329 = sbr.rel (%p327) target = $region32
      $region31: #{_lambda_.3} parent=5 // pred_region
        // Predicated region
        $region33: #{_lambda_.3} parent=31 // pred_check
          %p330 = pneg %p127
        $region34: #{_lambda_.3} parent=31 // pred_check_branch
          %332 = sbr.rel (%p330) target = $region36
        $region35: #{_lambda_.3} parent=31 // pred_region
          %p333 = scmp.lt.s32.totalorder %s23, 1
          %s334 = scalar_select %p333, %s23, 1
          %s335 = smul.addr %s334, 32
          %s336 = smul.addr %s335, 4
          %s337 = scalar_lea.vmem %s4, %s336
        $region36: #{_lambda_.3} parent=31 // pred_fallthru
          _
        // Predicated region
        $region37: #{_lambda_.3} parent=31 // pred_check
          %p338 = pneg %p153
        $region38: #{_lambda_.3} parent=31 // pred_check_branch
          %340 = sbr.rel (%p338) target = $region40
        $region39: #{_lambda_.3} parent=31 // pred_region
          %s341 = sand.u32 %s23, 1
          %s342 = scalar_lea.sflag [#allocation5], %s341
          %s343 = sand.u32 %s143, 1
          %s344 = scalar_lea.vmem [#allocation4], %s343
          %s346 = ssub.s32 16, 16
          %347 = vsyncadd %s342, %s346
          %s348 = smul.addr %s23, 16
          %s349 = scalar_lea.hbm %s5, %s348
          %s351 = sshll.u32 %s344, 4
          %s352 = int_to_ptr.vmem [resolvable:$true] %s351
          %354 = dma.hbm_to_vmem [thread:$0]  %s349, 16, %s352, %s342
        $region40: #{_lambda_.3} parent=31 // pred_fallthru
          _
        // Predicated region
        $region41: #{_lambda_.3} parent=31 // pred_check
          %p355 = pneg %p179
        $region42: #{_lambda_.3} parent=31 // pred_check_branch
          %357 = sbr.rel (%p355) target = $region44
        $region43: #{_lambda_.3} parent=31 // pred_region
          %p358 = scmp.lt.s32.totalorder %s23, 1
          %s359 = scalar_select %p358, %s23, 1
          %s360 = smul.addr %s359, 32
          %s361 = smul.addr %s360, 4
          %s362 = scalar_lea.vmem %s6, %s361
        $region44: #{_lambda_.3} parent=31 // pred_fallthru
          _
        // Predicated region
        $region45: #{_lambda_.3} parent=31 // pred_check
          %p363 = pneg %p205
        $region46: #{_lambda_.3} parent=31 // pred_check_branch
          %365 = sbr.rel (%p363) target = $region48
        $region47: #{_lambda_.3} parent=31 // pred_region
          %s366 = sand.u32 %s23, 1
          %s367 = scalar_lea.sflag [#allocation5], %s366
          %s368 = sand.u32 %s195, 1
          %s369 = scalar_lea.vmem [#allocation6], %s368
          %s371 = ssub.s32 16, 16
          %372 = vsyncadd %s367, %s371
          %s373 = smul.addr %s23, 16
          %s374 = scalar_lea.hbm %s7, %s373
          %s376 = sshll.u32 %s369, 4
          %s377 = int_to_ptr.vmem [resolvable:$true] %s376
          %379 = dma.hbm_to_vmem [thread:$0]  %s374, 16, %s377, %s367
        $region48: #{_lambda_.3} parent=31 // pred_fallthru
          _
        // Predicated region
        $region49: #{_lambda_.3} parent=31 // pred_check
          %p380 = pneg %p231
        $region50: #{_lambda_.3} parent=31 // pred_check_branch
          %382 = sbr.rel (%p380) target = $region52
        $region51: #{_lambda_.3} parent=31 // pred_region
          %p383 = scmp.lt.s32.totalorder %s23, 1
          %s384 = scalar_select %p383, %s23, 1
          %s385 = smul.addr %s384, 32
          %s386 = smul.addr %s385, 4
          %s387 = scalar_lea.vmem %s8, %s386
        $region52: #{_lambda_.3} parent=31 // pred_fallthru
          _
        // Predicated region
        $region53: #{_lambda_.3} parent=31 // pred_check
          %p388 = pneg %p257
        $region54: #{_lambda_.3} parent=31 // pred_check_branch
          %390 = sbr.rel (%p388) target = $region56
        $region55: #{_lambda_.3} parent=31 // pred_region
          %s391 = sand.u32 %s247, 1
          %s392 = scalar_lea.sflag [#allocation8], %s391
          %s393 = sand.u32 %s247, 1
          %s394 = scalar_lea.vmem [#allocation7], %s393
          %s396 = ssub.s32 16, 16
          %397 = vsyncadd %s392, %s396
          %s398 = smul.addr %s23, 16
          %s399 = scalar_lea.hbm %s9, %s398
          %s401 = sshll.u32 %s394, 4
          %s402 = int_to_ptr.vmem [resolvable:$true] %s401
          %404 = dma.hbm_to_vmem [thread:$0]  %s399, 16, %s402, %s392
        $region56: #{_lambda_.3} parent=31 // pred_fallthru
          _
      $region32: #{_lambda_.3} parent=5 // pred_fallthru
        _
      %p405 = scmp.le.s32.totalorder 1, %s23
      %p406 = scmp.lt.s32.totalorder %s23, 3
      %p407 = pnand %p405, %p406
      %p408 = pneg %p407
      // Predicated region
      $region57: #{_lambda_.3} parent=5 // pred_check
        _
      $region58: #{_lambda_.3} parent=5 // pred_check_branch
        %410 = sbr.rel (%p407) target = $region60
      $region59: #{_lambda_.3} parent=5 // pred_region
        %s411 = ssub.s32 %s23, 1
        // Predicated region
        $region61: #{_lambda_.3} parent=59 // pred_check
          %p412 = pneg %p65
        $region62: #{_lambda_.3} parent=59 // pred_check_branch
          %414 = sbr.rel (%p412) target = $region64
        $region63: #{_lambda_.3} parent=59 // pred_region
          %415 = dma.done [#allocation3], 1024
        $region64: #{_lambda_.3} parent=59 // pred_fallthru
          _
        %s416 = sand.u32 %s28, 1
        %s417 = scalar_lea.sflag [#allocation5], %s416
        %s418 = sand.u32 %s146, 1
        %s419 = scalar_lea.vmem [#allocation4], %s418
        // Predicated region
        $region65: #{_lambda_.3} parent=59 // pred_check
          %p420 = pneg %p159
        $region66: #{_lambda_.3} parent=59 // pred_check_branch
          %422 = sbr.rel (%p420) target = $region68
        $region67: #{_lambda_.3} parent=59 // pred_region
          %423 = dma.done %s417, 16
        $region68: #{_lambda_.3} parent=59 // pred_fallthru
          _
        %s424 = sand.u32 %s28, 1
        %s425 = scalar_lea.sflag [#allocation5], %s424
        %s426 = sand.u32 %s198, 1
        %s427 = scalar_lea.vmem [#allocation6], %s426
        // Predicated region
        $region69: #{_lambda_.3} parent=59 // pred_check
          %p428 = pneg %p211
        $region70: #{_lambda_.3} parent=59 // pred_check_branch
          %430 = sbr.rel (%p428) target = $region72
        $region71: #{_lambda_.3} parent=59 // pred_region
          %431 = dma.done %s425, 16
        $region72: #{_lambda_.3} parent=59 // pred_fallthru
          _
        %s432 = sand.u32 %s250, 1
        %s433 = scalar_lea.sflag [#allocation8], %s432
        %s434 = sand.u32 %s250, 1
        %s435 = scalar_lea.vmem [#allocation7], %s434
        // Predicated region
        $region73: #{_lambda_.3} parent=59 // pred_check
          %p436 = pneg %p263
        $region74: #{_lambda_.3} parent=59 // pred_check_branch
          %438 = sbr.rel (%p436) target = $region76
        $region75: #{_lambda_.3} parent=59 // pred_region
          %439 = dma.done %s433, 16
        $region76: #{_lambda_.3} parent=59 // pred_fallthru
          _
        %p440 = pneg %p44
        %p441 = pneg %p41
        %p442 = pneg %p65
        %p443 = pneg %p62
        %p444 = pneg %p86
        %p445 = pneg %p83
        %p446 = pneg %p107
        %p447 = pneg %p104
        %p448 = scmp.lt.s32.totalorder %s28, 1
        %s449 = scalar_select %p448, %s28, 1
        %s450 = smul.addr %s449, 32
        %s451 = smul.addr %s450, 4
        %s452 = scalar_lea.vmem %s4, %s451
        %p453 = pneg %p133
        %p454 = pneg %p130
        %s455 = sand.u32 %s28, 1
        %s456 = scalar_lea.sflag [#allocation5], %s455
        %s457 = sand.u32 %s146, 1
        %s458 = scalar_lea.vmem [#allocation4], %s457
        %p459 = pneg %p159
        %p460 = pneg %p156
        %p461 = scmp.lt.s32.totalorder %s28, 1
        %s462 = scalar_select %p461, %s28, 1
        %s463 = smul.addr %s462, 32
        %s464 = smul.addr %s463, 4
        %s465 = scalar_lea.vmem %s6, %s464
        %p466 = pneg %p185
        %p467 = pneg %p182
        %s468 = sand.u32 %s28, 1
        %s469 = scalar_lea.sflag [#allocation5], %s468
        %s470 = sand.u32 %s198, 1
        %s471 = scalar_lea.vmem [#allocation6], %s470
        %p472 = pneg %p211
        %p473 = pneg %p208
        %p474 = scmp.lt.s32.totalorder %s28, 1
        %s475 = scalar_select %p474, %s28, 1
        %s476 = smul.addr %s475, 32
        %s477 = smul.addr %s476, 4
        %s478 = scalar_lea.vmem %s8, %s477
        %p479 = pneg %p237
        %p480 = pneg %p234
        %s481 = sand.u32 %s250, 1
        %s482 = scalar_lea.sflag [#allocation8], %s481
        %s483 = sand.u32 %s250, 1
        %s484 = scalar_lea.vmem [#allocation7], %s483
        %p485 = pneg %p263
        %p486 = pneg %p260
        %p487 = pneg %p289
        %p488 = pneg %p286
        %p489 = scmp.lt.s32.totalorder %s28, 1
        %s490 = scalar_select %p489, %s28, 1
        %s491 = smul.addr %s490, 64
        %s492 = smul.addr %s491, 8
        %s493 = scalar_lea.vmem %s10, %s492
        %p494 = scmp.lt.s32.totalorder %s28, 1
        %s495 = scalar_select %p494, %s28, 1
        %s496 = smul.addr %s495, 32
        %s497 = smul.addr %s496, 4
        %s498 = scalar_lea.vmem %s4, %s497
        %p499 = scmp.lt.s32.totalorder %s28, 1
        %s500 = scalar_select %p499, %s28, 1
        %s501 = smul.addr %s500, 32
        %s502 = smul.addr %s501, 4
        %s503 = scalar_lea.vmem %s6, %s502
        %p504 = scmp.lt.s32.totalorder %s28, 1
        %s505 = scalar_select %p504, %s28, 1
        %s506 = smul.addr %s505, 32
        %s507 = smul.addr %s506, 4
        %s508 = scalar_lea.vmem %s8, %s507
        %p509 = scmp.lt.s32.totalorder %s28, 1
        %s510 = scalar_select %p509, %s28, 1
        %s511 = smul.addr %s510, 64
        %s512 = smul.addr %s511, 8
        %s513 = scalar_lea.vmem %s10, %s512
        %v515 = vld [vmem:[%s0] sm:$0xf]
        %v516 = vld [vmem:[#allocation2] sm:$0xf]
        %v517 = vld [vmem:[#allocation2 + $0x4] sm:$0xf]
        %v518 = vld [vmem:[#allocation2 + $0x8] sm:$0xf]
        %v519 = vld [vmem:[#allocation2 + $0xc] sm:$0xf]
        %v524 = vunpack.c.l.b16 %v516
        %v525 = vunpack.c.l.b16 %v517
        %v526 = vunpack.c.l.b16 %v518
        %v527 = vunpack.c.l.b16 %v519
        %v528 = vpack.c.b16 %v525, %v524
        %v529 = vpack.c.b16 %v527, %v526
        %vm530 = vcmask 64512
        %v532 = vsel %vm530, %v528, 0
        %v535 = vsel %vm530, %v529, 0
        %vm537 = vcmask 1043456
        %v539 = vsel %vm537, %v515, 0
        %541 = vmatprep.subr.bf16.mxu0 0
        %542 = vmatpush1.bf16.msra.mxu0 %v539
        %543 = vmatprep.subr.bf16.mxu0 0
        %544 = vmatpush1.bf16.msra.mxu0 0
        %545 = vmatprep.subr.bf16.mxu0 0
        %546 = vmatpush1.bf16.msra.mxu0 0
        %547 = vmatprep.subr.bf16.mxu0 0
        %548 = vmatpush1.bf16.msra.mxu0 0
        %549 = vmatprep.subr.bf16.mxu0 0
        %550 = vmatpush1.bf16.msra.mxu0 0
        %551 = vmatprep.subr.bf16.mxu0 0
        %552 = vmatpush1.bf16.msra.mxu0 0
        %553 = vmatprep.subr.bf16.mxu0 0
        %554 = vmatpush1.bf16.msra.mxu0 0
        %555 = vmatprep.subr.bf16.mxu0 0
        %556 = vmatpush1.bf16.msra.mxu0 0
        %557 = vmatprep.subr.bf16.mxu0 0
        %558 = vmatpush1.bf16.msra.mxu0 0
        %559 = vmatprep.subr.bf16.mxu0 0
        %560 = vmatpush1.bf16.msra.mxu0 0
        %561 = vmatprep.subr.bf16.mxu0 0
        %562 = vmatpush1.bf16.msra.mxu0 0
        %563 = vmatprep.subr.bf16.mxu0 0
        %564 = vmatpush1.bf16.msra.mxu0 0
        %565 = vmatprep.subr.bf16.mxu0 0
        %566 = vmatpush1.bf16.msra.mxu0 0
        %567 = vmatprep.subr.bf16.mxu0 0
        %568 = vmatpush1.bf16.msra.mxu0 0
        %569 = vmatprep.subr.bf16.mxu0 0
        %570 = vmatpush1.bf16.msra.mxu0 0
        %571 = vmatprep.subr.bf16.mxu0 0
        %572 = vmatpush1.bf16.msra.mxu0 0
        %573 = vmatprep.mubr.bf16.mxu0 0
        %574 = vmatmul.mubr.bf16.gmra.mrb[0].mxu0 %v532
        %v575 = vpop.f32.mrb[0].mxu0
        %v576 = vadd.f32 0.0, %v575
        %v577 = vpop.f32.mrb[0].mxu0
        %v578 = vpop.f32.mrb[0].mxu0
        %v579 = vadd.f32 0.0, %v578
        %v580 = vpop.f32.mrb[0].mxu0
        %581 = vmatprep.mubr.bf16.mxu0 0
        %582 = vmatmul.mubr.bf16.gmra.mrb[0].mxu0 %v535
        %v583 = vpop.f32.mrb[0].mxu0
        %v584 = vadd.f32 0.0, %v583
        %v585 = vpop.f32.mrb[0].mxu0
        %v586 = vpop.f32.mrb[0].mxu0
        %v587 = vadd.f32 0.0, %v586
        %v588 = vpop.f32.mrb[0].mxu0
        %589 = vdwg.mxu0
        %v590 = vpack.c.bf16 %v579, %v576
        %v591 = vpack.c.bf16 %v587, %v584
        %v592 = vld [vmem:[%s498] sm:$0xf]
        %v593 = vld [vmem:[%s498 + $0x4] sm:$0xf]
        %v594 = vld [vmem:[%s498 + $0x8] sm:$0xf]
        %v595 = vld [vmem:[%s498 + $0xc] sm:$0xf]
        %v596 = vld [vmem:[%s498 + $0x10] sm:$0xf]
        %v597 = vld [vmem:[%s498 + $0x14] sm:$0xf]
        %v598 = vld [vmem:[%s498 + $0x18] sm:$0xf]
        %v599 = vld [vmem:[%s498 + $0x1c] sm:$0xf]
        %s600 = scalar_lea.vmem [#allocation2], 16
        %v601 = vld [vmem:[%s600] sm:$0xf]
        %v602 = vld [vmem:[%s600 + $0x4] sm:$0xf]
        %v603 = vld [vmem:[%s600 + $0x8] sm:$0xf]
        %v604 = vld [vmem:[%s600 + $0xc] sm:$0xf]
        %v609 = vunpack.c.l.b16 %v601
        %v610 = vunpack.c.l.b16 %v602
        %v611 = vunpack.c.l.b16 %v603
        %v612 = vunpack.c.l.b16 %v604
        %v613 = vpack.c.b16 %v610, %v609
        %v614 = vpack.c.b16 %v612, %v611
        %v616 = vsel %vm530, %v613, 0
        %v619 = vsel %vm530, %v614, 0
        %621 = vmatprep.subr.bf16.mxu0 0
        %622 = vmatpush1.bf16.msra.mxu0 %v539
        %623 = vmatprep.subr.bf16.mxu0 0
        %624 = vmatpush1.bf16.msra.mxu0 0
        %625 = vmatprep.subr.bf16.mxu0 0
        %626 = vmatpush1.bf16.msra.mxu0 0
        %627 = vmatprep.subr.bf16.mxu0 0
        %628 = vmatpush1.bf16.msra.mxu0 0
        %629 = vmatprep.subr.bf16.mxu0 0
        %630 = vmatpush1.bf16.msra.mxu0 0
        %631 = vmatprep.subr.bf16.mxu0 0
        %632 = vmatpush1.bf16.msra.mxu0 0
        %633 = vmatprep.subr.bf16.mxu0 0
        %634 = vmatpush1.bf16.msra.mxu0 0
        %635 = vmatprep.subr.bf16.mxu0 0
        %636 = vmatpush1.bf16.msra.mxu0 0
        %637 = vmatprep.subr.bf16.mxu0 0
        %638 = vmatpush1.bf16.msra.mxu0 0
        %639 = vmatprep.subr.bf16.mxu0 0
        %640 = vmatpush1.bf16.msra.mxu0 0
        %641 = vmatprep.subr.bf16.mxu0 0
        %642 = vmatpush1.bf16.msra.mxu0 0
        %643 = vmatprep.subr.bf16.mxu0 0
        %644 = vmatpush1.bf16.msra.mxu0 0
        %645 = vmatprep.subr.bf16.mxu0 0
        %646 = vmatpush1.bf16.msra.mxu0 0
        %647 = vmatprep.subr.bf16.mxu0 0
        %648 = vmatpush1.bf16.msra.mxu0 0
        %649 = vmatprep.subr.bf16.mxu0 0
        %650 = vmatpush1.bf16.msra.mxu0 0
        %651 = vmatprep.subr.bf16.mxu0 0
        %652 = vmatpush1.bf16.msra.mxu0 0
        %653 = vmatprep.mubr.bf16.mxu0 0
        %654 = vmatmul.mubr.bf16.gmra.mrb[0].mxu0 %v616
        %v655 = vpop.f32.mrb[0].mxu0
        %v656 = vadd.f32 0.0, %v655
        %v657 = vpop.f32.mrb[0].mxu0
        %v658 = vpop.f32.mrb[0].mxu0
        %v659 = vadd.f32 0.0, %v658
        %v660 = vpop.f32.mrb[0].mxu0
        %661 = vmatprep.mubr.bf16.mxu0 0
        %662 = vmatmul.mubr.bf16.gmra.mrb[0].mxu0 %v619
        %v663 = vpop.f32.mrb[0].mxu0
        %v664 = vadd.f32 0.0, %v663
        %v665 = vpop.f32.mrb[0].mxu0
        %v666 = vpop.f32.mrb[0].mxu0
        %v667 = vadd.f32 0.0, %v666
        %v668 = vpop.f32.mrb[0].mxu0
        %669 = vdwg.mxu0
        %v670 = vpack.c.bf16 %v659, %v656
        %v671 = vpack.c.bf16 %v667, %v664
        %s672 = scalar_lea.vmem %s498, 32
        %v673 = vld [vmem:[%s672] sm:$0xf]
        %v674 = vld [vmem:[%s672 + $0x4] sm:$0xf]
        %v675 = vld [vmem:[%s672 + $0x8] sm:$0xf]
        %v676 = vld [vmem:[%s672 + $0xc] sm:$0xf]
        %v677 = vld [vmem:[%s672 + $0x10] sm:$0xf]
        %v678 = vld [vmem:[%s672 + $0x14] sm:$0xf]
        %v679 = vld [vmem:[%s672 + $0x18] sm:$0xf]
        %v680 = vld [vmem:[%s672 + $0x1c] sm:$0xf]
        %v689 = vunpack.c.l.b16 %v673
        %v690 = vunpack.c.l.b16 %v674
        %v691 = vunpack.c.l.b16 %v675
        %v692 = vunpack.c.l.b16 %v676
        %v693 = vunpack.c.l.b16 %v677
        %v694 = vunpack.c.l.b16 %v678
        %v695 = vunpack.c.l.b16 %v679
        %v696 = vunpack.c.l.b16 %v680
        %v697 = vpack.c.b16 %v690, %v689
        %v698 = vpack.c.b16 %v692, %v691
        %v699 = vpack.c.b16 %v694, %v693
        %v700 = vpack.c.b16 %v696, %v695
        %vm705 = vcmask 523264
        %v707 = vsel %vm705, %v670, 0
        %v710 = vsel %vm705, %v671, 0
        %712 = vmatprep.subr.bf16.mxu0 0
        %713 = vmatpush1.bf16.msra.mxu0 %v697
        %714 = vmatprep.subr.bf16.mxu0 0
        %715 = vmatpush1.bf16.msra.mxu0 %v698
        %716 = vmatprep.subr.bf16.mxu0 0
        %717 = vmatpush1.bf16.msra.mxu0 %v699
        %718 = vmatprep.subr.bf16.mxu0 0
        %719 = vmatpush1.bf16.msra.mxu0 %v700
        %720 = vmatprep.subr.bf16.mxu0 0
        %721 = vmatpush1.bf16.msra.mxu0 0
        %722 = vmatprep.subr.bf16.mxu0 0
        %723 = vmatpush1.bf16.msra.mxu0 0
        %724 = vmatprep.subr.bf16.mxu0 0
        %725 = vmatpush1.bf16.msra.mxu0 0
        %726 = vmatprep.subr.bf16.mxu0 0
        %727 = vmatpush1.bf16.msra.mxu0 0
        %728 = vmatprep.subr.bf16.mxu0 0
        %729 = vmatpush1.bf16.msra.mxu0 0
        %730 = vmatprep.subr.bf16.mxu0 0
        %731 = vmatpush1.bf16.msra.mxu0 0
        %732 = vmatprep.subr.bf16.mxu0 0
        %733 = vmatpush1.bf16.msra.mxu0 0
        %734 = vmatprep.subr.bf16.mxu0 0
        %735 = vmatpush1.bf16.msra.mxu0 0
        %736 = vmatprep.subr.bf16.mxu0 0
        %737 = vmatpush1.bf16.msra.mxu0 0
        %738 = vmatprep.subr.bf16.mxu0 0
        %739 = vmatpush1.bf16.msra.mxu0 0
        %740 = vmatprep.subr.bf16.mxu0 0
        %741 = vmatpush1.bf16.msra.mxu0 0
        %742 = vmatprep.subr.bf16.mxu0 0
        %743 = vmatpush1.bf16.msra.mxu0 0
        %744 = vmatprep.mubr.bf16.mxu0 0
        %745 = vmatmul.mubr.bf16.gmra.mrb[0].mxu0 %v707
        %v746 = vpop.f32.mrb[0].mxu0
        %v747 = vadd.f32 0.0, %v746
        %v748 = vpop.f32.mrb[0].mxu0
        %v749 = vpop.f32.mrb[0].mxu0
        %v750 = vadd.f32 0.0, %v749
        %v751 = vpop.f32.mrb[0].mxu0
        %752 = vmatprep.mubr.bf16.mxu0 0
        %753 = vmatmul.mubr.bf16.gmra.mrb[0].mxu0 %v710
        %v754 = vpop.f32.mrb[0].mxu0
        %v755 = vadd.f32 0.0, %v754
        %v756 = vpop.f32.mrb[0].mxu0
        %v757 = vpop.f32.mrb[0].mxu0
        %v758 = vadd.f32 0.0, %v757
        %v759 = vpop.f32.mrb[0].mxu0
        %760 = vdwg.mxu0
        %v769 = vunpack.c.l.b16 %v592
        %v770 = vunpack.c.l.b16 %v593
        %v771 = vunpack.c.l.b16 %v594
        %v772 = vunpack.c.l.b16 %v595
        %v773 = vunpack.c.l.b16 %v596
        %v774 = vunpack.c.l.b16 %v597
        %v775 = vunpack.c.l.b16 %v598
        %v776 = vunpack.c.l.b16 %v599
        %v777 = vpack.c.b16 %v770, %v769
        %v778 = vpack.c.b16 %v772, %v771
        %v779 = vpack.c.b16 %v774, %v773
        %v780 = vpack.c.b16 %v776, %v775
        %v786 = vsel %vm705, %v590, 0
        %v789 = vsel %vm705, %v591, 0
        %791 = vmatprep.subr.bf16.mxu0 0
        %792 = vmatpush1.bf16.msra.mxu0 %v777
        %793 = vmatprep.subr.bf16.mxu0 0
        %794 = vmatpush1.bf16.msra.mxu0 %v778
        %795 = vmatprep.subr.bf16.mxu0 0
        %796 = vmatpush1.bf16.msra.mxu0 %v779
        %797 = vmatprep.subr.bf16.mxu0 0
        %798 = vmatpush1.bf16.msra.mxu0 %v780
        %799 = vmatprep.subr.bf16.mxu0 0
        %800 = vmatpush1.bf16.msra.mxu0 0
        %801 = vmatprep.subr.bf16.mxu0 0
        %802 = vmatpush1.bf16.msra.mxu0 0
        %803 = vmatprep.subr.bf16.mxu0 0
        %804 = vmatpush1.bf16.msra.mxu0 0
        %805 = vmatprep.subr.bf16.mxu0 0
        %806 = vmatpush1.bf16.msra.mxu0 0
        %807 = vmatprep.subr.bf16.mxu0 0
        %808 = vmatpush1.bf16.msra.mxu0 0
        %809 = vmatprep.subr.bf16.mxu0 0
        %810 = vmatpush1.bf16.msra.mxu0 0
        %811 = vmatprep.subr.bf16.mxu0 0
        %812 = vmatpush1.bf16.msra.mxu0 0
        %813 = vmatprep.subr.bf16.mxu0 0
        %814 = vmatpush1.bf16.msra.mxu0 0
        %815 = vmatprep.subr.bf16.mxu0 0
        %816 = vmatpush1.bf16.msra.mxu0 0
        %817 = vmatprep.subr.bf16.mxu0 0
        %818 = vmatpush1.bf16.msra.mxu0 0
        %819 = vmatprep.subr.bf16.mxu0 0
        %820 = vmatpush1.bf16.msra.mxu0 0
        %821 = vmatprep.subr.bf16.mxu0 0
        %822 = vmatpush1.bf16.msra.mxu0 0
        %823 = vmatprep.mubr.bf16.mxu0 0
        %824 = vmatmul.mubr.bf16.gmra.mrb[0].mxu0 %v786
        %v825 = vpop.f32.mrb[0].mxu0
        %v826 = vadd.f32 %v747, %v825
        %v827 = vpop.f32.mrb[0].mxu0
        %v828 = vpop.f32.mrb[0].mxu0
        %v829 = vadd.f32 %v750, %v828
        %v830 = vpop.f32.mrb[0].mxu0
        %831 = vmatprep.mubr.bf16.mxu0 0
        %832 = vmatmul.mubr.bf16.gmra.mrb[0].mxu0 %v789
        %v833 = vpop.f32.mrb[0].mxu0
        %v834 = vadd.f32 %v755, %v833
        %v835 = vpop.f32.mrb[0].mxu0
        %v836 = vpop.f32.mrb[0].mxu0
        %v837 = vadd.f32 %v758, %v836
        %v838 = vpop.f32.mrb[0].mxu0
        %839 = vdwg.mxu0
        %s840 = scalar_lea.vmem [#allocation2], 32
        %v841 = vld [vmem:[%s840] sm:$0xf]
        %v842 = vld [vmem:[%s840 + $0x4] sm:$0xf]
        %v843 = vld [vmem:[%s840 + $0x8] sm:$0xf]
        %v844 = vld [vmem:[%s840 + $0xc] sm:$0xf]
        %v849 = vunpack.c.l.b16 %v841
        %v850 = vunpack.c.l.b16 %v842
        %v851 = vunpack.c.l.b16 %v843
        %v852 = vunpack.c.l.b16 %v844
        %v853 = vpack.c.b16 %v850, %v849
        %v854 = vpack.c.b16 %v852, %v851
        %v856 = vsel %vm530, %v853, 0
        %v859 = vsel %vm530, %v854, 0
        %861 = vmatprep.subr.bf16.mxu0 0
        %862 = vmatpush1.bf16.msra.mxu0 %v539
        %863 = vmatprep.subr.bf16.mxu0 0
        %864 = vmatpush1.bf16.msra.mxu0 0
        %865 = vmatprep.subr.bf16.mxu0 0
        %866 = vmatpush1.bf16.msra.mxu0 0
        %867 = vmatprep.subr.bf16.mxu0 0
        %868 = vmatpush1.bf16.msra.mxu0 0
        %869 = vmatprep.subr.bf16.mxu0 0
        %870 = vmatpush1.bf16.msra.mxu0 0
        %871 = vmatprep.subr.bf16.mxu0 0
        %872 = vmatpush1.bf16.msra.mxu0 0
        %873 = vmatprep.subr.bf16.mxu0 0
        %874 = vmatpush1.bf16.msra.mxu0 0
        %875 = vmatprep.subr.bf16.mxu0 0
        %876 = vmatpush1.bf16.msra.mxu0 0
        %877 = vmatprep.subr.bf16.mxu0 0
        %878 = vmatpush1.bf16.msra.mxu0 0
        %879 = vmatprep.subr.bf16.mxu0 0
        %880 = vmatpush1.bf16.msra.mxu0 0
        %881 = vmatprep.subr.bf16.mxu0 0
        %882 = vmatpush1.bf16.msra.mxu0 0
        %883 = vmatprep.subr.bf16.mxu0 0
        %884 = vmatpush1.bf16.msra.mxu0 0
        %885 = vmatprep.subr.bf16.mxu0 0
        %886 = vmatpush1.bf16.msra.mxu0 0
        %887 = vmatprep.subr.bf16.mxu0 0
        %888 = vmatpush1.bf16.msra.mxu0 0
        %889 = vmatprep.subr.bf16.mxu0 0
        %890 = vmatpush1.bf16.msra.mxu0 0
        %891 = vmatprep.subr.bf16.mxu0 0
        %892 = vmatpush1.bf16.msra.mxu0 0
        %893 = vmatprep.mubr.bf16.mxu0 0
        %894 = vmatmul.mubr.bf16.gmra.mrb[0].mxu0 %v856
        %v895 = vpop.f32.mrb[0].mxu0
        %v896 = vadd.f32 0.0, %v895
        %v897 = vpop.f32.mrb[0].mxu0
        %v898 = vpop.f32.mrb[0].mxu0
        %v899 = vadd.f32 0.0, %v898
        %v900 = vpop.f32.mrb[0].mxu0
        %901 = vmatprep.mubr.bf16.mxu0 0
        %902 = vmatmul.mubr.bf16.gmra.mrb[0].mxu0 %v859
        %v903 = vpop.f32.mrb[0].mxu0
        %v904 = vadd.f32 0.0, %v903
        %v905 = vpop.f32.mrb[0].mxu0
        %v906 = vpop.f32.mrb[0].mxu0
        %v907 = vadd.f32 0.0, %v906
        %v908 = vpop.f32.mrb[0].mxu0
        %909 = vdwg.mxu0
        %v910 = vpack.c.bf16 %v899, %v896
        %v911 = vpack.c.bf16 %v907, %v904
        %s912 = scalar_lea.vmem %s498, 64
        %v913 = vld [vmem:[%s912] sm:$0xf]
        %v914 = vld [vmem:[%s912 + $0x4] sm:$0xf]
        %v915 = vld [vmem:[%s912 + $0x8] sm:$0xf]
        %v916 = vld [vmem:[%s912 + $0xc] sm:$0xf]
        %v917 = vld [vmem:[%s912 + $0x10] sm:$0xf]
        %v918 = vld [vmem:[%s912 + $0x14] sm:$0xf]
        %v919 = vld [vmem:[%s912 + $0x18] sm:$0xf]
        %v920 = vld [vmem:[%s912 + $0x1c] sm:$0xf]
        %v929 = vunpack.c.l.b16 %v913
        %v930 = vunpack.c.l.b16 %v914
        %v931 = vunpack.c.l.b16 %v915
        %v932 = vunpack.c.l.b16 %v916
        %v933 = vunpack.c.l.b16 %v917
        %v934 = vunpack.c.l.b16 %v918
        %v935 = vunpack.c.l.b16 %v919
        %v936 = vunpack.c.l.b16 %v920
        %v937 = vpack.c.b16 %v930, %v929
        %v938 = vpack.c.b16 %v932, %v931
        %v939 = vpack.c.b16 %v934, %v933
        %v940 = vpack.c.b16 %v936, %v935
        %v946 = vsel %vm705, %v910, 0
        %v949 = vsel %vm705, %v911, 0
        %951 = vmatprep.subr.bf16.mxu0 0
        %952 = vmatpush1.bf16.msra.mxu0 %v937
        %953 = vmatprep.subr.bf16.mxu0 0
        %954 = vmatpush1.bf16.msra.mxu0 %v938
        %955 = vmatprep.subr.bf16.mxu0 0
        %956 = vmatpush1.bf16.msra.mxu0 %v939
        %957 = vmatprep.subr.bf16.mxu0 0
        %958 = vmatpush1.bf16.msra.mxu0 %v940
        %959 = vmatprep.subr.bf16.mxu0 0
        %960 = vmatpush1.bf16.msra.mxu0 0
        %961 = vmatprep.subr.bf16.mxu0 0
        %962 = vmatpush1.bf16.msra.mxu0 0
        %963 = vmatprep.subr.bf16.mxu0 0
        %964 = vmatpush1.bf16.msra.mxu0 0
        %965 = vmatprep.subr.bf16.mxu0 0
        %966 = vmatpush1.bf16.msra.mxu0 0
        %967 = vmatprep.subr.bf16.mxu0 0
        %968 = vmatpush1.bf16.msra.mxu0 0
        %969 = vmatprep.subr.bf16.mxu0 0
        %970 = vmatpush1.bf16.msra.mxu0 0
        %971 = vmatprep.subr.bf16.mxu0 0
        %972 = vmatpush1.bf16.msra.mxu0 0
        %973 = vmatprep.subr.bf16.mxu0 0
        %974 = vmatpush1.bf16.msra.mxu0 0
        %975 = vmatprep.subr.bf16.mxu0 0
        %976 = vmatpush1.bf16.msra.mxu0 0
        %977 = vmatprep.subr.bf16.mxu0 0
        %978 = vmatpush1.bf16.msra.mxu0 0
        %979 = vmatprep.subr.bf16.mxu0 0
        %980 = vmatpush1.bf16.msra.mxu0 0
        %981 = vmatprep.subr.bf16.mxu0 0
        %982 = vmatpush1.bf16.msra.mxu0 0
        %983 = vmatprep.mubr.bf16.mxu0 0
        %984 = vmatmul.mubr.bf16.gmra.mrb[0].mxu0 %v946
        %v985 = vpop.f32.mrb[0].mxu0
        %v986 = vadd.f32 0.0, %v985
        %v987 = vpop.f32.mrb[0].mxu0
        %v988 = vpop.f32.mrb[0].mxu0
        %v989 = vadd.f32 0.0, %v988
        %v990 = vpop.f32.mrb[0].mxu0
        %991 = vmatprep.mubr.bf16.mxu0 0
        %992 = vmatmul.mubr.bf16.gmra.mrb[0].mxu0 %v949
        %v993 = vpop.f32.mrb[0].mxu0
        %v994 = vadd.f32 0.0, %v993
        %v995 = vpop.f32.mrb[0].mxu0
        %v996 = vpop.f32.mrb[0].mxu0
        %v997 = vadd.f32 0.0, %v996
        %v998 = vpop.f32.mrb[0].mxu0
        %999 = vdwg.mxu0
        %v1000 = vadd.f32 %v826, %v986
        %v1001 = vadd.f32 %v829, %v989
        %v1002 = vadd.f32 %v834, %v994
        %v1003 = vadd.f32 %v837, %v997
        %s1004 = scalar_lea.vmem [#allocation2], 48
        %v1005 = vld [vmem:[%s1004] sm:$0xf]
        %v1006 = vld [vmem:[%s1004 + $0x4] sm:$0xf]
        %v1007 = vld [vmem:[%s1004 + $0x8] sm:$0xf]
        %v1008 = vld [vmem:[%s1004 + $0xc] sm:$0xf]
        %v1013 = vunpack.c.l.b16 %v1005
        %v1014 = vunpack.c.l.b16 %v1006
        %v1015 = vunpack.c.l.b16 %v1007
        %v1016 = vunpack.c.l.b16 %v1008
        %v1017 = vpack.c.b16 %v1014, %v1013
        %v1018 = vpack.c.b16 %v1016, %v1015
        %v1020 = vsel %vm530, %v1017, 0
        %v1023 = vsel %vm530, %v1018, 0
        %1025 = vmatprep.subr.bf16.mxu0 0
        %1026 = vmatpush1.bf16.msra.mxu0 %v539
        %1027 = vmatprep.subr.bf16.mxu0 0
        %1028 = vmatpush1.bf16.msra.mxu0 0
        %1029 = vmatprep.subr.bf16.mxu0 0
        %1030 = vmatpush1.bf16.msra.mxu0 0
        %1031 = vmatprep.subr.bf16.mxu0 0
        %1032 = vmatpush1.bf16.msra.mxu0 0
        %1033 = vmatprep.subr.bf16.mxu0 0
        %1034 = vmatpush1.bf16.msra.mxu0 0
        %1035 = vmatprep.subr.bf16.mxu0 0
        %1036 = vmatpush1.bf16.msra.mxu0 0
        %1037 = vmatprep.subr.bf16.mxu0 0
        %1038 = vmatpush1.bf16.msra.mxu0 0
        %1039 = vmatprep.subr.bf16.mxu0 0
        %1040 = vmatpush1.bf16.msra.mxu0 0
        %1041 = vmatprep.subr.bf16.mxu0 0
        %1042 = vmatpush1.bf16.msra.mxu0 0
        %1043 = vmatprep.subr.bf16.mxu0 0
        %1044 = vmatpush1.bf16.msra.mxu0 0
        %1045 = vmatprep.subr.bf16.mxu0 0
        %1046 = vmatpush1.bf16.msra.mxu0 0
        %1047 = vmatprep.subr.bf16.mxu0 0
        %1048 = vmatpush1.bf16.msra.mxu0 0
        %1049 = vmatprep.subr.bf16.mxu0 0
        %1050 = vmatpush1.bf16.msra.mxu0 0
        %1051 = vmatprep.subr.bf16.mxu0 0
        %1052 = vmatpush1.bf16.msra.mxu0 0
        %1053 = vmatprep.subr.bf16.mxu0 0
        %1054 = vmatpush1.bf16.msra.mxu0 0
        %1055 = vmatprep.subr.bf16.mxu0 0
        %1056 = vmatpush1.bf16.msra.mxu0 0
        %1057 = vmatprep.mubr.bf16.mxu0 0
        %1058 = vmatmul.mubr.bf16.gmra.mrb[0].mxu0 %v1020
        %v1059 = vpop.f32.mrb[0].mxu0
        %v1060 = vadd.f32 0.0, %v1059
        %v1061 = vpop.f32.mrb[0].mxu0
        %v1062 = vpop.f32.mrb[0].mxu0
        %v1063 = vadd.f32 0.0, %v1062
        %v1064 = vpop.f32.mrb[0].mxu0
        %1065 = vmatprep.mubr.bf16.mxu0 0
        %1066 = vmatmul.mubr.bf16.gmra.mrb[0].mxu0 %v1023
        %v1067 = vpop.f32.mrb[0].mxu0
        %v1068 = vadd.f32 0.0, %v1067
        %v1069 = vpop.f32.mrb[0].mxu0
        %v1070 = vpop.f32.mrb[0].mxu0
        %v1071 = vadd.f32 0.0, %v1070
        %v1072 = vpop.f32.mrb[0].mxu0
        %1073 = vdwg.mxu0
        %v1074 = vpack.c.bf16 %v1063, %v1060
        %v1075 = vpack.c.bf16 %v1071, %v1068
        %s1076 = scalar_lea.vmem %s498, 96
        %v1077 = vld [vmem:[%s1076] sm:$0xf]
        %v1078 = vld [vmem:[%s1076 + $0x4] sm:$0xf]
        %v1079 = vld [vmem:[%s1076 + $0x8] sm:$0xf]
        %v1080 = vld [vmem:[%s1076 + $0xc] sm:$0xf]
        %v1081 = vld [vmem:[%s1076 + $0x10] sm:$0xf]
        %v1082 = vld [vmem:[%s1076 + $0x14] sm:$0xf]
        %v1083 = vld [vmem:[%s1076 + $0x18] sm:$0xf]
        %v1084 = vld [vmem:[%s1076 + $0x1c] sm:$0xf]
        %v1093 = vunpack.c.l.b16 %v1077
        %v1094 = vunpack.c.l.b16 %v1078
        %v1095 = vunpack.c.l.b16 %v1079
        %v1096 = vunpack.c.l.b16 %v1080
        %v1097 = vunpack.c.l.b16 %v1081
        %v1098 = vunpack.c.l.b16 %v1082
        %v1099 = vunpack.c.l.b16 %v1083
        %v1100 = vunpack.c.l.b16 %v1084
        %v1101 = vpack.c.b16 %v1094, %v1093
        %v1102 = vpack.c.b16 %v1096, %v1095
        %v1103 = vpack.c.b16 %v1098, %v1097
        %v1104 = vpack.c.b16 %v1100, %v1099
        %v1110 = vsel %vm705, %v1074, 0
        %v1113 = vsel %vm705, %v1075, 0
        %1115 = vmatprep.subr.bf16.mxu0 0
        %1116 = vmatpush1.bf16.msra.mxu0 %v1101
        %1117 = vmatprep.subr.bf16.mxu0 0
        %1118 = vmatpush1.bf16.msra.mxu0 %v1102
        %1119 = vmatprep.subr.bf16.mxu0 0
        %1120 = vmatpush1.bf16.msra.mxu0 %v1103
        %1121 = vmatprep.subr.bf16.mxu0 0
        %1122 = vmatpush1.bf16.msra.mxu0 %v1104
        %1123 = vmatprep.subr.bf16.mxu0 0
        %1124 = vmatpush1.bf16.msra.mxu0 0
        %1125 = vmatprep.subr.bf16.mxu0 0
        %1126 = vmatpush1.bf16.msra.mxu0 0
        %1127 = vmatprep.subr.bf16.mxu0 0
        %1128 = vmatpush1.bf16.msra.mxu0 0
        %1129 = vmatprep.subr.bf16.mxu0 0
        %1130 = vmatpush1.bf16.msra.mxu0 0
        %1131 = vmatprep.subr.bf16.mxu0 0
        %1132 = vmatpush1.bf16.msra.mxu0 0
        %1133 = vmatprep.subr.bf16.mxu0 0
        %1134 = vmatpush1.bf16.msra.mxu0 0
        %1135 = vmatprep.subr.bf16.mxu0 0
        %1136 = vmatpush1.bf16.msra.mxu0 0
        %1137 = vmatprep.subr.bf16.mxu0 0
        %1138 = vmatpush1.bf16.msra.mxu0 0
        %1139 = vmatprep.subr.bf16.mxu0 0
        %1140 = vmatpush1.bf16.msra.mxu0 0
        %1141 = vmatprep.subr.bf16.mxu0 0
        %1142 = vmatpush1.bf16.msra.mxu0 0
        %1143 = vmatprep.subr.bf16.mxu0 0
        %1144 = vmatpush1.bf16.msra.mxu0 0
        %1145 = vmatprep.subr.bf16.mxu0 0
        %1146 = vmatpush1.bf16.msra.mxu0 0
        %1147 = vmatprep.mubr.bf16.mxu0 0
        %1148 = vmatmul.mubr.bf16.gmra.mrb[0].mxu0 %v1110
        %v1149 = vpop.f32.mrb[0].mxu0
        %v1150 = vadd.f32 0.0, %v1149
        %v1151 = vpop.f32.mrb[0].mxu0
        %v1152 = vpop.f32.mrb[0].mxu0
        %v1153 = vadd.f32 0.0, %v1152
        %v1154 = vpop.f32.mrb[0].mxu0
        %1155 = vmatprep.mubr.bf16.mxu0 0
        %1156 = vmatmul.mubr.bf16.gmra.mrb[0].mxu0 %v1113
        %v1157 = vpop.f32.mrb[0].mxu0
        %v1158 = vadd.f32 0.0, %v1157
        %v1159 = vpop.f32.mrb[0].mxu0
        %v1160 = vpop.f32.mrb[0].mxu0
        %v1161 = vadd.f32 0.0, %v1160
        %v1162 = vpop.f32.mrb[0].mxu0
        %1163 = vdwg.mxu0
        %v1164 = vadd.f32 %v1000, %v1150
        %v1165 = vadd.f32 %v1001, %v1153
        %v1166 = vadd.f32 %v1002, %v1158
        %v1167 = vadd.f32 %v1003, %v1161
        %v1168 = vld [vmem:[%s419] sm:$0x1]
        %v1170 = vlaneseq
        %v1171 = vshrl.u32 %v1170, 7
        %v1172 = vsub.s32 0, %v1171
        %v1173 = vrot.slane %v1168, %v1172
        %v1175 = vadd.f32 %v1164, %v1173
        %v1176 = vadd.f32 %v1165, %v1173
        %v1177 = vadd.f32 %v1166, %v1173
        %v1178 = vadd.f32 %v1167, %v1173
        %v1179 = vpack.c.bf16 %v1176, %v1175
        %v1180 = vpack.c.bf16 %v1178, %v1177
        %v1181 = vld [vmem:[%s2] sm:$0xf]
        %v1182 = vld [vmem:[%s2 + $0x4] sm:$0xf]
        %v1183 = vld [vmem:[%s2 + $0x8] sm:$0xf]
        %v1184 = vld [vmem:[%s2 + $0xc] sm:$0xf]
        %v1185 = vld [vmem:[%s2 + $0x10] sm:$0xf]
        %v1186 = vld [vmem:[%s2 + $0x14] sm:$0xf]
        %v1187 = vld [vmem:[%s2 + $0x18] sm:$0xf]
        %v1188 = vld [vmem:[%s2 + $0x1c] sm:$0xf]
        %v1189 = vld [vmem:[%s2 + $0x20] sm:$0xf]
        %v1190 = vld [vmem:[%s2 + $0x24] sm:$0xf]
        %v1191 = vld [vmem:[%s2 + $0x28] sm:$0xf]
        %v1192 = vld [vmem:[%s2 + $0x2c] sm:$0xf]
        %v1193 = vld [vmem:[%s2 + $0x30] sm:$0xf]
        %v1194 = vld [vmem:[%s2 + $0x34] sm:$0xf]
        %v1195 = vld [vmem:[%s2 + $0x38] sm:$0xf]
        %v1196 = vld [vmem:[%s2 + $0x3c] sm:$0xf]
        %v1213 = vunpack.c.l.b16 %v1181
        %v1214 = vunpack.c.l.b16 %v1182
        %v1215 = vunpack.c.l.b16 %v1183
        %v1216 = vunpack.c.l.b16 %v1184
        %v1217 = vunpack.c.l.b16 %v1185
        %v1218 = vunpack.c.l.b16 %v1186
        %v1219 = vunpack.c.l.b16 %v1187
        %v1220 = vunpack.c.l.b16 %v1188
        %v1221 = vunpack.c.l.b16 %v1189
        %v1222 = vunpack.c.l.b16 %v1190
        %v1223 = vunpack.c.l.b16 %v1191
        %v1224 = vunpack.c.l.b16 %v1192
        %v1225 = vunpack.c.l.b16 %v1193
        %v1226 = vunpack.c.l.b16 %v1194
        %v1227 = vunpack.c.l.b16 %v1195
        %v1228 = vunpack.c.l.b16 %v1196
        %v1229 = vpack.c.b16 %v1214, %v1213
        %v1230 = vpack.c.b16 %v1216, %v1215
        %v1231 = vpack.c.b16 %v1218, %v1217
        %v1232 = vpack.c.b16 %v1220, %v1219
        %v1233 = vpack.c.b16 %v1222, %v1221
        %v1234 = vpack.c.b16 %v1224, %v1223
        %v1235 = vpack.c.b16 %v1226, %v1225
        %v1236 = vpack.c.b16 %v1228, %v1227
        %vm1237 = vcmask 261120
        %v1239 = vsel %vm1237, %v1229, 0
        %v1242 = vsel %vm1237, %v1230, 0
        %v1245 = vsel %vm1237, %v1231, 0
        %v1248 = vsel %vm1237, %v1232, 0
        %v1251 = vsel %vm1237, %v1233, 0
        %v1254 = vsel %vm1237, %v1234, 0
        %v1257 = vsel %vm1237, %v1235, 0
        %v1260 = vsel %vm1237, %v1236, 0
        %1262 = vmatprep.subr.bf16.mxu0 0
        %1263 = vmatpush1.bf16.msra.mxu0 %v1179
        %1264 = vmatprep.subr.bf16.mxu0 0
        %1265 = vmatpush1.bf16.msra.mxu0 %v1180
        %1266 = vmatprep.subr.bf16.mxu0 0
        %1267 = vmatpush1.bf16.msra.mxu0 0
        %1268 = vmatprep.subr.bf16.mxu0 0
        %1269 = vmatpush1.bf16.msra.mxu0 0
        %1270 = vmatprep.subr.bf16.mxu0 0
        %1271 = vmatpush1.bf16.msra.mxu0 0
        %1272 = vmatprep.subr.bf16.mxu0 0
        %1273 = vmatpush1.bf16.msra.mxu0 0
        %1274 = vmatprep.subr.bf16.mxu0 0
        %1275 = vmatpush1.bf16.msra.mxu0 0
        %1276 = vmatprep.subr.bf16.mxu0 0
        %1277 = vmatpush1.bf16.msra.mxu0 0
        %1278 = vmatprep.subr.bf16.mxu0 0
        %1279 = vmatpush1.bf16.msra.mxu0 0
        %1280 = vmatprep.subr.bf16.mxu0 0
        %1281 = vmatpush1.bf16.msra.mxu0 0
        %1282 = vmatprep.subr.bf16.mxu0 0
        %1283 = vmatpush1.bf16.msra.mxu0 0
        %1284 = vmatprep.subr.bf16.mxu0 0
        %1285 = vmatpush1.bf16.msra.mxu0 0
        %1286 = vmatprep.subr.bf16.mxu0 0
        %1287 = vmatpush1.bf16.msra.mxu0 0
        %1288 = vmatprep.subr.bf16.mxu0 0
        %1289 = vmatpush1.bf16.msra.mxu0 0
        %1290 = vmatprep.subr.bf16.mxu0 0
        %1291 = vmatpush1.bf16.msra.mxu0 0
        %1292 = vmatprep.subr.bf16.mxu0 0
        %1293 = vmatpush1.bf16.msra.mxu0 0
        %1294 = vmatprep.mubr.bf16.mxu0 0
        %1295 = vmatmul.mubr.bf16.gmra.mrb[0].mxu0 %v1239
        %v1296 = vpop.f32.mrb[0].mxu0
        %v1297 = vadd.f32 0.0, %v1296
        %v1298 = vpop.f32.mrb[0].mxu0
        %v1299 = vpop.f32.mrb[0].mxu0
        %v1300 = vadd.f32 0.0, %v1299
        %v1301 = vpop.f32.mrb[0].mxu0
        %1302 = vmatprep.mubr.bf16.mxu0 0
        %1303 = vmatmul.mubr.bf16.gmra.mrb[0].mxu0 %v1242
        %v1304 = vpop.f32.mrb[0].mxu0
        %v1305 = vadd.f32 0.0, %v1304
        %v1306 = vpop.f32.mrb[0].mxu0
        %v1307 = vpop.f32.mrb[0].mxu0
        %v1308 = vadd.f32 0.0, %v1307
        %v1309 = vpop.f32.mrb[0].mxu0
        %1310 = vmatprep.mubr.bf16.mxu0 0
        %1311 = vmatmul.mubr.bf16.gmra.mrb[0].mxu0 %v1245
        %v1312 = vpop.f32.mrb[0].mxu0
        %v1313 = vadd.f32 0.0, %v1312
        %v1314 = vpop.f32.mrb[0].mxu0
        %v1315 = vpop.f32.mrb[0].mxu0
        %v1316 = vadd.f32 0.0, %v1315
        %v1317 = vpop.f32.mrb[0].mxu0
        %1318 = vmatprep.mubr.bf16.mxu0 0
        %1319 = vmatmul.mubr.bf16.gmra.mrb[0].mxu0 %v1248
        %v1320 = vpop.f32.mrb[0].mxu0
        %v1321 = vadd.f32 0.0, %v1320
        %v1322 = vpop.f32.mrb[0].mxu0
        %v1323 = vpop.f32.mrb[0].mxu0
        %v1324 = vadd.f32 0.0, %v1323
        %v1325 = vpop.f32.mrb[0].mxu0
        %1326 = vmatprep.mubr.bf16.mxu0 0
        %1327 = vmatmul.mubr.bf16.gmra.mrb[0].mxu0 %v1251
        %v1328 = vpop.f32.mrb[0].mxu0
        %v1329 = vadd.f32 0.0, %v1328
        %v1330 = vpop.f32.mrb[0].mxu0
        %v1331 = vpop.f32.mrb[0].mxu0
        %v1332 = vadd.f32 0.0, %v1331
        %v1333 = vpop.f32.mrb[0].mxu0
        %1334 = vmatprep.mubr.bf16.mxu0 0
        %1335 = vmatmul.mubr.bf16.gmra.mrb[0].mxu0 %v1254
        %v1336 = vpop.f32.mrb[0].mxu0
        %v1337 = vadd.f32 0.0, %v1336
        %v1338 = vpop.f32.mrb[0].mxu0
        %v1339 = vpop.f32.mrb[0].mxu0
        %v1340 = vadd.f32 0.0, %v1339
        %v1341 = vpop.f32.mrb[0].mxu0
        %1342 = vmatprep.mubr.bf16.mxu0 0
        %1343 = vmatmul.mubr.bf16.gmra.mrb[0].mxu0 %v1257
        %v1344 = vpop.f32.mrb[0].mxu0
        %v1345 = vadd.f32 0.0, %v1344
        %v1346 = vpop.f32.mrb[0].mxu0
        %v1347 = vpop.f32.mrb[0].mxu0
        %v1348 = vadd.f32 0.0, %v1347
        %v1349 = vpop.f32.mrb[0].mxu0
        %1350 = vmatprep.mubr.bf16.mxu0 0
        %1351 = vmatmul.mubr.bf16.gmra.mrb[0].mxu0 %v1260
        %v1352 = vpop.f32.mrb[0].mxu0
        %v1353 = vadd.f32 0.0, %v1352
        %v1354 = vpop.f32.mrb[0].mxu0
        %v1355 = vpop.f32.mrb[0].mxu0
        %v1356 = vadd.f32 0.0, %v1355
        %v1357 = vpop.f32.mrb[0].mxu0
        %1358 = vdwg.mxu0
        %v1359 = vpack.c.bf16 %v1300, %v1297
        %v1360 = vpack.c.bf16 %v1308, %v1305
        %v1361 = vpack.c.bf16 %v1316, %v1313
        %v1362 = vpack.c.bf16 %v1324, %v1321
        %v1363 = vpack.c.bf16 %v1332, %v1329
        %v1364 = vpack.c.bf16 %v1340, %v1337
        %v1365 = vpack.c.bf16 %v1348, %v1345
        %v1366 = vpack.c.bf16 %v1356, %v1353
        %v1367 = vld [vmem:[%s503] sm:$0xf]
        %v1368 = vld [vmem:[%s503 + $0x4] sm:$0xf]
        %v1369 = vld [vmem:[%s503 + $0x8] sm:$0xf]
        %v1370 = vld [vmem:[%s503 + $0xc] sm:$0xf]
        %v1371 = vld [vmem:[%s503 + $0x10] sm:$0xf]
        %v1372 = vld [vmem:[%s503 + $0x14] sm:$0xf]
        %v1373 = vld [vmem:[%s503 + $0x18] sm:$0xf]
        %v1374 = vld [vmem:[%s503 + $0x1c] sm:$0xf]
        %s1375 = scalar_lea.vmem %s2, 64
        %v1376 = vld [vmem:[%s1375] sm:$0xf]
        %v1377 = vld [vmem:[%s1375 + $0x4] sm:$0xf]
        %v1378 = vld [vmem:[%s1375 + $0x8] sm:$0xf]
        %v1379 = vld [vmem:[%s1375 + $0xc] sm:$0xf]
        %v1380 = vld [vmem:[%s1375 + $0x10] sm:$0xf]
        %v1381 = vld [vmem:[%s1375 + $0x14] sm:$0xf]
        %v1382 = vld [vmem:[%s1375 + $0x18] sm:$0xf]
        %v1383 = vld [vmem:[%s1375 + $0x1c] sm:$0xf]
        %v1384 = vld [vmem:[%s1375 + $0x20] sm:$0xf]
        %v1385 = vld [vmem:[%s1375 + $0x24] sm:$0xf]
        %v1386 = vld [vmem:[%s1375 + $0x28] sm:$0xf]
        %v1387 = vld [vmem:[%s1375 + $0x2c] sm:$0xf]
        %v1388 = vld [vmem:[%s1375 + $0x30] sm:$0xf]
        %v1389 = vld [vmem:[%s1375 + $0x34] sm:$0xf]
        %v1390 = vld [vmem:[%s1375 + $0x38] sm:$0xf]
        %v1391 = vld [vmem:[%s1375 + $0x3c] sm:$0xf]
        %v1408 = vunpack.c.l.b16 %v1376
        %v1409 = vunpack.c.l.b16 %v1377
        %v1410 = vunpack.c.l.b16 %v1378
        %v1411 = vunpack.c.l.b16 %v1379
        %v1412 = vunpack.c.l.b16 %v1380
        %v1413 = vunpack.c.l.b16 %v1381
        %v1414 = vunpack.c.l.b16 %v1382
        %v1415 = vunpack.c.l.b16 %v1383
        %v1416 = vunpack.c.l.b16 %v1384
        %v1417 = vunpack.c.l.b16 %v1385
        %v1418 = vunpack.c.l.b16 %v1386
        %v1419 = vunpack.c.l.b16 %v1387
        %v1420 = vunpack.c.l.b16 %v1388
        %v1421 = vunpack.c.l.b16 %v1389
        %v1422 = vunpack.c.l.b16 %v1390
        %v1423 = vunpack.c.l.b16 %v1391
        %v1424 = vpack.c.b16 %v1409, %v1408
        %v1425 = vpack.c.b16 %v1411, %v1410
        %v1426 = vpack.c.b16 %v1413, %v1412
        %v1427 = vpack.c.b16 %v1415, %v1414
        %v1428 = vpack.c.b16 %v1417, %v1416
        %v1429 = vpack.c.b16 %v1419, %v1418
        %v1430 = vpack.c.b16 %v1421, %v1420
        %v1431 = vpack.c.b16 %v1423, %v1422
        %v1433 = vsel %vm1237, %v1424, 0
        %v1436 = vsel %vm1237, %v1425, 0
        %v1439 = vsel %vm1237, %v1426, 0
        %v1442 = vsel %vm1237, %v1427, 0
        %v1445 = vsel %vm1237, %v1428, 0
        %v1448 = vsel %vm1237, %v1429, 0
        %v1451 = vsel %vm1237, %v1430, 0
        %v1454 = vsel %vm1237, %v1431, 0
        %1456 = vmatprep.subr.bf16.mxu0 0
        %1457 = vmatpush1.bf16.msra.mxu0 %v1179
        %1458 = vmatprep.subr.bf16.mxu0 0
        %1459 = vmatpush1.bf16.msra.mxu0 %v1180
        %1460 = vmatprep.subr.bf16.mxu0 0
        %1461 = vmatpush1.bf16.msra.mxu0 0
        %1462 = vmatprep.subr.bf16.mxu0 0
        %1463 = vmatpush1.bf16.msra.mxu0 0
        %1464 = vmatprep.subr.bf16.mxu0 0
        %1465 = vmatpush1.bf16.msra.mxu0 0
        %1466 = vmatprep.subr.bf16.mxu0 0
        %1467 = vmatpush1.bf16.msra.mxu0 0
        %1468 = vmatprep.subr.bf16.mxu0 0
        %1469 = vmatpush1.bf16.msra.mxu0 0
        %1470 = vmatprep.subr.bf16.mxu0 0
        %1471 = vmatpush1.bf16.msra.mxu0 0
        %1472 = vmatprep.subr.bf16.mxu0 0
        %1473 = vmatpush1.bf16.msra.mxu0 0
        %1474 = vmatprep.subr.bf16.mxu0 0
        %1475 = vmatpush1.bf16.msra.mxu0 0
        %1476 = vmatprep.subr.bf16.mxu0 0
        %1477 = vmatpush1.bf16.msra.mxu0 0
        %1478 = vmatprep.subr.bf16.mxu0 0
        %1479 = vmatpush1.bf16.msra.mxu0 0
        %1480 = vmatprep.subr.bf16.mxu0 0
        %1481 = vmatpush1.bf16.msra.mxu0 0
        %1482 = vmatprep.subr.bf16.mxu0 0
        %1483 = vmatpush1.bf16.msra.mxu0 0
        %1484 = vmatprep.subr.bf16.mxu0 0
        %1485 = vmatpush1.bf16.msra.mxu0 0
        %1486 = vmatprep.subr.bf16.mxu0 0
        %1487 = vmatpush1.bf16.msra.mxu0 0
        %1488 = vmatprep.mubr.bf16.mxu0 0
        %1489 = vmatmul.mubr.bf16.gmra.mrb[0].mxu0 %v1433
        %v1490 = vpop.f32.mrb[0].mxu0
        %v1491 = vadd.f32 0.0, %v1490
        %v1492 = vpop.f32.mrb[0].mxu0
        %v1493 = vpop.f32.mrb[0].mxu0
        %v1494 = vadd.f32 0.0, %v1493
        %v1495 = vpop.f32.mrb[0].mxu0
        %1496 = vmatprep.mubr.bf16.mxu0 0
        %1497 = vmatmul.mubr.bf16.gmra.mrb[0].mxu0 %v1436
        %v1498 = vpop.f32.mrb[0].mxu0
        %v1499 = vadd.f32 0.0, %v1498
        %v1500 = vpop.f32.mrb[0].mxu0
        %v1501 = vpop.f32.mrb[0].mxu0
        %v1502 = vadd.f32 0.0, %v1501
        %v1503 = vpop.f32.mrb[0].mxu0
        %1504 = vmatprep.mubr.bf16.mxu0 0
        %1505 = vmatmul.mubr.bf16.gmra.mrb[0].mxu0 %v1439
        %v1506 = vpop.f32.mrb[0].mxu0
        %v1507 = vadd.f32 0.0, %v1506
        %v1508 = vpop.f32.mrb[0].mxu0
        %v1509 = vpop.f32.mrb[0].mxu0
        %v1510 = vadd.f32 0.0, %v1509
        %v1511 = vpop.f32.mrb[0].mxu0
        %1512 = vmatprep.mubr.bf16.mxu0 0
        %1513 = vmatmul.mubr.bf16.gmra.mrb[0].mxu0 %v1442
        %v1514 = vpop.f32.mrb[0].mxu0
        %v1515 = vadd.f32 0.0, %v1514
        %v1516 = vpop.f32.mrb[0].mxu0
        %v1517 = vpop.f32.mrb[0].mxu0
        %v1518 = vadd.f32 0.0, %v1517
        %v1519 = vpop.f32.mrb[0].mxu0
        %1520 = vmatprep.mubr.bf16.mxu0 0
        %1521 = vmatmul.mubr.bf16.gmra.mrb[0].mxu0 %v1445
        %v1522 = vpop.f32.mrb[0].mxu0
        %v1523 = vadd.f32 0.0, %v1522
        %v1524 = vpop.f32.mrb[0].mxu0
        %v1525 = vpop.f32.mrb[0].mxu0
        %v1526 = vadd.f32 0.0, %v1525
        %v1527 = vpop.f32.mrb[0].mxu0
        %1528 = vmatprep.mubr.bf16.mxu0 0
        %1529 = vmatmul.mubr.bf16.gmra.mrb[0].mxu0 %v1448
        %v1530 = vpop.f32.mrb[0].mxu0
        %v1531 = vadd.f32 0.0, %v1530
        %v1532 = vpop.f32.mrb[0].mxu0
        %v1533 = vpop.f32.mrb[0].mxu0
        %v1534 = vadd.f32 0.0, %v1533
        %v1535 = vpop.f32.mrb[0].mxu0
        %1536 = vmatprep.mubr.bf16.mxu0 0
        %1537 = vmatmul.mubr.bf16.gmra.mrb[0].mxu0 %v1451
        %v1538 = vpop.f32.mrb[0].mxu0
        %v1539 = vadd.f32 0.0, %v1538
        %v1540 = vpop.f32.mrb[0].mxu0
        %v1541 = vpop.f32.mrb[0].mxu0
        %v1542 = vadd.f32 0.0, %v1541
        %v1543 = vpop.f32.mrb[0].mxu0
        %1544 = vmatprep.mubr.bf16.mxu0 0
        %1545 = vmatmul.mubr.bf16.gmra.mrb[0].mxu0 %v1454
        %v1546 = vpop.f32.mrb[0].mxu0
        %v1547 = vadd.f32 0.0, %v1546
        %v1548 = vpop.f32.mrb[0].mxu0
        %v1549 = vpop.f32.mrb[0].mxu0
        %v1550 = vadd.f32 0.0, %v1549
        %v1551 = vpop.f32.mrb[0].mxu0
        %1552 = vdwg.mxu0
        %v1553 = vpack.c.bf16 %v1494, %v1491
        %v1554 = vpack.c.bf16 %v1502, %v1499
        %v1555 = vpack.c.bf16 %v1510, %v1507
        %v1556 = vpack.c.bf16 %v1518, %v1515
        %v1557 = vpack.c.bf16 %v1526, %v1523
        %v1558 = vpack.c.bf16 %v1534, %v1531
        %v1559 = vpack.c.bf16 %v1542, %v1539
        %v1560 = vpack.c.bf16 %v1550, %v1547
        %s1561 = scalar_lea.vmem %s503, 32
        %v1562 = vld [vmem:[%s1561] sm:$0xf]
        %v1563 = vld [vmem:[%s1561 + $0x4] sm:$0xf]
        %v1564 = vld [vmem:[%s1561 + $0x8] sm:$0xf]
        %v1565 = vld [vmem:[%s1561 + $0xc] sm:$0xf]
        %v1566 = vld [vmem:[%s1561 + $0x10] sm:$0xf]
        %v1567 = vld [vmem:[%s1561 + $0x14] sm:$0xf]
        %v1568 = vld [vmem:[%s1561 + $0x18] sm:$0xf]
        %v1569 = vld [vmem:[%s1561 + $0x1c] sm:$0xf]
        %v1578 = vunpack.c.l.b16 %v1562
        %v1579 = vunpack.c.l.b16 %v1563
        %v1580 = vunpack.c.l.b16 %v1564
        %v1581 = vunpack.c.l.b16 %v1565
        %v1582 = vunpack.c.l.b16 %v1566
        %v1583 = vunpack.c.l.b16 %v1567
        %v1584 = vunpack.c.l.b16 %v1568
        %v1585 = vunpack.c.l.b16 %v1569
        %v1586 = vpack.c.b16 %v1579, %v1578
        %v1587 = vpack.c.b16 %v1581, %v1580
        %v1588 = vpack.c.b16 %v1583, %v1582
        %v1589 = vpack.c.b16 %v1585, %v1584
        %v1595 = vsel %vm705, %v1553, 0
        %v1598 = vsel %vm705, %v1554, 0
        %v1601 = vsel %vm705, %v1555, 0
        %v1604 = vsel %vm705, %v1556, 0
        %v1607 = vsel %vm705, %v1557, 0
        %v1610 = vsel %vm705, %v1558, 0
        %v1613 = vsel %vm705, %v1559, 0
        %v1616 = vsel %vm705, %v1560, 0
        %1618 = vmatprep.subr.bf16.mxu0 0
        %1619 = vmatpush1.bf16.msra.mxu0 %v1586
        %1620 = vmatprep.subr.bf16.mxu0 0
        %1621 = vmatpush1.bf16.msra.mxu0 %v1587
        %1622 = vmatprep.subr.bf16.mxu0 0
        %1623 = vmatpush1.bf16.msra.mxu0 %v1588
        %1624 = vmatprep.subr.bf16.mxu0 0
        %1625 = vmatpush1.bf16.msra.mxu0 %v1589
        %1626 = vmatprep.subr.bf16.mxu0 0
        %1627 = vmatpush1.bf16.msra.mxu0 0
        %1628 = vmatprep.subr.bf16.mxu0 0
        %1629 = vmatpush1.bf16.msra.mxu0 0
        %1630 = vmatprep.subr.bf16.mxu0 0
        %1631 = vmatpush1.bf16.msra.mxu0 0
        %1632 = vmatprep.subr.bf16.mxu0 0
        %1633 = vmatpush1.bf16.msra.mxu0 0
        %1634 = vmatprep.subr.bf16.mxu0 0
        %1635 = vmatpush1.bf16.msra.mxu0 0
        %1636 = vmatprep.subr.bf16.mxu0 0
        %1637 = vmatpush1.bf16.msra.mxu0 0
        %1638 = vmatprep.subr.bf16.mxu0 0
        %1639 = vmatpush1.bf16.msra.mxu0 0
        %1640 = vmatprep.subr.bf16.mxu0 0
        %1641 = vmatpush1.bf16.msra.mxu0 0
        %1642 = vmatprep.subr.bf16.mxu0 0
        %1643 = vmatpush1.bf16.msra.mxu0 0
        %1644 = vmatprep.subr.bf16.mxu0 0
        %1645 = vmatpush1.bf16.msra.mxu0 0
        %1646 = vmatprep.subr.bf16.mxu0 0
        %1647 = vmatpush1.bf16.msra.mxu0 0
        %1648 = vmatprep.subr.bf16.mxu0 0
        %1649 = vmatpush1.bf16.msra.mxu0 0
        %1650 = vmatprep.mubr.bf16.mxu0 0
        %1651 = vmatmul.mubr.bf16.gmra.mrb[0].mxu0 %v1595
        %v1652 = vpop.f32.mrb[0].mxu0
        %v1653 = vadd.f32 0.0, %v1652
        %v1654 = vpop.f32.mrb[0].mxu0
        %v1655 = vpop.f32.mrb[0].mxu0
        %v1656 = vadd.f32 0.0, %v1655
        %v1657 = vpop.f32.mrb[0].mxu0
        %1658 = vmatprep.mubr.bf16.mxu0 0
        %1659 = vmatmul.mubr.bf16.gmra.mrb[0].mxu0 %v1598
        %v1660 = vpop.f32.mrb[0].mxu0
        %v1661 = vadd.f32 0.0, %v1660
        %v1662 = vpop.f32.mrb[0].mxu0
        %v1663 = vpop.f32.mrb[0].mxu0
        %v1664 = vadd.f32 0.0, %v1663
        %v1665 = vpop.f32.mrb[0].mxu0
        %1666 = vmatprep.mubr.bf16.mxu0 0
        %1667 = vmatmul.mubr.bf16.gmra.mrb[0].mxu0 %v1601
        %v1668 = vpop.f32.mrb[0].mxu0
        %v1669 = vadd.f32 0.0, %v1668
        %v1670 = vpop.f32.mrb[0].mxu0
        %v1671 = vpop.f32.mrb[0].mxu0
        %v1672 = vadd.f32 0.0, %v1671
        %v1673 = vpop.f32.mrb[0].mxu0
        %1674 = vmatprep.mubr.bf16.mxu0 0
        %1675 = vmatmul.mubr.bf16.gmra.mrb[0].mxu0 %v1604
        %v1676 = vpop.f32.mrb[0].mxu0
        %v1677 = vadd.f32 0.0, %v1676
        %v1678 = vpop.f32.mrb[0].mxu0
        %v1679 = vpop.f32.mrb[0].mxu0
        %v1680 = vadd.f32 0.0, %v1679
        %v1681 = vpop.f32.mrb[0].mxu0
        %1682 = vmatprep.mubr.bf16.mxu0 0
        %1683 = vmatmul.mubr.bf16.gmra.mrb[0].mxu0 %v1607
        %v1684 = vpop.f32.mrb[0].mxu0
        %v1685 = vadd.f32 0.0, %v1684
        %v1686 = vpop.f32.mrb[0].mxu0
        %v1687 = vpop.f32.mrb[0].mxu0
        %v1688 = vadd.f32 0.0, %v1687
        %v1689 = vpop.f32.mrb[0].mxu0
        %1690 = vmatprep.mubr.bf16.mxu0 0
        %1691 = vmatmul.mubr.bf16.gmra.mrb[0].mxu0 %v1610
        %v1692 = vpop.f32.mrb[0].mxu0
        %v1693 = vadd.f32 0.0, %v1692
        %v1694 = vpop.f32.mrb[0].mxu0
        %v1695 = vpop.f32.mrb[0].mxu0
        %v1696 = vadd.f32 0.0, %v1695
        %v1697 = vpop.f32.mrb[0].mxu0
        %1698 = vmatprep.mubr.bf16.mxu0 0
        %1699 = vmatmul.mubr.bf16.gmra.mrb[0].mxu0 %v1613
        %v1700 = vpop.f32.mrb[0].mxu0
        %v1701 = vadd.f32 0.0, %v1700
        %v1702 = vpop.f32.mrb[0].mxu0
        %v1703 = vpop.f32.mrb[0].mxu0
        %v1704 = vadd.f32 0.0, %v1703
        %v1705 = vpop.f32.mrb[0].mxu0
        %1706 = vmatprep.mubr.bf16.mxu0 0
        %1707 = vmatmul.mubr.bf16.gmra.mrb[0].mxu0 %v1616
        %v1708 = vpop.f32.mrb[0].mxu0
        %v1709 = vadd.f32 0.0, %v1708
        %v1710 = vpop.f32.mrb[0].mxu0
        %v1711 = vpop.f32.mrb[0].mxu0
        %v1712 = vadd.f32 0.0, %v1711
        %v1713 = vpop.f32.mrb[0].mxu0
        %1714 = vdwg.mxu0
        %v1723 = vunpack.c.l.b16 %v1367
        %v1724 = vunpack.c.l.b16 %v1368
        %v1725 = vunpack.c.l.b16 %v1369
        %v1726 = vunpack.c.l.b16 %v1370
        %v1727 = vunpack.c.l.b16 %v1371
        %v1728 = vunpack.c.l.b16 %v1372
        %v1729 = vunpack.c.l.b16 %v1373
        %v1730 = vunpack.c.l.b16 %v1374
        %v1731 = vpack.c.b16 %v1724, %v1723
        %v1732 = vpack.c.b16 %v1726, %v1725
        %v1733 = vpack.c.b16 %v1728, %v1727
        %v1734 = vpack.c.b16 %v1730, %v1729
        %v1740 = vsel %vm705, %v1359, 0
        %v1743 = vsel %vm705, %v1360, 0
        %v1746 = vsel %vm705, %v1361, 0
        %v1749 = vsel %vm705, %v1362, 0
        %v1752 = vsel %vm705, %v1363, 0
        %v1755 = vsel %vm705, %v1364, 0
        %v1758 = vsel %vm705, %v1365, 0
        %v1761 = vsel %vm705, %v1366, 0
        %1763 = vmatprep.subr.bf16.mxu0 0
        %1764 = vmatpush1.bf16.msra.mxu0 %v1731
        %1765 = vmatprep.subr.bf16.mxu0 0
        %1766 = vmatpush1.bf16.msra.mxu0 %v1732
        %1767 = vmatprep.subr.bf16.mxu0 0
        %1768 = vmatpush1.bf16.msra.mxu0 %v1733
        %1769 = vmatprep.subr.bf16.mxu0 0
        %1770 = vmatpush1.bf16.msra.mxu0 %v1734
        %1771 = vmatprep.subr.bf16.mxu0 0
        %1772 = vmatpush1.bf16.msra.mxu0 0
        %1773 = vmatprep.subr.bf16.mxu0 0
        %1774 = vmatpush1.bf16.msra.mxu0 0
        %1775 = vmatprep.subr.bf16.mxu0 0
        %1776 = vmatpush1.bf16.msra.mxu0 0
        %1777 = vmatprep.subr.bf16.mxu0 0
        %1778 = vmatpush1.bf16.msra.mxu0 0
        %1779 = vmatprep.subr.bf16.mxu0 0
        %1780 = vmatpush1.bf16.msra.mxu0 0
        %1781 = vmatprep.subr.bf16.mxu0 0
        %1782 = vmatpush1.bf16.msra.mxu0 0
        %1783 = vmatprep.subr.bf16.mxu0 0
        %1784 = vmatpush1.bf16.msra.mxu0 0
        %1785 = vmatprep.subr.bf16.mxu0 0
        %1786 = vmatpush1.bf16.msra.mxu0 0
        %1787 = vmatprep.subr.bf16.mxu0 0
        %1788 = vmatpush1.bf16.msra.mxu0 0
        %1789 = vmatprep.subr.bf16.mxu0 0
        %1790 = vmatpush1.bf16.msra.mxu0 0
        %1791 = vmatprep.subr.bf16.mxu0 0
        %1792 = vmatpush1.bf16.msra.mxu0 0
        %1793 = vmatprep.subr.bf16.mxu0 0
        %1794 = vmatpush1.bf16.msra.mxu0 0
        %1795 = vmatprep.mubr.bf16.mxu0 0
        %1796 = vmatmul.mubr.bf16.gmra.mrb[0].mxu0 %v1740
        %v1797 = vpop.f32.mrb[0].mxu0
        %v1798 = vadd.f32 %v1653, %v1797
        %v1799 = vpop.f32.mrb[0].mxu0
        %v1800 = vpop.f32.mrb[0].mxu0
        %v1801 = vadd.f32 %v1656, %v1800
        %v1802 = vpop.f32.mrb[0].mxu0
        %1803 = vmatprep.mubr.bf16.mxu0 0
        %1804 = vmatmul.mubr.bf16.gmra.mrb[0].mxu0 %v1743
        %v1805 = vpop.f32.mrb[0].mxu0
        %v1806 = vadd.f32 %v1661, %v1805
        %v1807 = vpop.f32.mrb[0].mxu0
        %v1808 = vpop.f32.mrb[0].mxu0
        %v1809 = vadd.f32 %v1664, %v1808
        %v1810 = vpop.f32.mrb[0].mxu0
        %1811 = vmatprep.mubr.bf16.mxu0 0
        %1812 = vmatmul.mubr.bf16.gmra.mrb[0].mxu0 %v1746
        %v1813 = vpop.f32.mrb[0].mxu0
        %v1814 = vadd.f32 %v1669, %v1813
        %v1815 = vpop.f32.mrb[0].mxu0
        %v1816 = vpop.f32.mrb[0].mxu0
        %v1817 = vadd.f32 %v1672, %v1816
        %v1818 = vpop.f32.mrb[0].mxu0
        %1819 = vmatprep.mubr.bf16.mxu0 0
        %1820 = vmatmul.mubr.bf16.gmra.mrb[0].mxu0 %v1749
        %v1821 = vpop.f32.mrb[0].mxu0
        %v1822 = vadd.f32 %v1677, %v1821
        %v1823 = vpop.f32.mrb[0].mxu0
        %v1824 = vpop.f32.mrb[0].mxu0
        %v1825 = vadd.f32 %v1680, %v1824
        %v1826 = vpop.f32.mrb[0].mxu0
        %1827 = vmatprep.mubr.bf16.mxu0 0
        %1828 = vmatmul.mubr.bf16.gmra.mrb[0].mxu0 %v1752
        %v1829 = vpop.f32.mrb[0].mxu0
        %v1830 = vadd.f32 %v1685, %v1829
        %v1831 = vpop.f32.mrb[0].mxu0
        %v1832 = vpop.f32.mrb[0].mxu0
        %v1833 = vadd.f32 %v1688, %v1832
        %v1834 = vpop.f32.mrb[0].mxu0
        %1835 = vmatprep.mubr.bf16.mxu0 0
        %1836 = vmatmul.mubr.bf16.gmra.mrb[0].mxu0 %v1755
        %v1837 = vpop.f32.mrb[0].mxu0
        %v1838 = vadd.f32 %v1693, %v1837
        %v1839 = vpop.f32.mrb[0].mxu0
        %v1840 = vpop.f32.mrb[0].mxu0
        %v1841 = vadd.f32 %v1696, %v1840
        %v1842 = vpop.f32.mrb[0].mxu0
        %1843 = vmatprep.mubr.bf16.mxu0 0
        %1844 = vmatmul.mubr.bf16.gmra.mrb[0].mxu0 %v1758
        %v1845 = vpop.f32.mrb[0].mxu0
        %v1846 = vadd.f32 %v1701, %v1845
        %v1847 = vpop.f32.mrb[0].mxu0
        %v1848 = vpop.f32.mrb[0].mxu0
        %v1849 = vadd.f32 %v1704, %v1848
        %v1850 = vpop.f32.mrb[0].mxu0
        %1851 = vmatprep.mubr.bf16.mxu0 0
        %1852 = vmatmul.mubr.bf16.gmra.mrb[0].mxu0 %v1761
        %v1853 = vpop.f32.mrb[0].mxu0
        %v1854 = vadd.f32 %v1709, %v1853
        %v1855 = vpop.f32.mrb[0].mxu0
        %v1856 = vpop.f32.mrb[0].mxu0
        %v1857 = vadd.f32 %v1712, %v1856
        %v1858 = vpop.f32.mrb[0].mxu0
        %1859 = vdwg.mxu0
        %s1860 = scalar_lea.vmem %s2, 128
        %v1861 = vld [vmem:[%s1860] sm:$0xf]
        %v1862 = vld [vmem:[%s1860 + $0x4] sm:$0xf]
        %v1863 = vld [vmem:[%s1860 + $0x8] sm:$0xf]
        %v1864 = vld [vmem:[%s1860 + $0xc] sm:$0xf]
        %v1865 = vld [vmem:[%s1860 + $0x10] sm:$0xf]
        %v1866 = vld [vmem:[%s1860 + $0x14] sm:$0xf]
        %v1867 = vld [vmem:[%s1860 + $0x18] sm:$0xf]
        %v1868 = vld [vmem:[%s1860 + $0x1c] sm:$0xf]
        %v1869 = vld [vmem:[%s1860 + $0x20] sm:$0xf]
        %v1870 = vld [vmem:[%s1860 + $0x24] sm:$0xf]
        %v1871 = vld [vmem:[%s1860 + $0x28] sm:$0xf]
        %v1872 = vld [vmem:[%s1860 + $0x2c] sm:$0xf]
        %v1873 = vld [vmem:[%s1860 + $0x30] sm:$0xf]
        %v1874 = vld [vmem:[%s1860 + $0x34] sm:$0xf]
        %v1875 = vld [vmem:[%s1860 + $0x38] sm:$0xf]
        %v1876 = vld [vmem:[%s1860 + $0x3c] sm:$0xf]
        %v1893 = vunpack.c.l.b16 %v1861
        %v1894 = vunpack.c.l.b16 %v1862
        %v1895 = vunpack.c.l.b16 %v1863
        %v1896 = vunpack.c.l.b16 %v1864
        %v1897 = vunpack.c.l.b16 %v1865
        %v1898 = vunpack.c.l.b16 %v1866
        %v1899 = vunpack.c.l.b16 %v1867
        %v1900 = vunpack.c.l.b16 %v1868
        %v1901 = vunpack.c.l.b16 %v1869
        %v1902 = vunpack.c.l.b16 %v1870
        %v1903 = vunpack.c.l.b16 %v1871
        %v1904 = vunpack.c.l.b16 %v1872
        %v1905 = vunpack.c.l.b16 %v1873
        %v1906 = vunpack.c.l.b16 %v1874
        %v1907 = vunpack.c.l.b16 %v1875
        %v1908 = vunpack.c.l.b16 %v1876
        %v1909 = vpack.c.b16 %v1894, %v1893
        %v1910 = vpack.c.b16 %v1896, %v1895
        %v1911 = vpack.c.b16 %v1898, %v1897
        %v1912 = vpack.c.b16 %v1900, %v1899
        %v1913 = vpack.c.b16 %v1902, %v1901
        %v1914 = vpack.c.b16 %v1904, %v1903
        %v1915 = vpack.c.b16 %v1906, %v1905
        %v1916 = vpack.c.b16 %v1908, %v1907
        %v1918 = vsel %vm1237, %v1909, 0
        %v1921 = vsel %vm1237, %v1910, 0
        %v1924 = vsel %vm1237, %v1911, 0
        %v1927 = vsel %vm1237, %v1912, 0
        %v1930 = vsel %vm1237, %v1913, 0
        %v1933 = vsel %vm1237, %v1914, 0
        %v1936 = vsel %vm1237, %v1915, 0
        %v1939 = vsel %vm1237, %v1916, 0
        %1941 = vmatprep.subr.bf16.mxu0 0
        %1942 = vmatpush1.bf16.msra.mxu0 %v1179
        %1943 = vmatprep.subr.bf16.mxu0 0
        %1944 = vmatpush1.bf16.msra.mxu0 %v1180
        %1945 = vmatprep.subr.bf16.mxu0 0
        %1946 = vmatpush1.bf16.msra.mxu0 0
        %1947 = vmatprep.subr.bf16.mxu0 0
        %1948 = vmatpush1.bf16.msra.mxu0 0
        %1949 = vmatprep.subr.bf16.mxu0 0
        %1950 = vmatpush1.bf16.msra.mxu0 0
        %1951 = vmatprep.subr.bf16.mxu0 0
        %1952 = vmatpush1.bf16.msra.mxu0 0
        %1953 = vmatprep.subr.bf16.mxu0 0
        %1954 = vmatpush1.bf16.msra.mxu0 0
        %1955 = vmatprep.subr.bf16.mxu0 0
        %1956 = vmatpush1.bf16.msra.mxu0 0
        %1957 = vmatprep.subr.bf16.mxu0 0
        %1958 = vmatpush1.bf16.msra.mxu0 0
        %1959 = vmatprep.subr.bf16.mxu0 0
        %1960 = vmatpush1.bf16.msra.mxu0 0
        %1961 = vmatprep.subr.bf16.mxu0 0
        %1962 = vmatpush1.bf16.msra.mxu0 0
        %1963 = vmatprep.subr.bf16.mxu0 0
        %1964 = vmatpush1.bf16.msra.mxu0 0
        %1965 = vmatprep.subr.bf16.mxu0 0
        %1966 = vmatpush1.bf16.msra.mxu0 0
        %1967 = vmatprep.subr.bf16.mxu0 0
        %1968 = vmatpush1.bf16.msra.mxu0 0
        %1969 = vmatprep.subr.bf16.mxu0 0
        %1970 = vmatpush1.bf16.msra.mxu0 0
        %1971 = vmatprep.subr.bf16.mxu0 0
        %1972 = vmatpush1.bf16.msra.mxu0 0
        %1973 = vmatprep.mubr.bf16.mxu0 0
        %1974 = vmatmul.mubr.bf16.gmra.mrb[0].mxu0 %v1918
        %v1975 = vpop.f32.mrb[0].mxu0
        %v1976 = vadd.f32 0.0, %v1975
        %v1977 = vpop.f32.mrb[0].mxu0
        %v1978 = vpop.f32.mrb[0].mxu0
        %v1979 = vadd.f32 0.0, %v1978
        %v1980 = vpop.f32.mrb[0].mxu0
        %1981 = vmatprep.mubr.bf16.mxu0 0
        %1982 = vmatmul.mubr.bf16.gmra.mrb[0].mxu0 %v1921
        %v1983 = vpop.f32.mrb[0].mxu0
        %v1984 = vadd.f32 0.0, %v1983
        %v1985 = vpop.f32.mrb[0].mxu0
        %v1986 = vpop.f32.mrb[0].mxu0
        %v1987 = vadd.f32 0.0, %v1986
        %v1988 = vpop.f32.mrb[0].mxu0
        %1989 = vmatprep.mubr.bf16.mxu0 0
        %1990 = vmatmul.mubr.bf16.gmra.mrb[0].mxu0 %v1924
        %v1991 = vpop.f32.mrb[0].mxu0
        %v1992 = vadd.f32 0.0, %v1991
        %v1993 = vpop.f32.mrb[0].mxu0
        %v1994 = vpop.f32.mrb[0].mxu0
        %v1995 = vadd.f32 0.0, %v1994
        %v1996 = vpop.f32.mrb[0].mxu0
        %1997 = vmatprep.mubr.bf16.mxu0 0
        %1998 = vmatmul.mubr.bf16.gmra.mrb[0].mxu0 %v1927
        %v1999 = vpop.f32.mrb[0].mxu0
        %v2000 = vadd.f32 0.0, %v1999
        %v2001 = vpop.f32.mrb[0].mxu0
        %v2002 = vpop.f32.mrb[0].mxu0
        %v2003 = vadd.f32 0.0, %v2002
        %v2004 = vpop.f32.mrb[0].mxu0
        %2005 = vmatprep.mubr.bf16.mxu0 0
        %2006 = vmatmul.mubr.bf16.gmra.mrb[0].mxu0 %v1930
        %v2007 = vpop.f32.mrb[0].mxu0
        %v2008 = vadd.f32 0.0, %v2007
        %v2009 = vpop.f32.mrb[0].mxu0
        %v2010 = vpop.f32.mrb[0].mxu0
        %v2011 = vadd.f32 0.0, %v2010
        %v2012 = vpop.f32.mrb[0].mxu0
        %2013 = vmatprep.mubr.bf16.mxu0 0
        %2014 = vmatmul.mubr.bf16.gmra.mrb[0].mxu0 %v1933
        %v2015 = vpop.f32.mrb[0].mxu0
        %v2016 = vadd.f32 0.0, %v2015
        %v2017 = vpop.f32.mrb[0].mxu0
        %v2018 = vpop.f32.mrb[0].mxu0
        %v2019 = vadd.f32 0.0, %v2018
        %v2020 = vpop.f32.mrb[0].mxu0
        %2021 = vmatprep.mubr.bf16.mxu0 0
        %2022 = vmatmul.mubr.bf16.gmra.mrb[0].mxu0 %v1936
        %v2023 = vpop.f32.mrb[0].mxu0
        %v2024 = vadd.f32 0.0, %v2023
        %v2025 = vpop.f32.mrb[0].mxu0
        %v2026 = vpop.f32.mrb[0].mxu0
        %v2027 = vadd.f32 0.0, %v2026
        %v2028 = vpop.f32.mrb[0].mxu0
        %2029 = vmatprep.mubr.bf16.mxu0 0
        %2030 = vmatmul.mubr.bf16.gmra.mrb[0].mxu0 %v1939
        %v2031 = vpop.f32.mrb[0].mxu0
        %v2032 = vadd.f32 0.0, %v2031
        %v2033 = vpop.f32.mrb[0].mxu0
        %v2034 = vpop.f32.mrb[0].mxu0
        %v2035 = vadd.f32 0.0, %v2034
        %v2036 = vpop.f32.mrb[0].mxu0
        %2037 = vdwg.mxu0
        %v2038 = vpack.c.bf16 %v1979, %v1976
        %v2039 = vpack.c.bf16 %v1987, %v1984
        %v2040 = vpack.c.bf16 %v1995, %v1992
        %v2041 = vpack.c.bf16 %v2003, %v2000
        %v2042 = vpack.c.bf16 %v2011, %v2008
        %v2043 = vpack.c.bf16 %v2019, %v2016
        %v2044 = vpack.c.bf16 %v2027, %v2024
        %v2045 = vpack.c.bf16 %v2035, %v2032
        %s2046 = scalar_lea.vmem %s503, 64
        %v2047 = vld [vmem:[%s2046] sm:$0xf]
        %v2048 = vld [vmem:[%s2046 + $0x4] sm:$0xf]
        %v2049 = vld [vmem:[%s2046 + $0x8] sm:$0xf]
        %v2050 = vld [vmem:[%s2046 + $0xc] sm:$0xf]
        %v2051 = vld [vmem:[%s2046 + $0x10] sm:$0xf]
        %v2052 = vld [vmem:[%s2046 + $0x14] sm:$0xf]
        %v2053 = vld [vmem:[%s2046 + $0x18] sm:$0xf]
        %v2054 = vld [vmem:[%s2046 + $0x1c] sm:$0xf]
        %v2063 = vunpack.c.l.b16 %v2047
        %v2064 = vunpack.c.l.b16 %v2048
        %v2065 = vunpack.c.l.b16 %v2049
        %v2066 = vunpack.c.l.b16 %v2050
        %v2067 = vunpack.c.l.b16 %v2051
        %v2068 = vunpack.c.l.b16 %v2052
        %v2069 = vunpack.c.l.b16 %v2053
        %v2070 = vunpack.c.l.b16 %v2054
        %v2071 = vpack.c.b16 %v2064, %v2063
        %v2072 = vpack.c.b16 %v2066, %v2065
        %v2073 = vpack.c.b16 %v2068, %v2067
        %v2074 = vpack.c.b16 %v2070, %v2069
        %v2080 = vsel %vm705, %v2038, 0
        %v2083 = vsel %vm705, %v2039, 0
        %v2086 = vsel %vm705, %v2040, 0
        %v2089 = vsel %vm705, %v2041, 0
        %v2092 = vsel %vm705, %v2042, 0
        %v2095 = vsel %vm705, %v2043, 0
        %v2098 = vsel %vm705, %v2044, 0
        %v2101 = vsel %vm705, %v2045, 0
        %2103 = vmatprep.subr.bf16.mxu0 0
        %2104 = vmatpush1.bf16.msra.mxu0 %v2071
        %2105 = vmatprep.subr.bf16.mxu0 0
        %2106 = vmatpush1.bf16.msra.mxu0 %v2072
        %2107 = vmatprep.subr.bf16.mxu0 0
        %2108 = vmatpush1.bf16.msra.mxu0 %v2073
        %2109 = vmatprep.subr.bf16.mxu0 0
        %2110 = vmatpush1.bf16.msra.mxu0 %v2074
        %2111 = vmatprep.subr.bf16.mxu0 0
        %2112 = vmatpush1.bf16.msra.mxu0 0
        %2113 = vmatprep.subr.bf16.mxu0 0
        %2114 = vmatpush1.bf16.msra.mxu0 0
        %2115 = vmatprep.subr.bf16.mxu0 0
        %2116 = vmatpush1.bf16.msra.mxu0 0
        %2117 = vmatprep.subr.bf16.mxu0 0
        %2118 = vmatpush1.bf16.msra.mxu0 0
        %2119 = vmatprep.subr.bf16.mxu0 0
        %2120 = vmatpush1.bf16.msra.mxu0 0
        %2121 = vmatprep.subr.bf16.mxu0 0
        %2122 = vmatpush1.bf16.msra.mxu0 0
        %2123 = vmatprep.subr.bf16.mxu0 0
        %2124 = vmatpush1.bf16.msra.mxu0 0
        %2125 = vmatprep.subr.bf16.mxu0 0
        %2126 = vmatpush1.bf16.msra.mxu0 0
        %2127 = vmatprep.subr.bf16.mxu0 0
        %2128 = vmatpush1.bf16.msra.mxu0 0
        %2129 = vmatprep.subr.bf16.mxu0 0
        %2130 = vmatpush1.bf16.msra.mxu0 0
        %2131 = vmatprep.subr.bf16.mxu0 0
        %2132 = vmatpush1.bf16.msra.mxu0 0
        %2133 = vmatprep.subr.bf16.mxu0 0
        %2134 = vmatpush1.bf16.msra.mxu0 0
        %2135 = vmatprep.mubr.bf16.mxu0 0
        %2136 = vmatmul.mubr.bf16.gmra.mrb[0].mxu0 %v2080
        %v2137 = vpop.f32.mrb[0].mxu0
        %v2138 = vadd.f32 0.0, %v2137
        %v2139 = vpop.f32.mrb[0].mxu0
        %v2140 = vpop.f32.mrb[0].mxu0
        %v2141 = vadd.f32 0.0, %v2140
        %v2142 = vpop.f32.mrb[0].mxu0
        %2143 = vmatprep.mubr.bf16.mxu0 0
        %2144 = vmatmul.mubr.bf16.gmra.mrb[0].mxu0 %v2083
        %v2145 = vpop.f32.mrb[0].mxu0
        %v2146 = vadd.f32 0.0, %v2145
        %v2147 = vpop.f32.mrb[0].mxu0
        %v2148 = vpop.f32.mrb[0].mxu0
        %v2149 = vadd.f32 0.0, %v2148
        %v2150 = vpop.f32.mrb[0].mxu0
        %2151 = vmatprep.mubr.bf16.mxu0 0
        %2152 = vmatmul.mubr.bf16.gmra.mrb[0].mxu0 %v2086
        %v2153 = vpop.f32.mrb[0].mxu0
        %v2154 = vadd.f32 0.0, %v2153
        %v2155 = vpop.f32.mrb[0].mxu0
        %v2156 = vpop.f32.mrb[0].mxu0
        %v2157 = vadd.f32 0.0, %v2156
        %v2158 = vpop.f32.mrb[0].mxu0
        %2159 = vmatprep.mubr.bf16.mxu0 0
        %2160 = vmatmul.mubr.bf16.gmra.mrb[0].mxu0 %v2089
        %v2161 = vpop.f32.mrb[0].mxu0
        %v2162 = vadd.f32 0.0, %v2161
        %v2163 = vpop.f32.mrb[0].mxu0
        %v2164 = vpop.f32.mrb[0].mxu0
        %v2165 = vadd.f32 0.0, %v2164
        %v2166 = vpop.f32.mrb[0].mxu0
        %2167 = vmatprep.mubr.bf16.mxu0 0
        %2168 = vmatmul.mubr.bf16.gmra.mrb[0].mxu0 %v2092
        %v2169 = vpop.f32.mrb[0].mxu0
        %v2170 = vadd.f32 0.0, %v2169
        %v2171 = vpop.f32.mrb[0].mxu0
        %v2172 = vpop.f32.mrb[0].mxu0
        %v2173 = vadd.f32 0.0, %v2172
        %v2174 = vpop.f32.mrb[0].mxu0
        %2175 = vmatprep.mubr.bf16.mxu0 0
        %2176 = vmatmul.mubr.bf16.gmra.mrb[0].mxu0 %v2095
        %v2177 = vpop.f32.mrb[0].mxu0
        %v2178 = vadd.f32 0.0, %v2177
        %v2179 = vpop.f32.mrb[0].mxu0
        %v2180 = vpop.f32.mrb[0].mxu0
        %v2181 = vadd.f32 0.0, %v2180
        %v2182 = vpop.f32.mrb[0].mxu0
        %2183 = vmatprep.mubr.bf16.mxu0 0
        %2184 = vmatmul.mubr.bf16.gmra.mrb[0].mxu0 %v2098
        %v2185 = vpop.f32.mrb[0].mxu0
        %v2186 = vadd.f32 0.0, %v2185
        %v2187 = vpop.f32.mrb[0].mxu0
        %v2188 = vpop.f32.mrb[0].mxu0
        %v2189 = vadd.f32 0.0, %v2188
        %v2190 = vpop.f32.mrb[0].mxu0
        %2191 = vmatprep.mubr.bf16.mxu0 0
        %2192 = vmatmul.mubr.bf16.gmra.mrb[0].mxu0 %v2101
        %v2193 = vpop.f32.mrb[0].mxu0
        %v2194 = vadd.f32 0.0, %v2193
        %v2195 = vpop.f32.mrb[0].mxu0
        %v2196 = vpop.f32.mrb[0].mxu0
        %v2197 = vadd.f32 0.0, %v2196
        %v2198 = vpop.f32.mrb[0].mxu0
        %2199 = vdwg.mxu0
        %v2200 = vadd.f32 %v1798, %v2138
        %v2201 = vadd.f32 %v1801, %v2141
        %v2202 = vadd.f32 %v1806, %v2146
        %v2203 = vadd.f32 %v1809, %v2149
        %v2204 = vadd.f32 %v1814, %v2154
        %v2205 = vadd.f32 %v1817, %v2157
        %v2206 = vadd.f32 %v1822, %v2162
        %v2207 = vadd.f32 %v1825, %v2165
        %v2208 = vadd.f32 %v1830, %v2170
        %v2209 = vadd.f32 %v1833, %v2173
        %v2210 = vadd.f32 %v1838, %v2178
        %v2211 = vadd.f32 %v1841, %v2181
        %v2212 = vadd.f32 %v1846, %v2186
        %v2213 = vadd.f32 %v1849, %v2189
        %v2214 = vadd.f32 %v1854, %v2194
        %v2215 = vadd.f32 %v1857, %v2197
        %s2216 = scalar_lea.vmem %s2, 192
        %v2217 = vld [vmem:[%s2216] sm:$0xf]
        %v2218 = vld [vmem:[%s2216 + $0x4] sm:$0xf]
        %v2219 = vld [vmem:[%s2216 + $0x8] sm:$0xf]
        %v2220 = vld [vmem:[%s2216 + $0xc] sm:$0xf]
        %v2221 = vld [vmem:[%s2216 + $0x10] sm:$0xf]
        %v2222 = vld [vmem:[%s2216 + $0x14] sm:$0xf]
        %v2223 = vld [vmem:[%s2216 + $0x18] sm:$0xf]
        %v2224 = vld [vmem:[%s2216 + $0x1c] sm:$0xf]
        %v2225 = vld [vmem:[%s2216 + $0x20] sm:$0xf]
        %v2226 = vld [vmem:[%s2216 + $0x24] sm:$0xf]
        %v2227 = vld [vmem:[%s2216 + $0x28] sm:$0xf]
        %v2228 = vld [vmem:[%s2216 + $0x2c] sm:$0xf]
        %v2229 = vld [vmem:[%s2216 + $0x30] sm:$0xf]
        %v2230 = vld [vmem:[%s2216 + $0x34] sm:$0xf]
        %v2231 = vld [vmem:[%s2216 + $0x38] sm:$0xf]
        %v2232 = vld [vmem:[%s2216 + $0x3c] sm:$0xf]
        %v2249 = vunpack.c.l.b16 %v2217
        %v2250 = vunpack.c.l.b16 %v2218
        %v2251 = vunpack.c.l.b16 %v2219
        %v2252 = vunpack.c.l.b16 %v2220
        %v2253 = vunpack.c.l.b16 %v2221
        %v2254 = vunpack.c.l.b16 %v2222
        %v2255 = vunpack.c.l.b16 %v2223
        %v2256 = vunpack.c.l.b16 %v2224
        %v2257 = vunpack.c.l.b16 %v2225
        %v2258 = vunpack.c.l.b16 %v2226
        %v2259 = vunpack.c.l.b16 %v2227
        %v2260 = vunpack.c.l.b16 %v2228
        %v2261 = vunpack.c.l.b16 %v2229
        %v2262 = vunpack.c.l.b16 %v2230
        %v2263 = vunpack.c.l.b16 %v2231
        %v2264 = vunpack.c.l.b16 %v2232
        %v2265 = vpack.c.b16 %v2250, %v2249
        %v2266 = vpack.c.b16 %v2252, %v2251
        %v2267 = vpack.c.b16 %v2254, %v2253
        %v2268 = vpack.c.b16 %v2256, %v2255
        %v2269 = vpack.c.b16 %v2258, %v2257
        %v2270 = vpack.c.b16 %v2260, %v2259
        %v2271 = vpack.c.b16 %v2262, %v2261
        %v2272 = vpack.c.b16 %v2264, %v2263
        %v2274 = vsel %vm1237, %v2265, 0
        %v2277 = vsel %vm1237, %v2266, 0
        %v2280 = vsel %vm1237, %v2267, 0
        %v2283 = vsel %vm1237, %v2268, 0
        %v2286 = vsel %vm1237, %v2269, 0
        %v2289 = vsel %vm1237, %v2270, 0
        %v2292 = vsel %vm1237, %v2271, 0
        %v2295 = vsel %vm1237, %v2272, 0
        %2297 = vmatprep.subr.bf16.mxu0 0
        %2298 = vmatpush1.bf16.msra.mxu0 %v1179
        %2299 = vmatprep.subr.bf16.mxu0 0
        %2300 = vmatpush1.bf16.msra.mxu0 %v1180
        %2301 = vmatprep.subr.bf16.mxu0 0
        %2302 = vmatpush1.bf16.msra.mxu0 0
        %2303 = vmatprep.subr.bf16.mxu0 0
        %2304 = vmatpush1.bf16.msra.mxu0 0
        %2305 = vmatprep.subr.bf16.mxu0 0
        %2306 = vmatpush1.bf16.msra.mxu0 0
        %2307 = vmatprep.subr.bf16.mxu0 0
        %2308 = vmatpush1.bf16.msra.mxu0 0
        %2309 = vmatprep.subr.bf16.mxu0 0
        %2310 = vmatpush1.bf16.msra.mxu0 0
        %2311 = vmatprep.subr.bf16.mxu0 0
        %2312 = vmatpush1.bf16.msra.mxu0 0
        %2313 = vmatprep.subr.bf16.mxu0 0
        %2314 = vmatpush1.bf16.msra.mxu0 0
        %2315 = vmatprep.subr.bf16.mxu0 0
        %2316 = vmatpush1.bf16.msra.mxu0 0
        %2317 = vmatprep.subr.bf16.mxu0 0
        %2318 = vmatpush1.bf16.msra.mxu0 0
        %2319 = vmatprep.subr.bf16.mxu0 0
        %2320 = vmatpush1.bf16.msra.mxu0 0
        %2321 = vmatprep.subr.bf16.mxu0 0
        %2322 = vmatpush1.bf16.msra.mxu0 0
        %2323 = vmatprep.subr.bf16.mxu0 0
        %2324 = vmatpush1.bf16.msra.mxu0 0
        %2325 = vmatprep.subr.bf16.mxu0 0
        %2326 = vmatpush1.bf16.msra.mxu0 0
        %2327 = vmatprep.subr.bf16.mxu0 0
        %2328 = vmatpush1.bf16.msra.mxu0 0
        %2329 = vmatprep.mubr.bf16.mxu0 0
        %2330 = vmatmul.mubr.bf16.gmra.mrb[0].mxu0 %v2274
        %v2331 = vpop.f32.mrb[0].mxu0
        %v2332 = vadd.f32 0.0, %v2331
        %v2333 = vpop.f32.mrb[0].mxu0
        %v2334 = vpop.f32.mrb[0].mxu0
        %v2335 = vadd.f32 0.0, %v2334
        %v2336 = vpop.f32.mrb[0].mxu0
        %2337 = vmatprep.mubr.bf16.mxu0 0
        %2338 = vmatmul.mubr.bf16.gmra.mrb[0].mxu0 %v2277
        %v2339 = vpop.f32.mrb[0].mxu0
        %v2340 = vadd.f32 0.0, %v2339
        %v2341 = vpop.f32.mrb[0].mxu0
        %v2342 = vpop.f32.mrb[0].mxu0
        %v2343 = vadd.f32 0.0, %v2342
        %v2344 = vpop.f32.mrb[0].mxu0
        %2345 = vmatprep.mubr.bf16.mxu0 0
        %2346 = vmatmul.mubr.bf16.gmra.mrb[0].mxu0 %v2280
        %v2347 = vpop.f32.mrb[0].mxu0
        %v2348 = vadd.f32 0.0, %v2347
        %v2349 = vpop.f32.mrb[0].mxu0
        %v2350 = vpop.f32.mrb[0].mxu0
        %v2351 = vadd.f32 0.0, %v2350
        %v2352 = vpop.f32.mrb[0].mxu0
        %2353 = vmatprep.mubr.bf16.mxu0 0
        %2354 = vmatmul.mubr.bf16.gmra.mrb[0].mxu0 %v2283
        %v2355 = vpop.f32.mrb[0].mxu0
        %v2356 = vadd.f32 0.0, %v2355
        %v2357 = vpop.f32.mrb[0].mxu0
        %v2358 = vpop.f32.mrb[0].mxu0
        %v2359 = vadd.f32 0.0, %v2358
        %v2360 = vpop.f32.mrb[0].mxu0
        %2361 = vmatprep.mubr.bf16.mxu0 0
        %2362 = vmatmul.mubr.bf16.gmra.mrb[0].mxu0 %v2286
        %v2363 = vpop.f32.mrb[0].mxu0
        %v2364 = vadd.f32 0.0, %v2363
        %v2365 = vpop.f32.mrb[0].mxu0
        %v2366 = vpop.f32.mrb[0].mxu0
        %v2367 = vadd.f32 0.0, %v2366
        %v2368 = vpop.f32.mrb[0].mxu0
        %2369 = vmatprep.mubr.bf16.mxu0 0
        %2370 = vmatmul.mubr.bf16.gmra.mrb[0].mxu0 %v2289
        %v2371 = vpop.f32.mrb[0].mxu0
        %v2372 = vadd.f32 0.0, %v2371
        %v2373 = vpop.f32.mrb[0].mxu0
        %v2374 = vpop.f32.mrb[0].mxu0
        %v2375 = vadd.f32 0.0, %v2374
        %v2376 = vpop.f32.mrb[0].mxu0
        %2377 = vmatprep.mubr.bf16.mxu0 0
        %2378 = vmatmul.mubr.bf16.gmra.mrb[0].mxu0 %v2292
        %v2379 = vpop.f32.mrb[0].mxu0
        %v2380 = vadd.f32 0.0, %v2379
        %v2381 = vpop.f32.mrb[0].mxu0
        %v2382 = vpop.f32.mrb[0].mxu0
        %v2383 = vadd.f32 0.0, %v2382
        %v2384 = vpop.f32.mrb[0].mxu0
        %2385 = vmatprep.mubr.bf16.mxu0 0
        %2386 = vmatmul.mubr.bf16.gmra.mrb[0].mxu0 %v2295
        %v2387 = vpop.f32.mrb[0].mxu0
        %v2388 = vadd.f32 0.0, %v2387
        %v2389 = vpop.f32.mrb[0].mxu0
        %v2390 = vpop.f32.mrb[0].mxu0
        %v2391 = vadd.f32 0.0, %v2390
        %v2392 = vpop.f32.mrb[0].mxu0
        %2393 = vdwg.mxu0
        %v2394 = vpack.c.bf16 %v2335, %v2332
        %v2395 = vpack.c.bf16 %v2343, %v2340
        %v2396 = vpack.c.bf16 %v2351, %v2348
        %v2397 = vpack.c.bf16 %v2359, %v2356
        %v2398 = vpack.c.bf16 %v2367, %v2364
        %v2399 = vpack.c.bf16 %v2375, %v2372
        %v2400 = vpack.c.bf16 %v2383, %v2380
        %v2401 = vpack.c.bf16 %v2391, %v2388
        %s2402 = scalar_lea.vmem %s503, 96
        %v2403 = vld [vmem:[%s2402] sm:$0xf]
        %v2404 = vld [vmem:[%s2402 + $0x4] sm:$0xf]
        %v2405 = vld [vmem:[%s2402 + $0x8] sm:$0xf]
        %v2406 = vld [vmem:[%s2402 + $0xc] sm:$0xf]
        %v2407 = vld [vmem:[%s2402 + $0x10] sm:$0xf]
        %v2408 = vld [vmem:[%s2402 + $0x14] sm:$0xf]
        %v2409 = vld [vmem:[%s2402 + $0x18] sm:$0xf]
        %v2410 = vld [vmem:[%s2402 + $0x1c] sm:$0xf]
        %v2419 = vunpack.c.l.b16 %v2403
        %v2420 = vunpack.c.l.b16 %v2404
        %v2421 = vunpack.c.l.b16 %v2405
        %v2422 = vunpack.c.l.b16 %v2406
        %v2423 = vunpack.c.l.b16 %v2407
        %v2424 = vunpack.c.l.b16 %v2408
        %v2425 = vunpack.c.l.b16 %v2409
        %v2426 = vunpack.c.l.b16 %v2410
        %v2427 = vpack.c.b16 %v2420, %v2419
        %v2428 = vpack.c.b16 %v2422, %v2421
        %v2429 = vpack.c.b16 %v2424, %v2423
        %v2430 = vpack.c.b16 %v2426, %v2425
        %v2436 = vsel %vm705, %v2394, 0
        %v2439 = vsel %vm705, %v2395, 0
        %v2442 = vsel %vm705, %v2396, 0
        %v2445 = vsel %vm705, %v2397, 0
        %v2448 = vsel %vm705, %v2398, 0
        %v2451 = vsel %vm705, %v2399, 0
        %v2454 = vsel %vm705, %v2400, 0
        %v2457 = vsel %vm705, %v2401, 0
        %2459 = vmatprep.subr.bf16.mxu0 0
        %2460 = vmatpush1.bf16.msra.mxu0 %v2427
        %2461 = vmatprep.subr.bf16.mxu0 0
        %2462 = vmatpush1.bf16.msra.mxu0 %v2428
        %2463 = vmatprep.subr.bf16.mxu0 0
        %2464 = vmatpush1.bf16.msra.mxu0 %v2429
        %2465 = vmatprep.subr.bf16.mxu0 0
        %2466 = vmatpush1.bf16.msra.mxu0 %v2430
        %2467 = vmatprep.subr.bf16.mxu0 0
        %2468 = vmatpush1.bf16.msra.mxu0 0
        %2469 = vmatprep.subr.bf16.mxu0 0
        %2470 = vmatpush1.bf16.msra.mxu0 0
        %2471 = vmatprep.subr.bf16.mxu0 0
        %2472 = vmatpush1.bf16.msra.mxu0 0
        %2473 = vmatprep.subr.bf16.mxu0 0
        %2474 = vmatpush1.bf16.msra.mxu0 0
        %2475 = vmatprep.subr.bf16.mxu0 0
        %2476 = vmatpush1.bf16.msra.mxu0 0
        %2477 = vmatprep.subr.bf16.mxu0 0
        %2478 = vmatpush1.bf16.msra.mxu0 0
        %2479 = vmatprep.subr.bf16.mxu0 0
        %2480 = vmatpush1.bf16.msra.mxu0 0
        %2481 = vmatprep.subr.bf16.mxu0 0
        %2482 = vmatpush1.bf16.msra.mxu0 0
        %2483 = vmatprep.subr.bf16.mxu0 0
        %2484 = vmatpush1.bf16.msra.mxu0 0
        %2485 = vmatprep.subr.bf16.mxu0 0
        %2486 = vmatpush1.bf16.msra.mxu0 0
        %2487 = vmatprep.subr.bf16.mxu0 0
        %2488 = vmatpush1.bf16.msra.mxu0 0
        %2489 = vmatprep.subr.bf16.mxu0 0
        %2490 = vmatpush1.bf16.msra.mxu0 0
        %2491 = vmatprep.mubr.bf16.mxu0 0
        %2492 = vmatmul.mubr.bf16.gmra.mrb[0].mxu0 %v2436
        %v2493 = vpop.f32.mrb[0].mxu0
        %v2494 = vadd.f32 0.0, %v2493
        %v2495 = vpop.f32.mrb[0].mxu0
        %v2496 = vpop.f32.mrb[0].mxu0
        %v2497 = vadd.f32 0.0, %v2496
        %v2498 = vpop.f32.mrb[0].mxu0
        %2499 = vmatprep.mubr.bf16.mxu0 0
        %2500 = vmatmul.mubr.bf16.gmra.mrb[0].mxu0 %v2439
        %v2501 = vpop.f32.mrb[0].mxu0
        %v2502 = vadd.f32 0.0, %v2501
        %v2503 = vpop.f32.mrb[0].mxu0
        %v2504 = vpop.f32.mrb[0].mxu0
        %v2505 = vadd.f32 0.0, %v2504
        %v2506 = vpop.f32.mrb[0].mxu0
        %2507 = vmatprep.mubr.bf16.mxu0 0
        %2508 = vmatmul.mubr.bf16.gmra.mrb[0].mxu0 %v2442
        %v2509 = vpop.f32.mrb[0].mxu0
        %v2510 = vadd.f32 0.0, %v2509
        %v2511 = vpop.f32.mrb[0].mxu0
        %v2512 = vpop.f32.mrb[0].mxu0
        %v2513 = vadd.f32 0.0, %v2512
        %v2514 = vpop.f32.mrb[0].mxu0
        %2515 = vmatprep.mubr.bf16.mxu0 0
        %2516 = vmatmul.mubr.bf16.gmra.mrb[0].mxu0 %v2445
        %v2517 = vpop.f32.mrb[0].mxu0
        %v2518 = vadd.f32 0.0, %v2517
        %v2519 = vpop.f32.mrb[0].mxu0
        %v2520 = vpop.f32.mrb[0].mxu0
        %v2521 = vadd.f32 0.0, %v2520
        %v2522 = vpop.f32.mrb[0].mxu0
        %2523 = vmatprep.mubr.bf16.mxu0 0
        %2524 = vmatmul.mubr.bf16.gmra.mrb[0].mxu0 %v2448
        %v2525 = vpop.f32.mrb[0].mxu0
        %v2526 = vadd.f32 0.0, %v2525
        %v2527 = vpop.f32.mrb[0].mxu0
        %v2528 = vpop.f32.mrb[0].mxu0
        %v2529 = vadd.f32 0.0, %v2528
        %v2530 = vpop.f32.mrb[0].mxu0
        %2531 = vmatprep.mubr.bf16.mxu0 0
        %2532 = vmatmul.mubr.bf16.gmra.mrb[0].mxu0 %v2451
        %v2533 = vpop.f32.mrb[0].mxu0
        %v2534 = vadd.f32 0.0, %v2533
        %v2535 = vpop.f32.mrb[0].mxu0
        %v2536 = vpop.f32.mrb[0].mxu0
        %v2537 = vadd.f32 0.0, %v2536
        %v2538 = vpop.f32.mrb[0].mxu0
        %2539 = vmatprep.mubr.bf16.mxu0 0
        %2540 = vmatmul.mubr.bf16.gmra.mrb[0].mxu0 %v2454
        %v2541 = vpop.f32.mrb[0].mxu0
        %v2542 = vadd.f32 0.0, %v2541
        %v2543 = vpop.f32.mrb[0].mxu0
        %v2544 = vpop.f32.mrb[0].mxu0
        %v2545 = vadd.f32 0.0, %v2544
        %v2546 = vpop.f32.mrb[0].mxu0
        %2547 = vmatprep.mubr.bf16.mxu0 0
        %2548 = vmatmul.mubr.bf16.gmra.mrb[0].mxu0 %v2457
        %v2549 = vpop.f32.mrb[0].mxu0
        %v2550 = vadd.f32 0.0, %v2549
        %v2551 = vpop.f32.mrb[0].mxu0
        %v2552 = vpop.f32.mrb[0].mxu0
        %v2553 = vadd.f32 0.0, %v2552
        %v2554 = vpop.f32.mrb[0].mxu0
        %2555 = vdwg.mxu0
        %v2556 = vadd.f32 %v2200, %v2494
        %v2557 = vadd.f32 %v2201, %v2497
        %v2558 = vadd.f32 %v2202, %v2502
        %v2559 = vadd.f32 %v2203, %v2505
        %v2560 = vadd.f32 %v2204, %v2510
        %v2561 = vadd.f32 %v2205, %v2513
        %v2562 = vadd.f32 %v2206, %v2518
        %v2563 = vadd.f32 %v2207, %v2521
        %v2564 = vadd.f32 %v2208, %v2526
        %v2565 = vadd.f32 %v2209, %v2529
        %v2566 = vadd.f32 %v2210, %v2534
        %v2567 = vadd.f32 %v2211, %v2537
        %v2568 = vadd.f32 %v2212, %v2542
        %v2569 = vadd.f32 %v2213, %v2545
        %v2570 = vadd.f32 %v2214, %v2550
        %v2571 = vadd.f32 %v2215, %v2553
        %v2572 = vld [vmem:[%s427] sm:$0x1]
        %v2574 = vlaneseq
        %v2575 = vshrl.u32 %v2574, 7
        %v2576 = vsub.s32 0, %v2575
        %v2577 = vrot.slane %v2572, %v2576
        %v2579 = vadd.f32 %v2556, %v2577
        %v2580 = vadd.f32 %v2557, %v2577
        %v2581 = vadd.f32 %v2558, %v2577
        %v2582 = vadd.f32 %v2559, %v2577
        %v2583 = vadd.f32 %v2560, %v2577
        %v2584 = vadd.f32 %v2561, %v2577
        %v2585 = vadd.f32 %v2562, %v2577
        %v2586 = vadd.f32 %v2563, %v2577
        %v2587 = vadd.f32 %v2564, %v2577
        %v2588 = vadd.f32 %v2565, %v2577
        %v2589 = vadd.f32 %v2566, %v2577
        %v2590 = vadd.f32 %v2567, %v2577
        %v2591 = vadd.f32 %v2568, %v2577
        %v2592 = vadd.f32 %v2569, %v2577
        %v2593 = vadd.f32 %v2570, %v2577
        %v2594 = vadd.f32 %v2571, %v2577
        %v2595 = vpack.c.bf16 %v2580, %v2579
        %v2596 = vpack.c.bf16 %v2582, %v2581
        %v2597 = vpack.c.bf16 %v2584, %v2583
        %v2598 = vpack.c.bf16 %v2586, %v2585
        %v2599 = vpack.c.bf16 %v2588, %v2587
        %v2600 = vpack.c.bf16 %v2590, %v2589
        %v2601 = vpack.c.bf16 %v2592, %v2591
        %v2602 = vpack.c.bf16 %v2594, %v2593
        %v2603 = vld [vmem:[%s3] sm:$0xf]
        %v2604 = vld [vmem:[%s3 + $0x4] sm:$0xf]
        %v2605 = vld [vmem:[%s3 + $0x8] sm:$0xf]
        %v2606 = vld [vmem:[%s3 + $0xc] sm:$0xf]
        %v2607 = vld [vmem:[%s3 + $0x10] sm:$0xf]
        %v2608 = vld [vmem:[%s3 + $0x14] sm:$0xf]
        %v2609 = vld [vmem:[%s3 + $0x18] sm:$0xf]
        %v2610 = vld [vmem:[%s3 + $0x1c] sm:$0xf]
        %v2611 = vld [vmem:[%s3 + $0x20] sm:$0xf]
        %v2612 = vld [vmem:[%s3 + $0x24] sm:$0xf]
        %v2613 = vld [vmem:[%s3 + $0x28] sm:$0xf]
        %v2614 = vld [vmem:[%s3 + $0x2c] sm:$0xf]
        %v2615 = vld [vmem:[%s3 + $0x30] sm:$0xf]
        %v2616 = vld [vmem:[%s3 + $0x34] sm:$0xf]
        %v2617 = vld [vmem:[%s3 + $0x38] sm:$0xf]
        %v2618 = vld [vmem:[%s3 + $0x3c] sm:$0xf]
        %v2619 = vld [vmem:[%s3 + $0x40] sm:$0xf]
        %v2620 = vld [vmem:[%s3 + $0x44] sm:$0xf]
        %v2621 = vld [vmem:[%s3 + $0x48] sm:$0xf]
        %v2622 = vld [vmem:[%s3 + $0x4c] sm:$0xf]
        %v2623 = vld [vmem:[%s3 + $0x50] sm:$0xf]
        %v2624 = vld [vmem:[%s3 + $0x54] sm:$0xf]
        %v2625 = vld [vmem:[%s3 + $0x58] sm:$0xf]
        %v2626 = vld [vmem:[%s3 + $0x5c] sm:$0xf]
        %v2627 = vld [vmem:[%s3 + $0x60] sm:$0xf]
        %v2628 = vld [vmem:[%s3 + $0x64] sm:$0xf]
        %v2629 = vld [vmem:[%s3 + $0x68] sm:$0xf]
        %v2630 = vld [vmem:[%s3 + $0x6c] sm:$0xf]
        %v2631 = vld [vmem:[%s3 + $0x70] sm:$0xf]
        %v2632 = vld [vmem:[%s3 + $0x74] sm:$0xf]
        %v2633 = vld [vmem:[%s3 + $0x78] sm:$0xf]
        %v2634 = vld [vmem:[%s3 + $0x7c] sm:$0xf]
        %v2635 = vld [vmem:[%s3 + $0x80] sm:$0xf]
        %v2636 = vld [vmem:[%s3 + $0x84] sm:$0xf]
        %v2637 = vld [vmem:[%s3 + $0x88] sm:$0xf]
        %v2638 = vld [vmem:[%s3 + $0x8c] sm:$0xf]
        %v2639 = vld [vmem:[%s3 + $0x90] sm:$0xf]
        %v2640 = vld [vmem:[%s3 + $0x94] sm:$0xf]
        %v2641 = vld [vmem:[%s3 + $0x98] sm:$0xf]
        %v2642 = vld [vmem:[%s3 + $0x9c] sm:$0xf]
        %v2643 = vld [vmem:[%s3 + $0xa0] sm:$0xf]
        %v2644 = vld [vmem:[%s3 + $0xa4] sm:$0xf]
        %v2645 = vld [vmem:[%s3 + $0xa8] sm:$0xf]
        %v2646 = vld [vmem:[%s3 + $0xac] sm:$0xf]
        %v2647 = vld [vmem:[%s3 + $0xb0] sm:$0xf]
        %v2648 = vld [vmem:[%s3 + $0xb4] sm:$0xf]
        %v2649 = vld [vmem:[%s3 + $0xb8] sm:$0xf]
        %v2650 = vld [vmem:[%s3 + $0xbc] sm:$0xf]
        %v2651 = vld [vmem:[%s3 + $0xc0] sm:$0xf]
        %v2652 = vld [vmem:[%s3 + $0xc4] sm:$0xf]
        %v2653 = vld [vmem:[%s3 + $0xc8] sm:$0xf]
        %v2654 = vld [vmem:[%s3 + $0xcc] sm:$0xf]
        %v2655 = vld [vmem:[%s3 + $0xd0] sm:$0xf]
        %v2656 = vld [vmem:[%s3 + $0xd4] sm:$0xf]
        %v2657 = vld [vmem:[%s3 + $0xd8] sm:$0xf]
        %v2658 = vld [vmem:[%s3 + $0xdc] sm:$0xf]
        %v2659 = vld [vmem:[%s3 + $0xe0] sm:$0xf]
        %v2660 = vld [vmem:[%s3 + $0xe4] sm:$0xf]
        %v2661 = vld [vmem:[%s3 + $0xe8] sm:$0xf]
        %v2662 = vld [vmem:[%s3 + $0xec] sm:$0xf]
        %v2663 = vld [vmem:[%s3 + $0xf0] sm:$0xf]
        %v2664 = vld [vmem:[%s3 + $0xf4] sm:$0xf]
        %v2665 = vld [vmem:[%s3 + $0xf8] sm:$0xf]
        %v2666 = vld [vmem:[%s3 + $0xfc] sm:$0xf]
        %v2731 = vunpack.c.l.b16 %v2603
        %v2732 = vunpack.c.l.b16 %v2604
        %v2733 = vunpack.c.l.b16 %v2605
        %v2734 = vunpack.c.l.b16 %v2606
        %v2735 = vunpack.c.l.b16 %v2607
        %v2736 = vunpack.c.l.b16 %v2608
        %v2737 = vunpack.c.l.b16 %v2609
        %v2738 = vunpack.c.l.b16 %v2610
        %v2739 = vunpack.c.l.b16 %v2611
        %v2740 = vunpack.c.l.b16 %v2612
        %v2741 = vunpack.c.l.b16 %v2613
        %v2742 = vunpack.c.l.b16 %v2614
        %v2743 = vunpack.c.l.b16 %v2615
        %v2744 = vunpack.c.l.b16 %v2616
        %v2745 = vunpack.c.l.b16 %v2617
        %v2746 = vunpack.c.l.b16 %v2618
        %v2747 = vunpack.c.l.b16 %v2619
        %v2748 = vunpack.c.l.b16 %v2620
        %v2749 = vunpack.c.l.b16 %v2621
        %v2750 = vunpack.c.l.b16 %v2622
        %v2751 = vunpack.c.l.b16 %v2623
        %v2752 = vunpack.c.l.b16 %v2624
        %v2753 = vunpack.c.l.b16 %v2625
        %v2754 = vunpack.c.l.b16 %v2626
        %v2755 = vunpack.c.l.b16 %v2627
        %v2756 = vunpack.c.l.b16 %v2628
        %v2757 = vunpack.c.l.b16 %v2629
        %v2758 = vunpack.c.l.b16 %v2630
        %v2759 = vunpack.c.l.b16 %v2631
        %v2760 = vunpack.c.l.b16 %v2632
        %v2761 = vunpack.c.l.b16 %v2633
        %v2762 = vunpack.c.l.b16 %v2634
        %v2763 = vunpack.c.l.b16 %v2635
        %v2764 = vunpack.c.l.b16 %v2636
        %v2765 = vunpack.c.l.b16 %v2637
        %v2766 = vunpack.c.l.b16 %v2638
        %v2767 = vunpack.c.l.b16 %v2639
        %v2768 = vunpack.c.l.b16 %v2640
        %v2769 = vunpack.c.l.b16 %v2641
        %v2770 = vunpack.c.l.b16 %v2642
        %v2771 = vunpack.c.l.b16 %v2643
        %v2772 = vunpack.c.l.b16 %v2644
        %v2773 = vunpack.c.l.b16 %v2645
        %v2774 = vunpack.c.l.b16 %v2646
        %v2775 = vunpack.c.l.b16 %v2647
        %v2776 = vunpack.c.l.b16 %v2648
        %v2777 = vunpack.c.l.b16 %v2649
        %v2778 = vunpack.c.l.b16 %v2650
        %v2779 = vunpack.c.l.b16 %v2651
        %v2780 = vunpack.c.l.b16 %v2652
        %v2781 = vunpack.c.l.b16 %v2653
        %v2782 = vunpack.c.l.b16 %v2654
        %v2783 = vunpack.c.l.b16 %v2655
        %v2784 = vunpack.c.l.b16 %v2656
        %v2785 = vunpack.c.l.b16 %v2657
        %v2786 = vunpack.c.l.b16 %v2658
        %v2787 = vunpack.c.l.b16 %v2659
        %v2788 = vunpack.c.l.b16 %v2660
        %v2789 = vunpack.c.l.b16 %v2661
        %v2790 = vunpack.c.l.b16 %v2662
        %v2791 = vunpack.c.l.b16 %v2663
        %v2792 = vunpack.c.l.b16 %v2664
        %v2793 = vunpack.c.l.b16 %v2665
        %v2794 = vunpack.c.l.b16 %v2666
        %v2795 = vpack.c.b16 %v2732, %v2731
        %v2796 = vpack.c.b16 %v2734, %v2733
        %v2797 = vpack.c.b16 %v2736, %v2735
        %v2798 = vpack.c.b16 %v2738, %v2737
        %v2799 = vpack.c.b16 %v2740, %v2739
        %v2800 = vpack.c.b16 %v2742, %v2741
        %v2801 = vpack.c.b16 %v2744, %v2743
        %v2802 = vpack.c.b16 %v2746, %v2745
        %v2803 = vpack.c.b16 %v2748, %v2747
        %v2804 = vpack.c.b16 %v2750, %v2749
        %v2805 = vpack.c.b16 %v2752, %v2751
        %v2806 = vpack.c.b16 %v2754, %v2753
        %v2807 = vpack.c.b16 %v2756, %v2755
        %v2808 = vpack.c.b16 %v2758, %v2757
        %v2809 = vpack.c.b16 %v2760, %v2759
        %v2810 = vpack.c.b16 %v2762, %v2761
        %v2811 = vpack.c.b16 %v2764, %v2763
        %v2812 = vpack.c.b16 %v2766, %v2765
        %v2813 = vpack.c.b16 %v2768, %v2767
        %v2814 = vpack.c.b16 %v2770, %v2769
        %v2815 = vpack.c.b16 %v2772, %v2771
        %v2816 = vpack.c.b16 %v2774, %v2773
        %v2817 = vpack.c.b16 %v2776, %v2775
        %v2818 = vpack.c.b16 %v2778, %v2777
        %v2819 = vpack.c.b16 %v2780, %v2779
        %v2820 = vpack.c.b16 %v2782, %v2781
        %v2821 = vpack.c.b16 %v2784, %v2783
        %v2822 = vpack.c.b16 %v2786, %v2785
        %v2823 = vpack.c.b16 %v2788, %v2787
        %v2824 = vpack.c.b16 %v2790, %v2789
        %v2825 = vpack.c.b16 %v2792, %v2791
        %v2826 = vpack.c.b16 %v2794, %v2793
        %2859 = vmatprep.subr.bf16.mxu0 0
        %2860 = vmatpush1.bf16.msra.mxu0 %v2595
        %2861 = vmatprep.subr.bf16.mxu0 0
        %2862 = vmatpush1.bf16.msra.mxu0 %v2596
        %2863 = vmatprep.subr.bf16.mxu0 0
        %2864 = vmatpush1.bf16.msra.mxu0 %v2597
        %2865 = vmatprep.subr.bf16.mxu0 0
        %2866 = vmatpush1.bf16.msra.mxu0 %v2598
        %2867 = vmatprep.subr.bf16.mxu0 0
        %2868 = vmatpush1.bf16.msra.mxu0 %v2599
        %2869 = vmatprep.subr.bf16.mxu0 0
        %2870 = vmatpush1.bf16.msra.mxu0 %v2600
        %2871 = vmatprep.subr.bf16.mxu0 0
        %2872 = vmatpush1.bf16.msra.mxu0 %v2601
        %2873 = vmatprep.subr.bf16.mxu0 0
        %2874 = vmatpush1.bf16.msra.mxu0 %v2602
        %2875 = vmatprep.subr.bf16.mxu0 0
        %2876 = vmatpush1.bf16.msra.mxu0 0
        %2877 = vmatprep.subr.bf16.mxu0 0
        %2878 = vmatpush1.bf16.msra.mxu0 0
        %2879 = vmatprep.subr.bf16.mxu0 0
        %2880 = vmatpush1.bf16.msra.mxu0 0
        %2881 = vmatprep.subr.bf16.mxu0 0
        %2882 = vmatpush1.bf16.msra.mxu0 0
        %2883 = vmatprep.subr.bf16.mxu0 0
        %2884 = vmatpush1.bf16.msra.mxu0 0
        %2885 = vmatprep.subr.bf16.mxu0 0
        %2886 = vmatpush1.bf16.msra.mxu0 0
        %2887 = vmatprep.subr.bf16.mxu0 0
        %2888 = vmatpush1.bf16.msra.mxu0 0
        %2889 = vmatprep.subr.bf16.mxu0 0
        %2890 = vmatpush1.bf16.msra.mxu0 0
        %2891 = vmatprep.mubr.bf16.mxu0 0
        %2892 = vmatmul.mubr.bf16.gmra.mrb[0].mxu0 %v2795
        %v2893 = vpop.f32.mrb[0].mxu0
        %v2894 = vadd.f32 0.0, %v2893
        %v2895 = vpop.f32.mrb[0].mxu0
        %v2896 = vpop.f32.mrb[0].mxu0
        %v2897 = vadd.f32 0.0, %v2896
        %v2898 = vpop.f32.mrb[0].mxu0
        %2899 = vmatprep.mubr.bf16.mxu0 0
        %2900 = vmatmul.mubr.bf16.gmra.mrb[0].mxu0 %v2796
        %v2901 = vpop.f32.mrb[0].mxu0
        %v2902 = vadd.f32 0.0, %v2901
        %v2903 = vpop.f32.mrb[0].mxu0
        %v2904 = vpop.f32.mrb[0].mxu0
        %v2905 = vadd.f32 0.0, %v2904
        %v2906 = vpop.f32.mrb[0].mxu0
        %2907 = vmatprep.mubr.bf16.mxu0 0
        %2908 = vmatmul.mubr.bf16.gmra.mrb[0].mxu0 %v2797
        %v2909 = vpop.f32.mrb[0].mxu0
        %v2910 = vadd.f32 0.0, %v2909
        %v2911 = vpop.f32.mrb[0].mxu0
        %v2912 = vpop.f32.mrb[0].mxu0
        %v2913 = vadd.f32 0.0, %v2912
        %v2914 = vpop.f32.mrb[0].mxu0
        %2915 = vmatprep.mubr.bf16.mxu0 0
        %2916 = vmatmul.mubr.bf16.gmra.mrb[0].mxu0 %v2798
        %v2917 = vpop.f32.mrb[0].mxu0
        %v2918 = vadd.f32 0.0, %v2917
        %v2919 = vpop.f32.mrb[0].mxu0
        %v2920 = vpop.f32.mrb[0].mxu0
        %v2921 = vadd.f32 0.0, %v2920
        %v2922 = vpop.f32.mrb[0].mxu0
        %2923 = vmatprep.mubr.bf16.mxu0 0
        %2924 = vmatmul.mubr.bf16.gmra.mrb[0].mxu0 %v2799
        %v2925 = vpop.f32.mrb[0].mxu0
        %v2926 = vadd.f32 0.0, %v2925
        %v2927 = vpop.f32.mrb[0].mxu0
        %v2928 = vpop.f32.mrb[0].mxu0
        %v2929 = vadd.f32 0.0, %v2928
        %v2930 = vpop.f32.mrb[0].mxu0
        %2931 = vmatprep.mubr.bf16.mxu0 0
        %2932 = vmatmul.mubr.bf16.gmra.mrb[0].mxu0 %v2800
        %v2933 = vpop.f32.mrb[0].mxu0
        %v2934 = vadd.f32 0.0, %v2933
        %v2935 = vpop.f32.mrb[0].mxu0
        %v2936 = vpop.f32.mrb[0].mxu0
        %v2937 = vadd.f32 0.0, %v2936
        %v2938 = vpop.f32.mrb[0].mxu0
        %2939 = vmatprep.mubr.bf16.mxu0 0
        %2940 = vmatmul.mubr.bf16.gmra.mrb[0].mxu0 %v2801
        %v2941 = vpop.f32.mrb[0].mxu0
        %v2942 = vadd.f32 0.0, %v2941
        %v2943 = vpop.f32.mrb[0].mxu0
        %v2944 = vpop.f32.mrb[0].mxu0
        %v2945 = vadd.f32 0.0, %v2944
        %v2946 = vpop.f32.mrb[0].mxu0
        %2947 = vmatprep.mubr.bf16.mxu0 0
        %2948 = vmatmul.mubr.bf16.gmra.mrb[0].mxu0 %v2802
        %v2949 = vpop.f32.mrb[0].mxu0
        %v2950 = vadd.f32 0.0, %v2949
        %v2951 = vpop.f32.mrb[0].mxu0
        %v2952 = vpop.f32.mrb[0].mxu0
        %v2953 = vadd.f32 0.0, %v2952
        %v2954 = vpop.f32.mrb[0].mxu0
        %2955 = vmatprep.mubr.bf16.mxu0 0
        %2956 = vmatmul.mubr.bf16.gmra.mrb[0].mxu0 %v2803
        %v2957 = vpop.f32.mrb[0].mxu0
        %v2958 = vadd.f32 0.0, %v2957
        %v2959 = vpop.f32.mrb[0].mxu0
        %v2960 = vpop.f32.mrb[0].mxu0
        %v2961 = vadd.f32 0.0, %v2960
        %v2962 = vpop.f32.mrb[0].mxu0
        %2963 = vmatprep.mubr.bf16.mxu0 0
        %2964 = vmatmul.mubr.bf16.gmra.mrb[0].mxu0 %v2804
        %v2965 = vpop.f32.mrb[0].mxu0
        %v2966 = vadd.f32 0.0, %v2965
        %v2967 = vpop.f32.mrb[0].mxu0
        %v2968 = vpop.f32.mrb[0].mxu0
        %v2969 = vadd.f32 0.0, %v2968
        %v2970 = vpop.f32.mrb[0].mxu0
        %2971 = vmatprep.mubr.bf16.mxu0 0
        %2972 = vmatmul.mubr.bf16.gmra.mrb[0].mxu0 %v2805
        %v2973 = vpop.f32.mrb[0].mxu0
        %v2974 = vadd.f32 0.0, %v2973
        %v2975 = vpop.f32.mrb[0].mxu0
        %v2976 = vpop.f32.mrb[0].mxu0
        %v2977 = vadd.f32 0.0, %v2976
        %v2978 = vpop.f32.mrb[0].mxu0
        %2979 = vmatprep.mubr.bf16.mxu0 0
        %2980 = vmatmul.mubr.bf16.gmra.mrb[0].mxu0 %v2806
        %v2981 = vpop.f32.mrb[0].mxu0
        %v2982 = vadd.f32 0.0, %v2981
        %v2983 = vpop.f32.mrb[0].mxu0
        %v2984 = vpop.f32.mrb[0].mxu0
        %v2985 = vadd.f32 0.0, %v2984
        %v2986 = vpop.f32.mrb[0].mxu0
        %2987 = vmatprep.mubr.bf16.mxu0 0
        %2988 = vmatmul.mubr.bf16.gmra.mrb[0].mxu0 %v2807
        %v2989 = vpop.f32.mrb[0].mxu0
        %v2990 = vadd.f32 0.0, %v2989
        %v2991 = vpop.f32.mrb[0].mxu0
        %v2992 = vpop.f32.mrb[0].mxu0
        %v2993 = vadd.f32 0.0, %v2992
        %v2994 = vpop.f32.mrb[0].mxu0
        %2995 = vmatprep.mubr.bf16.mxu0 0
        %2996 = vmatmul.mubr.bf16.gmra.mrb[0].mxu0 %v2808
        %v2997 = vpop.f32.mrb[0].mxu0
        %v2998 = vadd.f32 0.0, %v2997
        %v2999 = vpop.f32.mrb[0].mxu0
        %v3000 = vpop.f32.mrb[0].mxu0
        %v3001 = vadd.f32 0.0, %v3000
        %v3002 = vpop.f32.mrb[0].mxu0
        %3003 = vmatprep.mubr.bf16.mxu0 0
        %3004 = vmatmul.mubr.bf16.gmra.mrb[0].mxu0 %v2809
        %v3005 = vpop.f32.mrb[0].mxu0
        %v3006 = vadd.f32 0.0, %v3005
        %v3007 = vpop.f32.mrb[0].mxu0
        %v3008 = vpop.f32.mrb[0].mxu0
        %v3009 = vadd.f32 0.0, %v3008
        %v3010 = vpop.f32.mrb[0].mxu0
        %3011 = vmatprep.mubr.bf16.mxu0 0
        %3012 = vmatmul.mubr.bf16.gmra.mrb[0].mxu0 %v2810
        %v3013 = vpop.f32.mrb[0].mxu0
        %v3014 = vadd.f32 0.0, %v3013
        %v3015 = vpop.f32.mrb[0].mxu0
        %v3016 = vpop.f32.mrb[0].mxu0
        %v3017 = vadd.f32 0.0, %v3016
        %v3018 = vpop.f32.mrb[0].mxu0
        %3019 = vmatprep.mubr.bf16.mxu0 0
        %3020 = vmatmul.mubr.bf16.gmra.mrb[0].mxu0 %v2811
        %v3021 = vpop.f32.mrb[0].mxu0
        %v3022 = vadd.f32 0.0, %v3021
        %v3023 = vpop.f32.mrb[0].mxu0
        %v3024 = vpop.f32.mrb[0].mxu0
        %v3025 = vadd.f32 0.0, %v3024
        %v3026 = vpop.f32.mrb[0].mxu0
        %3027 = vmatprep.mubr.bf16.mxu0 0
        %3028 = vmatmul.mubr.bf16.gmra.mrb[0].mxu0 %v2812
        %v3029 = vpop.f32.mrb[0].mxu0
        %v3030 = vadd.f32 0.0, %v3029
        %v3031 = vpop.f32.mrb[0].mxu0
        %v3032 = vpop.f32.mrb[0].mxu0
        %v3033 = vadd.f32 0.0, %v3032
        %v3034 = vpop.f32.mrb[0].mxu0
        %3035 = vmatprep.mubr.bf16.mxu0 0
        %3036 = vmatmul.mubr.bf16.gmra.mrb[0].mxu0 %v2813
        %v3037 = vpop.f32.mrb[0].mxu0
        %v3038 = vadd.f32 0.0, %v3037
        %v3039 = vpop.f32.mrb[0].mxu0
        %v3040 = vpop.f32.mrb[0].mxu0
        %v3041 = vadd.f32 0.0, %v3040
        %v3042 = vpop.f32.mrb[0].mxu0
        %3043 = vmatprep.mubr.bf16.mxu0 0
        %3044 = vmatmul.mubr.bf16.gmra.mrb[0].mxu0 %v2814
        %v3045 = vpop.f32.mrb[0].mxu0
        %v3046 = vadd.f32 0.0, %v3045
        %v3047 = vpop.f32.mrb[0].mxu0
        %v3048 = vpop.f32.mrb[0].mxu0
        %v3049 = vadd.f32 0.0, %v3048
        %v3050 = vpop.f32.mrb[0].mxu0
        %3051 = vmatprep.mubr.bf16.mxu0 0
        %3052 = vmatmul.mubr.bf16.gmra.mrb[0].mxu0 %v2815
        %v3053 = vpop.f32.mrb[0].mxu0
        %v3054 = vadd.f32 0.0, %v3053
        %v3055 = vpop.f32.mrb[0].mxu0
        %v3056 = vpop.f32.mrb[0].mxu0
        %v3057 = vadd.f32 0.0, %v3056
        %v3058 = vpop.f32.mrb[0].mxu0
        %3059 = vmatprep.mubr.bf16.mxu0 0
        %3060 = vmatmul.mubr.bf16.gmra.mrb[0].mxu0 %v2816
        %v3061 = vpop.f32.mrb[0].mxu0
        %v3062 = vadd.f32 0.0, %v3061
        %v3063 = vpop.f32.mrb[0].mxu0
        %v3064 = vpop.f32.mrb[0].mxu0
        %v3065 = vadd.f32 0.0, %v3064
        %v3066 = vpop.f32.mrb[0].mxu0
        %3067 = vmatprep.mubr.bf16.mxu0 0
        %3068 = vmatmul.mubr.bf16.gmra.mrb[0].mxu0 %v2817
        %v3069 = vpop.f32.mrb[0].mxu0
        %v3070 = vadd.f32 0.0, %v3069
        %v3071 = vpop.f32.mrb[0].mxu0
        %v3072 = vpop.f32.mrb[0].mxu0
        %v3073 = vadd.f32 0.0, %v3072
        %v3074 = vpop.f32.mrb[0].mxu0
        %3075 = vmatprep.mubr.bf16.mxu0 0
        %3076 = vmatmul.mubr.bf16.gmra.mrb[0].mxu0 %v2818
        %v3077 = vpop.f32.mrb[0].mxu0
        %v3078 = vadd.f32 0.0, %v3077
        %v3079 = vpop.f32.mrb[0].mxu0
        %v3080 = vpop.f32.mrb[0].mxu0
        %v3081 = vadd.f32 0.0, %v3080
        %v3082 = vpop.f32.mrb[0].mxu0
        %3083 = vmatprep.mubr.bf16.mxu0 0
        %3084 = vmatmul.mubr.bf16.gmra.mrb[0].mxu0 %v2819
        %v3085 = vpop.f32.mrb[0].mxu0
        %v3086 = vadd.f32 0.0, %v3085
        %v3087 = vpop.f32.mrb[0].mxu0
        %v3088 = vpop.f32.mrb[0].mxu0
        %v3089 = vadd.f32 0.0, %v3088
        %v3090 = vpop.f32.mrb[0].mxu0
        %3091 = vmatprep.mubr.bf16.mxu0 0
        %3092 = vmatmul.mubr.bf16.gmra.mrb[0].mxu0 %v2820
        %v3093 = vpop.f32.mrb[0].mxu0
        %v3094 = vadd.f32 0.0, %v3093
        %v3095 = vpop.f32.mrb[0].mxu0
        %v3096 = vpop.f32.mrb[0].mxu0
        %v3097 = vadd.f32 0.0, %v3096
        %v3098 = vpop.f32.mrb[0].mxu0
        %3099 = vmatprep.mubr.bf16.mxu0 0
        %3100 = vmatmul.mubr.bf16.gmra.mrb[0].mxu0 %v2821
        %v3101 = vpop.f32.mrb[0].mxu0
        %v3102 = vadd.f32 0.0, %v3101
        %v3103 = vpop.f32.mrb[0].mxu0
        %v3104 = vpop.f32.mrb[0].mxu0
        %v3105 = vadd.f32 0.0, %v3104
        %v3106 = vpop.f32.mrb[0].mxu0
        %3107 = vmatprep.mubr.bf16.mxu0 0
        %3108 = vmatmul.mubr.bf16.gmra.mrb[0].mxu0 %v2822
        %v3109 = vpop.f32.mrb[0].mxu0
        %v3110 = vadd.f32 0.0, %v3109
        %v3111 = vpop.f32.mrb[0].mxu0
        %v3112 = vpop.f32.mrb[0].mxu0
        %v3113 = vadd.f32 0.0, %v3112
        %v3114 = vpop.f32.mrb[0].mxu0
        %3115 = vmatprep.mubr.bf16.mxu0 0
        %3116 = vmatmul.mubr.bf16.gmra.mrb[0].mxu0 %v2823
        %v3117 = vpop.f32.mrb[0].mxu0
        %v3118 = vadd.f32 0.0, %v3117
        %v3119 = vpop.f32.mrb[0].mxu0
        %v3120 = vpop.f32.mrb[0].mxu0
        %v3121 = vadd.f32 0.0, %v3120
        %v3122 = vpop.f32.mrb[0].mxu0
        %3123 = vmatprep.mubr.bf16.mxu0 0
        %3124 = vmatmul.mubr.bf16.gmra.mrb[0].mxu0 %v2824
        %v3125 = vpop.f32.mrb[0].mxu0
        %v3126 = vadd.f32 0.0, %v3125
        %v3127 = vpop.f32.mrb[0].mxu0
        %v3128 = vpop.f32.mrb[0].mxu0
        %v3129 = vadd.f32 0.0, %v3128
        %v3130 = vpop.f32.mrb[0].mxu0
        %3131 = vmatprep.mubr.bf16.mxu0 0
        %3132 = vmatmul.mubr.bf16.gmra.mrb[0].mxu0 %v2825
        %v3133 = vpop.f32.mrb[0].mxu0
        %v3134 = vadd.f32 0.0, %v3133
        %v3135 = vpop.f32.mrb[0].mxu0
        %v3136 = vpop.f32.mrb[0].mxu0
        %v3137 = vadd.f32 0.0, %v3136
        %v3138 = vpop.f32.mrb[0].mxu0
        %3139 = vmatprep.mubr.bf16.mxu0 0
        %3140 = vmatmul.mubr.bf16.gmra.mrb[0].mxu0 %v2826
        %v3141 = vpop.f32.mrb[0].mxu0
        %v3142 = vadd.f32 0.0, %v3141
        %v3143 = vpop.f32.mrb[0].mxu0
        %v3144 = vpop.f32.mrb[0].mxu0
        %v3145 = vadd.f32 0.0, %v3144
        %v3146 = vpop.f32.mrb[0].mxu0
        %3147 = vdwg.mxu0
        %v3148 = vpack.c.bf16 %v2897, %v2894
        %v3149 = vpack.c.bf16 %v2905, %v2902
        %v3150 = vpack.c.bf16 %v2913, %v2910
        %v3151 = vpack.c.bf16 %v2921, %v2918
        %v3152 = vpack.c.bf16 %v2929, %v2926
        %v3153 = vpack.c.bf16 %v2937, %v2934
        %v3154 = vpack.c.bf16 %v2945, %v2942
        %v3155 = vpack.c.bf16 %v2953, %v2950
        %v3156 = vpack.c.bf16 %v2961, %v2958
        %v3157 = vpack.c.bf16 %v2969, %v2966
        %v3158 = vpack.c.bf16 %v2977, %v2974
        %v3159 = vpack.c.bf16 %v2985, %v2982
        %v3160 = vpack.c.bf16 %v2993, %v2990
        %v3161 = vpack.c.bf16 %v3001, %v2998
        %v3162 = vpack.c.bf16 %v3009, %v3006
        %v3163 = vpack.c.bf16 %v3017, %v3014
        %v3164 = vpack.c.bf16 %v3025, %v3022
        %v3165 = vpack.c.bf16 %v3033, %v3030
        %v3166 = vpack.c.bf16 %v3041, %v3038
        %v3167 = vpack.c.bf16 %v3049, %v3046
        %v3168 = vpack.c.bf16 %v3057, %v3054
        %v3169 = vpack.c.bf16 %v3065, %v3062
        %v3170 = vpack.c.bf16 %v3073, %v3070
        %v3171 = vpack.c.bf16 %v3081, %v3078
        %v3172 = vpack.c.bf16 %v3089, %v3086
        %v3173 = vpack.c.bf16 %v3097, %v3094
        %v3174 = vpack.c.bf16 %v3105, %v3102
        %v3175 = vpack.c.bf16 %v3113, %v3110
        %v3176 = vpack.c.bf16 %v3121, %v3118
        %v3177 = vpack.c.bf16 %v3129, %v3126
        %v3178 = vpack.c.bf16 %v3137, %v3134
        %v3179 = vpack.c.bf16 %v3145, %v3142
        %v3180 = vld [vmem:[%s508] sm:$0xf]
        %v3181 = vld [vmem:[%s508 + $0x4] sm:$0xf]
        %v3182 = vld [vmem:[%s508 + $0x8] sm:$0xf]
        %v3183 = vld [vmem:[%s508 + $0xc] sm:$0xf]
        %v3184 = vld [vmem:[%s508 + $0x10] sm:$0xf]
        %v3185 = vld [vmem:[%s508 + $0x14] sm:$0xf]
        %v3186 = vld [vmem:[%s508 + $0x18] sm:$0xf]
        %v3187 = vld [vmem:[%s508 + $0x1c] sm:$0xf]
        %s3188 = scalar_lea.vmem %s3, 256
        %v3189 = vld [vmem:[%s3188] sm:$0xf]
        %v3190 = vld [vmem:[%s3188 + $0x4] sm:$0xf]
        %v3191 = vld [vmem:[%s3188 + $0x8] sm:$0xf]
        %v3192 = vld [vmem:[%s3188 + $0xc] sm:$0xf]
        %v3193 = vld [vmem:[%s3188 + $0x10] sm:$0xf]
        %v3194 = vld [vmem:[%s3188 + $0x14] sm:$0xf]
        %v3195 = vld [vmem:[%s3188 + $0x18] sm:$0xf]
        %v3196 = vld [vmem:[%s3188 + $0x1c] sm:$0xf]
        %v3197 = vld [vmem:[%s3188 + $0x20] sm:$0xf]
        %v3198 = vld [vmem:[%s3188 + $0x24] sm:$0xf]
        %v3199 = vld [vmem:[%s3188 + $0x28] sm:$0xf]
        %v3200 = vld [vmem:[%s3188 + $0x2c] sm:$0xf]
        %v3201 = vld [vmem:[%s3188 + $0x30] sm:$0xf]
        %v3202 = vld [vmem:[%s3188 + $0x34] sm:$0xf]
        %v3203 = vld [vmem:[%s3188 + $0x38] sm:$0xf]
        %v3204 = vld [vmem:[%s3188 + $0x3c] sm:$0xf]
        %v3205 = vld [vmem:[%s3188 + $0x40] sm:$0xf]
        %v3206 = vld [vmem:[%s3188 + $0x44] sm:$0xf]
        %v3207 = vld [vmem:[%s3188 + $0x48] sm:$0xf]
        %v3208 = vld [vmem:[%s3188 + $0x4c] sm:$0xf]
        %v3209 = vld [vmem:[%s3188 + $0x50] sm:$0xf]
        %v3210 = vld [vmem:[%s3188 + $0x54] sm:$0xf]
        %v3211 = vld [vmem:[%s3188 + $0x58] sm:$0xf]
        %v3212 = vld [vmem:[%s3188 + $0x5c] sm:$0xf]
        %v3213 = vld [vmem:[%s3188 + $0x60] sm:$0xf]
        %v3214 = vld [vmem:[%s3188 + $0x64] sm:$0xf]
        %v3215 = vld [vmem:[%s3188 + $0x68] sm:$0xf]
        %v3216 = vld [vmem:[%s3188 + $0x6c] sm:$0xf]
        %v3217 = vld [vmem:[%s3188 + $0x70] sm:$0xf]
        %v3218 = vld [vmem:[%s3188 + $0x74] sm:$0xf]
        %v3219 = vld [vmem:[%s3188 + $0x78] sm:$0xf]
        %v3220 = vld [vmem:[%s3188 + $0x7c] sm:$0xf]
        %v3221 = vld [vmem:[%s3188 + $0x80] sm:$0xf]
        %v3222 = vld [vmem:[%s3188 + $0x84] sm:$0xf]
        %v3223 = vld [vmem:[%s3188 + $0x88] sm:$0xf]
        %v3224 = vld [vmem:[%s3188 + $0x8c] sm:$0xf]
        %v3225 = vld [vmem:[%s3188 + $0x90] sm:$0xf]
        %v3226 = vld [vmem:[%s3188 + $0x94] sm:$0xf]
        %v3227 = vld [vmem:[%s3188 + $0x98] sm:$0xf]
        %v3228 = vld [vmem:[%s3188 + $0x9c] sm:$0xf]
        %v3229 = vld [vmem:[%s3188 + $0xa0] sm:$0xf]
        %v3230 = vld [vmem:[%s3188 + $0xa4] sm:$0xf]
        %v3231 = vld [vmem:[%s3188 + $0xa8] sm:$0xf]
        %v3232 = vld [vmem:[%s3188 + $0xac] sm:$0xf]
        %v3233 = vld [vmem:[%s3188 + $0xb0] sm:$0xf]
        %v3234 = vld [vmem:[%s3188 + $0xb4] sm:$0xf]
        %v3235 = vld [vmem:[%s3188 + $0xb8] sm:$0xf]
        %v3236 = vld [vmem:[%s3188 + $0xbc] sm:$0xf]
        %v3237 = vld [vmem:[%s3188 + $0xc0] sm:$0xf]
        %v3238 = vld [vmem:[%s3188 + $0xc4] sm:$0xf]
        %v3239 = vld [vmem:[%s3188 + $0xc8] sm:$0xf]
        %v3240 = vld [vmem:[%s3188 + $0xcc] sm:$0xf]
        %v3241 = vld [vmem:[%s3188 + $0xd0] sm:$0xf]
        %v3242 = vld [vmem:[%s3188 + $0xd4] sm:$0xf]
        %v3243 = vld [vmem:[%s3188 + $0xd8] sm:$0xf]
        %v3244 = vld [vmem:[%s3188 + $0xdc] sm:$0xf]
        %v3245 = vld [vmem:[%s3188 + $0xe0] sm:$0xf]
        %v3246 = vld [vmem:[%s3188 + $0xe4] sm:$0xf]
        %v3247 = vld [vmem:[%s3188 + $0xe8] sm:$0xf]
        %v3248 = vld [vmem:[%s3188 + $0xec] sm:$0xf]
        %v3249 = vld [vmem:[%s3188 + $0xf0] sm:$0xf]
        %v3250 = vld [vmem:[%s3188 + $0xf4] sm:$0xf]
        %v3251 = vld [vmem:[%s3188 + $0xf8] sm:$0xf]
        %v3252 = vld [vmem:[%s3188 + $0xfc] sm:$0xf]
        %v3317 = vunpack.c.l.b16 %v3189
        %v3318 = vunpack.c.l.b16 %v3190
        %v3319 = vunpack.c.l.b16 %v3191
        %v3320 = vunpack.c.l.b16 %v3192
        %v3321 = vunpack.c.l.b16 %v3193
        %v3322 = vunpack.c.l.b16 %v3194
        %v3323 = vunpack.c.l.b16 %v3195
        %v3324 = vunpack.c.l.b16 %v3196
        %v3325 = vunpack.c.l.b16 %v3197
        %v3326 = vunpack.c.l.b16 %v3198
        %v3327 = vunpack.c.l.b16 %v3199
        %v3328 = vunpack.c.l.b16 %v3200
        %v3329 = vunpack.c.l.b16 %v3201
        %v3330 = vunpack.c.l.b16 %v3202
        %v3331 = vunpack.c.l.b16 %v3203
        %v3332 = vunpack.c.l.b16 %v3204
        %v3333 = vunpack.c.l.b16 %v3205
        %v3334 = vunpack.c.l.b16 %v3206
        %v3335 = vunpack.c.l.b16 %v3207
        %v3336 = vunpack.c.l.b16 %v3208
        %v3337 = vunpack.c.l.b16 %v3209
        %v3338 = vunpack.c.l.b16 %v3210
        %v3339 = vunpack.c.l.b16 %v3211
        %v3340 = vunpack.c.l.b16 %v3212
        %v3341 = vunpack.c.l.b16 %v3213
        %v3342 = vunpack.c.l.b16 %v3214
        %v3343 = vunpack.c.l.b16 %v3215
        %v3344 = vunpack.c.l.b16 %v3216
        %v3345 = vunpack.c.l.b16 %v3217
        %v3346 = vunpack.c.l.b16 %v3218
        %v3347 = vunpack.c.l.b16 %v3219
        %v3348 = vunpack.c.l.b16 %v3220
        %v3349 = vunpack.c.l.b16 %v3221
        %v3350 = vunpack.c.l.b16 %v3222
        %v3351 = vunpack.c.l.b16 %v3223
        %v3352 = vunpack.c.l.b16 %v3224
        %v3353 = vunpack.c.l.b16 %v3225
        %v3354 = vunpack.c.l.b16 %v3226
        %v3355 = vunpack.c.l.b16 %v3227
        %v3356 = vunpack.c.l.b16 %v3228
        %v3357 = vunpack.c.l.b16 %v3229
        %v3358 = vunpack.c.l.b16 %v3230
        %v3359 = vunpack.c.l.b16 %v3231
        %v3360 = vunpack.c.l.b16 %v3232
        %v3361 = vunpack.c.l.b16 %v3233
        %v3362 = vunpack.c.l.b16 %v3234
        %v3363 = vunpack.c.l.b16 %v3235
        %v3364 = vunpack.c.l.b16 %v3236
        %v3365 = vunpack.c.l.b16 %v3237
        %v3366 = vunpack.c.l.b16 %v3238
        %v3367 = vunpack.c.l.b16 %v3239
        %v3368 = vunpack.c.l.b16 %v3240
        %v3369 = vunpack.c.l.b16 %v3241
        %v3370 = vunpack.c.l.b16 %v3242
        %v3371 = vunpack.c.l.b16 %v3243
        %v3372 = vunpack.c.l.b16 %v3244
        %v3373 = vunpack.c.l.b16 %v3245
        %v3374 = vunpack.c.l.b16 %v3246
        %v3375 = vunpack.c.l.b16 %v3247
        %v3376 = vunpack.c.l.b16 %v3248
        %v3377 = vunpack.c.l.b16 %v3249
        %v3378 = vunpack.c.l.b16 %v3250
        %v3379 = vunpack.c.l.b16 %v3251
        %v3380 = vunpack.c.l.b16 %v3252
        %v3381 = vpack.c.b16 %v3318, %v3317
        %v3382 = vpack.c.b16 %v3320, %v3319
        %v3383 = vpack.c.b16 %v3322, %v3321
        %v3384 = vpack.c.b16 %v3324, %v3323
        %v3385 = vpack.c.b16 %v3326, %v3325
        %v3386 = vpack.c.b16 %v3328, %v3327
        %v3387 = vpack.c.b16 %v3330, %v3329
        %v3388 = vpack.c.b16 %v3332, %v3331
        %v3389 = vpack.c.b16 %v3334, %v3333
        %v3390 = vpack.c.b16 %v3336, %v3335
        %v3391 = vpack.c.b16 %v3338, %v3337
        %v3392 = vpack.c.b16 %v3340, %v3339
        %v3393 = vpack.c.b16 %v3342, %v3341
        %v3394 = vpack.c.b16 %v3344, %v3343
        %v3395 = vpack.c.b16 %v3346, %v3345
        %v3396 = vpack.c.b16 %v3348, %v3347
        %v3397 = vpack.c.b16 %v3350, %v3349
        %v3398 = vpack.c.b16 %v3352, %v3351
        %v3399 = vpack.c.b16 %v3354, %v3353
        %v3400 = vpack.c.b16 %v3356, %v3355
        %v3401 = vpack.c.b16 %v3358, %v3357
        %v3402 = vpack.c.b16 %v3360, %v3359
        %v3403 = vpack.c.b16 %v3362, %v3361
        %v3404 = vpack.c.b16 %v3364, %v3363
        %v3405 = vpack.c.b16 %v3366, %v3365
        %v3406 = vpack.c.b16 %v3368, %v3367
        %v3407 = vpack.c.b16 %v3370, %v3369
        %v3408 = vpack.c.b16 %v3372, %v3371
        %v3409 = vpack.c.b16 %v3374, %v3373
        %v3410 = vpack.c.b16 %v3376, %v3375
        %v3411 = vpack.c.b16 %v3378, %v3377
        %v3412 = vpack.c.b16 %v3380, %v3379
        %3445 = vmatprep.subr.bf16.mxu0 0
        %3446 = vmatpush1.bf16.msra.mxu0 %v2595
        %3447 = vmatprep.subr.bf16.mxu0 0
        %3448 = vmatpush1.bf16.msra.mxu0 %v2596
        %3449 = vmatprep.subr.bf16.mxu0 0
        %3450 = vmatpush1.bf16.msra.mxu0 %v2597
        %3451 = vmatprep.subr.bf16.mxu0 0
        %3452 = vmatpush1.bf16.msra.mxu0 %v2598
        %3453 = vmatprep.subr.bf16.mxu0 0
        %3454 = vmatpush1.bf16.msra.mxu0 %v2599
        %3455 = vmatprep.subr.bf16.mxu0 0
        %3456 = vmatpush1.bf16.msra.mxu0 %v2600
        %3457 = vmatprep.subr.bf16.mxu0 0
        %3458 = vmatpush1.bf16.msra.mxu0 %v2601
        %3459 = vmatprep.subr.bf16.mxu0 0
        %3460 = vmatpush1.bf16.msra.mxu0 %v2602
        %3461 = vmatprep.subr.bf16.mxu0 0
        %3462 = vmatpush1.bf16.msra.mxu0 0
        %3463 = vmatprep.subr.bf16.mxu0 0
        %3464 = vmatpush1.bf16.msra.mxu0 0
        %3465 = vmatprep.subr.bf16.mxu0 0
        %3466 = vmatpush1.bf16.msra.mxu0 0
        %3467 = vmatprep.subr.bf16.mxu0 0
        %3468 = vmatpush1.bf16.msra.mxu0 0
        %3469 = vmatprep.subr.bf16.mxu0 0
        %3470 = vmatpush1.bf16.msra.mxu0 0
        %3471 = vmatprep.subr.bf16.mxu0 0
        %3472 = vmatpush1.bf16.msra.mxu0 0
        %3473 = vmatprep.subr.bf16.mxu0 0
        %3474 = vmatpush1.bf16.msra.mxu0 0
        %3475 = vmatprep.subr.bf16.mxu0 0
        %3476 = vmatpush1.bf16.msra.mxu0 0
        %3477 = vmatprep.mubr.bf16.mxu0 0
        %3478 = vmatmul.mubr.bf16.gmra.mrb[0].mxu0 %v3381
        %v3479 = vpop.f32.mrb[0].mxu0
        %v3480 = vadd.f32 0.0, %v3479
        %v3481 = vpop.f32.mrb[0].mxu0
        %v3482 = vpop.f32.mrb[0].mxu0
        %v3483 = vadd.f32 0.0, %v3482
        %v3484 = vpop.f32.mrb[0].mxu0
        %3485 = vmatprep.mubr.bf16.mxu0 0
        %3486 = vmatmul.mubr.bf16.gmra.mrb[0].mxu0 %v3382
        %v3487 = vpop.f32.mrb[0].mxu0
        %v3488 = vadd.f32 0.0, %v3487
        %v3489 = vpop.f32.mrb[0].mxu0
        %v3490 = vpop.f32.mrb[0].mxu0
        %v3491 = vadd.f32 0.0, %v3490
        %v3492 = vpop.f32.mrb[0].mxu0
        %3493 = vmatprep.mubr.bf16.mxu0 0
        %3494 = vmatmul.mubr.bf16.gmra.mrb[0].mxu0 %v3383
        %v3495 = vpop.f32.mrb[0].mxu0
        %v3496 = vadd.f32 0.0, %v3495
        %v3497 = vpop.f32.mrb[0].mxu0
        %v3498 = vpop.f32.mrb[0].mxu0
        %v3499 = vadd.f32 0.0, %v3498
        %v3500 = vpop.f32.mrb[0].mxu0
        %3501 = vmatprep.mubr.bf16.mxu0 0
        %3502 = vmatmul.mubr.bf16.gmra.mrb[0].mxu0 %v3384
        %v3503 = vpop.f32.mrb[0].mxu0
        %v3504 = vadd.f32 0.0, %v3503
        %v3505 = vpop.f32.mrb[0].mxu0
        %v3506 = vpop.f32.mrb[0].mxu0
        %v3507 = vadd.f32 0.0, %v3506
        %v3508 = vpop.f32.mrb[0].mxu0
        %3509 = vmatprep.mubr.bf16.mxu0 0
        %3510 = vmatmul.mubr.bf16.gmra.mrb[0].mxu0 %v3385
        %v3511 = vpop.f32.mrb[0].mxu0
        %v3512 = vadd.f32 0.0, %v3511
        %v3513 = vpop.f32.mrb[0].mxu0
        %v3514 = vpop.f32.mrb[0].mxu0
        %v3515 = vadd.f32 0.0, %v3514
        %v3516 = vpop.f32.mrb[0].mxu0
        %3517 = vmatprep.mubr.bf16.mxu0 0
        %3518 = vmatmul.mubr.bf16.gmra.mrb[0].mxu0 %v3386
        %v3519 = vpop.f32.mrb[0].mxu0
        %v3520 = vadd.f32 0.0, %v3519
        %v3521 = vpop.f32.mrb[0].mxu0
        %v3522 = vpop.f32.mrb[0].mxu0
        %v3523 = vadd.f32 0.0, %v3522
        %v3524 = vpop.f32.mrb[0].mxu0
        %3525 = vmatprep.mubr.bf16.mxu0 0
        %3526 = vmatmul.mubr.bf16.gmra.mrb[0].mxu0 %v3387
        %v3527 = vpop.f32.mrb[0].mxu0
        %v3528 = vadd.f32 0.0, %v3527
        %v3529 = vpop.f32.mrb[0].mxu0
        %v3530 = vpop.f32.mrb[0].mxu0
        %v3531 = vadd.f32 0.0, %v3530
        %v3532 = vpop.f32.mrb[0].mxu0
        %3533 = vmatprep.mubr.bf16.mxu0 0
        %3534 = vmatmul.mubr.bf16.gmra.mrb[0].mxu0 %v3388
        %v3535 = vpop.f32.mrb[0].mxu0
        %v3536 = vadd.f32 0.0, %v3535
        %v3537 = vpop.f32.mrb[0].mxu0
        %v3538 = vpop.f32.mrb[0].mxu0
        %v3539 = vadd.f32 0.0, %v3538
        %v3540 = vpop.f32.mrb[0].mxu0
        %3541 = vmatprep.mubr.bf16.mxu0 0
        %3542 = vmatmul.mubr.bf16.gmra.mrb[0].mxu0 %v3389
        %v3543 = vpop.f32.mrb[0].mxu0
        %v3544 = vadd.f32 0.0, %v3543
        %v3545 = vpop.f32.mrb[0].mxu0
        %v3546 = vpop.f32.mrb[0].mxu0
        %v3547 = vadd.f32 0.0, %v3546
        %v3548 = vpop.f32.mrb[0].mxu0
        %3549 = vmatprep.mubr.bf16.mxu0 0
        %3550 = vmatmul.mubr.bf16.gmra.mrb[0].mxu0 %v3390
        %v3551 = vpop.f32.mrb[0].mxu0
        %v3552 = vadd.f32 0.0, %v3551
        %v3553 = vpop.f32.mrb[0].mxu0
        %v3554 = vpop.f32.mrb[0].mxu0
        %v3555 = vadd.f32 0.0, %v3554
        %v3556 = vpop.f32.mrb[0].mxu0
        %3557 = vmatprep.mubr.bf16.mxu0 0
        %3558 = vmatmul.mubr.bf16.gmra.mrb[0].mxu0 %v3391
        %v3559 = vpop.f32.mrb[0].mxu0
        %v3560 = vadd.f32 0.0, %v3559
        %v3561 = vpop.f32.mrb[0].mxu0
        %v3562 = vpop.f32.mrb[0].mxu0
        %v3563 = vadd.f32 0.0, %v3562
        %v3564 = vpop.f32.mrb[0].mxu0
        %3565 = vmatprep.mubr.bf16.mxu0 0
        %3566 = vmatmul.mubr.bf16.gmra.mrb[0].mxu0 %v3392
        %v3567 = vpop.f32.mrb[0].mxu0
        %v3568 = vadd.f32 0.0, %v3567
        %v3569 = vpop.f32.mrb[0].mxu0
        %v3570 = vpop.f32.mrb[0].mxu0
        %v3571 = vadd.f32 0.0, %v3570
        %v3572 = vpop.f32.mrb[0].mxu0
        %3573 = vmatprep.mubr.bf16.mxu0 0
        %3574 = vmatmul.mubr.bf16.gmra.mrb[0].mxu0 %v3393
        %v3575 = vpop.f32.mrb[0].mxu0
        %v3576 = vadd.f32 0.0, %v3575
        %v3577 = vpop.f32.mrb[0].mxu0
        %v3578 = vpop.f32.mrb[0].mxu0
        %v3579 = vadd.f32 0.0, %v3578
        %v3580 = vpop.f32.mrb[0].mxu0
        %3581 = vmatprep.mubr.bf16.mxu0 0
        %3582 = vmatmul.mubr.bf16.gmra.mrb[0].mxu0 %v3394
        %v3583 = vpop.f32.mrb[0].mxu0
        %v3584 = vadd.f32 0.0, %v3583
        %v3585 = vpop.f32.mrb[0].mxu0
        %v3586 = vpop.f32.mrb[0].mxu0
        %v3587 = vadd.f32 0.0, %v3586
        %v3588 = vpop.f32.mrb[0].mxu0
        %3589 = vmatprep.mubr.bf16.mxu0 0
        %3590 = vmatmul.mubr.bf16.gmra.mrb[0].mxu0 %v3395
        %v3591 = vpop.f32.mrb[0].mxu0
        %v3592 = vadd.f32 0.0, %v3591
        %v3593 = vpop.f32.mrb[0].mxu0
        %v3594 = vpop.f32.mrb[0].mxu0
        %v3595 = vadd.f32 0.0, %v3594
        %v3596 = vpop.f32.mrb[0].mxu0
        %3597 = vmatprep.mubr.bf16.mxu0 0
        %3598 = vmatmul.mubr.bf16.gmra.mrb[0].mxu0 %v3396
        %v3599 = vpop.f32.mrb[0].mxu0
        %v3600 = vadd.f32 0.0, %v3599
        %v3601 = vpop.f32.mrb[0].mxu0
        %v3602 = vpop.f32.mrb[0].mxu0
        %v3603 = vadd.f32 0.0, %v3602
        %v3604 = vpop.f32.mrb[0].mxu0
        %3605 = vmatprep.mubr.bf16.mxu0 0
        %3606 = vmatmul.mubr.bf16.gmra.mrb[0].mxu0 %v3397
        %v3607 = vpop.f32.mrb[0].mxu0
        %v3608 = vadd.f32 0.0, %v3607
        %v3609 = vpop.f32.mrb[0].mxu0
        %v3610 = vpop.f32.mrb[0].mxu0
        %v3611 = vadd.f32 0.0, %v3610
        %v3612 = vpop.f32.mrb[0].mxu0
        %3613 = vmatprep.mubr.bf16.mxu0 0
        %3614 = vmatmul.mubr.bf16.gmra.mrb[0].mxu0 %v3398
        %v3615 = vpop.f32.mrb[0].mxu0
        %v3616 = vadd.f32 0.0, %v3615
        %v3617 = vpop.f32.mrb[0].mxu0
        %v3618 = vpop.f32.mrb[0].mxu0
        %v3619 = vadd.f32 0.0, %v3618
        %v3620 = vpop.f32.mrb[0].mxu0
        %3621 = vmatprep.mubr.bf16.mxu0 0
        %3622 = vmatmul.mubr.bf16.gmra.mrb[0].mxu0 %v3399
        %v3623 = vpop.f32.mrb[0].mxu0
        %v3624 = vadd.f32 0.0, %v3623
        %v3625 = vpop.f32.mrb[0].mxu0
        %v3626 = vpop.f32.mrb[0].mxu0
        %v3627 = vadd.f32 0.0, %v3626
        %v3628 = vpop.f32.mrb[0].mxu0
        %3629 = vmatprep.mubr.bf16.mxu0 0
        %3630 = vmatmul.mubr.bf16.gmra.mrb[0].mxu0 %v3400
        %v3631 = vpop.f32.mrb[0].mxu0
        %v3632 = vadd.f32 0.0, %v3631
        %v3633 = vpop.f32.mrb[0].mxu0
        %v3634 = vpop.f32.mrb[0].mxu0
        %v3635 = vadd.f32 0.0, %v3634
        %v3636 = vpop.f32.mrb[0].mxu0
        %3637 = vmatprep.mubr.bf16.mxu0 0
        %3638 = vmatmul.mubr.bf16.gmra.mrb[0].mxu0 %v3401
        %v3639 = vpop.f32.mrb[0].mxu0
        %v3640 = vadd.f32 0.0, %v3639
        %v3641 = vpop.f32.mrb[0].mxu0
        %v3642 = vpop.f32.mrb[0].mxu0
        %v3643 = vadd.f32 0.0, %v3642
        %v3644 = vpop.f32.mrb[0].mxu0
        %3645 = vmatprep.mubr.bf16.mxu0 0
        %3646 = vmatmul.mubr.bf16.gmra.mrb[0].mxu0 %v3402
        %v3647 = vpop.f32.mrb[0].mxu0
        %v3648 = vadd.f32 0.0, %v3647
        %v3649 = vpop.f32.mrb[0].mxu0
        %v3650 = vpop.f32.mrb[0].mxu0
        %v3651 = vadd.f32 0.0, %v3650
        %v3652 = vpop.f32.mrb[0].mxu0
        %3653 = vmatprep.mubr.bf16.mxu0 0
        %3654 = vmatmul.mubr.bf16.gmra.mrb[0].mxu0 %v3403
        %v3655 = vpop.f32.mrb[0].mxu0
        %v3656 = vadd.f32 0.0, %v3655
        %v3657 = vpop.f32.mrb[0].mxu0
        %v3658 = vpop.f32.mrb[0].mxu0
        %v3659 = vadd.f32 0.0, %v3658
        %v3660 = vpop.f32.mrb[0].mxu0
        %3661 = vmatprep.mubr.bf16.mxu0 0
        %3662 = vmatmul.mubr.bf16.gmra.mrb[0].mxu0 %v3404
        %v3663 = vpop.f32.mrb[0].mxu0
        %v3664 = vadd.f32 0.0, %v3663
        %v3665 = vpop.f32.mrb[0].mxu0
        %v3666 = vpop.f32.mrb[0].mxu0
        %v3667 = vadd.f32 0.0, %v3666
        %v3668 = vpop.f32.mrb[0].mxu0
        %3669 = vmatprep.mubr.bf16.mxu0 0
        %3670 = vmatmul.mubr.bf16.gmra.mrb[0].mxu0 %v3405
        %v3671 = vpop.f32.mrb[0].mxu0
        %v3672 = vadd.f32 0.0, %v3671
        %v3673 = vpop.f32.mrb[0].mxu0
        %v3674 = vpop.f32.mrb[0].mxu0
        %v3675 = vadd.f32 0.0, %v3674
        %v3676 = vpop.f32.mrb[0].mxu0
        %3677 = vmatprep.mubr.bf16.mxu0 0
        %3678 = vmatmul.mubr.bf16.gmra.mrb[0].mxu0 %v3406
        %v3679 = vpop.f32.mrb[0].mxu0
        %v3680 = vadd.f32 0.0, %v3679
        %v3681 = vpop.f32.mrb[0].mxu0
        %v3682 = vpop.f32.mrb[0].mxu0
        %v3683 = vadd.f32 0.0, %v3682
        %v3684 = vpop.f32.mrb[0].mxu0
        %3685 = vmatprep.mubr.bf16.mxu0 0
        %3686 = vmatmul.mubr.bf16.gmra.mrb[0].mxu0 %v3407
        %v3687 = vpop.f32.mrb[0].mxu0
        %v3688 = vadd.f32 0.0, %v3687
        %v3689 = vpop.f32.mrb[0].mxu0
        %v3690 = vpop.f32.mrb[0].mxu0
        %v3691 = vadd.f32 0.0, %v3690
        %v3692 = vpop.f32.mrb[0].mxu0
        %3693 = vmatprep.mubr.bf16.mxu0 0
        %3694 = vmatmul.mubr.bf16.gmra.mrb[0].mxu0 %v3408
        %v3695 = vpop.f32.mrb[0].mxu0
        %v3696 = vadd.f32 0.0, %v3695
        %v3697 = vpop.f32.mrb[0].mxu0
        %v3698 = vpop.f32.mrb[0].mxu0
        %v3699 = vadd.f32 0.0, %v3698
        %v3700 = vpop.f32.mrb[0].mxu0
        %3701 = vmatprep.mubr.bf16.mxu0 0
        %3702 = vmatmul.mubr.bf16.gmra.mrb[0].mxu0 %v3409
        %v3703 = vpop.f32.mrb[0].mxu0
        %v3704 = vadd.f32 0.0, %v3703
        %v3705 = vpop.f32.mrb[0].mxu0
        %v3706 = vpop.f32.mrb[0].mxu0
        %v3707 = vadd.f32 0.0, %v3706
        %v3708 = vpop.f32.mrb[0].mxu0
        %3709 = vmatprep.mubr.bf16.mxu0 0
        %3710 = vmatmul.mubr.bf16.gmra.mrb[0].mxu0 %v3410
        %v3711 = vpop.f32.mrb[0].mxu0
        %v3712 = vadd.f32 0.0, %v3711
        %v3713 = vpop.f32.mrb[0].mxu0
        %v3714 = vpop.f32.mrb[0].mxu0
        %v3715 = vadd.f32 0.0, %v3714
        %v3716 = vpop.f32.mrb[0].mxu0
        %3717 = vmatprep.mubr.bf16.mxu0 0
        %3718 = vmatmul.mubr.bf16.gmra.mrb[0].mxu0 %v3411
        %v3719 = vpop.f32.mrb[0].mxu0
        %v3720 = vadd.f32 0.0, %v3719
        %v3721 = vpop.f32.mrb[0].mxu0
        %v3722 = vpop.f32.mrb[0].mxu0
        %v3723 = vadd.f32 0.0, %v3722
        %v3724 = vpop.f32.mrb[0].mxu0
        %3725 = vmatprep.mubr.bf16.mxu0 0
        %3726 = vmatmul.mubr.bf16.gmra.mrb[0].mxu0 %v3412
        %v3727 = vpop.f32.mrb[0].mxu0
        %v3728 = vadd.f32 0.0, %v3727
        %v3729 = vpop.f32.mrb[0].mxu0
        %v3730 = vpop.f32.mrb[0].mxu0
        %v3731 = vadd.f32 0.0, %v3730
        %v3732 = vpop.f32.mrb[0].mxu0
        %3733 = vdwg.mxu0
        %v3734 = vpack.c.bf16 %v3483, %v3480
        %v3735 = vpack.c.bf16 %v3491, %v3488
        %v3736 = vpack.c.bf16 %v3499, %v3496
        %v3737 = vpack.c.bf16 %v3507, %v3504
        %v3738 = vpack.c.bf16 %v3515, %v3512
        %v3739 = vpack.c.bf16 %v3523, %v3520
        %v3740 = vpack.c.bf16 %v3531, %v3528
        %v3741 = vpack.c.bf16 %v3539, %v3536
        %v3742 = vpack.c.bf16 %v3547, %v3544
        %v3743 = vpack.c.bf16 %v3555, %v3552
        %v3744 = vpack.c.bf16 %v3563, %v3560
        %v3745 = vpack.c.bf16 %v3571, %v3568
        %v3746 = vpack.c.bf16 %v3579, %v3576
        %v3747 = vpack.c.bf16 %v3587, %v3584
        %v3748 = vpack.c.bf16 %v3595, %v3592
        %v3749 = vpack.c.bf16 %v3603, %v3600
        %v3750 = vpack.c.bf16 %v3611, %v3608
        %v3751 = vpack.c.bf16 %v3619, %v3616
        %v3752 = vpack.c.bf16 %v3627, %v3624
        %v3753 = vpack.c.bf16 %v3635, %v3632
        %v3754 = vpack.c.bf16 %v3643, %v3640
        %v3755 = vpack.c.bf16 %v3651, %v3648
        %v3756 = vpack.c.bf16 %v3659, %v3656
        %v3757 = vpack.c.bf16 %v3667, %v3664
        %v3758 = vpack.c.bf16 %v3675, %v3672
        %v3759 = vpack.c.bf16 %v3683, %v3680
        %v3760 = vpack.c.bf16 %v3691, %v3688
        %v3761 = vpack.c.bf16 %v3699, %v3696
        %v3762 = vpack.c.bf16 %v3707, %v3704
        %v3763 = vpack.c.bf16 %v3715, %v3712
        %v3764 = vpack.c.bf16 %v3723, %v3720
        %v3765 = vpack.c.bf16 %v3731, %v3728
        %s3766 = scalar_lea.vmem %s508, 32
        %v3767 = vld [vmem:[%s3766] sm:$0xf]
        %v3768 = vld [vmem:[%s3766 + $0x4] sm:$0xf]
        %v3769 = vld [vmem:[%s3766 + $0x8] sm:$0xf]
        %v3770 = vld [vmem:[%s3766 + $0xc] sm:$0xf]
        %v3771 = vld [vmem:[%s3766 + $0x10] sm:$0xf]
        %v3772 = vld [vmem:[%s3766 + $0x14] sm:$0xf]
        %v3773 = vld [vmem:[%s3766 + $0x18] sm:$0xf]
        %v3774 = vld [vmem:[%s3766 + $0x1c] sm:$0xf]
        %v3783 = vunpack.c.l.b16 %v3767
        %v3784 = vunpack.c.l.b16 %v3768
        %v3785 = vunpack.c.l.b16 %v3769
        %v3786 = vunpack.c.l.b16 %v3770
        %v3787 = vunpack.c.l.b16 %v3771
        %v3788 = vunpack.c.l.b16 %v3772
        %v3789 = vunpack.c.l.b16 %v3773
        %v3790 = vunpack.c.l.b16 %v3774
        %v3791 = vpack.c.b16 %v3784, %v3783
        %v3792 = vpack.c.b16 %v3786, %v3785
        %v3793 = vpack.c.b16 %v3788, %v3787
        %v3794 = vpack.c.b16 %v3790, %v3789
        %v3800 = vsel %vm705, %v3734, 0
        %v3803 = vsel %vm705, %v3735, 0
        %v3806 = vsel %vm705, %v3736, 0
        %v3809 = vsel %vm705, %v3737, 0
        %v3812 = vsel %vm705, %v3738, 0
        %v3815 = vsel %vm705, %v3739, 0
        %v3818 = vsel %vm705, %v3740, 0
        %v3821 = vsel %vm705, %v3741, 0
        %v3824 = vsel %vm705, %v3742, 0
        %v3827 = vsel %vm705, %v3743, 0
        %v3830 = vsel %vm705, %v3744, 0
        %v3833 = vsel %vm705, %v3745, 0
        %v3836 = vsel %vm705, %v3746, 0
        %v3839 = vsel %vm705, %v3747, 0
        %v3842 = vsel %vm705, %v3748, 0
        %v3845 = vsel %vm705, %v3749, 0
        %v3848 = vsel %vm705, %v3750, 0
        %v3851 = vsel %vm705, %v3751, 0
        %v3854 = vsel %vm705, %v3752, 0
        %v3857 = vsel %vm705, %v3753, 0
        %v3860 = vsel %vm705, %v3754, 0
        %v3863 = vsel %vm705, %v3755, 0
        %v3866 = vsel %vm705, %v3756, 0
        %v3869 = vsel %vm705, %v3757, 0
        %v3872 = vsel %vm705, %v3758, 0
        %v3875 = vsel %vm705, %v3759, 0
        %v3878 = vsel %vm705, %v3760, 0
        %v3881 = vsel %vm705, %v3761, 0
        %v3884 = vsel %vm705, %v3762, 0
        %v3887 = vsel %vm705, %v3763, 0
        %v3890 = vsel %vm705, %v3764, 0
        %v3893 = vsel %vm705, %v3765, 0
        %3895 = vmatprep.subr.bf16.mxu0 0
        %3896 = vmatpush1.bf16.msra.mxu0 %v3791
        %3897 = vmatprep.subr.bf16.mxu0 0
        %3898 = vmatpush1.bf16.msra.mxu0 %v3792
        %3899 = vmatprep.subr.bf16.mxu0 0
        %3900 = vmatpush1.bf16.msra.mxu0 %v3793
        %3901 = vmatprep.subr.bf16.mxu0 0
        %3902 = vmatpush1.bf16.msra.mxu0 %v3794
        %3903 = vmatprep.subr.bf16.mxu0 0
        %3904 = vmatpush1.bf16.msra.mxu0 0
        %3905 = vmatprep.subr.bf16.mxu0 0
        %3906 = vmatpush1.bf16.msra.mxu0 0
        %3907 = vmatprep.subr.bf16.mxu0 0
        %3908 = vmatpush1.bf16.msra.mxu0 0
        %3909 = vmatprep.subr.bf16.mxu0 0
        %3910 = vmatpush1.bf16.msra.mxu0 0
        %3911 = vmatprep.subr.bf16.mxu0 0
        %3912 = vmatpush1.bf16.msra.mxu0 0
        %3913 = vmatprep.subr.bf16.mxu0 0
        %3914 = vmatpush1.bf16.msra.mxu0 0
        %3915 = vmatprep.subr.bf16.mxu0 0
        %3916 = vmatpush1.bf16.msra.mxu0 0
        %3917 = vmatprep.subr.bf16.mxu0 0
        %3918 = vmatpush1.bf16.msra.mxu0 0
        %3919 = vmatprep.subr.bf16.mxu0 0
        %3920 = vmatpush1.bf16.msra.mxu0 0
        %3921 = vmatprep.subr.bf16.mxu0 0
        %3922 = vmatpush1.bf16.msra.mxu0 0
        %3923 = vmatprep.subr.bf16.mxu0 0
        %3924 = vmatpush1.bf16.msra.mxu0 0
        %3925 = vmatprep.subr.bf16.mxu0 0
        %3926 = vmatpush1.bf16.msra.mxu0 0
        %3927 = vmatprep.mubr.bf16.mxu0 0
        %3928 = vmatmul.mubr.bf16.gmra.mrb[0].mxu0 %v3800
        %v3929 = vpop.f32.mrb[0].mxu0
        %v3930 = vadd.f32 0.0, %v3929
        %v3931 = vpop.f32.mrb[0].mxu0
        %v3932 = vpop.f32.mrb[0].mxu0
        %v3933 = vadd.f32 0.0, %v3932
        %v3934 = vpop.f32.mrb[0].mxu0
        %3935 = vmatprep.mubr.bf16.mxu0 0
        %3936 = vmatmul.mubr.bf16.gmra.mrb[0].mxu0 %v3803
        %v3937 = vpop.f32.mrb[0].mxu0
        %v3938 = vadd.f32 0.0, %v3937
        %v3939 = vpop.f32.mrb[0].mxu0
        %v3940 = vpop.f32.mrb[0].mxu0
        %v3941 = vadd.f32 0.0, %v3940
        %v3942 = vpop.f32.mrb[0].mxu0
        %3943 = vmatprep.mubr.bf16.mxu0 0
        %3944 = vmatmul.mubr.bf16.gmra.mrb[0].mxu0 %v3806
        %v3945 = vpop.f32.mrb[0].mxu0
        %v3946 = vadd.f32 0.0, %v3945
        %v3947 = vpop.f32.mrb[0].mxu0
        %v3948 = vpop.f32.mrb[0].mxu0
        %v3949 = vadd.f32 0.0, %v3948
        %v3950 = vpop.f32.mrb[0].mxu0
        %3951 = vmatprep.mubr.bf16.mxu0 0
        %3952 = vmatmul.mubr.bf16.gmra.mrb[0].mxu0 %v3809
        %v3953 = vpop.f32.mrb[0].mxu0
        %v3954 = vadd.f32 0.0, %v3953
        %v3955 = vpop.f32.mrb[0].mxu0
        %v3956 = vpop.f32.mrb[0].mxu0
        %v3957 = vadd.f32 0.0, %v3956
        %v3958 = vpop.f32.mrb[0].mxu0
        %3959 = vmatprep.mubr.bf16.mxu0 0
        %3960 = vmatmul.mubr.bf16.gmra.mrb[0].mxu0 %v3812
        %v3961 = vpop.f32.mrb[0].mxu0
        %v3962 = vadd.f32 0.0, %v3961
        %v3963 = vpop.f32.mrb[0].mxu0
        %v3964 = vpop.f32.mrb[0].mxu0
        %v3965 = vadd.f32 0.0, %v3964
        %v3966 = vpop.f32.mrb[0].mxu0
        %3967 = vmatprep.mubr.bf16.mxu0 0
        %3968 = vmatmul.mubr.bf16.gmra.mrb[0].mxu0 %v3815
        %v3969 = vpop.f32.mrb[0].mxu0
        %v3970 = vadd.f32 0.0, %v3969
        %v3971 = vpop.f32.mrb[0].mxu0
        %v3972 = vpop.f32.mrb[0].mxu0
        %v3973 = vadd.f32 0.0, %v3972
        %v3974 = vpop.f32.mrb[0].mxu0
        %3975 = vmatprep.mubr.bf16.mxu0 0
        %3976 = vmatmul.mubr.bf16.gmra.mrb[0].mxu0 %v3818
        %v3977 = vpop.f32.mrb[0].mxu0
        %v3978 = vadd.f32 0.0, %v3977
        %v3979 = vpop.f32.mrb[0].mxu0
        %v3980 = vpop.f32.mrb[0].mxu0
        %v3981 = vadd.f32 0.0, %v3980
        %v3982 = vpop.f32.mrb[0].mxu0
        %3983 = vmatprep.mubr.bf16.mxu0 0
        %3984 = vmatmul.mubr.bf16.gmra.mrb[0].mxu0 %v3821
        %v3985 = vpop.f32.mrb[0].mxu0
        %v3986 = vadd.f32 0.0, %v3985
        %v3987 = vpop.f32.mrb[0].mxu0
        %v3988 = vpop.f32.mrb[0].mxu0
        %v3989 = vadd.f32 0.0, %v3988
        %v3990 = vpop.f32.mrb[0].mxu0
        %3991 = vmatprep.mubr.bf16.mxu0 0
        %3992 = vmatmul.mubr.bf16.gmra.mrb[0].mxu0 %v3824
        %v3993 = vpop.f32.mrb[0].mxu0
        %v3994 = vadd.f32 0.0, %v3993
        %v3995 = vpop.f32.mrb[0].mxu0
        %v3996 = vpop.f32.mrb[0].mxu0
        %v3997 = vadd.f32 0.0, %v3996
        %v3998 = vpop.f32.mrb[0].mxu0
        %3999 = vmatprep.mubr.bf16.mxu0 0
        %4000 = vmatmul.mubr.bf16.gmra.mrb[0].mxu0 %v3827
        %v4001 = vpop.f32.mrb[0].mxu0
        %v4002 = vadd.f32 0.0, %v4001
        %v4003 = vpop.f32.mrb[0].mxu0
        %v4004 = vpop.f32.mrb[0].mxu0
        %v4005 = vadd.f32 0.0, %v4004
        %v4006 = vpop.f32.mrb[0].mxu0
        %4007 = vmatprep.mubr.bf16.mxu0 0
        %4008 = vmatmul.mubr.bf16.gmra.mrb[0].mxu0 %v3830
        %v4009 = vpop.f32.mrb[0].mxu0
        %v4010 = vadd.f32 0.0, %v4009
        %v4011 = vpop.f32.mrb[0].mxu0
        %v4012 = vpop.f32.mrb[0].mxu0
        %v4013 = vadd.f32 0.0, %v4012
        %v4014 = vpop.f32.mrb[0].mxu0
        %4015 = vmatprep.mubr.bf16.mxu0 0
        %4016 = vmatmul.mubr.bf16.gmra.mrb[0].mxu0 %v3833
        %v4017 = vpop.f32.mrb[0].mxu0
        %v4018 = vadd.f32 0.0, %v4017
        %v4019 = vpop.f32.mrb[0].mxu0
        %v4020 = vpop.f32.mrb[0].mxu0
        %v4021 = vadd.f32 0.0, %v4020
        %v4022 = vpop.f32.mrb[0].mxu0
        %4023 = vmatprep.mubr.bf16.mxu0 0
        %4024 = vmatmul.mubr.bf16.gmra.mrb[0].mxu0 %v3836
        %v4025 = vpop.f32.mrb[0].mxu0
        %v4026 = vadd.f32 0.0, %v4025
        %v4027 = vpop.f32.mrb[0].mxu0
        %v4028 = vpop.f32.mrb[0].mxu0
        %v4029 = vadd.f32 0.0, %v4028
        %v4030 = vpop.f32.mrb[0].mxu0
        %4031 = vmatprep.mubr.bf16.mxu0 0
        %4032 = vmatmul.mubr.bf16.gmra.mrb[0].mxu0 %v3839
        %v4033 = vpop.f32.mrb[0].mxu0
        %v4034 = vadd.f32 0.0, %v4033
        %v4035 = vpop.f32.mrb[0].mxu0
        %v4036 = vpop.f32.mrb[0].mxu0
        %v4037 = vadd.f32 0.0, %v4036
        %v4038 = vpop.f32.mrb[0].mxu0
        %4039 = vmatprep.mubr.bf16.mxu0 0
        %4040 = vmatmul.mubr.bf16.gmra.mrb[0].mxu0 %v3842
        %v4041 = vpop.f32.mrb[0].mxu0
        %v4042 = vadd.f32 0.0, %v4041
        %v4043 = vpop.f32.mrb[0].mxu0
        %v4044 = vpop.f32.mrb[0].mxu0
        %v4045 = vadd.f32 0.0, %v4044
        %v4046 = vpop.f32.mrb[0].mxu0
        %4047 = vmatprep.mubr.bf16.mxu0 0
        %4048 = vmatmul.mubr.bf16.gmra.mrb[0].mxu0 %v3845
        %v4049 = vpop.f32.mrb[0].mxu0
        %v4050 = vadd.f32 0.0, %v4049
        %v4051 = vpop.f32.mrb[0].mxu0
        %v4052 = vpop.f32.mrb[0].mxu0
        %v4053 = vadd.f32 0.0, %v4052
        %v4054 = vpop.f32.mrb[0].mxu0
        %4055 = vmatprep.mubr.bf16.mxu0 0
        %4056 = vmatmul.mubr.bf16.gmra.mrb[0].mxu0 %v3848
        %v4057 = vpop.f32.mrb[0].mxu0
        %v4058 = vadd.f32 0.0, %v4057
        %v4059 = vpop.f32.mrb[0].mxu0
        %v4060 = vpop.f32.mrb[0].mxu0
        %v4061 = vadd.f32 0.0, %v4060
        %v4062 = vpop.f32.mrb[0].mxu0
        %4063 = vmatprep.mubr.bf16.mxu0 0
        %4064 = vmatmul.mubr.bf16.gmra.mrb[0].mxu0 %v3851
        %v4065 = vpop.f32.mrb[0].mxu0
        %v4066 = vadd.f32 0.0, %v4065
        %v4067 = vpop.f32.mrb[0].mxu0
        %v4068 = vpop.f32.mrb[0].mxu0
        %v4069 = vadd.f32 0.0, %v4068
        %v4070 = vpop.f32.mrb[0].mxu0
        %4071 = vmatprep.mubr.bf16.mxu0 0
        %4072 = vmatmul.mubr.bf16.gmra.mrb[0].mxu0 %v3854
        %v4073 = vpop.f32.mrb[0].mxu0
        %v4074 = vadd.f32 0.0, %v4073
        %v4075 = vpop.f32.mrb[0].mxu0
        %v4076 = vpop.f32.mrb[0].mxu0
        %v4077 = vadd.f32 0.0, %v4076
        %v4078 = vpop.f32.mrb[0].mxu0
        %4079 = vmatprep.mubr.bf16.mxu0 0
        %4080 = vmatmul.mubr.bf16.gmra.mrb[0].mxu0 %v3857
        %v4081 = vpop.f32.mrb[0].mxu0
        %v4082 = vadd.f32 0.0, %v4081
        %v4083 = vpop.f32.mrb[0].mxu0
        %v4084 = vpop.f32.mrb[0].mxu0
        %v4085 = vadd.f32 0.0, %v4084
        %v4086 = vpop.f32.mrb[0].mxu0
        %4087 = vmatprep.mubr.bf16.mxu0 0
        %4088 = vmatmul.mubr.bf16.gmra.mrb[0].mxu0 %v3860
        %v4089 = vpop.f32.mrb[0].mxu0
        %v4090 = vadd.f32 0.0, %v4089
        %v4091 = vpop.f32.mrb[0].mxu0
        %v4092 = vpop.f32.mrb[0].mxu0
        %v4093 = vadd.f32 0.0, %v4092
        %v4094 = vpop.f32.mrb[0].mxu0
        %4095 = vmatprep.mubr.bf16.mxu0 0
        %4096 = vmatmul.mubr.bf16.gmra.mrb[0].mxu0 %v3863
        %v4097 = vpop.f32.mrb[0].mxu0
        %v4098 = vadd.f32 0.0, %v4097
        %v4099 = vpop.f32.mrb[0].mxu0
        %v4100 = vpop.f32.mrb[0].mxu0
        %v4101 = vadd.f32 0.0, %v4100
        %v4102 = vpop.f32.mrb[0].mxu0
        %4103 = vmatprep.mubr.bf16.mxu0 0
        %4104 = vmatmul.mubr.bf16.gmra.mrb[0].mxu0 %v3866
        %v4105 = vpop.f32.mrb[0].mxu0
        %v4106 = vadd.f32 0.0, %v4105
        %v4107 = vpop.f32.mrb[0].mxu0
        %v4108 = vpop.f32.mrb[0].mxu0
        %v4109 = vadd.f32 0.0, %v4108
        %v4110 = vpop.f32.mrb[0].mxu0
        %4111 = vmatprep.mubr.bf16.mxu0 0
        %4112 = vmatmul.mubr.bf16.gmra.mrb[0].mxu0 %v3869
        %v4113 = vpop.f32.mrb[0].mxu0
        %v4114 = vadd.f32 0.0, %v4113
        %v4115 = vpop.f32.mrb[0].mxu0
        %v4116 = vpop.f32.mrb[0].mxu0
        %v4117 = vadd.f32 0.0, %v4116
        %v4118 = vpop.f32.mrb[0].mxu0
        %4119 = vmatprep.mubr.bf16.mxu0 0
        %4120 = vmatmul.mubr.bf16.gmra.mrb[0].mxu0 %v3872
        %v4121 = vpop.f32.mrb[0].mxu0
        %v4122 = vadd.f32 0.0, %v4121
        %v4123 = vpop.f32.mrb[0].mxu0
        %v4124 = vpop.f32.mrb[0].mxu0
        %v4125 = vadd.f32 0.0, %v4124
        %v4126 = vpop.f32.mrb[0].mxu0
        %4127 = vmatprep.mubr.bf16.mxu0 0
        %4128 = vmatmul.mubr.bf16.gmra.mrb[0].mxu0 %v3875
        %v4129 = vpop.f32.mrb[0].mxu0
        %v4130 = vadd.f32 0.0, %v4129
        %v4131 = vpop.f32.mrb[0].mxu0
        %v4132 = vpop.f32.mrb[0].mxu0
        %v4133 = vadd.f32 0.0, %v4132
        %v4134 = vpop.f32.mrb[0].mxu0
        %4135 = vmatprep.mubr.bf16.mxu0 0
        %4136 = vmatmul.mubr.bf16.gmra.mrb[0].mxu0 %v3878
        %v4137 = vpop.f32.mrb[0].mxu0
        %v4138 = vadd.f32 0.0, %v4137
        %v4139 = vpop.f32.mrb[0].mxu0
        %v4140 = vpop.f32.mrb[0].mxu0
        %v4141 = vadd.f32 0.0, %v4140
        %v4142 = vpop.f32.mrb[0].mxu0
        %4143 = vmatprep.mubr.bf16.mxu0 0
        %4144 = vmatmul.mubr.bf16.gmra.mrb[0].mxu0 %v3881
        %v4145 = vpop.f32.mrb[0].mxu0
        %v4146 = vadd.f32 0.0, %v4145
        %v4147 = vpop.f32.mrb[0].mxu0
        %v4148 = vpop.f32.mrb[0].mxu0
        %v4149 = vadd.f32 0.0, %v4148
        %v4150 = vpop.f32.mrb[0].mxu0
        %4151 = vmatprep.mubr.bf16.mxu0 0
        %4152 = vmatmul.mubr.bf16.gmra.mrb[0].mxu0 %v3884
        %v4153 = vpop.f32.mrb[0].mxu0
        %v4154 = vadd.f32 0.0, %v4153
        %v4155 = vpop.f32.mrb[0].mxu0
        %v4156 = vpop.f32.mrb[0].mxu0
        %v4157 = vadd.f32 0.0, %v4156
        %v4158 = vpop.f32.mrb[0].mxu0
        %4159 = vmatprep.mubr.bf16.mxu0 0
        %4160 = vmatmul.mubr.bf16.gmra.mrb[0].mxu0 %v3887
        %v4161 = vpop.f32.mrb[0].mxu0
        %v4162 = vadd.f32 0.0, %v4161
        %v4163 = vpop.f32.mrb[0].mxu0
        %v4164 = vpop.f32.mrb[0].mxu0
        %v4165 = vadd.f32 0.0, %v4164
        %v4166 = vpop.f32.mrb[0].mxu0
        %4167 = vmatprep.mubr.bf16.mxu0 0
        %4168 = vmatmul.mubr.bf16.gmra.mrb[0].mxu0 %v3890
        %v4169 = vpop.f32.mrb[0].mxu0
        %v4170 = vadd.f32 0.0, %v4169
        %v4171 = vpop.f32.mrb[0].mxu0
        %v4172 = vpop.f32.mrb[0].mxu0
        %v4173 = vadd.f32 0.0, %v4172
        %v4174 = vpop.f32.mrb[0].mxu0
        %4175 = vmatprep.mubr.bf16.mxu0 0
        %4176 = vmatmul.mubr.bf16.gmra.mrb[0].mxu0 %v3893
        %v4177 = vpop.f32.mrb[0].mxu0
        %v4178 = vadd.f32 0.0, %v4177
        %v4179 = vpop.f32.mrb[0].mxu0
        %v4180 = vpop.f32.mrb[0].mxu0
        %v4181 = vadd.f32 0.0, %v4180
        %v4182 = vpop.f32.mrb[0].mxu0
        %4183 = vdwg.mxu0
        %v4192 = vunpack.c.l.b16 %v3180
        %v4193 = vunpack.c.l.b16 %v3181
        %v4194 = vunpack.c.l.b16 %v3182
        %v4195 = vunpack.c.l.b16 %v3183
        %v4196 = vunpack.c.l.b16 %v3184
        %v4197 = vunpack.c.l.b16 %v3185
        %v4198 = vunpack.c.l.b16 %v3186
        %v4199 = vunpack.c.l.b16 %v3187
        %v4200 = vpack.c.b16 %v4193, %v4192
        %v4201 = vpack.c.b16 %v4195, %v4194
        %v4202 = vpack.c.b16 %v4197, %v4196
        %v4203 = vpack.c.b16 %v4199, %v4198
        %v4209 = vsel %vm705, %v3148, 0
        %v4212 = vsel %vm705, %v3149, 0
        %v4215 = vsel %vm705, %v3150, 0
        %v4218 = vsel %vm705, %v3151, 0
        %v4221 = vsel %vm705, %v3152, 0
        %v4224 = vsel %vm705, %v3153, 0
        %v4227 = vsel %vm705, %v3154, 0
        %v4230 = vsel %vm705, %v3155, 0
        %v4233 = vsel %vm705, %v3156, 0
        %v4236 = vsel %vm705, %v3157, 0
        %v4239 = vsel %vm705, %v3158, 0
        %v4242 = vsel %vm705, %v3159, 0
        %v4245 = vsel %vm705, %v3160, 0
        %v4248 = vsel %vm705, %v3161, 0
        %v4251 = vsel %vm705, %v3162, 0
        %v4254 = vsel %vm705, %v3163, 0
        %v4257 = vsel %vm705, %v3164, 0
        %v4260 = vsel %vm705, %v3165, 0
        %v4263 = vsel %vm705, %v3166, 0
        %v4266 = vsel %vm705, %v3167, 0
        %v4269 = vsel %vm705, %v3168, 0
        %v4272 = vsel %vm705, %v3169, 0
        %v4275 = vsel %vm705, %v3170, 0
        %v4278 = vsel %vm705, %v3171, 0
        %v4281 = vsel %vm705, %v3172, 0
        %v4284 = vsel %vm705, %v3173, 0
        %v4287 = vsel %vm705, %v3174, 0
        %v4290 = vsel %vm705, %v3175, 0
        %v4293 = vsel %vm705, %v3176, 0
        %v4296 = vsel %vm705, %v3177, 0
        %v4299 = vsel %vm705, %v3178, 0
        %v4302 = vsel %vm705, %v3179, 0
        %4304 = vmatprep.subr.bf16.mxu0 0
        %4305 = vmatpush1.bf16.msra.mxu0 %v4200
        %4306 = vmatprep.subr.bf16.mxu0 0
        %4307 = vmatpush1.bf16.msra.mxu0 %v4201
        %4308 = vmatprep.subr.bf16.mxu0 0
        %4309 = vmatpush1.bf16.msra.mxu0 %v4202
        %4310 = vmatprep.subr.bf16.mxu0 0
        %4311 = vmatpush1.bf16.msra.mxu0 %v4203
        %4312 = vmatprep.subr.bf16.mxu0 0
        %4313 = vmatpush1.bf16.msra.mxu0 0
        %4314 = vmatprep.subr.bf16.mxu0 0
        %4315 = vmatpush1.bf16.msra.mxu0 0
        %4316 = vmatprep.subr.bf16.mxu0 0
        %4317 = vmatpush1.bf16.msra.mxu0 0
        %4318 = vmatprep.subr.bf16.mxu0 0
        %4319 = vmatpush1.bf16.msra.mxu0 0
        %4320 = vmatprep.subr.bf16.mxu0 0
        %4321 = vmatpush1.bf16.msra.mxu0 0
        %4322 = vmatprep.subr.bf16.mxu0 0
        %4323 = vmatpush1.bf16.msra.mxu0 0
        %4324 = vmatprep.subr.bf16.mxu0 0
        %4325 = vmatpush1.bf16.msra.mxu0 0
        %4326 = vmatprep.subr.bf16.mxu0 0
        %4327 = vmatpush1.bf16.msra.mxu0 0
        %4328 = vmatprep.subr.bf16.mxu0 0
        %4329 = vmatpush1.bf16.msra.mxu0 0
        %4330 = vmatprep.subr.bf16.mxu0 0
        %4331 = vmatpush1.bf16.msra.mxu0 0
        %4332 = vmatprep.subr.bf16.mxu0 0
        %4333 = vmatpush1.bf16.msra.mxu0 0
        %4334 = vmatprep.subr.bf16.mxu0 0
        %4335 = vmatpush1.bf16.msra.mxu0 0
        %4336 = vmatprep.mubr.bf16.mxu0 0
        %4337 = vmatmul.mubr.bf16.gmra.mrb[0].mxu0 %v4209
        %v4338 = vpop.f32.mrb[0].mxu0
        %v4339 = vadd.f32 %v3930, %v4338
        %v4340 = vpop.f32.mrb[0].mxu0
        %v4341 = vpop.f32.mrb[0].mxu0
        %v4342 = vadd.f32 %v3933, %v4341
        %v4343 = vpop.f32.mrb[0].mxu0
        %4344 = vmatprep.mubr.bf16.mxu0 0
        %4345 = vmatmul.mubr.bf16.gmra.mrb[0].mxu0 %v4212
        %v4346 = vpop.f32.mrb[0].mxu0
        %v4347 = vadd.f32 %v3938, %v4346
        %v4348 = vpop.f32.mrb[0].mxu0
        %v4349 = vpop.f32.mrb[0].mxu0
        %v4350 = vadd.f32 %v3941, %v4349
        %v4351 = vpop.f32.mrb[0].mxu0
        %4352 = vmatprep.mubr.bf16.mxu0 0
        %4353 = vmatmul.mubr.bf16.gmra.mrb[0].mxu0 %v4215
        %v4354 = vpop.f32.mrb[0].mxu0
        %v4355 = vadd.f32 %v3946, %v4354
        %v4356 = vpop.f32.mrb[0].mxu0
        %v4357 = vpop.f32.mrb[0].mxu0
        %v4358 = vadd.f32 %v3949, %v4357
        %v4359 = vpop.f32.mrb[0].mxu0
        %4360 = vmatprep.mubr.bf16.mxu0 0
        %4361 = vmatmul.mubr.bf16.gmra.mrb[0].mxu0 %v4218
        %v4362 = vpop.f32.mrb[0].mxu0
        %v4363 = vadd.f32 %v3954, %v4362
        %v4364 = vpop.f32.mrb[0].mxu0
        %v4365 = vpop.f32.mrb[0].mxu0
        %v4366 = vadd.f32 %v3957, %v4365
        %v4367 = vpop.f32.mrb[0].mxu0
        %4368 = vmatprep.mubr.bf16.mxu0 0
        %4369 = vmatmul.mubr.bf16.gmra.mrb[0].mxu0 %v4221
        %v4370 = vpop.f32.mrb[0].mxu0
        %v4371 = vadd.f32 %v3962, %v4370
        %v4372 = vpop.f32.mrb[0].mxu0
        %v4373 = vpop.f32.mrb[0].mxu0
        %v4374 = vadd.f32 %v3965, %v4373
        %v4375 = vpop.f32.mrb[0].mxu0
        %4376 = vmatprep.mubr.bf16.mxu0 0
        %4377 = vmatmul.mubr.bf16.gmra.mrb[0].mxu0 %v4224
        %v4378 = vpop.f32.mrb[0].mxu0
        %v4379 = vadd.f32 %v3970, %v4378
        %v4380 = vpop.f32.mrb[0].mxu0
        %v4381 = vpop.f32.mrb[0].mxu0
        %v4382 = vadd.f32 %v3973, %v4381
        %v4383 = vpop.f32.mrb[0].mxu0
        %4384 = vmatprep.mubr.bf16.mxu0 0
        %4385 = vmatmul.mubr.bf16.gmra.mrb[0].mxu0 %v4227
        %v4386 = vpop.f32.mrb[0].mxu0
        %v4387 = vadd.f32 %v3978, %v4386
        %v4388 = vpop.f32.mrb[0].mxu0
        %v4389 = vpop.f32.mrb[0].mxu0
        %v4390 = vadd.f32 %v3981, %v4389
        %v4391 = vpop.f32.mrb[0].mxu0
        %4392 = vmatprep.mubr.bf16.mxu0 0
        %4393 = vmatmul.mubr.bf16.gmra.mrb[0].mxu0 %v4230
        %v4394 = vpop.f32.mrb[0].mxu0
        %v4395 = vadd.f32 %v3986, %v4394
        %v4396 = vpop.f32.mrb[0].mxu0
        %v4397 = vpop.f32.mrb[0].mxu0
        %v4398 = vadd.f32 %v3989, %v4397
        %v4399 = vpop.f32.mrb[0].mxu0
        %4400 = vmatprep.mubr.bf16.mxu0 0
        %4401 = vmatmul.mubr.bf16.gmra.mrb[0].mxu0 %v4233
        %v4402 = vpop.f32.mrb[0].mxu0
        %v4403 = vadd.f32 %v3994, %v4402
        %v4404 = vpop.f32.mrb[0].mxu0
        %v4405 = vpop.f32.mrb[0].mxu0
        %v4406 = vadd.f32 %v3997, %v4405
        %v4407 = vpop.f32.mrb[0].mxu0
        %4408 = vmatprep.mubr.bf16.mxu0 0
        %4409 = vmatmul.mubr.bf16.gmra.mrb[0].mxu0 %v4236
        %v4410 = vpop.f32.mrb[0].mxu0
        %v4411 = vadd.f32 %v4002, %v4410
        %v4412 = vpop.f32.mrb[0].mxu0
        %v4413 = vpop.f32.mrb[0].mxu0
        %v4414 = vadd.f32 %v4005, %v4413
        %v4415 = vpop.f32.mrb[0].mxu0
        %4416 = vmatprep.mubr.bf16.mxu0 0
        %4417 = vmatmul.mubr.bf16.gmra.mrb[0].mxu0 %v4239
        %v4418 = vpop.f32.mrb[0].mxu0
        %v4419 = vadd.f32 %v4010, %v4418
        %v4420 = vpop.f32.mrb[0].mxu0
        %v4421 = vpop.f32.mrb[0].mxu0
        %v4422 = vadd.f32 %v4013, %v4421
        %v4423 = vpop.f32.mrb[0].mxu0
        %4424 = vmatprep.mubr.bf16.mxu0 0
        %4425 = vmatmul.mubr.bf16.gmra.mrb[0].mxu0 %v4242
        %v4426 = vpop.f32.mrb[0].mxu0
        %v4427 = vadd.f32 %v4018, %v4426
        %v4428 = vpop.f32.mrb[0].mxu0
        %v4429 = vpop.f32.mrb[0].mxu0
        %v4430 = vadd.f32 %v4021, %v4429
        %v4431 = vpop.f32.mrb[0].mxu0
        %4432 = vmatprep.mubr.bf16.mxu0 0
        %4433 = vmatmul.mubr.bf16.gmra.mrb[0].mxu0 %v4245
        %v4434 = vpop.f32.mrb[0].mxu0
        %v4435 = vadd.f32 %v4026, %v4434
        %v4436 = vpop.f32.mrb[0].mxu0
        %v4437 = vpop.f32.mrb[0].mxu0
        %v4438 = vadd.f32 %v4029, %v4437
        %v4439 = vpop.f32.mrb[0].mxu0
        %4440 = vmatprep.mubr.bf16.mxu0 0
        %4441 = vmatmul.mubr.bf16.gmra.mrb[0].mxu0 %v4248
        %v4442 = vpop.f32.mrb[0].mxu0
        %v4443 = vadd.f32 %v4034, %v4442
        %v4444 = vpop.f32.mrb[0].mxu0
        %v4445 = vpop.f32.mrb[0].mxu0
        %v4446 = vadd.f32 %v4037, %v4445
        %v4447 = vpop.f32.mrb[0].mxu0
        %4448 = vmatprep.mubr.bf16.mxu0 0
        %4449 = vmatmul.mubr.bf16.gmra.mrb[0].mxu0 %v4251
        %v4450 = vpop.f32.mrb[0].mxu0
        %v4451 = vadd.f32 %v4042, %v4450
        %v4452 = vpop.f32.mrb[0].mxu0
        %v4453 = vpop.f32.mrb[0].mxu0
        %v4454 = vadd.f32 %v4045, %v4453
        %v4455 = vpop.f32.mrb[0].mxu0
        %4456 = vmatprep.mubr.bf16.mxu0 0
        %4457 = vmatmul.mubr.bf16.gmra.mrb[0].mxu0 %v4254
        %v4458 = vpop.f32.mrb[0].mxu0
        %v4459 = vadd.f32 %v4050, %v4458
        %v4460 = vpop.f32.mrb[0].mxu0
        %v4461 = vpop.f32.mrb[0].mxu0
        %v4462 = vadd.f32 %v4053, %v4461
        %v4463 = vpop.f32.mrb[0].mxu0
        %4464 = vmatprep.mubr.bf16.mxu0 0
        %4465 = vmatmul.mubr.bf16.gmra.mrb[0].mxu0 %v4257
        %v4466 = vpop.f32.mrb[0].mxu0
        %v4467 = vadd.f32 %v4058, %v4466
        %v4468 = vpop.f32.mrb[0].mxu0
        %v4469 = vpop.f32.mrb[0].mxu0
        %v4470 = vadd.f32 %v4061, %v4469
        %v4471 = vpop.f32.mrb[0].mxu0
        %4472 = vmatprep.mubr.bf16.mxu0 0
        %4473 = vmatmul.mubr.bf16.gmra.mrb[0].mxu0 %v4260
        %v4474 = vpop.f32.mrb[0].mxu0
        %v4475 = vadd.f32 %v4066, %v4474
        %v4476 = vpop.f32.mrb[0].mxu0
        %v4477 = vpop.f32.mrb[0].mxu0
        %v4478 = vadd.f32 %v4069, %v4477
        %v4479 = vpop.f32.mrb[0].mxu0
        %4480 = vmatprep.mubr.bf16.mxu0 0
        %4481 = vmatmul.mubr.bf16.gmra.mrb[0].mxu0 %v4263
        %v4482 = vpop.f32.mrb[0].mxu0
        %v4483 = vadd.f32 %v4074, %v4482
        %v4484 = vpop.f32.mrb[0].mxu0
        %v4485 = vpop.f32.mrb[0].mxu0
        %v4486 = vadd.f32 %v4077, %v4485
        %v4487 = vpop.f32.mrb[0].mxu0
        %4488 = vmatprep.mubr.bf16.mxu0 0
        %4489 = vmatmul.mubr.bf16.gmra.mrb[0].mxu0 %v4266
        %v4490 = vpop.f32.mrb[0].mxu0
        %v4491 = vadd.f32 %v4082, %v4490
        %v4492 = vpop.f32.mrb[0].mxu0
        %v4493 = vpop.f32.mrb[0].mxu0
        %v4494 = vadd.f32 %v4085, %v4493
        %v4495 = vpop.f32.mrb[0].mxu0
        %4496 = vmatprep.mubr.bf16.mxu0 0
        %4497 = vmatmul.mubr.bf16.gmra.mrb[0].mxu0 %v4269
        %v4498 = vpop.f32.mrb[0].mxu0
        %v4499 = vadd.f32 %v4090, %v4498
        %v4500 = vpop.f32.mrb[0].mxu0
        %v4501 = vpop.f32.mrb[0].mxu0
        %v4502 = vadd.f32 %v4093, %v4501
        %v4503 = vpop.f32.mrb[0].mxu0
        %4504 = vmatprep.mubr.bf16.mxu0 0
        %4505 = vmatmul.mubr.bf16.gmra.mrb[0].mxu0 %v4272
        %v4506 = vpop.f32.mrb[0].mxu0
        %v4507 = vadd.f32 %v4098, %v4506
        %v4508 = vpop.f32.mrb[0].mxu0
        %v4509 = vpop.f32.mrb[0].mxu0
        %v4510 = vadd.f32 %v4101, %v4509
        %v4511 = vpop.f32.mrb[0].mxu0
        %4512 = vmatprep.mubr.bf16.mxu0 0
        %4513 = vmatmul.mubr.bf16.gmra.mrb[0].mxu0 %v4275
        %v4514 = vpop.f32.mrb[0].mxu0
        %v4515 = vadd.f32 %v4106, %v4514
        %v4516 = vpop.f32.mrb[0].mxu0
        %v4517 = vpop.f32.mrb[0].mxu0
        %v4518 = vadd.f32 %v4109, %v4517
        %v4519 = vpop.f32.mrb[0].mxu0
        %4520 = vmatprep.mubr.bf16.mxu0 0
        %4521 = vmatmul.mubr.bf16.gmra.mrb[0].mxu0 %v4278
        %v4522 = vpop.f32.mrb[0].mxu0
        %v4523 = vadd.f32 %v4114, %v4522
        %v4524 = vpop.f32.mrb[0].mxu0
        %v4525 = vpop.f32.mrb[0].mxu0
        %v4526 = vadd.f32 %v4117, %v4525
        %v4527 = vpop.f32.mrb[0].mxu0
        %4528 = vmatprep.mubr.bf16.mxu0 0
        %4529 = vmatmul.mubr.bf16.gmra.mrb[0].mxu0 %v4281
        %v4530 = vpop.f32.mrb[0].mxu0
        %v4531 = vadd.f32 %v4122, %v4530
        %v4532 = vpop.f32.mrb[0].mxu0
        %v4533 = vpop.f32.mrb[0].mxu0
        %v4534 = vadd.f32 %v4125, %v4533
        %v4535 = vpop.f32.mrb[0].mxu0
        %4536 = vmatprep.mubr.bf16.mxu0 0
        %4537 = vmatmul.mubr.bf16.gmra.mrb[0].mxu0 %v4284
        %v4538 = vpop.f32.mrb[0].mxu0
        %v4539 = vadd.f32 %v4130, %v4538
        %v4540 = vpop.f32.mrb[0].mxu0
        %v4541 = vpop.f32.mrb[0].mxu0
        %v4542 = vadd.f32 %v4133, %v4541
        %v4543 = vpop.f32.mrb[0].mxu0
        %4544 = vmatprep.mubr.bf16.mxu0 0
        %4545 = vmatmul.mubr.bf16.gmra.mrb[0].mxu0 %v4287
        %v4546 = vpop.f32.mrb[0].mxu0
        %v4547 = vadd.f32 %v4138, %v4546
        %v4548 = vpop.f32.mrb[0].mxu0
        %v4549 = vpop.f32.mrb[0].mxu0
        %v4550 = vadd.f32 %v4141, %v4549
        %v4551 = vpop.f32.mrb[0].mxu0
        %4552 = vmatprep.mubr.bf16.mxu0 0
        %4553 = vmatmul.mubr.bf16.gmra.mrb[0].mxu0 %v4290
        %v4554 = vpop.f32.mrb[0].mxu0
        %v4555 = vadd.f32 %v4146, %v4554
        %v4556 = vpop.f32.mrb[0].mxu0
        %v4557 = vpop.f32.mrb[0].mxu0
        %v4558 = vadd.f32 %v4149, %v4557
        %v4559 = vpop.f32.mrb[0].mxu0
        %4560 = vmatprep.mubr.bf16.mxu0 0
        %4561 = vmatmul.mubr.bf16.gmra.mrb[0].mxu0 %v4293
        %v4562 = vpop.f32.mrb[0].mxu0
        %v4563 = vadd.f32 %v4154, %v4562
        %v4564 = vpop.f32.mrb[0].mxu0
        %v4565 = vpop.f32.mrb[0].mxu0
        %v4566 = vadd.f32 %v4157, %v4565
        %v4567 = vpop.f32.mrb[0].mxu0
        %4568 = vmatprep.mubr.bf16.mxu0 0
        %4569 = vmatmul.mubr.bf16.gmra.mrb[0].mxu0 %v4296
        %v4570 = vpop.f32.mrb[0].mxu0
        %v4571 = vadd.f32 %v4162, %v4570
        %v4572 = vpop.f32.mrb[0].mxu0
        %v4573 = vpop.f32.mrb[0].mxu0
        %v4574 = vadd.f32 %v4165, %v4573
        %v4575 = vpop.f32.mrb[0].mxu0
        %4576 = vmatprep.mubr.bf16.mxu0 0
        %4577 = vmatmul.mubr.bf16.gmra.mrb[0].mxu0 %v4299
        %v4578 = vpop.f32.mrb[0].mxu0
        %v4579 = vadd.f32 %v4170, %v4578
        %v4580 = vpop.f32.mrb[0].mxu0
        %v4581 = vpop.f32.mrb[0].mxu0
        %v4582 = vadd.f32 %v4173, %v4581
        %v4583 = vpop.f32.mrb[0].mxu0
        %4584 = vmatprep.mubr.bf16.mxu0 0
        %4585 = vmatmul.mubr.bf16.gmra.mrb[0].mxu0 %v4302
        %v4586 = vpop.f32.mrb[0].mxu0
        %v4587 = vadd.f32 %v4178, %v4586
        %v4588 = vpop.f32.mrb[0].mxu0
        %v4589 = vpop.f32.mrb[0].mxu0
        %v4590 = vadd.f32 %v4181, %v4589
        %v4591 = vpop.f32.mrb[0].mxu0
        %4592 = vdwg.mxu0
        %s4593 = scalar_lea.vmem %s3, 512
        %v4594 = vld [vmem:[%s4593] sm:$0xf]
        %v4595 = vld [vmem:[%s4593 + $0x4] sm:$0xf]
        %v4596 = vld [vmem:[%s4593 + $0x8] sm:$0xf]
        %v4597 = vld [vmem:[%s4593 + $0xc] sm:$0xf]
        %v4598 = vld [vmem:[%s4593 + $0x10] sm:$0xf]
        %v4599 = vld [vmem:[%s4593 + $0x14] sm:$0xf]
        %v4600 = vld [vmem:[%s4593 + $0x18] sm:$0xf]
        %v4601 = vld [vmem:[%s4593 + $0x1c] sm:$0xf]
        %v4602 = vld [vmem:[%s4593 + $0x20] sm:$0xf]
        %v4603 = vld [vmem:[%s4593 + $0x24] sm:$0xf]
        %v4604 = vld [vmem:[%s4593 + $0x28] sm:$0xf]
        %v4605 = vld [vmem:[%s4593 + $0x2c] sm:$0xf]
        %v4606 = vld [vmem:[%s4593 + $0x30] sm:$0xf]
        %v4607 = vld [vmem:[%s4593 + $0x34] sm:$0xf]
        %v4608 = vld [vmem:[%s4593 + $0x38] sm:$0xf]
        %v4609 = vld [vmem:[%s4593 + $0x3c] sm:$0xf]
        %v4610 = vld [vmem:[%s4593 + $0x40] sm:$0xf]
        %v4611 = vld [vmem:[%s4593 + $0x44] sm:$0xf]
        %v4612 = vld [vmem:[%s4593 + $0x48] sm:$0xf]
        %v4613 = vld [vmem:[%s4593 + $0x4c] sm:$0xf]
        %v4614 = vld [vmem:[%s4593 + $0x50] sm:$0xf]
        %v4615 = vld [vmem:[%s4593 + $0x54] sm:$0xf]
        %v4616 = vld [vmem:[%s4593 + $0x58] sm:$0xf]
        %v4617 = vld [vmem:[%s4593 + $0x5c] sm:$0xf]
        %v4618 = vld [vmem:[%s4593 + $0x60] sm:$0xf]
        %v4619 = vld [vmem:[%s4593 + $0x64] sm:$0xf]
        %v4620 = vld [vmem:[%s4593 + $0x68] sm:$0xf]
        %v4621 = vld [vmem:[%s4593 + $0x6c] sm:$0xf]
        %v4622 = vld [vmem:[%s4593 + $0x70] sm:$0xf]
        %v4623 = vld [vmem:[%s4593 + $0x74] sm:$0xf]
        %v4624 = vld [vmem:[%s4593 + $0x78] sm:$0xf]
        %v4625 = vld [vmem:[%s4593 + $0x7c] sm:$0xf]
        %v4626 = vld [vmem:[%s4593 + $0x80] sm:$0xf]
        %v4627 = vld [vmem:[%s4593 + $0x84] sm:$0xf]
        %v4628 = vld [vmem:[%s4593 + $0x88] sm:$0xf]
        %v4629 = vld [vmem:[%s4593 + $0x8c] sm:$0xf]
        %v4630 = vld [vmem:[%s4593 + $0x90] sm:$0xf]
        %v4631 = vld [vmem:[%s4593 + $0x94] sm:$0xf]
        %v4632 = vld [vmem:[%s4593 + $0x98] sm:$0xf]
        %v4633 = vld [vmem:[%s4593 + $0x9c] sm:$0xf]
        %v4634 = vld [vmem:[%s4593 + $0xa0] sm:$0xf]
        %v4635 = vld [vmem:[%s4593 + $0xa4] sm:$0xf]
        %v4636 = vld [vmem:[%s4593 + $0xa8] sm:$0xf]
        %v4637 = vld [vmem:[%s4593 + $0xac] sm:$0xf]
        %v4638 = vld [vmem:[%s4593 + $0xb0] sm:$0xf]
        %v4639 = vld [vmem:[%s4593 + $0xb4] sm:$0xf]
        %v4640 = vld [vmem:[%s4593 + $0xb8] sm:$0xf]
        %v4641 = vld [vmem:[%s4593 + $0xbc] sm:$0xf]
        %v4642 = vld [vmem:[%s4593 + $0xc0] sm:$0xf]
        %v4643 = vld [vmem:[%s4593 + $0xc4] sm:$0xf]
        %v4644 = vld [vmem:[%s4593 + $0xc8] sm:$0xf]
        %v4645 = vld [vmem:[%s4593 + $0xcc] sm:$0xf]
        %v4646 = vld [vmem:[%s4593 + $0xd0] sm:$0xf]
        %v4647 = vld [vmem:[%s4593 + $0xd4] sm:$0xf]
        %v4648 = vld [vmem:[%s4593 + $0xd8] sm:$0xf]
        %v4649 = vld [vmem:[%s4593 + $0xdc] sm:$0xf]
        %v4650 = vld [vmem:[%s4593 + $0xe0] sm:$0xf]
        %v4651 = vld [vmem:[%s4593 + $0xe4] sm:$0xf]
        %v4652 = vld [vmem:[%s4593 + $0xe8] sm:$0xf]
        %v4653 = vld [vmem:[%s4593 + $0xec] sm:$0xf]
        %v4654 = vld [vmem:[%s4593 + $0xf0] sm:$0xf]
        %v4655 = vld [vmem:[%s4593 + $0xf4] sm:$0xf]
        %v4656 = vld [vmem:[%s4593 + $0xf8] sm:$0xf]
        %v4657 = vld [vmem:[%s4593 + $0xfc] sm:$0xf]
        %v4722 = vunpack.c.l.b16 %v4594
        %v4723 = vunpack.c.l.b16 %v4595
        %v4724 = vunpack.c.l.b16 %v4596
        %v4725 = vunpack.c.l.b16 %v4597
        %v4726 = vunpack.c.l.b16 %v4598
        %v4727 = vunpack.c.l.b16 %v4599
        %v4728 = vunpack.c.l.b16 %v4600
        %v4729 = vunpack.c.l.b16 %v4601
        %v4730 = vunpack.c.l.b16 %v4602
        %v4731 = vunpack.c.l.b16 %v4603
        %v4732 = vunpack.c.l.b16 %v4604
        %v4733 = vunpack.c.l.b16 %v4605
        %v4734 = vunpack.c.l.b16 %v4606
        %v4735 = vunpack.c.l.b16 %v4607
        %v4736 = vunpack.c.l.b16 %v4608
        %v4737 = vunpack.c.l.b16 %v4609
        %v4738 = vunpack.c.l.b16 %v4610
        %v4739 = vunpack.c.l.b16 %v4611
        %v4740 = vunpack.c.l.b16 %v4612
        %v4741 = vunpack.c.l.b16 %v4613
        %v4742 = vunpack.c.l.b16 %v4614
        %v4743 = vunpack.c.l.b16 %v4615
        %v4744 = vunpack.c.l.b16 %v4616
        %v4745 = vunpack.c.l.b16 %v4617
        %v4746 = vunpack.c.l.b16 %v4618
        %v4747 = vunpack.c.l.b16 %v4619
        %v4748 = vunpack.c.l.b16 %v4620
        %v4749 = vunpack.c.l.b16 %v4621
        %v4750 = vunpack.c.l.b16 %v4622
        %v4751 = vunpack.c.l.b16 %v4623
        %v4752 = vunpack.c.l.b16 %v4624
        %v4753 = vunpack.c.l.b16 %v4625
        %v4754 = vunpack.c.l.b16 %v4626
        %v4755 = vunpack.c.l.b16 %v4627
        %v4756 = vunpack.c.l.b16 %v4628
        %v4757 = vunpack.c.l.b16 %v4629
        %v4758 = vunpack.c.l.b16 %v4630
        %v4759 = vunpack.c.l.b16 %v4631
        %v4760 = vunpack.c.l.b16 %v4632
        %v4761 = vunpack.c.l.b16 %v4633
        %v4762 = vunpack.c.l.b16 %v4634
        %v4763 = vunpack.c.l.b16 %v4635
        %v4764 = vunpack.c.l.b16 %v4636
        %v4765 = vunpack.c.l.b16 %v4637
        %v4766 = vunpack.c.l.b16 %v4638
        %v4767 = vunpack.c.l.b16 %v4639
        %v4768 = vunpack.c.l.b16 %v4640
        %v4769 = vunpack.c.l.b16 %v4641
        %v4770 = vunpack.c.l.b16 %v4642
        %v4771 = vunpack.c.l.b16 %v4643
        %v4772 = vunpack.c.l.b16 %v4644
        %v4773 = vunpack.c.l.b16 %v4645
        %v4774 = vunpack.c.l.b16 %v4646
        %v4775 = vunpack.c.l.b16 %v4647
        %v4776 = vunpack.c.l.b16 %v4648
        %v4777 = vunpack.c.l.b16 %v4649
        %v4778 = vunpack.c.l.b16 %v4650
        %v4779 = vunpack.c.l.b16 %v4651
        %v4780 = vunpack.c.l.b16 %v4652
        %v4781 = vunpack.c.l.b16 %v4653
        %v4782 = vunpack.c.l.b16 %v4654
        %v4783 = vunpack.c.l.b16 %v4655
        %v4784 = vunpack.c.l.b16 %v4656
        %v4785 = vunpack.c.l.b16 %v4657
        %v4786 = vpack.c.b16 %v4723, %v4722
        %v4787 = vpack.c.b16 %v4725, %v4724
        %v4788 = vpack.c.b16 %v4727, %v4726
        %v4789 = vpack.c.b16 %v4729, %v4728
        %v4790 = vpack.c.b16 %v4731, %v4730
        %v4791 = vpack.c.b16 %v4733, %v4732
        %v4792 = vpack.c.b16 %v4735, %v4734
        %v4793 = vpack.c.b16 %v4737, %v4736
        %v4794 = vpack.c.b16 %v4739, %v4738
        %v4795 = vpack.c.b16 %v4741, %v4740
        %v4796 = vpack.c.b16 %v4743, %v4742
        %v4797 = vpack.c.b16 %v4745, %v4744
        %v4798 = vpack.c.b16 %v4747, %v4746
        %v4799 = vpack.c.b16 %v4749, %v4748
        %v4800 = vpack.c.b16 %v4751, %v4750
        %v4801 = vpack.c.b16 %v4753, %v4752
        %v4802 = vpack.c.b16 %v4755, %v4754
        %v4803 = vpack.c.b16 %v4757, %v4756
        %v4804 = vpack.c.b16 %v4759, %v4758
        %v4805 = vpack.c.b16 %v4761, %v4760
        %v4806 = vpack.c.b16 %v4763, %v4762
        %v4807 = vpack.c.b16 %v4765, %v4764
        %v4808 = vpack.c.b16 %v4767, %v4766
        %v4809 = vpack.c.b16 %v4769, %v4768
        %v4810 = vpack.c.b16 %v4771, %v4770
        %v4811 = vpack.c.b16 %v4773, %v4772
        %v4812 = vpack.c.b16 %v4775, %v4774
        %v4813 = vpack.c.b16 %v4777, %v4776
        %v4814 = vpack.c.b16 %v4779, %v4778
        %v4815 = vpack.c.b16 %v4781, %v4780
        %v4816 = vpack.c.b16 %v4783, %v4782
        %v4817 = vpack.c.b16 %v4785, %v4784
        %4850 = vmatprep.subr.bf16.mxu0 0
        %4851 = vmatpush1.bf16.msra.mxu0 %v2595
        %4852 = vmatprep.subr.bf16.mxu0 0
        %4853 = vmatpush1.bf16.msra.mxu0 %v2596
        %4854 = vmatprep.subr.bf16.mxu0 0
        %4855 = vmatpush1.bf16.msra.mxu0 %v2597
        %4856 = vmatprep.subr.bf16.mxu0 0
        %4857 = vmatpush1.bf16.msra.mxu0 %v2598
        %4858 = vmatprep.subr.bf16.mxu0 0
        %4859 = vmatpush1.bf16.msra.mxu0 %v2599
        %4860 = vmatprep.subr.bf16.mxu0 0
        %4861 = vmatpush1.bf16.msra.mxu0 %v2600
        %4862 = vmatprep.subr.bf16.mxu0 0
        %4863 = vmatpush1.bf16.msra.mxu0 %v2601
        %4864 = vmatprep.subr.bf16.mxu0 0
        %4865 = vmatpush1.bf16.msra.mxu0 %v2602
        %4866 = vmatprep.subr.bf16.mxu0 0
        %4867 = vmatpush1.bf16.msra.mxu0 0
        %4868 = vmatprep.subr.bf16.mxu0 0
        %4869 = vmatpush1.bf16.msra.mxu0 0
        %4870 = vmatprep.subr.bf16.mxu0 0
        %4871 = vmatpush1.bf16.msra.mxu0 0
        %4872 = vmatprep.subr.bf16.mxu0 0
        %4873 = vmatpush1.bf16.msra.mxu0 0
        %4874 = vmatprep.subr.bf16.mxu0 0
        %4875 = vmatpush1.bf16.msra.mxu0 0
        %4876 = vmatprep.subr.bf16.mxu0 0
        %4877 = vmatpush1.bf16.msra.mxu0 0
        %4878 = vmatprep.subr.bf16.mxu0 0
        %4879 = vmatpush1.bf16.msra.mxu0 0
        %4880 = vmatprep.subr.bf16.mxu0 0
        %4881 = vmatpush1.bf16.msra.mxu0 0
        %4882 = vmatprep.mubr.bf16.mxu0 0
        %4883 = vmatmul.mubr.bf16.gmra.mrb[0].mxu0 %v4786
        %v4884 = vpop.f32.mrb[0].mxu0
        %v4885 = vadd.f32 0.0, %v4884
        %v4886 = vpop.f32.mrb[0].mxu0
        %v4887 = vpop.f32.mrb[0].mxu0
        %v4888 = vadd.f32 0.0, %v4887
        %v4889 = vpop.f32.mrb[0].mxu0
        %4890 = vmatprep.mubr.bf16.mxu0 0
        %4891 = vmatmul.mubr.bf16.gmra.mrb[0].mxu0 %v4787
        %v4892 = vpop.f32.mrb[0].mxu0
        %v4893 = vadd.f32 0.0, %v4892
        %v4894 = vpop.f32.mrb[0].mxu0
        %v4895 = vpop.f32.mrb[0].mxu0
        %v4896 = vadd.f32 0.0, %v4895
        %v4897 = vpop.f32.mrb[0].mxu0
        %4898 = vmatprep.mubr.bf16.mxu0 0
        %4899 = vmatmul.mubr.bf16.gmra.mrb[0].mxu0 %v4788
        %v4900 = vpop.f32.mrb[0].mxu0
        %v4901 = vadd.f32 0.0, %v4900
        %v4902 = vpop.f32.mrb[0].mxu0
        %v4903 = vpop.f32.mrb[0].mxu0
        %v4904 = vadd.f32 0.0, %v4903
        %v4905 = vpop.f32.mrb[0].mxu0
        %4906 = vmatprep.mubr.bf16.mxu0 0
        %4907 = vmatmul.mubr.bf16.gmra.mrb[0].mxu0 %v4789
        %v4908 = vpop.f32.mrb[0].mxu0
        %v4909 = vadd.f32 0.0, %v4908
        %v4910 = vpop.f32.mrb[0].mxu0
        %v4911 = vpop.f32.mrb[0].mxu0
        %v4912 = vadd.f32 0.0, %v4911
        %v4913 = vpop.f32.mrb[0].mxu0
        %4914 = vmatprep.mubr.bf16.mxu0 0
        %4915 = vmatmul.mubr.bf16.gmra.mrb[0].mxu0 %v4790
        %v4916 = vpop.f32.mrb[0].mxu0
        %v4917 = vadd.f32 0.0, %v4916
        %v4918 = vpop.f32.mrb[0].mxu0
        %v4919 = vpop.f32.mrb[0].mxu0
        %v4920 = vadd.f32 0.0, %v4919
        %v4921 = vpop.f32.mrb[0].mxu0
        %4922 = vmatprep.mubr.bf16.mxu0 0
        %4923 = vmatmul.mubr.bf16.gmra.mrb[0].mxu0 %v4791
        %v4924 = vpop.f32.mrb[0].mxu0
        %v4925 = vadd.f32 0.0, %v4924
        %v4926 = vpop.f32.mrb[0].mxu0
        %v4927 = vpop.f32.mrb[0].mxu0
        %v4928 = vadd.f32 0.0, %v4927
        %v4929 = vpop.f32.mrb[0].mxu0
        %4930 = vmatprep.mubr.bf16.mxu0 0
        %4931 = vmatmul.mubr.bf16.gmra.mrb[0].mxu0 %v4792
        %v4932 = vpop.f32.mrb[0].mxu0
        %v4933 = vadd.f32 0.0, %v4932
        %v4934 = vpop.f32.mrb[0].mxu0
        %v4935 = vpop.f32.mrb[0].mxu0
        %v4936 = vadd.f32 0.0, %v4935
        %v4937 = vpop.f32.mrb[0].mxu0
        %4938 = vmatprep.mubr.bf16.mxu0 0
        %4939 = vmatmul.mubr.bf16.gmra.mrb[0].mxu0 %v4793
        %v4940 = vpop.f32.mrb[0].mxu0
        %v4941 = vadd.f32 0.0, %v4940
        %v4942 = vpop.f32.mrb[0].mxu0
        %v4943 = vpop.f32.mrb[0].mxu0
        %v4944 = vadd.f32 0.0, %v4943
        %v4945 = vpop.f32.mrb[0].mxu0
        %4946 = vmatprep.mubr.bf16.mxu0 0
        %4947 = vmatmul.mubr.bf16.gmra.mrb[0].mxu0 %v4794
        %v4948 = vpop.f32.mrb[0].mxu0
        %v4949 = vadd.f32 0.0, %v4948
        %v4950 = vpop.f32.mrb[0].mxu0
        %v4951 = vpop.f32.mrb[0].mxu0
        %v4952 = vadd.f32 0.0, %v4951
        %v4953 = vpop.f32.mrb[0].mxu0
        %4954 = vmatprep.mubr.bf16.mxu0 0
        %4955 = vmatmul.mubr.bf16.gmra.mrb[0].mxu0 %v4795
        %v4956 = vpop.f32.mrb[0].mxu0
        %v4957 = vadd.f32 0.0, %v4956
        %v4958 = vpop.f32.mrb[0].mxu0
        %v4959 = vpop.f32.mrb[0].mxu0
        %v4960 = vadd.f32 0.0, %v4959
        %v4961 = vpop.f32.mrb[0].mxu0
        %4962 = vmatprep.mubr.bf16.mxu0 0
        %4963 = vmatmul.mubr.bf16.gmra.mrb[0].mxu0 %v4796
        %v4964 = vpop.f32.mrb[0].mxu0
        %v4965 = vadd.f32 0.0, %v4964
        %v4966 = vpop.f32.mrb[0].mxu0
        %v4967 = vpop.f32.mrb[0].mxu0
        %v4968 = vadd.f32 0.0, %v4967
        %v4969 = vpop.f32.mrb[0].mxu0
        %4970 = vmatprep.mubr.bf16.mxu0 0
        %4971 = vmatmul.mubr.bf16.gmra.mrb[0].mxu0 %v4797
        %v4972 = vpop.f32.mrb[0].mxu0
        %v4973 = vadd.f32 0.0, %v4972
        %v4974 = vpop.f32.mrb[0].mxu0
        %v4975 = vpop.f32.mrb[0].mxu0
        %v4976 = vadd.f32 0.0, %v4975
        %v4977 = vpop.f32.mrb[0].mxu0
        %4978 = vmatprep.mubr.bf16.mxu0 0
        %4979 = vmatmul.mubr.bf16.gmra.mrb[0].mxu0 %v4798
        %v4980 = vpop.f32.mrb[0].mxu0
        %v4981 = vadd.f32 0.0, %v4980
        %v4982 = vpop.f32.mrb[0].mxu0
        %v4983 = vpop.f32.mrb[0].mxu0
        %v4984 = vadd.f32 0.0, %v4983
        %v4985 = vpop.f32.mrb[0].mxu0
        %4986 = vmatprep.mubr.bf16.mxu0 0
        %4987 = vmatmul.mubr.bf16.gmra.mrb[0].mxu0 %v4799
        %v4988 = vpop.f32.mrb[0].mxu0
        %v4989 = vadd.f32 0.0, %v4988
        %v4990 = vpop.f32.mrb[0].mxu0
        %v4991 = vpop.f32.mrb[0].mxu0
        %v4992 = vadd.f32 0.0, %v4991
        %v4993 = vpop.f32.mrb[0].mxu0
        %4994 = vmatprep.mubr.bf16.mxu0 0
        %4995 = vmatmul.mubr.bf16.gmra.mrb[0].mxu0 %v4800
        %v4996 = vpop.f32.mrb[0].mxu0
        %v4997 = vadd.f32 0.0, %v4996
        %v4998 = vpop.f32.mrb[0].mxu0
        %v4999 = vpop.f32.mrb[0].mxu0
        %v5000 = vadd.f32 0.0, %v4999
        %v5001 = vpop.f32.mrb[0].mxu0
        %5002 = vmatprep.mubr.bf16.mxu0 0
        %5003 = vmatmul.mubr.bf16.gmra.mrb[0].mxu0 %v4801
        %v5004 = vpop.f32.mrb[0].mxu0
        %v5005 = vadd.f32 0.0, %v5004
        %v5006 = vpop.f32.mrb[0].mxu0
        %v5007 = vpop.f32.mrb[0].mxu0
        %v5008 = vadd.f32 0.0, %v5007
        %v5009 = vpop.f32.mrb[0].mxu0
        %5010 = vmatprep.mubr.bf16.mxu0 0
        %5011 = vmatmul.mubr.bf16.gmra.mrb[0].mxu0 %v4802
        %v5012 = vpop.f32.mrb[0].mxu0
        %v5013 = vadd.f32 0.0, %v5012
        %v5014 = vpop.f32.mrb[0].mxu0
        %v5015 = vpop.f32.mrb[0].mxu0
        %v5016 = vadd.f32 0.0, %v5015
        %v5017 = vpop.f32.mrb[0].mxu0
        %5018 = vmatprep.mubr.bf16.mxu0 0
        %5019 = vmatmul.mubr.bf16.gmra.mrb[0].mxu0 %v4803
        %v5020 = vpop.f32.mrb[0].mxu0
        %v5021 = vadd.f32 0.0, %v5020
        %v5022 = vpop.f32.mrb[0].mxu0
        %v5023 = vpop.f32.mrb[0].mxu0
        %v5024 = vadd.f32 0.0, %v5023
        %v5025 = vpop.f32.mrb[0].mxu0
        %5026 = vmatprep.mubr.bf16.mxu0 0
        %5027 = vmatmul.mubr.bf16.gmra.mrb[0].mxu0 %v4804
        %v5028 = vpop.f32.mrb[0].mxu0
        %v5029 = vadd.f32 0.0, %v5028
        %v5030 = vpop.f32.mrb[0].mxu0
        %v5031 = vpop.f32.mrb[0].mxu0
        %v5032 = vadd.f32 0.0, %v5031
        %v5033 = vpop.f32.mrb[0].mxu0
        %5034 = vmatprep.mubr.bf16.mxu0 0
        %5035 = vmatmul.mubr.bf16.gmra.mrb[0].mxu0 %v4805
        %v5036 = vpop.f32.mrb[0].mxu0
        %v5037 = vadd.f32 0.0, %v5036
        %v5038 = vpop.f32.mrb[0].mxu0
        %v5039 = vpop.f32.mrb[0].mxu0
        %v5040 = vadd.f32 0.0, %v5039
        %v5041 = vpop.f32.mrb[0].mxu0
        %5042 = vmatprep.mubr.bf16.mxu0 0
        %5043 = vmatmul.mubr.bf16.gmra.mrb[0].mxu0 %v4806
        %v5044 = vpop.f32.mrb[0].mxu0
        %v5045 = vadd.f32 0.0, %v5044
        %v5046 = vpop.f32.mrb[0].mxu0
        %v5047 = vpop.f32.mrb[0].mxu0
        %v5048 = vadd.f32 0.0, %v5047
        %v5049 = vpop.f32.mrb[0].mxu0
        %5050 = vmatprep.mubr.bf16.mxu0 0
        %5051 = vmatmul.mubr.bf16.gmra.mrb[0].mxu0 %v4807
        %v5052 = vpop.f32.mrb[0].mxu0
        %v5053 = vadd.f32 0.0, %v5052
        %v5054 = vpop.f32.mrb[0].mxu0
        %v5055 = vpop.f32.mrb[0].mxu0
        %v5056 = vadd.f32 0.0, %v5055
        %v5057 = vpop.f32.mrb[0].mxu0
        %5058 = vmatprep.mubr.bf16.mxu0 0
        %5059 = vmatmul.mubr.bf16.gmra.mrb[0].mxu0 %v4808
        %v5060 = vpop.f32.mrb[0].mxu0
        %v5061 = vadd.f32 0.0, %v5060
        %v5062 = vpop.f32.mrb[0].mxu0
        %v5063 = vpop.f32.mrb[0].mxu0
        %v5064 = vadd.f32 0.0, %v5063
        %v5065 = vpop.f32.mrb[0].mxu0
        %5066 = vmatprep.mubr.bf16.mxu0 0
        %5067 = vmatmul.mubr.bf16.gmra.mrb[0].mxu0 %v4809
        %v5068 = vpop.f32.mrb[0].mxu0
        %v5069 = vadd.f32 0.0, %v5068
        %v5070 = vpop.f32.mrb[0].mxu0
        %v5071 = vpop.f32.mrb[0].mxu0
        %v5072 = vadd.f32 0.0, %v5071
        %v5073 = vpop.f32.mrb[0].mxu0
        %5074 = vmatprep.mubr.bf16.mxu0 0
        %5075 = vmatmul.mubr.bf16.gmra.mrb[0].mxu0 %v4810
        %v5076 = vpop.f32.mrb[0].mxu0
        %v5077 = vadd.f32 0.0, %v5076
        %v5078 = vpop.f32.mrb[0].mxu0
        %v5079 = vpop.f32.mrb[0].mxu0
        %v5080 = vadd.f32 0.0, %v5079
        %v5081 = vpop.f32.mrb[0].mxu0
        %5082 = vmatprep.mubr.bf16.mxu0 0
        %5083 = vmatmul.mubr.bf16.gmra.mrb[0].mxu0 %v4811
        %v5084 = vpop.f32.mrb[0].mxu0
        %v5085 = vadd.f32 0.0, %v5084
        %v5086 = vpop.f32.mrb[0].mxu0
        %v5087 = vpop.f32.mrb[0].mxu0
        %v5088 = vadd.f32 0.0, %v5087
        %v5089 = vpop.f32.mrb[0].mxu0
        %5090 = vmatprep.mubr.bf16.mxu0 0
        %5091 = vmatmul.mubr.bf16.gmra.mrb[0].mxu0 %v4812
        %v5092 = vpop.f32.mrb[0].mxu0
        %v5093 = vadd.f32 0.0, %v5092
        %v5094 = vpop.f32.mrb[0].mxu0
        %v5095 = vpop.f32.mrb[0].mxu0
        %v5096 = vadd.f32 0.0, %v5095
        %v5097 = vpop.f32.mrb[0].mxu0
        %5098 = vmatprep.mubr.bf16.mxu0 0
        %5099 = vmatmul.mubr.bf16.gmra.mrb[0].mxu0 %v4813
        %v5100 = vpop.f32.mrb[0].mxu0
        %v5101 = vadd.f32 0.0, %v5100
        %v5102 = vpop.f32.mrb[0].mxu0
        %v5103 = vpop.f32.mrb[0].mxu0
        %v5104 = vadd.f32 0.0, %v5103
        %v5105 = vpop.f32.mrb[0].mxu0
        %5106 = vmatprep.mubr.bf16.mxu0 0
        %5107 = vmatmul.mubr.bf16.gmra.mrb[0].mxu0 %v4814
        %v5108 = vpop.f32.mrb[0].mxu0
        %v5109 = vadd.f32 0.0, %v5108
        %v5110 = vpop.f32.mrb[0].mxu0
        %v5111 = vpop.f32.mrb[0].mxu0
        %v5112 = vadd.f32 0.0, %v5111
        %v5113 = vpop.f32.mrb[0].mxu0
        %5114 = vmatprep.mubr.bf16.mxu0 0
        %5115 = vmatmul.mubr.bf16.gmra.mrb[0].mxu0 %v4815
        %v5116 = vpop.f32.mrb[0].mxu0
        %v5117 = vadd.f32 0.0, %v5116
        %v5118 = vpop.f32.mrb[0].mxu0
        %v5119 = vpop.f32.mrb[0].mxu0
        %v5120 = vadd.f32 0.0, %v5119
        %v5121 = vpop.f32.mrb[0].mxu0
        %5122 = vmatprep.mubr.bf16.mxu0 0
        %5123 = vmatmul.mubr.bf16.gmra.mrb[0].mxu0 %v4816
        %v5124 = vpop.f32.mrb[0].mxu0
        %v5125 = vadd.f32 0.0, %v5124
        %v5126 = vpop.f32.mrb[0].mxu0
        %v5127 = vpop.f32.mrb[0].mxu0
        %v5128 = vadd.f32 0.0, %v5127
        %v5129 = vpop.f32.mrb[0].mxu0
        %5130 = vmatprep.mubr.bf16.mxu0 0
        %5131 = vmatmul.mubr.bf16.gmra.mrb[0].mxu0 %v4817
        %v5132 = vpop.f32.mrb[0].mxu0
        %v5133 = vadd.f32 0.0, %v5132
        %v5134 = vpop.f32.mrb[0].mxu0
        %v5135 = vpop.f32.mrb[0].mxu0
        %v5136 = vadd.f32 0.0, %v5135
        %v5137 = vpop.f32.mrb[0].mxu0
        %5138 = vdwg.mxu0
        %v5139 = vpack.c.bf16 %v4888, %v4885
        %v5140 = vpack.c.bf16 %v4896, %v4893
        %v5141 = vpack.c.bf16 %v4904, %v4901
        %v5142 = vpack.c.bf16 %v4912, %v4909
        %v5143 = vpack.c.bf16 %v4920, %v4917
        %v5144 = vpack.c.bf16 %v4928, %v4925
        %v5145 = vpack.c.bf16 %v4936, %v4933
        %v5146 = vpack.c.bf16 %v4944, %v4941
        %v5147 = vpack.c.bf16 %v4952, %v4949
        %v5148 = vpack.c.bf16 %v4960, %v4957
        %v5149 = vpack.c.bf16 %v4968, %v4965
        %v5150 = vpack.c.bf16 %v4976, %v4973
        %v5151 = vpack.c.bf16 %v4984, %v4981
        %v5152 = vpack.c.bf16 %v4992, %v4989
        %v5153 = vpack.c.bf16 %v5000, %v4997
        %v5154 = vpack.c.bf16 %v5008, %v5005
        %v5155 = vpack.c.bf16 %v5016, %v5013
        %v5156 = vpack.c.bf16 %v5024, %v5021
        %v5157 = vpack.c.bf16 %v5032, %v5029
        %v5158 = vpack.c.bf16 %v5040, %v5037
        %v5159 = vpack.c.bf16 %v5048, %v5045
        %v5160 = vpack.c.bf16 %v5056, %v5053
        %v5161 = vpack.c.bf16 %v5064, %v5061
        %v5162 = vpack.c.bf16 %v5072, %v5069
        %v5163 = vpack.c.bf16 %v5080, %v5077
        %v5164 = vpack.c.bf16 %v5088, %v5085
        %v5165 = vpack.c.bf16 %v5096, %v5093
        %v5166 = vpack.c.bf16 %v5104, %v5101
        %v5167 = vpack.c.bf16 %v5112, %v5109
        %v5168 = vpack.c.bf16 %v5120, %v5117
        %v5169 = vpack.c.bf16 %v5128, %v5125
        %v5170 = vpack.c.bf16 %v5136, %v5133
        %s5171 = scalar_lea.vmem %s508, 64
        %v5172 = vld [vmem:[%s5171] sm:$0xf]
        %v5173 = vld [vmem:[%s5171 + $0x4] sm:$0xf]
        %v5174 = vld [vmem:[%s5171 + $0x8] sm:$0xf]
        %v5175 = vld [vmem:[%s5171 + $0xc] sm:$0xf]
        %v5176 = vld [vmem:[%s5171 + $0x10] sm:$0xf]
        %v5177 = vld [vmem:[%s5171 + $0x14] sm:$0xf]
        %v5178 = vld [vmem:[%s5171 + $0x18] sm:$0xf]
        %v5179 = vld [vmem:[%s5171 + $0x1c] sm:$0xf]
        %v5188 = vunpack.c.l.b16 %v5172
        %v5189 = vunpack.c.l.b16 %v5173
        %v5190 = vunpack.c.l.b16 %v5174
        %v5191 = vunpack.c.l.b16 %v5175
        %v5192 = vunpack.c.l.b16 %v5176
        %v5193 = vunpack.c.l.b16 %v5177
        %v5194 = vunpack.c.l.b16 %v5178
        %v5195 = vunpack.c.l.b16 %v5179
        %v5196 = vpack.c.b16 %v5189, %v5188
        %v5197 = vpack.c.b16 %v5191, %v5190
        %v5198 = vpack.c.b16 %v5193, %v5192
        %v5199 = vpack.c.b16 %v5195, %v5194
        %v5205 = vsel %vm705, %v5139, 0
        %v5208 = vsel %vm705, %v5140, 0
        %v5211 = vsel %vm705, %v5141, 0
        %v5214 = vsel %vm705, %v5142, 0
        %v5217 = vsel %vm705, %v5143, 0
        %v5220 = vsel %vm705, %v5144, 0
        %v5223 = vsel %vm705, %v5145, 0
        %v5226 = vsel %vm705, %v5146, 0
        %v5229 = vsel %vm705, %v5147, 0
        %v5232 = vsel %vm705, %v5148, 0
        %v5235 = vsel %vm705, %v5149, 0
        %v5238 = vsel %vm705, %v5150, 0
        %v5241 = vsel %vm705, %v5151, 0
        %v5244 = vsel %vm705, %v5152, 0
        %v5247 = vsel %vm705, %v5153, 0
        %v5250 = vsel %vm705, %v5154, 0
        %v5253 = vsel %vm705, %v5155, 0
        %v5256 = vsel %vm705, %v5156, 0
        %v5259 = vsel %vm705, %v5157, 0
        %v5262 = vsel %vm705, %v5158, 0
        %v5265 = vsel %vm705, %v5159, 0
        %v5268 = vsel %vm705, %v5160, 0
        %v5271 = vsel %vm705, %v5161, 0
        %v5274 = vsel %vm705, %v5162, 0
        %v5277 = vsel %vm705, %v5163, 0
        %v5280 = vsel %vm705, %v5164, 0
        %v5283 = vsel %vm705, %v5165, 0
        %v5286 = vsel %vm705, %v5166, 0
        %v5289 = vsel %vm705, %v5167, 0
        %v5292 = vsel %vm705, %v5168, 0
        %v5295 = vsel %vm705, %v5169, 0
        %v5298 = vsel %vm705, %v5170, 0
        %5300 = vmatprep.subr.bf16.mxu0 0
        %5301 = vmatpush1.bf16.msra.mxu0 %v5196
        %5302 = vmatprep.subr.bf16.mxu0 0
        %5303 = vmatpush1.bf16.msra.mxu0 %v5197
        %5304 = vmatprep.subr.bf16.mxu0 0
        %5305 = vmatpush1.bf16.msra.mxu0 %v5198
        %5306 = vmatprep.subr.bf16.mxu0 0
        %5307 = vmatpush1.bf16.msra.mxu0 %v5199
        %5308 = vmatprep.subr.bf16.mxu0 0
        %5309 = vmatpush1.bf16.msra.mxu0 0
        %5310 = vmatprep.subr.bf16.mxu0 0
        %5311 = vmatpush1.bf16.msra.mxu0 0
        %5312 = vmatprep.subr.bf16.mxu0 0
        %5313 = vmatpush1.bf16.msra.mxu0 0
        %5314 = vmatprep.subr.bf16.mxu0 0
        %5315 = vmatpush1.bf16.msra.mxu0 0
        %5316 = vmatprep.subr.bf16.mxu0 0
        %5317 = vmatpush1.bf16.msra.mxu0 0
        %5318 = vmatprep.subr.bf16.mxu0 0
        %5319 = vmatpush1.bf16.msra.mxu0 0
        %5320 = vmatprep.subr.bf16.mxu0 0
        %5321 = vmatpush1.bf16.msra.mxu0 0
        %5322 = vmatprep.subr.bf16.mxu0 0
        %5323 = vmatpush1.bf16.msra.mxu0 0
        %5324 = vmatprep.subr.bf16.mxu0 0
        %5325 = vmatpush1.bf16.msra.mxu0 0
        %5326 = vmatprep.subr.bf16.mxu0 0
        %5327 = vmatpush1.bf16.msra.mxu0 0
        %5328 = vmatprep.subr.bf16.mxu0 0
        %5329 = vmatpush1.bf16.msra.mxu0 0
        %5330 = vmatprep.subr.bf16.mxu0 0
        %5331 = vmatpush1.bf16.msra.mxu0 0
        %5332 = vmatprep.mubr.bf16.mxu0 0
        %5333 = vmatmul.mubr.bf16.gmra.mrb[0].mxu0 %v5205
        %v5334 = vpop.f32.mrb[0].mxu0
        %v5335 = vadd.f32 0.0, %v5334
        %v5336 = vpop.f32.mrb[0].mxu0
        %v5337 = vpop.f32.mrb[0].mxu0
        %v5338 = vadd.f32 0.0, %v5337
        %v5339 = vpop.f32.mrb[0].mxu0
        %5340 = vmatprep.mubr.bf16.mxu0 0
        %5341 = vmatmul.mubr.bf16.gmra.mrb[0].mxu0 %v5208
        %v5342 = vpop.f32.mrb[0].mxu0
        %v5343 = vadd.f32 0.0, %v5342
        %v5344 = vpop.f32.mrb[0].mxu0
        %v5345 = vpop.f32.mrb[0].mxu0
        %v5346 = vadd.f32 0.0, %v5345
        %v5347 = vpop.f32.mrb[0].mxu0
        %5348 = vmatprep.mubr.bf16.mxu0 0
        %5349 = vmatmul.mubr.bf16.gmra.mrb[0].mxu0 %v5211
        %v5350 = vpop.f32.mrb[0].mxu0
        %v5351 = vadd.f32 0.0, %v5350
        %v5352 = vpop.f32.mrb[0].mxu0
        %v5353 = vpop.f32.mrb[0].mxu0
        %v5354 = vadd.f32 0.0, %v5353
        %v5355 = vpop.f32.mrb[0].mxu0
        %5356 = vmatprep.mubr.bf16.mxu0 0
        %5357 = vmatmul.mubr.bf16.gmra.mrb[0].mxu0 %v5214
        %v5358 = vpop.f32.mrb[0].mxu0
        %v5359 = vadd.f32 0.0, %v5358
        %v5360 = vpop.f32.mrb[0].mxu0
        %v5361 = vpop.f32.mrb[0].mxu0
        %v5362 = vadd.f32 0.0, %v5361
        %v5363 = vpop.f32.mrb[0].mxu0
        %5364 = vmatprep.mubr.bf16.mxu0 0
        %5365 = vmatmul.mubr.bf16.gmra.mrb[0].mxu0 %v5217
        %v5366 = vpop.f32.mrb[0].mxu0
        %v5367 = vadd.f32 0.0, %v5366
        %v5368 = vpop.f32.mrb[0].mxu0
        %v5369 = vpop.f32.mrb[0].mxu0
        %v5370 = vadd.f32 0.0, %v5369
        %v5371 = vpop.f32.mrb[0].mxu0
        %5372 = vmatprep.mubr.bf16.mxu0 0
        %5373 = vmatmul.mubr.bf16.gmra.mrb[0].mxu0 %v5220
        %v5374 = vpop.f32.mrb[0].mxu0
        %v5375 = vadd.f32 0.0, %v5374
        %v5376 = vpop.f32.mrb[0].mxu0
        %v5377 = vpop.f32.mrb[0].mxu0
        %v5378 = vadd.f32 0.0, %v5377
        %v5379 = vpop.f32.mrb[0].mxu0
        %5380 = vmatprep.mubr.bf16.mxu0 0
        %5381 = vmatmul.mubr.bf16.gmra.mrb[0].mxu0 %v5223
        %v5382 = vpop.f32.mrb[0].mxu0
        %v5383 = vadd.f32 0.0, %v5382
        %v5384 = vpop.f32.mrb[0].mxu0
        %v5385 = vpop.f32.mrb[0].mxu0
        %v5386 = vadd.f32 0.0, %v5385
        %v5387 = vpop.f32.mrb[0].mxu0
        %5388 = vmatprep.mubr.bf16.mxu0 0
        %5389 = vmatmul.mubr.bf16.gmra.mrb[0].mxu0 %v5226
        %v5390 = vpop.f32.mrb[0].mxu0
        %v5391 = vadd.f32 0.0, %v5390
        %v5392 = vpop.f32.mrb[0].mxu0
        %v5393 = vpop.f32.mrb[0].mxu0
        %v5394 = vadd.f32 0.0, %v5393
        %v5395 = vpop.f32.mrb[0].mxu0
        %5396 = vmatprep.mubr.bf16.mxu0 0
        %5397 = vmatmul.mubr.bf16.gmra.mrb[0].mxu0 %v5229
        %v5398 = vpop.f32.mrb[0].mxu0
        %v5399 = vadd.f32 0.0, %v5398
        %v5400 = vpop.f32.mrb[0].mxu0
        %v5401 = vpop.f32.mrb[0].mxu0
        %v5402 = vadd.f32 0.0, %v5401
        %v5403 = vpop.f32.mrb[0].mxu0
        %5404 = vmatprep.mubr.bf16.mxu0 0
        %5405 = vmatmul.mubr.bf16.gmra.mrb[0].mxu0 %v5232
        %v5406 = vpop.f32.mrb[0].mxu0
        %v5407 = vadd.f32 0.0, %v5406
        %v5408 = vpop.f32.mrb[0].mxu0
        %v5409 = vpop.f32.mrb[0].mxu0
        %v5410 = vadd.f32 0.0, %v5409
        %v5411 = vpop.f32.mrb[0].mxu0
        %5412 = vmatprep.mubr.bf16.mxu0 0
        %5413 = vmatmul.mubr.bf16.gmra.mrb[0].mxu0 %v5235
        %v5414 = vpop.f32.mrb[0].mxu0
        %v5415 = vadd.f32 0.0, %v5414
        %v5416 = vpop.f32.mrb[0].mxu0
        %v5417 = vpop.f32.mrb[0].mxu0
        %v5418 = vadd.f32 0.0, %v5417
        %v5419 = vpop.f32.mrb[0].mxu0
        %5420 = vmatprep.mubr.bf16.mxu0 0
        %5421 = vmatmul.mubr.bf16.gmra.mrb[0].mxu0 %v5238
        %v5422 = vpop.f32.mrb[0].mxu0
        %v5423 = vadd.f32 0.0, %v5422
        %v5424 = vpop.f32.mrb[0].mxu0
        %v5425 = vpop.f32.mrb[0].mxu0
        %v5426 = vadd.f32 0.0, %v5425
        %v5427 = vpop.f32.mrb[0].mxu0
        %5428 = vmatprep.mubr.bf16.mxu0 0
        %5429 = vmatmul.mubr.bf16.gmra.mrb[0].mxu0 %v5241
        %v5430 = vpop.f32.mrb[0].mxu0
        %v5431 = vadd.f32 0.0, %v5430
        %v5432 = vpop.f32.mrb[0].mxu0
        %v5433 = vpop.f32.mrb[0].mxu0
        %v5434 = vadd.f32 0.0, %v5433
        %v5435 = vpop.f32.mrb[0].mxu0
        %5436 = vmatprep.mubr.bf16.mxu0 0
        %5437 = vmatmul.mubr.bf16.gmra.mrb[0].mxu0 %v5244
        %v5438 = vpop.f32.mrb[0].mxu0
        %v5439 = vadd.f32 0.0, %v5438
        %v5440 = vpop.f32.mrb[0].mxu0
        %v5441 = vpop.f32.mrb[0].mxu0
        %v5442 = vadd.f32 0.0, %v5441
        %v5443 = vpop.f32.mrb[0].mxu0
        %5444 = vmatprep.mubr.bf16.mxu0 0
        %5445 = vmatmul.mubr.bf16.gmra.mrb[0].mxu0 %v5247
        %v5446 = vpop.f32.mrb[0].mxu0
        %v5447 = vadd.f32 0.0, %v5446
        %v5448 = vpop.f32.mrb[0].mxu0
        %v5449 = vpop.f32.mrb[0].mxu0
        %v5450 = vadd.f32 0.0, %v5449
        %v5451 = vpop.f32.mrb[0].mxu0
        %5452 = vmatprep.mubr.bf16.mxu0 0
        %5453 = vmatmul.mubr.bf16.gmra.mrb[0].mxu0 %v5250
        %v5454 = vpop.f32.mrb[0].mxu0
        %v5455 = vadd.f32 0.0, %v5454
        %v5456 = vpop.f32.mrb[0].mxu0
        %v5457 = vpop.f32.mrb[0].mxu0
        %v5458 = vadd.f32 0.0, %v5457
        %v5459 = vpop.f32.mrb[0].mxu0
        %5460 = vmatprep.mubr.bf16.mxu0 0
        %5461 = vmatmul.mubr.bf16.gmra.mrb[0].mxu0 %v5253
        %v5462 = vpop.f32.mrb[0].mxu0
        %v5463 = vadd.f32 0.0, %v5462
        %v5464 = vpop.f32.mrb[0].mxu0
        %v5465 = vpop.f32.mrb[0].mxu0
        %v5466 = vadd.f32 0.0, %v5465
        %v5467 = vpop.f32.mrb[0].mxu0
        %5468 = vmatprep.mubr.bf16.mxu0 0
        %5469 = vmatmul.mubr.bf16.gmra.mrb[0].mxu0 %v5256
        %v5470 = vpop.f32.mrb[0].mxu0
        %v5471 = vadd.f32 0.0, %v5470
        %v5472 = vpop.f32.mrb[0].mxu0
        %v5473 = vpop.f32.mrb[0].mxu0
        %v5474 = vadd.f32 0.0, %v5473
        %v5475 = vpop.f32.mrb[0].mxu0
        %5476 = vmatprep.mubr.bf16.mxu0 0
        %5477 = vmatmul.mubr.bf16.gmra.mrb[0].mxu0 %v5259
        %v5478 = vpop.f32.mrb[0].mxu0
        %v5479 = vadd.f32 0.0, %v5478
        %v5480 = vpop.f32.mrb[0].mxu0
        %v5481 = vpop.f32.mrb[0].mxu0
        %v5482 = vadd.f32 0.0, %v5481
        %v5483 = vpop.f32.mrb[0].mxu0
        %5484 = vmatprep.mubr.bf16.mxu0 0
        %5485 = vmatmul.mubr.bf16.gmra.mrb[0].mxu0 %v5262
        %v5486 = vpop.f32.mrb[0].mxu0
        %v5487 = vadd.f32 0.0, %v5486
        %v5488 = vpop.f32.mrb[0].mxu0
        %v5489 = vpop.f32.mrb[0].mxu0
        %v5490 = vadd.f32 0.0, %v5489
        %v5491 = vpop.f32.mrb[0].mxu0
        %5492 = vmatprep.mubr.bf16.mxu0 0
        %5493 = vmatmul.mubr.bf16.gmra.mrb[0].mxu0 %v5265
        %v5494 = vpop.f32.mrb[0].mxu0
        %v5495 = vadd.f32 0.0, %v5494
        %v5496 = vpop.f32.mrb[0].mxu0
        %v5497 = vpop.f32.mrb[0].mxu0
        %v5498 = vadd.f32 0.0, %v5497
        %v5499 = vpop.f32.mrb[0].mxu0
        %5500 = vmatprep.mubr.bf16.mxu0 0
        %5501 = vmatmul.mubr.bf16.gmra.mrb[0].mxu0 %v5268
        %v5502 = vpop.f32.mrb[0].mxu0
        %v5503 = vadd.f32 0.0, %v5502
        %v5504 = vpop.f32.mrb[0].mxu0
        %v5505 = vpop.f32.mrb[0].mxu0
        %v5506 = vadd.f32 0.0, %v5505
        %v5507 = vpop.f32.mrb[0].mxu0
        %5508 = vmatprep.mubr.bf16.mxu0 0
        %5509 = vmatmul.mubr.bf16.gmra.mrb[0].mxu0 %v5271
        %v5510 = vpop.f32.mrb[0].mxu0
        %v5511 = vadd.f32 0.0, %v5510
        %v5512 = vpop.f32.mrb[0].mxu0
        %v5513 = vpop.f32.mrb[0].mxu0
        %v5514 = vadd.f32 0.0, %v5513
        %v5515 = vpop.f32.mrb[0].mxu0
        %5516 = vmatprep.mubr.bf16.mxu0 0
        %5517 = vmatmul.mubr.bf16.gmra.mrb[0].mxu0 %v5274
        %v5518 = vpop.f32.mrb[0].mxu0
        %v5519 = vadd.f32 0.0, %v5518
        %v5520 = vpop.f32.mrb[0].mxu0
        %v5521 = vpop.f32.mrb[0].mxu0
        %v5522 = vadd.f32 0.0, %v5521
        %v5523 = vpop.f32.mrb[0].mxu0
        %5524 = vmatprep.mubr.bf16.mxu0 0
        %5525 = vmatmul.mubr.bf16.gmra.mrb[0].mxu0 %v5277
        %v5526 = vpop.f32.mrb[0].mxu0
        %v5527 = vadd.f32 0.0, %v5526
        %v5528 = vpop.f32.mrb[0].mxu0
        %v5529 = vpop.f32.mrb[0].mxu0
        %v5530 = vadd.f32 0.0, %v5529
        %v5531 = vpop.f32.mrb[0].mxu0
        %5532 = vmatprep.mubr.bf16.mxu0 0
        %5533 = vmatmul.mubr.bf16.gmra.mrb[0].mxu0 %v5280
        %v5534 = vpop.f32.mrb[0].mxu0
        %v5535 = vadd.f32 0.0, %v5534
        %v5536 = vpop.f32.mrb[0].mxu0
        %v5537 = vpop.f32.mrb[0].mxu0
        %v5538 = vadd.f32 0.0, %v5537
        %v5539 = vpop.f32.mrb[0].mxu0
        %5540 = vmatprep.mubr.bf16.mxu0 0
        %5541 = vmatmul.mubr.bf16.gmra.mrb[0].mxu0 %v5283
        %v5542 = vpop.f32.mrb[0].mxu0
        %v5543 = vadd.f32 0.0, %v5542
        %v5544 = vpop.f32.mrb[0].mxu0
        %v5545 = vpop.f32.mrb[0].mxu0
        %v5546 = vadd.f32 0.0, %v5545
        %v5547 = vpop.f32.mrb[0].mxu0
        %5548 = vmatprep.mubr.bf16.mxu0 0
        %5549 = vmatmul.mubr.bf16.gmra.mrb[0].mxu0 %v5286
        %v5550 = vpop.f32.mrb[0].mxu0
        %v5551 = vadd.f32 0.0, %v5550
        %v5552 = vpop.f32.mrb[0].mxu0
        %v5553 = vpop.f32.mrb[0].mxu0
        %v5554 = vadd.f32 0.0, %v5553
        %v5555 = vpop.f32.mrb[0].mxu0
        %5556 = vmatprep.mubr.bf16.mxu0 0
        %5557 = vmatmul.mubr.bf16.gmra.mrb[0].mxu0 %v5289
        %v5558 = vpop.f32.mrb[0].mxu0
        %v5559 = vadd.f32 0.0, %v5558
        %v5560 = vpop.f32.mrb[0].mxu0
        %v5561 = vpop.f32.mrb[0].mxu0
        %v5562 = vadd.f32 0.0, %v5561
        %v5563 = vpop.f32.mrb[0].mxu0
        %5564 = vmatprep.mubr.bf16.mxu0 0
        %5565 = vmatmul.mubr.bf16.gmra.mrb[0].mxu0 %v5292
        %v5566 = vpop.f32.mrb[0].mxu0
        %v5567 = vadd.f32 0.0, %v5566
        %v5568 = vpop.f32.mrb[0].mxu0
        %v5569 = vpop.f32.mrb[0].mxu0
        %v5570 = vadd.f32 0.0, %v5569
        %v5571 = vpop.f32.mrb[0].mxu0
        %5572 = vmatprep.mubr.bf16.mxu0 0
        %5573 = vmatmul.mubr.bf16.gmra.mrb[0].mxu0 %v5295
        %v5574 = vpop.f32.mrb[0].mxu0
        %v5575 = vadd.f32 0.0, %v5574
        %v5576 = vpop.f32.mrb[0].mxu0
        %v5577 = vpop.f32.mrb[0].mxu0
        %v5578 = vadd.f32 0.0, %v5577
        %v5579 = vpop.f32.mrb[0].mxu0
        %5580 = vmatprep.mubr.bf16.mxu0 0
        %5581 = vmatmul.mubr.bf16.gmra.mrb[0].mxu0 %v5298
        %v5582 = vpop.f32.mrb[0].mxu0
        %v5583 = vadd.f32 0.0, %v5582
        %v5584 = vpop.f32.mrb[0].mxu0
        %v5585 = vpop.f32.mrb[0].mxu0
        %v5586 = vadd.f32 0.0, %v5585
        %v5587 = vpop.f32.mrb[0].mxu0
        %5588 = vdwg.mxu0
        %v5589 = vadd.f32 %v4339, %v5335
        %v5590 = vadd.f32 %v4342, %v5338
        %v5591 = vadd.f32 %v4347, %v5343
        %v5592 = vadd.f32 %v4350, %v5346
        %v5593 = vadd.f32 %v4355, %v5351
        %v5594 = vadd.f32 %v4358, %v5354
        %v5595 = vadd.f32 %v4363, %v5359
        %v5596 = vadd.f32 %v4366, %v5362
        %v5597 = vadd.f32 %v4371, %v5367
        %v5598 = vadd.f32 %v4374, %v5370
        %v5599 = vadd.f32 %v4379, %v5375
        %v5600 = vadd.f32 %v4382, %v5378
        %v5601 = vadd.f32 %v4387, %v5383
        %v5602 = vadd.f32 %v4390, %v5386
        %v5603 = vadd.f32 %v4395, %v5391
        %v5604 = vadd.f32 %v4398, %v5394
        %v5605 = vadd.f32 %v4403, %v5399
        %v5606 = vadd.f32 %v4406, %v5402
        %v5607 = vadd.f32 %v4411, %v5407
        %v5608 = vadd.f32 %v4414, %v5410
        %v5609 = vadd.f32 %v4419, %v5415
        %v5610 = vadd.f32 %v4422, %v5418
        %v5611 = vadd.f32 %v4427, %v5423
        %v5612 = vadd.f32 %v4430, %v5426
        %v5613 = vadd.f32 %v4435, %v5431
        %v5614 = vadd.f32 %v4438, %v5434
        %v5615 = vadd.f32 %v4443, %v5439
        %v5616 = vadd.f32 %v4446, %v5442
        %v5617 = vadd.f32 %v4451, %v5447
        %v5618 = vadd.f32 %v4454, %v5450
        %v5619 = vadd.f32 %v4459, %v5455
        %v5620 = vadd.f32 %v4462, %v5458
        %v5621 = vadd.f32 %v4467, %v5463
        %v5622 = vadd.f32 %v4470, %v5466
        %v5623 = vadd.f32 %v4475, %v5471
        %v5624 = vadd.f32 %v4478, %v5474
        %v5625 = vadd.f32 %v4483, %v5479
        %v5626 = vadd.f32 %v4486, %v5482
        %v5627 = vadd.f32 %v4491, %v5487
        %v5628 = vadd.f32 %v4494, %v5490
        %v5629 = vadd.f32 %v4499, %v5495
        %v5630 = vadd.f32 %v4502, %v5498
        %v5631 = vadd.f32 %v4507, %v5503
        %v5632 = vadd.f32 %v4510, %v5506
        %v5633 = vadd.f32 %v4515, %v5511
        %v5634 = vadd.f32 %v4518, %v5514
        %v5635 = vadd.f32 %v4523, %v5519
        %v5636 = vadd.f32 %v4526, %v5522
        %v5637 = vadd.f32 %v4531, %v5527
        %v5638 = vadd.f32 %v4534, %v5530
        %v5639 = vadd.f32 %v4539, %v5535
        %v5640 = vadd.f32 %v4542, %v5538
        %v5641 = vadd.f32 %v4547, %v5543
        %v5642 = vadd.f32 %v4550, %v5546
        %v5643 = vadd.f32 %v4555, %v5551
        %v5644 = vadd.f32 %v4558, %v5554
        %v5645 = vadd.f32 %v4563, %v5559
        %v5646 = vadd.f32 %v4566, %v5562
        %v5647 = vadd.f32 %v4571, %v5567
        %v5648 = vadd.f32 %v4574, %v5570
        %v5649 = vadd.f32 %v4579, %v5575
        %v5650 = vadd.f32 %v4582, %v5578
        %v5651 = vadd.f32 %v4587, %v5583
        %v5652 = vadd.f32 %v4590, %v5586
        %s5653 = scalar_lea.vmem %s3, 768
        %v5654 = vld [vmem:[%s5653] sm:$0xf]
        %v5655 = vld [vmem:[%s5653 + $0x4] sm:$0xf]
        %v5656 = vld [vmem:[%s5653 + $0x8] sm:$0xf]
        %v5657 = vld [vmem:[%s5653 + $0xc] sm:$0xf]
        %v5658 = vld [vmem:[%s5653 + $0x10] sm:$0xf]
        %v5659 = vld [vmem:[%s5653 + $0x14] sm:$0xf]
        %v5660 = vld [vmem:[%s5653 + $0x18] sm:$0xf]
        %v5661 = vld [vmem:[%s5653 + $0x1c] sm:$0xf]
        %v5662 = vld [vmem:[%s5653 + $0x20] sm:$0xf]
        %v5663 = vld [vmem:[%s5653 + $0x24] sm:$0xf]
        %v5664 = vld [vmem:[%s5653 + $0x28] sm:$0xf]
        %v5665 = vld [vmem:[%s5653 + $0x2c] sm:$0xf]
        %v5666 = vld [vmem:[%s5653 + $0x30] sm:$0xf]
        %v5667 = vld [vmem:[%s5653 + $0x34] sm:$0xf]
        %v5668 = vld [vmem:[%s5653 + $0x38] sm:$0xf]
        %v5669 = vld [vmem:[%s5653 + $0x3c] sm:$0xf]
        %v5670 = vld [vmem:[%s5653 + $0x40] sm:$0xf]
        %v5671 = vld [vmem:[%s5653 + $0x44] sm:$0xf]
        %v5672 = vld [vmem:[%s5653 + $0x48] sm:$0xf]
        %v5673 = vld [vmem:[%s5653 + $0x4c] sm:$0xf]
        %v5674 = vld [vmem:[%s5653 + $0x50] sm:$0xf]
        %v5675 = vld [vmem:[%s5653 + $0x54] sm:$0xf]
        %v5676 = vld [vmem:[%s5653 + $0x58] sm:$0xf]
        %v5677 = vld [vmem:[%s5653 + $0x5c] sm:$0xf]
        %v5678 = vld [vmem:[%s5653 + $0x60] sm:$0xf]
        %v5679 = vld [vmem:[%s5653 + $0x64] sm:$0xf]
        %v5680 = vld [vmem:[%s5653 + $0x68] sm:$0xf]
        %v5681 = vld [vmem:[%s5653 + $0x6c] sm:$0xf]
        %v5682 = vld [vmem:[%s5653 + $0x70] sm:$0xf]
        %v5683 = vld [vmem:[%s5653 + $0x74] sm:$0xf]
        %v5684 = vld [vmem:[%s5653 + $0x78] sm:$0xf]
        %v5685 = vld [vmem:[%s5653 + $0x7c] sm:$0xf]
        %v5686 = vld [vmem:[%s5653 + $0x80] sm:$0xf]
        %v5687 = vld [vmem:[%s5653 + $0x84] sm:$0xf]
        %v5688 = vld [vmem:[%s5653 + $0x88] sm:$0xf]
        %v5689 = vld [vmem:[%s5653 + $0x8c] sm:$0xf]
        %v5690 = vld [vmem:[%s5653 + $0x90] sm:$0xf]
        %v5691 = vld [vmem:[%s5653 + $0x94] sm:$0xf]
        %v5692 = vld [vmem:[%s5653 + $0x98] sm:$0xf]
        %v5693 = vld [vmem:[%s5653 + $0x9c] sm:$0xf]
        %v5694 = vld [vmem:[%s5653 + $0xa0] sm:$0xf]
        %v5695 = vld [vmem:[%s5653 + $0xa4] sm:$0xf]
        %v5696 = vld [vmem:[%s5653 + $0xa8] sm:$0xf]
        %v5697 = vld [vmem:[%s5653 + $0xac] sm:$0xf]
        %v5698 = vld [vmem:[%s5653 + $0xb0] sm:$0xf]
        %v5699 = vld [vmem:[%s5653 + $0xb4] sm:$0xf]
        %v5700 = vld [vmem:[%s5653 + $0xb8] sm:$0xf]
        %v5701 = vld [vmem:[%s5653 + $0xbc] sm:$0xf]
        %v5702 = vld [vmem:[%s5653 + $0xc0] sm:$0xf]
        %v5703 = vld [vmem:[%s5653 + $0xc4] sm:$0xf]
        %v5704 = vld [vmem:[%s5653 + $0xc8] sm:$0xf]
        %v5705 = vld [vmem:[%s5653 + $0xcc] sm:$0xf]
        %v5706 = vld [vmem:[%s5653 + $0xd0] sm:$0xf]
        %v5707 = vld [vmem:[%s5653 + $0xd4] sm:$0xf]
        %v5708 = vld [vmem:[%s5653 + $0xd8] sm:$0xf]
        %v5709 = vld [vmem:[%s5653 + $0xdc] sm:$0xf]
        %v5710 = vld [vmem:[%s5653 + $0xe0] sm:$0xf]
        %v5711 = vld [vmem:[%s5653 + $0xe4] sm:$0xf]
        %v5712 = vld [vmem:[%s5653 + $0xe8] sm:$0xf]
        %v5713 = vld [vmem:[%s5653 + $0xec] sm:$0xf]
        %v5714 = vld [vmem:[%s5653 + $0xf0] sm:$0xf]
        %v5715 = vld [vmem:[%s5653 + $0xf4] sm:$0xf]
        %v5716 = vld [vmem:[%s5653 + $0xf8] sm:$0xf]
        %v5717 = vld [vmem:[%s5653 + $0xfc] sm:$0xf]
        %v5782 = vunpack.c.l.b16 %v5654
        %v5783 = vunpack.c.l.b16 %v5655
        %v5784 = vunpack.c.l.b16 %v5656
        %v5785 = vunpack.c.l.b16 %v5657
        %v5786 = vunpack.c.l.b16 %v5658
        %v5787 = vunpack.c.l.b16 %v5659
        %v5788 = vunpack.c.l.b16 %v5660
        %v5789 = vunpack.c.l.b16 %v5661
        %v5790 = vunpack.c.l.b16 %v5662
        %v5791 = vunpack.c.l.b16 %v5663
        %v5792 = vunpack.c.l.b16 %v5664
        %v5793 = vunpack.c.l.b16 %v5665
        %v5794 = vunpack.c.l.b16 %v5666
        %v5795 = vunpack.c.l.b16 %v5667
        %v5796 = vunpack.c.l.b16 %v5668
        %v5797 = vunpack.c.l.b16 %v5669
        %v5798 = vunpack.c.l.b16 %v5670
        %v5799 = vunpack.c.l.b16 %v5671
        %v5800 = vunpack.c.l.b16 %v5672
        %v5801 = vunpack.c.l.b16 %v5673
        %v5802 = vunpack.c.l.b16 %v5674
        %v5803 = vunpack.c.l.b16 %v5675
        %v5804 = vunpack.c.l.b16 %v5676
        %v5805 = vunpack.c.l.b16 %v5677
        %v5806 = vunpack.c.l.b16 %v5678
        %v5807 = vunpack.c.l.b16 %v5679
        %v5808 = vunpack.c.l.b16 %v5680
        %v5809 = vunpack.c.l.b16 %v5681
        %v5810 = vunpack.c.l.b16 %v5682
        %v5811 = vunpack.c.l.b16 %v5683
        %v5812 = vunpack.c.l.b16 %v5684
        %v5813 = vunpack.c.l.b16 %v5685
        %v5814 = vunpack.c.l.b16 %v5686
        %v5815 = vunpack.c.l.b16 %v5687
        %v5816 = vunpack.c.l.b16 %v5688
        %v5817 = vunpack.c.l.b16 %v5689
        %v5818 = vunpack.c.l.b16 %v5690
        %v5819 = vunpack.c.l.b16 %v5691
        %v5820 = vunpack.c.l.b16 %v5692
        %v5821 = vunpack.c.l.b16 %v5693
        %v5822 = vunpack.c.l.b16 %v5694
        %v5823 = vunpack.c.l.b16 %v5695
        %v5824 = vunpack.c.l.b16 %v5696
        %v5825 = vunpack.c.l.b16 %v5697
        %v5826 = vunpack.c.l.b16 %v5698
        %v5827 = vunpack.c.l.b16 %v5699
        %v5828 = vunpack.c.l.b16 %v5700
        %v5829 = vunpack.c.l.b16 %v5701
        %v5830 = vunpack.c.l.b16 %v5702
        %v5831 = vunpack.c.l.b16 %v5703
        %v5832 = vunpack.c.l.b16 %v5704
        %v5833 = vunpack.c.l.b16 %v5705
        %v5834 = vunpack.c.l.b16 %v5706
        %v5835 = vunpack.c.l.b16 %v5707
        %v5836 = vunpack.c.l.b16 %v5708
        %v5837 = vunpack.c.l.b16 %v5709
        %v5838 = vunpack.c.l.b16 %v5710
        %v5839 = vunpack.c.l.b16 %v5711
        %v5840 = vunpack.c.l.b16 %v5712
        %v5841 = vunpack.c.l.b16 %v5713
        %v5842 = vunpack.c.l.b16 %v5714
        %v5843 = vunpack.c.l.b16 %v5715
        %v5844 = vunpack.c.l.b16 %v5716
        %v5845 = vunpack.c.l.b16 %v5717
        %v5846 = vpack.c.b16 %v5783, %v5782
        %v5847 = vpack.c.b16 %v5785, %v5784
        %v5848 = vpack.c.b16 %v5787, %v5786
        %v5849 = vpack.c.b16 %v5789, %v5788
        %v5850 = vpack.c.b16 %v5791, %v5790
        %v5851 = vpack.c.b16 %v5793, %v5792
        %v5852 = vpack.c.b16 %v5795, %v5794
        %v5853 = vpack.c.b16 %v5797, %v5796
        %v5854 = vpack.c.b16 %v5799, %v5798
        %v5855 = vpack.c.b16 %v5801, %v5800
        %v5856 = vpack.c.b16 %v5803, %v5802
        %v5857 = vpack.c.b16 %v5805, %v5804
        %v5858 = vpack.c.b16 %v5807, %v5806
        %v5859 = vpack.c.b16 %v5809, %v5808
        %v5860 = vpack.c.b16 %v5811, %v5810
        %v5861 = vpack.c.b16 %v5813, %v5812
        %v5862 = vpack.c.b16 %v5815, %v5814
        %v5863 = vpack.c.b16 %v5817, %v5816
        %v5864 = vpack.c.b16 %v5819, %v5818
        %v5865 = vpack.c.b16 %v5821, %v5820
        %v5866 = vpack.c.b16 %v5823, %v5822
        %v5867 = vpack.c.b16 %v5825, %v5824
        %v5868 = vpack.c.b16 %v5827, %v5826
        %v5869 = vpack.c.b16 %v5829, %v5828
        %v5870 = vpack.c.b16 %v5831, %v5830
        %v5871 = vpack.c.b16 %v5833, %v5832
        %v5872 = vpack.c.b16 %v5835, %v5834
        %v5873 = vpack.c.b16 %v5837, %v5836
        %v5874 = vpack.c.b16 %v5839, %v5838
        %v5875 = vpack.c.b16 %v5841, %v5840
        %v5876 = vpack.c.b16 %v5843, %v5842
        %v5877 = vpack.c.b16 %v5845, %v5844
        %5910 = vmatprep.subr.bf16.mxu0 0
        %5911 = vmatpush1.bf16.msra.mxu0 %v2595
        %5912 = vmatprep.subr.bf16.mxu0 0
        %5913 = vmatpush1.bf16.msra.mxu0 %v2596
        %5914 = vmatprep.subr.bf16.mxu0 0
        %5915 = vmatpush1.bf16.msra.mxu0 %v2597
        %5916 = vmatprep.subr.bf16.mxu0 0
        %5917 = vmatpush1.bf16.msra.mxu0 %v2598
        %5918 = vmatprep.subr.bf16.mxu0 0
        %5919 = vmatpush1.bf16.msra.mxu0 %v2599
        %5920 = vmatprep.subr.bf16.mxu0 0
        %5921 = vmatpush1.bf16.msra.mxu0 %v2600
        %5922 = vmatprep.subr.bf16.mxu0 0
        %5923 = vmatpush1.bf16.msra.mxu0 %v2601
        %5924 = vmatprep.subr.bf16.mxu0 0
        %5925 = vmatpush1.bf16.msra.mxu0 %v2602
        %5926 = vmatprep.subr.bf16.mxu0 0
        %5927 = vmatpush1.bf16.msra.mxu0 0
        %5928 = vmatprep.subr.bf16.mxu0 0
        %5929 = vmatpush1.bf16.msra.mxu0 0
        %5930 = vmatprep.subr.bf16.mxu0 0
        %5931 = vmatpush1.bf16.msra.mxu0 0
        %5932 = vmatprep.subr.bf16.mxu0 0
        %5933 = vmatpush1.bf16.msra.mxu0 0
        %5934 = vmatprep.subr.bf16.mxu0 0
        %5935 = vmatpush1.bf16.msra.mxu0 0
        %5936 = vmatprep.subr.bf16.mxu0 0
        %5937 = vmatpush1.bf16.msra.mxu0 0
        %5938 = vmatprep.subr.bf16.mxu0 0
        %5939 = vmatpush1.bf16.msra.mxu0 0
        %5940 = vmatprep.subr.bf16.mxu0 0
        %5941 = vmatpush1.bf16.msra.mxu0 0
        %5942 = vmatprep.mubr.bf16.mxu0 0
        %5943 = vmatmul.mubr.bf16.gmra.mrb[0].mxu0 %v5846
        %v5944 = vpop.f32.mrb[0].mxu0
        %v5945 = vadd.f32 0.0, %v5944
        %v5946 = vpop.f32.mrb[0].mxu0
        %v5947 = vpop.f32.mrb[0].mxu0
        %v5948 = vadd.f32 0.0, %v5947
        %v5949 = vpop.f32.mrb[0].mxu0
        %5950 = vmatprep.mubr.bf16.mxu0 0
        %5951 = vmatmul.mubr.bf16.gmra.mrb[0].mxu0 %v5847
        %v5952 = vpop.f32.mrb[0].mxu0
        %v5953 = vadd.f32 0.0, %v5952
        %v5954 = vpop.f32.mrb[0].mxu0
        %v5955 = vpop.f32.mrb[0].mxu0
        %v5956 = vadd.f32 0.0, %v5955
        %v5957 = vpop.f32.mrb[0].mxu0
        %5958 = vmatprep.mubr.bf16.mxu0 0
        %5959 = vmatmul.mubr.bf16.gmra.mrb[0].mxu0 %v5848
        %v5960 = vpop.f32.mrb[0].mxu0
        %v5961 = vadd.f32 0.0, %v5960
        %v5962 = vpop.f32.mrb[0].mxu0
        %v5963 = vpop.f32.mrb[0].mxu0
        %v5964 = vadd.f32 0.0, %v5963
        %v5965 = vpop.f32.mrb[0].mxu0
        %5966 = vmatprep.mubr.bf16.mxu0 0
        %5967 = vmatmul.mubr.bf16.gmra.mrb[0].mxu0 %v5849
        %v5968 = vpop.f32.mrb[0].mxu0
        %v5969 = vadd.f32 0.0, %v5968
        %v5970 = vpop.f32.mrb[0].mxu0
        %v5971 = vpop.f32.mrb[0].mxu0
        %v5972 = vadd.f32 0.0, %v5971
        %v5973 = vpop.f32.mrb[0].mxu0
        %5974 = vmatprep.mubr.bf16.mxu0 0
        %5975 = vmatmul.mubr.bf16.gmra.mrb[0].mxu0 %v5850
        %v5976 = vpop.f32.mrb[0].mxu0
        %v5977 = vadd.f32 0.0, %v5976
        %v5978 = vpop.f32.mrb[0].mxu0
        %v5979 = vpop.f32.mrb[0].mxu0
        %v5980 = vadd.f32 0.0, %v5979
        %v5981 = vpop.f32.mrb[0].mxu0
        %5982 = vmatprep.mubr.bf16.mxu0 0
        %5983 = vmatmul.mubr.bf16.gmra.mrb[0].mxu0 %v5851
        %v5984 = vpop.f32.mrb[0].mxu0
        %v5985 = vadd.f32 0.0, %v5984
        %v5986 = vpop.f32.mrb[0].mxu0
        %v5987 = vpop.f32.mrb[0].mxu0
        %v5988 = vadd.f32 0.0, %v5987
        %v5989 = vpop.f32.mrb[0].mxu0
        %5990 = vmatprep.mubr.bf16.mxu0 0
        %5991 = vmatmul.mubr.bf16.gmra.mrb[0].mxu0 %v5852
        %v5992 = vpop.f32.mrb[0].mxu0
        %v5993 = vadd.f32 0.0, %v5992
        %v5994 = vpop.f32.mrb[0].mxu0
        %v5995 = vpop.f32.mrb[0].mxu0
        %v5996 = vadd.f32 0.0, %v5995
        %v5997 = vpop.f32.mrb[0].mxu0
        %5998 = vmatprep.mubr.bf16.mxu0 0
        %5999 = vmatmul.mubr.bf16.gmra.mrb[0].mxu0 %v5853
        %v6000 = vpop.f32.mrb[0].mxu0
        %v6001 = vadd.f32 0.0, %v6000
        %v6002 = vpop.f32.mrb[0].mxu0
        %v6003 = vpop.f32.mrb[0].mxu0
        %v6004 = vadd.f32 0.0, %v6003
        %v6005 = vpop.f32.mrb[0].mxu0
        %6006 = vmatprep.mubr.bf16.mxu0 0
        %6007 = vmatmul.mubr.bf16.gmra.mrb[0].mxu0 %v5854
        %v6008 = vpop.f32.mrb[0].mxu0
        %v6009 = vadd.f32 0.0, %v6008
        %v6010 = vpop.f32.mrb[0].mxu0
        %v6011 = vpop.f32.mrb[0].mxu0
        %v6012 = vadd.f32 0.0, %v6011
        %v6013 = vpop.f32.mrb[0].mxu0
        %6014 = vmatprep.mubr.bf16.mxu0 0
        %6015 = vmatmul.mubr.bf16.gmra.mrb[0].mxu0 %v5855
        %v6016 = vpop.f32.mrb[0].mxu0
        %v6017 = vadd.f32 0.0, %v6016
        %v6018 = vpop.f32.mrb[0].mxu0
        %v6019 = vpop.f32.mrb[0].mxu0
        %v6020 = vadd.f32 0.0, %v6019
        %v6021 = vpop.f32.mrb[0].mxu0
        %6022 = vmatprep.mubr.bf16.mxu0 0
        %6023 = vmatmul.mubr.bf16.gmra.mrb[0].mxu0 %v5856
        %v6024 = vpop.f32.mrb[0].mxu0
        %v6025 = vadd.f32 0.0, %v6024
        %v6026 = vpop.f32.mrb[0].mxu0
        %v6027 = vpop.f32.mrb[0].mxu0
        %v6028 = vadd.f32 0.0, %v6027
        %v6029 = vpop.f32.mrb[0].mxu0
        %6030 = vmatprep.mubr.bf16.mxu0 0
        %6031 = vmatmul.mubr.bf16.gmra.mrb[0].mxu0 %v5857
        %v6032 = vpop.f32.mrb[0].mxu0
        %v6033 = vadd.f32 0.0, %v6032
        %v6034 = vpop.f32.mrb[0].mxu0
        %v6035 = vpop.f32.mrb[0].mxu0
        %v6036 = vadd.f32 0.0, %v6035
        %v6037 = vpop.f32.mrb[0].mxu0
        %6038 = vmatprep.mubr.bf16.mxu0 0
        %6039 = vmatmul.mubr.bf16.gmra.mrb[0].mxu0 %v5858
        %v6040 = vpop.f32.mrb[0].mxu0
        %v6041 = vadd.f32 0.0, %v6040
        %v6042 = vpop.f32.mrb[0].mxu0
        %v6043 = vpop.f32.mrb[0].mxu0
        %v6044 = vadd.f32 0.0, %v6043
        %v6045 = vpop.f32.mrb[0].mxu0
        %6046 = vmatprep.mubr.bf16.mxu0 0
        %6047 = vmatmul.mubr.bf16.gmra.mrb[0].mxu0 %v5859
        %v6048 = vpop.f32.mrb[0].mxu0
        %v6049 = vadd.f32 0.0, %v6048
        %v6050 = vpop.f32.mrb[0].mxu0
        %v6051 = vpop.f32.mrb[0].mxu0
        %v6052 = vadd.f32 0.0, %v6051
        %v6053 = vpop.f32.mrb[0].mxu0
        %6054 = vmatprep.mubr.bf16.mxu0 0
        %6055 = vmatmul.mubr.bf16.gmra.mrb[0].mxu0 %v5860
        %v6056 = vpop.f32.mrb[0].mxu0
        %v6057 = vadd.f32 0.0, %v6056
        %v6058 = vpop.f32.mrb[0].mxu0
        %v6059 = vpop.f32.mrb[0].mxu0
        %v6060 = vadd.f32 0.0, %v6059
        %v6061 = vpop.f32.mrb[0].mxu0
        %6062 = vmatprep.mubr.bf16.mxu0 0
        %6063 = vmatmul.mubr.bf16.gmra.mrb[0].mxu0 %v5861
        %v6064 = vpop.f32.mrb[0].mxu0
        %v6065 = vadd.f32 0.0, %v6064
        %v6066 = vpop.f32.mrb[0].mxu0
        %v6067 = vpop.f32.mrb[0].mxu0
        %v6068 = vadd.f32 0.0, %v6067
        %v6069 = vpop.f32.mrb[0].mxu0
        %6070 = vmatprep.mubr.bf16.mxu0 0
        %6071 = vmatmul.mubr.bf16.gmra.mrb[0].mxu0 %v5862
        %v6072 = vpop.f32.mrb[0].mxu0
        %v6073 = vadd.f32 0.0, %v6072
        %v6074 = vpop.f32.mrb[0].mxu0
        %v6075 = vpop.f32.mrb[0].mxu0
        %v6076 = vadd.f32 0.0, %v6075
        %v6077 = vpop.f32.mrb[0].mxu0
        %6078 = vmatprep.mubr.bf16.mxu0 0
        %6079 = vmatmul.mubr.bf16.gmra.mrb[0].mxu0 %v5863
        %v6080 = vpop.f32.mrb[0].mxu0
        %v6081 = vadd.f32 0.0, %v6080
        %v6082 = vpop.f32.mrb[0].mxu0
        %v6083 = vpop.f32.mrb[0].mxu0
        %v6084 = vadd.f32 0.0, %v6083
        %v6085 = vpop.f32.mrb[0].mxu0
        %6086 = vmatprep.mubr.bf16.mxu0 0
        %6087 = vmatmul.mubr.bf16.gmra.mrb[0].mxu0 %v5864
        %v6088 = vpop.f32.mrb[0].mxu0
        %v6089 = vadd.f32 0.0, %v6088
        %v6090 = vpop.f32.mrb[0].mxu0
        %v6091 = vpop.f32.mrb[0].mxu0
        %v6092 = vadd.f32 0.0, %v6091
        %v6093 = vpop.f32.mrb[0].mxu0
        %6094 = vmatprep.mubr.bf16.mxu0 0
        %6095 = vmatmul.mubr.bf16.gmra.mrb[0].mxu0 %v5865
        %v6096 = vpop.f32.mrb[0].mxu0
        %v6097 = vadd.f32 0.0, %v6096
        %v6098 = vpop.f32.mrb[0].mxu0
        %v6099 = vpop.f32.mrb[0].mxu0
        %v6100 = vadd.f32 0.0, %v6099
        %v6101 = vpop.f32.mrb[0].mxu0
        %6102 = vmatprep.mubr.bf16.mxu0 0
        %6103 = vmatmul.mubr.bf16.gmra.mrb[0].mxu0 %v5866
        %v6104 = vpop.f32.mrb[0].mxu0
        %v6105 = vadd.f32 0.0, %v6104
        %v6106 = vpop.f32.mrb[0].mxu0
        %v6107 = vpop.f32.mrb[0].mxu0
        %v6108 = vadd.f32 0.0, %v6107
        %v6109 = vpop.f32.mrb[0].mxu0
        %6110 = vmatprep.mubr.bf16.mxu0 0
        %6111 = vmatmul.mubr.bf16.gmra.mrb[0].mxu0 %v5867
        %v6112 = vpop.f32.mrb[0].mxu0
        %v6113 = vadd.f32 0.0, %v6112
        %v6114 = vpop.f32.mrb[0].mxu0
        %v6115 = vpop.f32.mrb[0].mxu0
        %v6116 = vadd.f32 0.0, %v6115
        %v6117 = vpop.f32.mrb[0].mxu0
        %6118 = vmatprep.mubr.bf16.mxu0 0
        %6119 = vmatmul.mubr.bf16.gmra.mrb[0].mxu0 %v5868
        %v6120 = vpop.f32.mrb[0].mxu0
        %v6121 = vadd.f32 0.0, %v6120
        %v6122 = vpop.f32.mrb[0].mxu0
        %v6123 = vpop.f32.mrb[0].mxu0
        %v6124 = vadd.f32 0.0, %v6123
        %v6125 = vpop.f32.mrb[0].mxu0
        %6126 = vmatprep.mubr.bf16.mxu0 0
        %6127 = vmatmul.mubr.bf16.gmra.mrb[0].mxu0 %v5869
        %v6128 = vpop.f32.mrb[0].mxu0
        %v6129 = vadd.f32 0.0, %v6128
        %v6130 = vpop.f32.mrb[0].mxu0
        %v6131 = vpop.f32.mrb[0].mxu0
        %v6132 = vadd.f32 0.0, %v6131
        %v6133 = vpop.f32.mrb[0].mxu0
        %6134 = vmatprep.mubr.bf16.mxu0 0
        %6135 = vmatmul.mubr.bf16.gmra.mrb[0].mxu0 %v5870
        %v6136 = vpop.f32.mrb[0].mxu0
        %v6137 = vadd.f32 0.0, %v6136
        %v6138 = vpop.f32.mrb[0].mxu0
        %v6139 = vpop.f32.mrb[0].mxu0
        %v6140 = vadd.f32 0.0, %v6139
        %v6141 = vpop.f32.mrb[0].mxu0
        %6142 = vmatprep.mubr.bf16.mxu0 0
        %6143 = vmatmul.mubr.bf16.gmra.mrb[0].mxu0 %v5871
        %v6144 = vpop.f32.mrb[0].mxu0
        %v6145 = vadd.f32 0.0, %v6144
        %v6146 = vpop.f32.mrb[0].mxu0
        %v6147 = vpop.f32.mrb[0].mxu0
        %v6148 = vadd.f32 0.0, %v6147
        %v6149 = vpop.f32.mrb[0].mxu0
        %6150 = vmatprep.mubr.bf16.mxu0 0
        %6151 = vmatmul.mubr.bf16.gmra.mrb[0].mxu0 %v5872
        %v6152 = vpop.f32.mrb[0].mxu0
        %v6153 = vadd.f32 0.0, %v6152
        %v6154 = vpop.f32.mrb[0].mxu0
        %v6155 = vpop.f32.mrb[0].mxu0
        %v6156 = vadd.f32 0.0, %v6155
        %v6157 = vpop.f32.mrb[0].mxu0
        %6158 = vmatprep.mubr.bf16.mxu0 0
        %6159 = vmatmul.mubr.bf16.gmra.mrb[0].mxu0 %v5873
        %v6160 = vpop.f32.mrb[0].mxu0
        %v6161 = vadd.f32 0.0, %v6160
        %v6162 = vpop.f32.mrb[0].mxu0
        %v6163 = vpop.f32.mrb[0].mxu0
        %v6164 = vadd.f32 0.0, %v6163
        %v6165 = vpop.f32.mrb[0].mxu0
        %6166 = vmatprep.mubr.bf16.mxu0 0
        %6167 = vmatmul.mubr.bf16.gmra.mrb[0].mxu0 %v5874
        %v6168 = vpop.f32.mrb[0].mxu0
        %v6169 = vadd.f32 0.0, %v6168
        %v6170 = vpop.f32.mrb[0].mxu0
        %v6171 = vpop.f32.mrb[0].mxu0
        %v6172 = vadd.f32 0.0, %v6171
        %v6173 = vpop.f32.mrb[0].mxu0
        %6174 = vmatprep.mubr.bf16.mxu0 0
        %6175 = vmatmul.mubr.bf16.gmra.mrb[0].mxu0 %v5875
        %v6176 = vpop.f32.mrb[0].mxu0
        %v6177 = vadd.f32 0.0, %v6176
        %v6178 = vpop.f32.mrb[0].mxu0
        %v6179 = vpop.f32.mrb[0].mxu0
        %v6180 = vadd.f32 0.0, %v6179
        %v6181 = vpop.f32.mrb[0].mxu0
        %6182 = vmatprep.mubr.bf16.mxu0 0
        %6183 = vmatmul.mubr.bf16.gmra.mrb[0].mxu0 %v5876
        %v6184 = vpop.f32.mrb[0].mxu0
        %v6185 = vadd.f32 0.0, %v6184
        %v6186 = vpop.f32.mrb[0].mxu0
        %v6187 = vpop.f32.mrb[0].mxu0
        %v6188 = vadd.f32 0.0, %v6187
        %v6189 = vpop.f32.mrb[0].mxu0
        %6190 = vmatprep.mubr.bf16.mxu0 0
        %6191 = vmatmul.mubr.bf16.gmra.mrb[0].mxu0 %v5877
        %v6192 = vpop.f32.mrb[0].mxu0
        %v6193 = vadd.f32 0.0, %v6192
        %v6194 = vpop.f32.mrb[0].mxu0
        %v6195 = vpop.f32.mrb[0].mxu0
        %v6196 = vadd.f32 0.0, %v6195
        %v6197 = vpop.f32.mrb[0].mxu0
        %6198 = vdwg.mxu0
        %v6199 = vpack.c.bf16 %v5948, %v5945
        %v6200 = vpack.c.bf16 %v5956, %v5953
        %v6201 = vpack.c.bf16 %v5964, %v5961
        %v6202 = vpack.c.bf16 %v5972, %v5969
        %v6203 = vpack.c.bf16 %v5980, %v5977
        %v6204 = vpack.c.bf16 %v5988, %v5985
        %v6205 = vpack.c.bf16 %v5996, %v5993
        %v6206 = vpack.c.bf16 %v6004, %v6001
        %v6207 = vpack.c.bf16 %v6012, %v6009
        %v6208 = vpack.c.bf16 %v6020, %v6017
        %v6209 = vpack.c.bf16 %v6028, %v6025
        %v6210 = vpack.c.bf16 %v6036, %v6033
        %v6211 = vpack.c.bf16 %v6044, %v6041
        %v6212 = vpack.c.bf16 %v6052, %v6049
        %v6213 = vpack.c.bf16 %v6060, %v6057
        %v6214 = vpack.c.bf16 %v6068, %v6065
        %v6215 = vpack.c.bf16 %v6076, %v6073
        %v6216 = vpack.c.bf16 %v6084, %v6081
        %v6217 = vpack.c.bf16 %v6092, %v6089
        %v6218 = vpack.c.bf16 %v6100, %v6097
        %v6219 = vpack.c.bf16 %v6108, %v6105
        %v6220 = vpack.c.bf16 %v6116, %v6113
        %v6221 = vpack.c.bf16 %v6124, %v6121
        %v6222 = vpack.c.bf16 %v6132, %v6129
        %v6223 = vpack.c.bf16 %v6140, %v6137
        %v6224 = vpack.c.bf16 %v6148, %v6145
        %v6225 = vpack.c.bf16 %v6156, %v6153
        %v6226 = vpack.c.bf16 %v6164, %v6161
        %v6227 = vpack.c.bf16 %v6172, %v6169
        %v6228 = vpack.c.bf16 %v6180, %v6177
        %v6229 = vpack.c.bf16 %v6188, %v6185
        %v6230 = vpack.c.bf16 %v6196, %v6193
        %s6231 = scalar_lea.vmem %s508, 96
        %v6232 = vld [vmem:[%s6231] sm:$0xf]
        %v6233 = vld [vmem:[%s6231 + $0x4] sm:$0xf]
        %v6234 = vld [vmem:[%s6231 + $0x8] sm:$0xf]
        %v6235 = vld [vmem:[%s6231 + $0xc] sm:$0xf]
        %v6236 = vld [vmem:[%s6231 + $0x10] sm:$0xf]
        %v6237 = vld [vmem:[%s6231 + $0x14] sm:$0xf]
        %v6238 = vld [vmem:[%s6231 + $0x18] sm:$0xf]
        %v6239 = vld [vmem:[%s6231 + $0x1c] sm:$0xf]
        %v6248 = vunpack.c.l.b16 %v6232
        %v6249 = vunpack.c.l.b16 %v6233
        %v6250 = vunpack.c.l.b16 %v6234
        %v6251 = vunpack.c.l.b16 %v6235
        %v6252 = vunpack.c.l.b16 %v6236
        %v6253 = vunpack.c.l.b16 %v6237
        %v6254 = vunpack.c.l.b16 %v6238
        %v6255 = vunpack.c.l.b16 %v6239
        %v6256 = vpack.c.b16 %v6249, %v6248
        %v6257 = vpack.c.b16 %v6251, %v6250
        %v6258 = vpack.c.b16 %v6253, %v6252
        %v6259 = vpack.c.b16 %v6255, %v6254
        %v6265 = vsel %vm705, %v6199, 0
        %v6268 = vsel %vm705, %v6200, 0
        %v6271 = vsel %vm705, %v6201, 0
        %v6274 = vsel %vm705, %v6202, 0
        %v6277 = vsel %vm705, %v6203, 0
        %v6280 = vsel %vm705, %v6204, 0
        %v6283 = vsel %vm705, %v6205, 0
        %v6286 = vsel %vm705, %v6206, 0
        %v6289 = vsel %vm705, %v6207, 0
        %v6292 = vsel %vm705, %v6208, 0
        %v6295 = vsel %vm705, %v6209, 0
        %v6298 = vsel %vm705, %v6210, 0
        %v6301 = vsel %vm705, %v6211, 0
        %v6304 = vsel %vm705, %v6212, 0
        %v6307 = vsel %vm705, %v6213, 0
        %v6310 = vsel %vm705, %v6214, 0
        %v6313 = vsel %vm705, %v6215, 0
        %v6316 = vsel %vm705, %v6216, 0
        %v6319 = vsel %vm705, %v6217, 0
        %v6322 = vsel %vm705, %v6218, 0
        %v6325 = vsel %vm705, %v6219, 0
        %v6328 = vsel %vm705, %v6220, 0
        %v6331 = vsel %vm705, %v6221, 0
        %v6334 = vsel %vm705, %v6222, 0
        %v6337 = vsel %vm705, %v6223, 0
        %v6340 = vsel %vm705, %v6224, 0
        %v6343 = vsel %vm705, %v6225, 0
        %v6346 = vsel %vm705, %v6226, 0
        %v6349 = vsel %vm705, %v6227, 0
        %v6352 = vsel %vm705, %v6228, 0
        %v6355 = vsel %vm705, %v6229, 0
        %v6358 = vsel %vm705, %v6230, 0
        %6360 = vmatprep.subr.bf16.mxu0 0
        %6361 = vmatpush1.bf16.msra.mxu0 %v6256
        %6362 = vmatprep.subr.bf16.mxu0 0
        %6363 = vmatpush1.bf16.msra.mxu0 %v6257
        %6364 = vmatprep.subr.bf16.mxu0 0
        %6365 = vmatpush1.bf16.msra.mxu0 %v6258
        %6366 = vmatprep.subr.bf16.mxu0 0
        %6367 = vmatpush1.bf16.msra.mxu0 %v6259
        %6368 = vmatprep.subr.bf16.mxu0 0
        %6369 = vmatpush1.bf16.msra.mxu0 0
        %6370 = vmatprep.subr.bf16.mxu0 0
        %6371 = vmatpush1.bf16.msra.mxu0 0
        %6372 = vmatprep.subr.bf16.mxu0 0
        %6373 = vmatpush1.bf16.msra.mxu0 0
        %6374 = vmatprep.subr.bf16.mxu0 0
        %6375 = vmatpush1.bf16.msra.mxu0 0
        %6376 = vmatprep.subr.bf16.mxu0 0
        %6377 = vmatpush1.bf16.msra.mxu0 0
        %6378 = vmatprep.subr.bf16.mxu0 0
        %6379 = vmatpush1.bf16.msra.mxu0 0
        %6380 = vmatprep.subr.bf16.mxu0 0
        %6381 = vmatpush1.bf16.msra.mxu0 0
        %6382 = vmatprep.subr.bf16.mxu0 0
        %6383 = vmatpush1.bf16.msra.mxu0 0
        %6384 = vmatprep.subr.bf16.mxu0 0
        %6385 = vmatpush1.bf16.msra.mxu0 0
        %6386 = vmatprep.subr.bf16.mxu0 0
        %6387 = vmatpush1.bf16.msra.mxu0 0
        %6388 = vmatprep.subr.bf16.mxu0 0
        %6389 = vmatpush1.bf16.msra.mxu0 0
        %6390 = vmatprep.subr.bf16.mxu0 0
        %6391 = vmatpush1.bf16.msra.mxu0 0
        %6392 = vmatprep.mubr.bf16.mxu0 0
        %6393 = vmatmul.mubr.bf16.gmra.mrb[0].mxu0 %v6265
        %v6394 = vpop.f32.mrb[0].mxu0
        %v6395 = vadd.f32 0.0, %v6394
        %v6396 = vpop.f32.mrb[0].mxu0
        %v6397 = vpop.f32.mrb[0].mxu0
        %v6398 = vadd.f32 0.0, %v6397
        %v6399 = vpop.f32.mrb[0].mxu0
        %6400 = vmatprep.mubr.bf16.mxu0 0
        %6401 = vmatmul.mubr.bf16.gmra.mrb[0].mxu0 %v6268
        %v6402 = vpop.f32.mrb[0].mxu0
        %v6403 = vadd.f32 0.0, %v6402
        %v6404 = vpop.f32.mrb[0].mxu0
        %v6405 = vpop.f32.mrb[0].mxu0
        %v6406 = vadd.f32 0.0, %v6405
        %v6407 = vpop.f32.mrb[0].mxu0
        %6408 = vmatprep.mubr.bf16.mxu0 0
        %6409 = vmatmul.mubr.bf16.gmra.mrb[0].mxu0 %v6271
        %v6410 = vpop.f32.mrb[0].mxu0
        %v6411 = vadd.f32 0.0, %v6410
        %v6412 = vpop.f32.mrb[0].mxu0
        %v6413 = vpop.f32.mrb[0].mxu0
        %v6414 = vadd.f32 0.0, %v6413
        %v6415 = vpop.f32.mrb[0].mxu0
        %6416 = vmatprep.mubr.bf16.mxu0 0
        %6417 = vmatmul.mubr.bf16.gmra.mrb[0].mxu0 %v6274
        %v6418 = vpop.f32.mrb[0].mxu0
        %v6419 = vadd.f32 0.0, %v6418
        %v6420 = vpop.f32.mrb[0].mxu0
        %v6421 = vpop.f32.mrb[0].mxu0
        %v6422 = vadd.f32 0.0, %v6421
        %v6423 = vpop.f32.mrb[0].mxu0
        %6424 = vmatprep.mubr.bf16.mxu0 0
        %6425 = vmatmul.mubr.bf16.gmra.mrb[0].mxu0 %v6277
        %v6426 = vpop.f32.mrb[0].mxu0
        %v6427 = vadd.f32 0.0, %v6426
        %v6428 = vpop.f32.mrb[0].mxu0
        %v6429 = vpop.f32.mrb[0].mxu0
        %v6430 = vadd.f32 0.0, %v6429
        %v6431 = vpop.f32.mrb[0].mxu0
        %6432 = vmatprep.mubr.bf16.mxu0 0
        %6433 = vmatmul.mubr.bf16.gmra.mrb[0].mxu0 %v6280
        %v6434 = vpop.f32.mrb[0].mxu0
        %v6435 = vadd.f32 0.0, %v6434
        %v6436 = vpop.f32.mrb[0].mxu0
        %v6437 = vpop.f32.mrb[0].mxu0
        %v6438 = vadd.f32 0.0, %v6437
        %v6439 = vpop.f32.mrb[0].mxu0
        %6440 = vmatprep.mubr.bf16.mxu0 0
        %6441 = vmatmul.mubr.bf16.gmra.mrb[0].mxu0 %v6283
        %v6442 = vpop.f32.mrb[0].mxu0
        %v6443 = vadd.f32 0.0, %v6442
        %v6444 = vpop.f32.mrb[0].mxu0
        %v6445 = vpop.f32.mrb[0].mxu0
        %v6446 = vadd.f32 0.0, %v6445
        %v6447 = vpop.f32.mrb[0].mxu0
        %6448 = vmatprep.mubr.bf16.mxu0 0
        %6449 = vmatmul.mubr.bf16.gmra.mrb[0].mxu0 %v6286
        %v6450 = vpop.f32.mrb[0].mxu0
        %v6451 = vadd.f32 0.0, %v6450
        %v6452 = vpop.f32.mrb[0].mxu0
        %v6453 = vpop.f32.mrb[0].mxu0
        %v6454 = vadd.f32 0.0, %v6453
        %v6455 = vpop.f32.mrb[0].mxu0
        %6456 = vmatprep.mubr.bf16.mxu0 0
        %6457 = vmatmul.mubr.bf16.gmra.mrb[0].mxu0 %v6289
        %v6458 = vpop.f32.mrb[0].mxu0
        %v6459 = vadd.f32 0.0, %v6458
        %v6460 = vpop.f32.mrb[0].mxu0
        %v6461 = vpop.f32.mrb[0].mxu0
        %v6462 = vadd.f32 0.0, %v6461
        %v6463 = vpop.f32.mrb[0].mxu0
        %6464 = vmatprep.mubr.bf16.mxu0 0
        %6465 = vmatmul.mubr.bf16.gmra.mrb[0].mxu0 %v6292
        %v6466 = vpop.f32.mrb[0].mxu0
        %v6467 = vadd.f32 0.0, %v6466
        %v6468 = vpop.f32.mrb[0].mxu0
        %v6469 = vpop.f32.mrb[0].mxu0
        %v6470 = vadd.f32 0.0, %v6469
        %v6471 = vpop.f32.mrb[0].mxu0
        %6472 = vmatprep.mubr.bf16.mxu0 0
        %6473 = vmatmul.mubr.bf16.gmra.mrb[0].mxu0 %v6295
        %v6474 = vpop.f32.mrb[0].mxu0
        %v6475 = vadd.f32 0.0, %v6474
        %v6476 = vpop.f32.mrb[0].mxu0
        %v6477 = vpop.f32.mrb[0].mxu0
        %v6478 = vadd.f32 0.0, %v6477
        %v6479 = vpop.f32.mrb[0].mxu0
        %6480 = vmatprep.mubr.bf16.mxu0 0
        %6481 = vmatmul.mubr.bf16.gmra.mrb[0].mxu0 %v6298
        %v6482 = vpop.f32.mrb[0].mxu0
        %v6483 = vadd.f32 0.0, %v6482
        %v6484 = vpop.f32.mrb[0].mxu0
        %v6485 = vpop.f32.mrb[0].mxu0
        %v6486 = vadd.f32 0.0, %v6485
        %v6487 = vpop.f32.mrb[0].mxu0
        %6488 = vmatprep.mubr.bf16.mxu0 0
        %6489 = vmatmul.mubr.bf16.gmra.mrb[0].mxu0 %v6301
        %v6490 = vpop.f32.mrb[0].mxu0
        %v6491 = vadd.f32 0.0, %v6490
        %v6492 = vpop.f32.mrb[0].mxu0
        %v6493 = vpop.f32.mrb[0].mxu0
        %v6494 = vadd.f32 0.0, %v6493
        %v6495 = vpop.f32.mrb[0].mxu0
        %6496 = vmatprep.mubr.bf16.mxu0 0
        %6497 = vmatmul.mubr.bf16.gmra.mrb[0].mxu0 %v6304
        %v6498 = vpop.f32.mrb[0].mxu0
        %v6499 = vadd.f32 0.0, %v6498
        %v6500 = vpop.f32.mrb[0].mxu0
        %v6501 = vpop.f32.mrb[0].mxu0
        %v6502 = vadd.f32 0.0, %v6501
        %v6503 = vpop.f32.mrb[0].mxu0
        %6504 = vmatprep.mubr.bf16.mxu0 0
        %6505 = vmatmul.mubr.bf16.gmra.mrb[0].mxu0 %v6307
        %v6506 = vpop.f32.mrb[0].mxu0
        %v6507 = vadd.f32 0.0, %v6506
        %v6508 = vpop.f32.mrb[0].mxu0
        %v6509 = vpop.f32.mrb[0].mxu0
        %v6510 = vadd.f32 0.0, %v6509
        %v6511 = vpop.f32.mrb[0].mxu0
        %6512 = vmatprep.mubr.bf16.mxu0 0
        %6513 = vmatmul.mubr.bf16.gmra.mrb[0].mxu0 %v6310
        %v6514 = vpop.f32.mrb[0].mxu0
        %v6515 = vadd.f32 0.0, %v6514
        %v6516 = vpop.f32.mrb[0].mxu0
        %v6517 = vpop.f32.mrb[0].mxu0
        %v6518 = vadd.f32 0.0, %v6517
        %v6519 = vpop.f32.mrb[0].mxu0
        %6520 = vmatprep.mubr.bf16.mxu0 0
        %6521 = vmatmul.mubr.bf16.gmra.mrb[0].mxu0 %v6313
        %v6522 = vpop.f32.mrb[0].mxu0
        %v6523 = vadd.f32 0.0, %v6522
        %v6524 = vpop.f32.mrb[0].mxu0
        %v6525 = vpop.f32.mrb[0].mxu0
        %v6526 = vadd.f32 0.0, %v6525
        %v6527 = vpop.f32.mrb[0].mxu0
        %6528 = vmatprep.mubr.bf16.mxu0 0
        %6529 = vmatmul.mubr.bf16.gmra.mrb[0].mxu0 %v6316
        %v6530 = vpop.f32.mrb[0].mxu0
        %v6531 = vadd.f32 0.0, %v6530
        %v6532 = vpop.f32.mrb[0].mxu0
        %v6533 = vpop.f32.mrb[0].mxu0
        %v6534 = vadd.f32 0.0, %v6533
        %v6535 = vpop.f32.mrb[0].mxu0
        %6536 = vmatprep.mubr.bf16.mxu0 0
        %6537 = vmatmul.mubr.bf16.gmra.mrb[0].mxu0 %v6319
        %v6538 = vpop.f32.mrb[0].mxu0
        %v6539 = vadd.f32 0.0, %v6538
        %v6540 = vpop.f32.mrb[0].mxu0
        %v6541 = vpop.f32.mrb[0].mxu0
        %v6542 = vadd.f32 0.0, %v6541
        %v6543 = vpop.f32.mrb[0].mxu0
        %6544 = vmatprep.mubr.bf16.mxu0 0
        %6545 = vmatmul.mubr.bf16.gmra.mrb[0].mxu0 %v6322
        %v6546 = vpop.f32.mrb[0].mxu0
        %v6547 = vadd.f32 0.0, %v6546
        %v6548 = vpop.f32.mrb[0].mxu0
        %v6549 = vpop.f32.mrb[0].mxu0
        %v6550 = vadd.f32 0.0, %v6549
        %v6551 = vpop.f32.mrb[0].mxu0
        %6552 = vmatprep.mubr.bf16.mxu0 0
        %6553 = vmatmul.mubr.bf16.gmra.mrb[0].mxu0 %v6325
        %v6554 = vpop.f32.mrb[0].mxu0
        %v6555 = vadd.f32 0.0, %v6554
        %v6556 = vpop.f32.mrb[0].mxu0
        %v6557 = vpop.f32.mrb[0].mxu0
        %v6558 = vadd.f32 0.0, %v6557
        %v6559 = vpop.f32.mrb[0].mxu0
        %6560 = vmatprep.mubr.bf16.mxu0 0
        %6561 = vmatmul.mubr.bf16.gmra.mrb[0].mxu0 %v6328
        %v6562 = vpop.f32.mrb[0].mxu0
        %v6563 = vadd.f32 0.0, %v6562
        %v6564 = vpop.f32.mrb[0].mxu0
        %v6565 = vpop.f32.mrb[0].mxu0
        %v6566 = vadd.f32 0.0, %v6565
        %v6567 = vpop.f32.mrb[0].mxu0
        %6568 = vmatprep.mubr.bf16.mxu0 0
        %6569 = vmatmul.mubr.bf16.gmra.mrb[0].mxu0 %v6331
        %v6570 = vpop.f32.mrb[0].mxu0
        %v6571 = vadd.f32 0.0, %v6570
        %v6572 = vpop.f32.mrb[0].mxu0
        %v6573 = vpop.f32.mrb[0].mxu0
        %v6574 = vadd.f32 0.0, %v6573
        %v6575 = vpop.f32.mrb[0].mxu0
        %6576 = vmatprep.mubr.bf16.mxu0 0
        %6577 = vmatmul.mubr.bf16.gmra.mrb[0].mxu0 %v6334
        %v6578 = vpop.f32.mrb[0].mxu0
        %v6579 = vadd.f32 0.0, %v6578
        %v6580 = vpop.f32.mrb[0].mxu0
        %v6581 = vpop.f32.mrb[0].mxu0
        %v6582 = vadd.f32 0.0, %v6581
        %v6583 = vpop.f32.mrb[0].mxu0
        %6584 = vmatprep.mubr.bf16.mxu0 0
        %6585 = vmatmul.mubr.bf16.gmra.mrb[0].mxu0 %v6337
        %v6586 = vpop.f32.mrb[0].mxu0
        %v6587 = vadd.f32 0.0, %v6586
        %v6588 = vpop.f32.mrb[0].mxu0
        %v6589 = vpop.f32.mrb[0].mxu0
        %v6590 = vadd.f32 0.0, %v6589
        %v6591 = vpop.f32.mrb[0].mxu0
        %6592 = vmatprep.mubr.bf16.mxu0 0
        %6593 = vmatmul.mubr.bf16.gmra.mrb[0].mxu0 %v6340
        %v6594 = vpop.f32.mrb[0].mxu0
        %v6595 = vadd.f32 0.0, %v6594
        %v6596 = vpop.f32.mrb[0].mxu0
        %v6597 = vpop.f32.mrb[0].mxu0
        %v6598 = vadd.f32 0.0, %v6597
        %v6599 = vpop.f32.mrb[0].mxu0
        %6600 = vmatprep.mubr.bf16.mxu0 0
        %6601 = vmatmul.mubr.bf16.gmra.mrb[0].mxu0 %v6343
        %v6602 = vpop.f32.mrb[0].mxu0
        %v6603 = vadd.f32 0.0, %v6602
        %v6604 = vpop.f32.mrb[0].mxu0
        %v6605 = vpop.f32.mrb[0].mxu0
        %v6606 = vadd.f32 0.0, %v6605
        %v6607 = vpop.f32.mrb[0].mxu0
        %6608 = vmatprep.mubr.bf16.mxu0 0
        %6609 = vmatmul.mubr.bf16.gmra.mrb[0].mxu0 %v6346
        %v6610 = vpop.f32.mrb[0].mxu0
        %v6611 = vadd.f32 0.0, %v6610
        %v6612 = vpop.f32.mrb[0].mxu0
        %v6613 = vpop.f32.mrb[0].mxu0
        %v6614 = vadd.f32 0.0, %v6613
        %v6615 = vpop.f32.mrb[0].mxu0
        %6616 = vmatprep.mubr.bf16.mxu0 0
        %6617 = vmatmul.mubr.bf16.gmra.mrb[0].mxu0 %v6349
        %v6618 = vpop.f32.mrb[0].mxu0
        %v6619 = vadd.f32 0.0, %v6618
        %v6620 = vpop.f32.mrb[0].mxu0
        %v6621 = vpop.f32.mrb[0].mxu0
        %v6622 = vadd.f32 0.0, %v6621
        %v6623 = vpop.f32.mrb[0].mxu0
        %6624 = vmatprep.mubr.bf16.mxu0 0
        %6625 = vmatmul.mubr.bf16.gmra.mrb[0].mxu0 %v6352
        %v6626 = vpop.f32.mrb[0].mxu0
        %v6627 = vadd.f32 0.0, %v6626
        %v6628 = vpop.f32.mrb[0].mxu0
        %v6629 = vpop.f32.mrb[0].mxu0
        %v6630 = vadd.f32 0.0, %v6629
        %v6631 = vpop.f32.mrb[0].mxu0
        %6632 = vmatprep.mubr.bf16.mxu0 0
        %6633 = vmatmul.mubr.bf16.gmra.mrb[0].mxu0 %v6355
        %v6634 = vpop.f32.mrb[0].mxu0
        %v6635 = vadd.f32 0.0, %v6634
        %v6636 = vpop.f32.mrb[0].mxu0
        %v6637 = vpop.f32.mrb[0].mxu0
        %v6638 = vadd.f32 0.0, %v6637
        %v6639 = vpop.f32.mrb[0].mxu0
        %6640 = vmatprep.mubr.bf16.mxu0 0
        %6641 = vmatmul.mubr.bf16.gmra.mrb[0].mxu0 %v6358
        %v6642 = vpop.f32.mrb[0].mxu0
        %v6643 = vadd.f32 0.0, %v6642
        %v6644 = vpop.f32.mrb[0].mxu0
        %v6645 = vpop.f32.mrb[0].mxu0
        %v6646 = vadd.f32 0.0, %v6645
        %v6647 = vpop.f32.mrb[0].mxu0
        %6648 = vdwg.mxu0
        %v6649 = vadd.f32 %v5589, %v6395
        %v6650 = vadd.f32 %v5590, %v6398
        %v6651 = vadd.f32 %v5591, %v6403
        %v6652 = vadd.f32 %v5592, %v6406
        %v6653 = vadd.f32 %v5593, %v6411
        %v6654 = vadd.f32 %v5594, %v6414
        %v6655 = vadd.f32 %v5595, %v6419
        %v6656 = vadd.f32 %v5596, %v6422
        %v6657 = vadd.f32 %v5597, %v6427
        %v6658 = vadd.f32 %v5598, %v6430
        %v6659 = vadd.f32 %v5599, %v6435
        %v6660 = vadd.f32 %v5600, %v6438
        %v6661 = vadd.f32 %v5601, %v6443
        %v6662 = vadd.f32 %v5602, %v6446
        %v6663 = vadd.f32 %v5603, %v6451
        %v6664 = vadd.f32 %v5604, %v6454
        %v6665 = vadd.f32 %v5605, %v6459
        %v6666 = vadd.f32 %v5606, %v6462
        %v6667 = vadd.f32 %v5607, %v6467
        %v6668 = vadd.f32 %v5608, %v6470
        %v6669 = vadd.f32 %v5609, %v6475
        %v6670 = vadd.f32 %v5610, %v6478
        %v6671 = vadd.f32 %v5611, %v6483
        %v6672 = vadd.f32 %v5612, %v6486
        %v6673 = vadd.f32 %v5613, %v6491
        %v6674 = vadd.f32 %v5614, %v6494
        %v6675 = vadd.f32 %v5615, %v6499
        %v6676 = vadd.f32 %v5616, %v6502
        %v6677 = vadd.f32 %v5617, %v6507
        %v6678 = vadd.f32 %v5618, %v6510
        %v6679 = vadd.f32 %v5619, %v6515
        %v6680 = vadd.f32 %v5620, %v6518
        %v6681 = vadd.f32 %v5621, %v6523
        %v6682 = vadd.f32 %v5622, %v6526
        %v6683 = vadd.f32 %v5623, %v6531
        %v6684 = vadd.f32 %v5624, %v6534
        %v6685 = vadd.f32 %v5625, %v6539
        %v6686 = vadd.f32 %v5626, %v6542
        %v6687 = vadd.f32 %v5627, %v6547
        %v6688 = vadd.f32 %v5628, %v6550
        %v6689 = vadd.f32 %v5629, %v6555
        %v6690 = vadd.f32 %v5630, %v6558
        %v6691 = vadd.f32 %v5631, %v6563
        %v6692 = vadd.f32 %v5632, %v6566
        %v6693 = vadd.f32 %v5633, %v6571
        %v6694 = vadd.f32 %v5634, %v6574
        %v6695 = vadd.f32 %v5635, %v6579
        %v6696 = vadd.f32 %v5636, %v6582
        %v6697 = vadd.f32 %v5637, %v6587
        %v6698 = vadd.f32 %v5638, %v6590
        %v6699 = vadd.f32 %v5639, %v6595
        %v6700 = vadd.f32 %v5640, %v6598
        %v6701 = vadd.f32 %v5641, %v6603
        %v6702 = vadd.f32 %v5642, %v6606
        %v6703 = vadd.f32 %v5643, %v6611
        %v6704 = vadd.f32 %v5644, %v6614
        %v6705 = vadd.f32 %v5645, %v6619
        %v6706 = vadd.f32 %v5646, %v6622
        %v6707 = vadd.f32 %v5647, %v6627
        %v6708 = vadd.f32 %v5648, %v6630
        %v6709 = vadd.f32 %v5649, %v6635
        %v6710 = vadd.f32 %v5650, %v6638
        %v6711 = vadd.f32 %v5651, %v6643
        %v6712 = vadd.f32 %v5652, %v6646
        %v6713 = vld [vmem:[%s435] sm:$0x1]
        %v6715 = vlaneseq
        %v6716 = vshrl.u32 %v6715, 7
        %v6717 = vsub.s32 0, %v6716
        %v6718 = vrot.slane %v6713, %v6717
        %v6720 = vadd.f32 %v6649, %v6718
        %v6721 = vadd.f32 %v6650, %v6718
        %v6722 = vadd.f32 %v6651, %v6718
        %v6723 = vadd.f32 %v6652, %v6718
        %v6724 = vadd.f32 %v6653, %v6718
        %v6725 = vadd.f32 %v6654, %v6718
        %v6726 = vadd.f32 %v6655, %v6718
        %v6727 = vadd.f32 %v6656, %v6718
        %v6728 = vadd.f32 %v6657, %v6718
        %v6729 = vadd.f32 %v6658, %v6718
        %v6730 = vadd.f32 %v6659, %v6718
        %v6731 = vadd.f32 %v6660, %v6718
        %v6732 = vadd.f32 %v6661, %v6718
        %v6733 = vadd.f32 %v6662, %v6718
        %v6734 = vadd.f32 %v6663, %v6718
        %v6735 = vadd.f32 %v6664, %v6718
        %v6736 = vadd.f32 %v6665, %v6718
        %v6737 = vadd.f32 %v6666, %v6718
        %v6738 = vadd.f32 %v6667, %v6718
        %v6739 = vadd.f32 %v6668, %v6718
        %v6740 = vadd.f32 %v6669, %v6718
        %v6741 = vadd.f32 %v6670, %v6718
        %v6742 = vadd.f32 %v6671, %v6718
        %v6743 = vadd.f32 %v6672, %v6718
        %v6744 = vadd.f32 %v6673, %v6718
        %v6745 = vadd.f32 %v6674, %v6718
        %v6746 = vadd.f32 %v6675, %v6718
        %v6747 = vadd.f32 %v6676, %v6718
        %v6748 = vadd.f32 %v6677, %v6718
        %v6749 = vadd.f32 %v6678, %v6718
        %v6750 = vadd.f32 %v6679, %v6718
        %v6751 = vadd.f32 %v6680, %v6718
        %v6752 = vadd.f32 %v6681, %v6718
        %v6753 = vadd.f32 %v6682, %v6718
        %v6754 = vadd.f32 %v6683, %v6718
        %v6755 = vadd.f32 %v6684, %v6718
        %v6756 = vadd.f32 %v6685, %v6718
        %v6757 = vadd.f32 %v6686, %v6718
        %v6758 = vadd.f32 %v6687, %v6718
        %v6759 = vadd.f32 %v6688, %v6718
        %v6760 = vadd.f32 %v6689, %v6718
        %v6761 = vadd.f32 %v6690, %v6718
        %v6762 = vadd.f32 %v6691, %v6718
        %v6763 = vadd.f32 %v6692, %v6718
        %v6764 = vadd.f32 %v6693, %v6718
        %v6765 = vadd.f32 %v6694, %v6718
        %v6766 = vadd.f32 %v6695, %v6718
        %v6767 = vadd.f32 %v6696, %v6718
        %v6768 = vadd.f32 %v6697, %v6718
        %v6769 = vadd.f32 %v6698, %v6718
        %v6770 = vadd.f32 %v6699, %v6718
        %v6771 = vadd.f32 %v6700, %v6718
        %v6772 = vadd.f32 %v6701, %v6718
        %v6773 = vadd.f32 %v6702, %v6718
        %v6774 = vadd.f32 %v6703, %v6718
        %v6775 = vadd.f32 %v6704, %v6718
        %v6776 = vadd.f32 %v6705, %v6718
        %v6777 = vadd.f32 %v6706, %v6718
        %v6778 = vadd.f32 %v6707, %v6718
        %v6779 = vadd.f32 %v6708, %v6718
        %v6780 = vadd.f32 %v6709, %v6718
        %v6781 = vadd.f32 %v6710, %v6718
        %v6782 = vadd.f32 %v6711, %v6718
        %v6783 = vadd.f32 %v6712, %v6718
        %v6784 = vpack.c.bf16 %v6721, %v6720
        %v6785 = vpack.c.bf16 %v6723, %v6722
        %v6786 = vpack.c.bf16 %v6725, %v6724
        %v6787 = vpack.c.bf16 %v6727, %v6726
        %v6788 = vpack.c.bf16 %v6729, %v6728
        %v6789 = vpack.c.bf16 %v6731, %v6730
        %v6790 = vpack.c.bf16 %v6733, %v6732
        %v6791 = vpack.c.bf16 %v6735, %v6734
        %v6792 = vpack.c.bf16 %v6737, %v6736
        %v6793 = vpack.c.bf16 %v6739, %v6738
        %v6794 = vpack.c.bf16 %v6741, %v6740
        %v6795 = vpack.c.bf16 %v6743, %v6742
        %v6796 = vpack.c.bf16 %v6745, %v6744
        %v6797 = vpack.c.bf16 %v6747, %v6746
        %v6798 = vpack.c.bf16 %v6749, %v6748
        %v6799 = vpack.c.bf16 %v6751, %v6750
        %v6800 = vpack.c.bf16 %v6753, %v6752
        %v6801 = vpack.c.bf16 %v6755, %v6754
        %v6802 = vpack.c.bf16 %v6757, %v6756
        %v6803 = vpack.c.bf16 %v6759, %v6758
        %v6804 = vpack.c.bf16 %v6761, %v6760
        %v6805 = vpack.c.bf16 %v6763, %v6762
        %v6806 = vpack.c.bf16 %v6765, %v6764
        %v6807 = vpack.c.bf16 %v6767, %v6766
        %v6808 = vpack.c.bf16 %v6769, %v6768
        %v6809 = vpack.c.bf16 %v6771, %v6770
        %v6810 = vpack.c.bf16 %v6773, %v6772
        %v6811 = vpack.c.bf16 %v6775, %v6774
        %v6812 = vpack.c.bf16 %v6777, %v6776
        %v6813 = vpack.c.bf16 %v6779, %v6778
        %v6814 = vpack.c.bf16 %v6781, %v6780
        %v6815 = vpack.c.bf16 %v6783, %v6782
        %v6816 = vunpack.c.l.bf16 %v6784
        %v6817 = vunpack.c.h.bf16 %v6784
        %v6818 = vunpack.c.l.bf16 %v6785
        %v6819 = vunpack.c.h.bf16 %v6785
        %v6820 = vunpack.c.l.bf16 %v6786
        %v6821 = vunpack.c.h.bf16 %v6786
        %v6822 = vunpack.c.l.bf16 %v6787
        %v6823 = vunpack.c.h.bf16 %v6787
        %v6824 = vunpack.c.l.bf16 %v6788
        %v6825 = vunpack.c.h.bf16 %v6788
        %v6826 = vunpack.c.l.bf16 %v6789
        %v6827 = vunpack.c.h.bf16 %v6789
        %v6828 = vunpack.c.l.bf16 %v6790
        %v6829 = vunpack.c.h.bf16 %v6790
        %v6830 = vunpack.c.l.bf16 %v6791
        %v6831 = vunpack.c.h.bf16 %v6791
        %v6832 = vunpack.c.l.bf16 %v6792
        %v6833 = vunpack.c.h.bf16 %v6792
        %v6834 = vunpack.c.l.bf16 %v6793
        %v6835 = vunpack.c.h.bf16 %v6793
        %v6836 = vunpack.c.l.bf16 %v6794
        %v6837 = vunpack.c.h.bf16 %v6794
        %v6838 = vunpack.c.l.bf16 %v6795
        %v6839 = vunpack.c.h.bf16 %v6795
        %v6840 = vunpack.c.l.bf16 %v6796
        %v6841 = vunpack.c.h.bf16 %v6796
        %v6842 = vunpack.c.l.bf16 %v6797
        %v6843 = vunpack.c.h.bf16 %v6797
        %v6844 = vunpack.c.l.bf16 %v6798
        %v6845 = vunpack.c.h.bf16 %v6798
        %v6846 = vunpack.c.l.bf16 %v6799
        %v6847 = vunpack.c.h.bf16 %v6799
        %v6848 = vunpack.c.l.bf16 %v6800
        %v6849 = vunpack.c.h.bf16 %v6800
        %v6850 = vunpack.c.l.bf16 %v6801
        %v6851 = vunpack.c.h.bf16 %v6801
        %v6852 = vunpack.c.l.bf16 %v6802
        %v6853 = vunpack.c.h.bf16 %v6802
        %v6854 = vunpack.c.l.bf16 %v6803
        %v6855 = vunpack.c.h.bf16 %v6803
        %v6856 = vunpack.c.l.bf16 %v6804
        %v6857 = vunpack.c.h.bf16 %v6804
        %v6858 = vunpack.c.l.bf16 %v6805
        %v6859 = vunpack.c.h.bf16 %v6805
        %v6860 = vunpack.c.l.bf16 %v6806
        %v6861 = vunpack.c.h.bf16 %v6806
        %v6862 = vunpack.c.l.bf16 %v6807
        %v6863 = vunpack.c.h.bf16 %v6807
        %v6864 = vunpack.c.l.bf16 %v6808
        %v6865 = vunpack.c.h.bf16 %v6808
        %v6866 = vunpack.c.l.bf16 %v6809
        %v6867 = vunpack.c.h.bf16 %v6809
        %v6868 = vunpack.c.l.bf16 %v6810
        %v6869 = vunpack.c.h.bf16 %v6810
        %v6870 = vunpack.c.l.bf16 %v6811
        %v6871 = vunpack.c.h.bf16 %v6811
        %v6872 = vunpack.c.l.bf16 %v6812
        %v6873 = vunpack.c.h.bf16 %v6812
        %v6874 = vunpack.c.l.bf16 %v6813
        %v6875 = vunpack.c.h.bf16 %v6813
        %v6876 = vunpack.c.l.bf16 %v6814
        %v6877 = vunpack.c.h.bf16 %v6814
        %v6878 = vunpack.c.l.bf16 %v6815
        %v6879 = vunpack.c.h.bf16 %v6815
        %vm6880 = vcmask 23552
        %6881 = vst.msk [vmem:[%s513] sm:$0xff] %vm6880, %v6816
        %6882 = vst.msk [vmem:[%s513 + $0x8] sm:$0xff] %vm6880, %v6817
        %6883 = vst.msk [vmem:[%s513 + $0x10] sm:$0xff] %vm6880, %v6818
        %6884 = vst.msk [vmem:[%s513 + $0x18] sm:$0xff] %vm6880, %v6819
        %6885 = vst.msk [vmem:[%s513 + $0x20] sm:$0xff] %vm6880, %v6820
        %6886 = vst.msk [vmem:[%s513 + $0x28] sm:$0xff] %vm6880, %v6821
        %6887 = vst.msk [vmem:[%s513 + $0x30] sm:$0xff] %vm6880, %v6822
        %6888 = vst.msk [vmem:[%s513 + $0x38] sm:$0xff] %vm6880, %v6823
        %6889 = vst.msk [vmem:[%s513 + $0x40] sm:$0xff] %vm6880, %v6824
        %6890 = vst.msk [vmem:[%s513 + $0x48] sm:$0xff] %vm6880, %v6825
        %6891 = vst.msk [vmem:[%s513 + $0x50] sm:$0xff] %vm6880, %v6826
        %6892 = vst.msk [vmem:[%s513 + $0x58] sm:$0xff] %vm6880, %v6827
        %6893 = vst.msk [vmem:[%s513 + $0x60] sm:$0xff] %vm6880, %v6828
        %6894 = vst.msk [vmem:[%s513 + $0x68] sm:$0xff] %vm6880, %v6829
        %6895 = vst.msk [vmem:[%s513 + $0x70] sm:$0xff] %vm6880, %v6830
        %6896 = vst.msk [vmem:[%s513 + $0x78] sm:$0xff] %vm6880, %v6831
        %6897 = vst.msk [vmem:[%s513 + $0x80] sm:$0xff] %vm6880, %v6832
        %6898 = vst.msk [vmem:[%s513 + $0x88] sm:$0xff] %vm6880, %v6833
        %6899 = vst.msk [vmem:[%s513 + $0x90] sm:$0xff] %vm6880, %v6834
        %6900 = vst.msk [vmem:[%s513 + $0x98] sm:$0xff] %vm6880, %v6835
        %6901 = vst.msk [vmem:[%s513 + $0xa0] sm:$0xff] %vm6880, %v6836
        %6902 = vst.msk [vmem:[%s513 + $0xa8] sm:$0xff] %vm6880, %v6837
        %6903 = vst.msk [vmem:[%s513 + $0xb0] sm:$0xff] %vm6880, %v6838
        %6904 = vst.msk [vmem:[%s513 + $0xb8] sm:$0xff] %vm6880, %v6839
        %6905 = vst.msk [vmem:[%s513 + $0xc0] sm:$0xff] %vm6880, %v6840
        %6906 = vst.msk [vmem:[%s513 + $0xc8] sm:$0xff] %vm6880, %v6841
        %6907 = vst.msk [vmem:[%s513 + $0xd0] sm:$0xff] %vm6880, %v6842
        %6908 = vst.msk [vmem:[%s513 + $0xd8] sm:$0xff] %vm6880, %v6843
        %6909 = vst.msk [vmem:[%s513 + $0xe0] sm:$0xff] %vm6880, %v6844
        %6910 = vst.msk [vmem:[%s513 + $0xe8] sm:$0xff] %vm6880, %v6845
        %6911 = vst.msk [vmem:[%s513 + $0xf0] sm:$0xff] %vm6880, %v6846
        %6912 = vst.msk [vmem:[%s513 + $0xf8] sm:$0xff] %vm6880, %v6847
        %6913 = vst.msk [vmem:[%s513 + $0x100] sm:$0xff] %vm6880, %v6848
        %6914 = vst.msk [vmem:[%s513 + $0x108] sm:$0xff] %vm6880, %v6849
        %6915 = vst.msk [vmem:[%s513 + $0x110] sm:$0xff] %vm6880, %v6850
        %6916 = vst.msk [vmem:[%s513 + $0x118] sm:$0xff] %vm6880, %v6851
        %6917 = vst.msk [vmem:[%s513 + $0x120] sm:$0xff] %vm6880, %v6852
        %6918 = vst.msk [vmem:[%s513 + $0x128] sm:$0xff] %vm6880, %v6853
        %6919 = vst.msk [vmem:[%s513 + $0x130] sm:$0xff] %vm6880, %v6854
        %6920 = vst.msk [vmem:[%s513 + $0x138] sm:$0xff] %vm6880, %v6855
        %6921 = vst.msk [vmem:[%s513 + $0x140] sm:$0xff] %vm6880, %v6856
        %6922 = vst.msk [vmem:[%s513 + $0x148] sm:$0xff] %vm6880, %v6857
        %6923 = vst.msk [vmem:[%s513 + $0x150] sm:$0xff] %vm6880, %v6858
        %6924 = vst.msk [vmem:[%s513 + $0x158] sm:$0xff] %vm6880, %v6859
        %6925 = vst.msk [vmem:[%s513 + $0x160] sm:$0xff] %vm6880, %v6860
        %6926 = vst.msk [vmem:[%s513 + $0x168] sm:$0xff] %vm6880, %v6861
        %6927 = vst.msk [vmem:[%s513 + $0x170] sm:$0xff] %vm6880, %v6862
        %6928 = vst.msk [vmem:[%s513 + $0x178] sm:$0xff] %vm6880, %v6863
        %6929 = vst.msk [vmem:[%s513 + $0x180] sm:$0xff] %vm6880, %v6864
        %6930 = vst.msk [vmem:[%s513 + $0x188] sm:$0xff] %vm6880, %v6865
        %6931 = vst.msk [vmem:[%s513 + $0x190] sm:$0xff] %vm6880, %v6866
        %6932 = vst.msk [vmem:[%s513 + $0x198] sm:$0xff] %vm6880, %v6867
        %6933 = vst.msk [vmem:[%s513 + $0x1a0] sm:$0xff] %vm6880, %v6868
        %6934 = vst.msk [vmem:[%s513 + $0x1a8] sm:$0xff] %vm6880, %v6869
        %6935 = vst.msk [vmem:[%s513 + $0x1b0] sm:$0xff] %vm6880, %v6870
        %6936 = vst.msk [vmem:[%s513 + $0x1b8] sm:$0xff] %vm6880, %v6871
        %6937 = vst.msk [vmem:[%s513 + $0x1c0] sm:$0xff] %vm6880, %v6872
        %6938 = vst.msk [vmem:[%s513 + $0x1c8] sm:$0xff] %vm6880, %v6873
        %6939 = vst.msk [vmem:[%s513 + $0x1d0] sm:$0xff] %vm6880, %v6874
        %6940 = vst.msk [vmem:[%s513 + $0x1d8] sm:$0xff] %vm6880, %v6875
        %6941 = vst.msk [vmem:[%s513 + $0x1e0] sm:$0xff] %vm6880, %v6876
        %6942 = vst.msk [vmem:[%s513 + $0x1e8] sm:$0xff] %vm6880, %v6877
        %6943 = vst.msk [vmem:[%s513 + $0x1f0] sm:$0xff] %vm6880, %v6878
        %6944 = vst.msk [vmem:[%s513 + $0x1f8] sm:$0xff] %vm6880, %v6879
        %p6945 = scmp.lt.s32.totalorder %s28, 1
        %s6946 = scalar_select %p6945, %s28, 1
        %s6947 = smul.addr %s6946, 64
        %s6948 = smul.addr %s6947, 8
        %s6949 = scalar_lea.vmem %s10, %s6948
        // Predicated region
        $region77: #{_lambda_.3} parent=59 // pred_check
          %p6950 = pneg %p286
        $region78: #{_lambda_.3} parent=59 // pred_check_branch
          %6952 = sbr.rel (%p6950) target = $region80
        $region79: #{_lambda_.3} parent=59 // pred_region
          _
        $region80: #{_lambda_.3} parent=59 // pred_fallthru
          _
      $region60: #{_lambda_.3} parent=5 // pred_fallthru
        _
      %p6953 = scmp.le.s32.totalorder 2, %s23
      // Predicated region
      $region81: #{_lambda_.3} parent=5 // pred_check
        %p6954 = pneg %p6953
      $region82: #{_lambda_.3} parent=5 // pred_check_branch
        %6956 = sbr.rel (%p6954) target = $region84
      $region83: #{_lambda_.3} parent=5 // pred_region
        %s6957 = ssub.s32 %s23, 2
        // Predicated region
        $region85: #{_lambda_.3} parent=83 // pred_check
          %p6958 = pneg %p292
        $region86: #{_lambda_.3} parent=83 // pred_check_branch
          %6960 = sbr.rel (%p6958) target = $region88
        $region87: #{_lambda_.3} parent=83 // pred_region
          %p6961 = scmp.lt.s32.totalorder %s29, 1
          %s6962 = scalar_select %p6961, %s29, 1
          %s6963 = smul.addr %s6962, 64
          %s6964 = smul.addr %s6963, 8
          %s6965 = scalar_lea.vmem %s10, %s6964
        $region88: #{_lambda_.3} parent=83 // pred_fallthru
          _
      $region84: #{_lambda_.3} parent=5 // pred_fallthru
        _
    $region6: #{_lambda_.3} parent=1 // loop_footer
      %s27 = sadd.s32 1, %s23
    $region7: #{_lambda_.3} parent=1 // loop_footer_branch
      %22 = sbr.rel target = $region3
    $region8: #{_lambda_.3} parent=1 // loop_exit
      _
    %6966 = vsyncpa [#allocation3], 1
    %s6967 = scalar_lea.sflag [#allocation3], 1
    %6968 = vsyncpa %s6967, 1
    %6969 = vsyncpa [#allocation5], 1
    %s6970 = scalar_lea.sflag [#allocation5], 1
    %6971 = vsyncpa %s6970, 1
    %6972 = vsyncpa [#allocation8], 1
    %s6973 = scalar_lea.sflag [#allocation8], 1
    %6974 = vsyncpa %s6973, 1

</llo_original>
